<compile_context>
chip_gen: v7x
topology: tpu7x:2x2x1
jax: 0.10.0
libtpu: 0.0.40
codegen_flags: <defaults>
</compile_context>

<pallas_src>
import functools

import jax
import jax.numpy as jnp
from jax.scipy.linalg import block_diag
from jax.experimental import pallas as pl
from jax.experimental.pallas import tpu as pltpu

OUT_PAD = 128  # lane-dense output slab width (tasks live in lanes [0, T))


def mmoe_kernel(x_ref, w1_ref, w2_ref, tw1_ref, tw2_ref, b_ref, o_ref,
                *, num_experts, tasks, experts_hidden, experts_out,
                towers_hidden):
    E, T = num_experts, tasks
    H, O, Hh = experts_hidden, experts_out, towers_hidden
    EH, EO, THh = E * H, E * O, T * Hh
    N1 = EH + T * E

    x = x_ref[...]                                    # [TB, D]
    b = b_ref[...]                                    # [4, maxw] packed biases

    # ---- Fused expert-fc1 + gate logits: one MXU call ---------------------
    y1 = jnp.dot(x, w1_ref[...], preferred_element_type=jnp.float32)
    y1 = y1 + b[0:1, :N1]                             # gate bias lanes are 0
    h_all = jnp.maximum(y1[:, :EH], 0.0)              # [TB, E*H] (dropout=id)
    logits = y1[:, EH:N1]                             # [TB, T*E]

    # ---- Expert fc2: block-diagonal -> all expert outputs lane-contiguous -
    y2 = jnp.dot(h_all, w2_ref[...], preferred_element_type=jnp.float32)
    y2 = y2 + b[1:2, :EO]                             # [TB, E*O]

    # ---- Gate softmax + expert mixture per task ---------------------------
    # (single fused logits matmul above; softmax itself done on 2-D lane
    #  slices to avoid a [TB, T, E] relayout — same element count either way)
    mixes = []
    for t in range(T):
        lg = logits[:, t * E:(t + 1) * E]             # [TB, E]
        lg = lg - jnp.max(lg, axis=-1, keepdims=True)
        p = jnp.exp(lg)
        gate = p / jnp.sum(p, axis=-1, keepdims=True) # [TB, E]
        m = gate[:, 0:1] * y2[:, 0:O]
        for e in range(1, E):
            m = m + gate[:, e:e + 1] * y2[:, e * O:(e + 1) * O]
        mixes.append(m)                               # [TB, O]
    mix = jnp.concatenate(mixes, axis=-1)             # [TB, T*O]

    # ---- Towers: block-diagonal, 2 matmuls for all tasks ------------------
    th = jnp.dot(mix, tw1_ref[...], preferred_element_type=jnp.float32)
    th = jnp.maximum(th + b[2:3, :THh], 0.0)          # [TB, T*Hh] (dropout=id)
    ty = jnp.dot(th, tw2_ref[...], preferred_element_type=jnp.float32)
    ty = ty + b[3:4, :OUT_PAD]                        # [TB, 128] lane-dense
    # Numerically-safe sigmoid on the EUP (no inf intermediate).
    o_ref[...] = (0.5 * (jnp.tanh(0.5 * ty) + 1.0)).astype(o_ref.dtype)


def pack_mmoe_params(params):
    """Build fused / block-diagonal weights ONCE (outside the kernel)."""
    ew1, eb1, ew2, eb2, wg, tw1, tb1, tw2, tb2 = params
    E, D, H = ew1.shape
    O = ew2.shape[2]
    T = wg.shape[0]
    Hh = tw1.shape[2]
    N1 = E * H + T * E

    # fused expert-fc1 (+ gate) weight: [D, E*H + T*E]
    w1 = jnp.concatenate(
        [ew1.transpose(1, 0, 2).reshape(D, E * H),
         wg.transpose(1, 0, 2).reshape(D, T * E)], axis=1)

    # block-diagonal expert fc2: [E*H, E*O]
    w2 = block_diag(*[ew2[e] for e in range(E)])

    # block-diagonal tower fc1: [T*O, T*Hh]
    tw1_bd = block_diag(*[tw1[t] for t in range(T)])

    # lane-padded tower fc2: [T*Hh, OUT_PAD], task t -> output lane t
    tw2_pad = jnp.zeros((T * Hh, OUT_PAD), jnp.float32)
    for t in range(T):
        tw2_pad = tw2_pad.at[t * Hh:(t + 1) * Hh, t].set(tw2[t][:, 0])

    # biases packed into ONE stacked resident buffer [4, maxw]
    maxw = max(N1, E * O, T * Hh, OUT_PAD)

    def row(v):
        v = v.reshape(-1)
        return jnp.pad(v, (0, maxw - v.shape[0]))

    b1 = jnp.concatenate([eb1.reshape(E * H),
                          jnp.zeros((T * E,), jnp.float32)])   # gate bias = 0
    tb2_row = jnp.zeros((OUT_PAD,), jnp.float32).at[:T].set(tb2.reshape(T))
    b_stack = jnp.stack([row(b1), row(eb2.reshape(E * O)),
                         row(tb1.reshape(T * Hh)), row(tb2_row)], axis=0)

    return w1, w2, tw1_bd, tw2_pad, b_stack


def mmoe_forward(x, packed, *, num_experts, tasks, block_b=512):
    """x: [B, D]; packed = pack_mmoe_params(params)."""
    w1, w2, tw1_bd, tw2_pad, b_stack = packed
    batch, in_dim = x.shape
    EH, EO = w2.shape
    TO, THh = tw1_bd.shape
    H, O, Hh = EH // num_experts, EO // num_experts, THh // tasks
    N1 = w1.shape[1]

    tb = min(block_b, batch)
    tb = max(8, (tb // 8) * 8)                 # multiple of 8 sublanes

    def resident(arr):
        # full array as one block, same block index every step -> stays
        # VMEM-resident (no per-step DMA)
        return pl.BlockSpec(arr.shape, lambda i: (0, 0))

    cost = pl.CostEstimate(
        flops=2 * batch * (in_dim * N1 + EH * EO + TO * THh + THh * OUT_PAD),
        transcendentals=batch * (tasks * num_experts + OUT_PAD),
        bytes_accessed=4 * (batch * in_dim + w1.size + w2.size + tw1_bd.size
                            + tw2_pad.size + b_stack.size + batch * OUT_PAD),
    )

    kernel = functools.partial(
        mmoe_kernel, num_experts=num_experts, tasks=tasks,
        experts_hidden=H, experts_out=O, towers_hidden=Hh)

    out_pad = pl.pallas_call(
        kernel,
        out_shape=jax.ShapeDtypeStruct((batch, OUT_PAD), jnp.float32),
        grid=(pl.cdiv(batch, tb),),
        in_specs=[
            pl.BlockSpec((tb, in_dim), lambda i: (i, 0)),   # streamed x tiles
            resident(w1), resident(w2), resident(tw1_bd), resident(tw2_pad),
            resident(b_stack),
        ],
        out_specs=pl.BlockSpec((tb, OUT_PAD), lambda i: (i, 0)),
        compiler_params=pltpu.CompilerParams(
            dimension_semantics=("parallel",)),
        cost_estimate=cost,
    )(x, w1, w2, tw1_bd, tw2_pad, b_stack)

    return out_pad[:, :tasks]                   # drop the lane padding


def init_mmoe_params(key, input_size, num_experts, experts_out, experts_hidden,
                     towers_hidden, tasks):
    """nn.Linear-style init (uniform +/- 1/sqrt(fan_in)); gates ~ N(0,1).

    Weights are stored stacked and pre-transposed: [leading, in, out]."""
    k_e1, k_e2, k_g, k_t1, k_t2 = jax.random.split(key, 5)

    def linear(k, leading, fan_in, fan_out):
        kw, kb = jax.random.split(k)
        bound = 1.0 / jnp.sqrt(jnp.float32(fan_in))
        w = jax.random.uniform(kw, (leading, fan_in, fan_out), jnp.float32,
                               -bound, bound)
        b = jax.random.uniform(kb, (leading, 1, fan_out), jnp.float32,
                               -bound, bound)
        return w, b

    ew1, eb1 = linear(k_e1, num_experts, input_size, experts_hidden)
    ew2, eb2 = linear(k_e2, num_experts, experts_hidden, experts_out)
    wg = jax.random.normal(k_g, (tasks, input_size, num_experts), jnp.float32)
    tw1, tb1 = linear(k_t1, tasks, experts_out, towers_hidden)
    tw2, tb2 = linear(k_t2, tasks, towers_hidden, 1)
    return ew1, eb1, ew2, eb2, wg, tw1, tb1, tw2, tb2


def mmoe_ref(x, params):
    """Pure-JAX reference matching the PyTorch eval-mode forward."""
    ew1, eb1, ew2, eb2, wg, tw1, tb1, tw2, tb2 = params
    num_experts = ew1.shape[0]
    tasks = wg.shape[0]
    experts = jnp.stack(
        [jnp.maximum(x @ ew1[e] + eb1[e], 0.0) @ ew2[e] + eb2[e]
         for e in range(num_experts)], axis=0)                     # [E, B, O]
    outs = []
    for t in range(tasks):
        gate = jax.nn.softmax(x @ wg[t], axis=1)                   # [B, E]
        mix = jnp.einsum("be,ebo->bo", gate, experts)              # [B, O]
        th = jnp.maximum(mix @ tw1[t] + tb1[t], 0.0)
        outs.append(jax.nn.sigmoid(th @ tw2[t] + tb2[t]))          # [B, 1]
    return jnp.concatenate(outs, axis=-1)                          # [B, T]


if __name__ == "__main__":
    key = jax.random.PRNGKey(0)
    kx, kp = jax.random.split(key)

    batch = 1024         # 2 grid steps of TB=512 -> pipeline + both v7x TCs
    input_size = 32
    num_experts = 4
    experts_out = 32
    experts_hidden = 32
    towers_hidden = 16
    tasks = 2

    x = jax.random.normal(kx, (batch, input_size), jnp.float32)
    params = init_mmoe_params(kp, input_size, num_experts, experts_out,
                              experts_hidden, towers_hidden, tasks)
    packed = pack_mmoe_params(params)

    out = mmoe_forward(x, packed, num_experts=num_experts, tasks=tasks,
                       block_b=512)
    out = jax.block_until_ready(out)

    ref = mmoe_ref(x, params)
    assert out.shape == (batch, tasks)
    assert jnp.allclose(out, ref, atol=1e-5, rtol=1e-5), \
        float(jnp.max(jnp.abs(out - ref)))

    # TODO(synk): training-mode dropout (p=0.3 experts / p=0.4 towers) is not
    # implemented; this kernel is the eval/inference forward.
    print("KERNEL_OK")
</pallas_src>

<mosaic_0001>
module attributes {stable_mosaic.version = 11 : i64} {
  func.func @mmoe_kernel(%arg0: i32, %arg1: memref<512x32xf32, #tpu.memory_space<vmem>>, %arg2: memref<32x136xf32, #tpu.memory_space<vmem>>, %arg3: memref<128x128xf32, #tpu.memory_space<vmem>>, %arg4: memref<64x32xf32, #tpu.memory_space<vmem>>, %arg5: memref<32x128xf32, #tpu.memory_space<vmem>>, %arg6: memref<4x136xf32, #tpu.memory_space<vmem>>, %arg7: memref<512x128xf32, #tpu.memory_space<vmem>>) attributes {dimension_semantics = [#tpu.dimension_semantics<parallel>], iteration_bounds = array<i64: 2>, scalar_prefetch = 0 : i64, scratch_operands = 0 : i64, tpu.core_type = #tpu.core_type<tc>, window_params = [{transform_indices = @transform_0, window_bounds = array<i64: 512, 32>}, {pipeline_mode = #tpu.pipeline_mode<synchronous>, transform_indices = @transform_1, window_bounds = array<i64: 32, 136>}, {pipeline_mode = #tpu.pipeline_mode<synchronous>, transform_indices = @transform_2, window_bounds = array<i64: 128, 128>}, {pipeline_mode = #tpu.pipeline_mode<synchronous>, transform_indices = @transform_3, window_bounds = array<i64: 64, 32>}, {pipeline_mode = #tpu.pipeline_mode<synchronous>, transform_indices = @transform_4, window_bounds = array<i64: 32, 128>}, {pipeline_mode = #tpu.pipeline_mode<synchronous>, transform_indices = @transform_5, window_bounds = array<i64: 4, 136>}, {transform_indices = @transform_6, window_bounds = array<i64: 512, 128>}]} {
    %c0 = arith.constant 0 : index
    %c0_0 = arith.constant 0 : index
    %0 = vector.load %arg1[%c0, %c0_0] : memref<512x32xf32, #tpu.memory_space<vmem>>, vector<512x32xf32>
    %c0_1 = arith.constant 0 : index
    %c0_2 = arith.constant 0 : index
    %1 = vector.load %arg6[%c0_1, %c0_2] : memref<4x136xf32, #tpu.memory_space<vmem>>, vector<4x136xf32>
    %c0_3 = arith.constant 0 : index
    %c0_4 = arith.constant 0 : index
    %2 = vector.load %arg2[%c0_3, %c0_4] : memref<32x136xf32, #tpu.memory_space<vmem>>, vector<32x136xf32>
    %cst = arith.constant dense<0.000000e+00> : vector<512x136xf32>
    %3 = tpu.matmul %0, %2, %cst {dimension_numbers = #tpu.dot_dimension_numbers<[1], [0], [0], [1], [0, 0, 1, 1], [], []>} : vector<512x32xf32>, vector<32x136xf32>, vector<512x136xf32> -> vector<512x136xf32>
    %4 = vector.extract_strided_slice %1 {offsets = [0, 0], sizes = [1, 136], strides = [1, 1]} : vector<4x136xf32> to vector<1x136xf32>
    %5 = vector.broadcast %4 : vector<1x136xf32> to vector<512x136xf32>
    %6 = arith.addf %3, %5 : vector<512x136xf32>
    %7 = vector.extract_strided_slice %6 {offsets = [0, 0], sizes = [512, 128], strides = [1, 1]} : vector<512x136xf32> to vector<512x128xf32>
    %cst_5 = arith.constant 0.000000e+00 : f32
    %8 = vector.broadcast %cst_5 : f32 to vector<512x128xf32>
    %9 = arith.maximumf %7, %8 : vector<512x128xf32>
    %10 = vector.extract_strided_slice %6 {offsets = [0, 128], sizes = [512, 8], strides = [1, 1]} : vector<512x136xf32> to vector<512x8xf32>
    %c0_6 = arith.constant 0 : index
    %c0_7 = arith.constant 0 : index
    %11 = vector.load %arg3[%c0_6, %c0_7] : memref<128x128xf32, #tpu.memory_space<vmem>>, vector<128x128xf32>
    %cst_8 = arith.constant dense<0.000000e+00> : vector<512x128xf32>
    %12 = tpu.matmul %9, %11, %cst_8 {dimension_numbers = #tpu.dot_dimension_numbers<[1], [0], [0], [1], [0, 0, 1, 1], [], []>} : vector<512x128xf32>, vector<128x128xf32>, vector<512x128xf32> -> vector<512x128xf32>
    %13 = vector.extract_strided_slice %1 {offsets = [1, 0], sizes = [1, 128], strides = [1, 1]} : vector<4x136xf32> to vector<1x128xf32>
    %14 = vector.broadcast %13 : vector<1x128xf32> to vector<512x128xf32>
    %15 = arith.addf %12, %14 : vector<512x128xf32>
    %16 = vector.extract_strided_slice %10 {offsets = [0, 0], sizes = [512, 4], strides = [1, 1]} : vector<512x8xf32> to vector<512x4xf32>
    %cst_9 = arith.constant dense<0xFF800000> : vector<512xf32>
    %17 = vector.multi_reduction <maximumf>, %16, %cst_9 [1] : vector<512x4xf32> to vector<512xf32>
    %18 = vector.shape_cast %17 : vector<512xf32> to vector<512x1xf32>
    %19 = vector.broadcast %18 : vector<512x1xf32> to vector<512x4xf32>
    %20 = arith.subf %16, %19 : vector<512x4xf32>
    %21 = math.exp %20 : vector<512x4xf32>
    %cst_10 = arith.constant dense<0.000000e+00> : vector<512xf32>
    %22 = vector.multi_reduction <add>, %21, %cst_10 [1] : vector<512x4xf32> to vector<512xf32>
    %23 = vector.shape_cast %22 : vector<512xf32> to vector<512x1xf32>
    %24 = vector.broadcast %23 : vector<512x1xf32> to vector<512x4xf32>
    %25 = arith.divf %21, %24 : vector<512x4xf32>
    %26 = vector.extract_strided_slice %25 {offsets = [0, 0], sizes = [512, 1], strides = [1, 1]} : vector<512x4xf32> to vector<512x1xf32>
    %27 = vector.extract_strided_slice %15 {offsets = [0, 0], sizes = [512, 32], strides = [1, 1]} : vector<512x128xf32> to vector<512x32xf32>
    %28 = vector.broadcast %26 : vector<512x1xf32> to vector<512x32xf32>
    %29 = arith.mulf %28, %27 : vector<512x32xf32>
    %30 = vector.extract_strided_slice %25 {offsets = [0, 1], sizes = [512, 1], strides = [1, 1]} : vector<512x4xf32> to vector<512x1xf32>
    %31 = vector.extract_strided_slice %15 {offsets = [0, 32], sizes = [512, 32], strides = [1, 1]} : vector<512x128xf32> to vector<512x32xf32>
    %32 = vector.broadcast %30 : vector<512x1xf32> to vector<512x32xf32>
    %33 = arith.mulf %32, %31 : vector<512x32xf32>
    %34 = arith.addf %29, %33 : vector<512x32xf32>
    %35 = vector.extract_strided_slice %25 {offsets = [0, 2], sizes = [512, 1], strides = [1, 1]} : vector<512x4xf32> to vector<512x1xf32>
    %36 = vector.extract_strided_slice %15 {offsets = [0, 64], sizes = [512, 32], strides = [1, 1]} : vector<512x128xf32> to vector<512x32xf32>
    %37 = vector.broadcast %35 : vector<512x1xf32> to vector<512x32xf32>
    %38 = arith.mulf %37, %36 : vector<512x32xf32>
    %39 = arith.addf %34, %38 : vector<512x32xf32>
    %40 = vector.extract_strided_slice %25 {offsets = [0, 3], sizes = [512, 1], strides = [1, 1]} : vector<512x4xf32> to vector<512x1xf32>
    %41 = vector.extract_strided_slice %15 {offsets = [0, 96], sizes = [512, 32], strides = [1, 1]} : vector<512x128xf32> to vector<512x32xf32>
    %42 = vector.broadcast %40 : vector<512x1xf32> to vector<512x32xf32>
    %43 = arith.mulf %42, %41 : vector<512x32xf32>
    %44 = arith.addf %39, %43 : vector<512x32xf32>
    %45 = vector.extract_strided_slice %10 {offsets = [0, 4], sizes = [512, 4], strides = [1, 1]} : vector<512x8xf32> to vector<512x4xf32>
    %cst_11 = arith.constant dense<0xFF800000> : vector<512xf32>
    %46 = vector.multi_reduction <maximumf>, %45, %cst_11 [1] : vector<512x4xf32> to vector<512xf32>
    %47 = vector.shape_cast %46 : vector<512xf32> to vector<512x1xf32>
    %48 = vector.broadcast %47 : vector<512x1xf32> to vector<512x4xf32>
    %49 = arith.subf %45, %48 : vector<512x4xf32>
    %50 = math.exp %49 : vector<512x4xf32>
    %cst_12 = arith.constant dense<0.000000e+00> : vector<512xf32>
    %51 = vector.multi_reduction <add>, %50, %cst_12 [1] : vector<512x4xf32> to vector<512xf32>
    %52 = vector.shape_cast %51 : vector<512xf32> to vector<512x1xf32>
    %53 = vector.broadcast %52 : vector<512x1xf32> to vector<512x4xf32>
    %54 = arith.divf %50, %53 : vector<512x4xf32>
    %55 = vector.extract_strided_slice %54 {offsets = [0, 0], sizes = [512, 1], strides = [1, 1]} : vector<512x4xf32> to vector<512x1xf32>
    %56 = vector.extract_strided_slice %15 {offsets = [0, 0], sizes = [512, 32], strides = [1, 1]} : vector<512x128xf32> to vector<512x32xf32>
    %57 = vector.broadcast %55 : vector<512x1xf32> to vector<512x32xf32>
    %58 = arith.mulf %57, %56 : vector<512x32xf32>
    %59 = vector.extract_strided_slice %54 {offsets = [0, 1], sizes = [512, 1], strides = [1, 1]} : vector<512x4xf32> to vector<512x1xf32>
    %60 = vector.extract_strided_slice %15 {offsets = [0, 32], sizes = [512, 32], strides = [1, 1]} : vector<512x128xf32> to vector<512x32xf32>
    %61 = vector.broadcast %59 : vector<512x1xf32> to vector<512x32xf32>
    %62 = arith.mulf %61, %60 : vector<512x32xf32>
    %63 = arith.addf %58, %62 : vector<512x32xf32>
    %64 = vector.extract_strided_slice %54 {offsets = [0, 2], sizes = [512, 1], strides = [1, 1]} : vector<512x4xf32> to vector<512x1xf32>
    %65 = vector.extract_strided_slice %15 {offsets = [0, 64], sizes = [512, 32], strides = [1, 1]} : vector<512x128xf32> to vector<512x32xf32>
    %66 = vector.broadcast %64 : vector<512x1xf32> to vector<512x32xf32>
    %67 = arith.mulf %66, %65 : vector<512x32xf32>
    %68 = arith.addf %63, %67 : vector<512x32xf32>
    %69 = vector.extract_strided_slice %54 {offsets = [0, 3], sizes = [512, 1], strides = [1, 1]} : vector<512x4xf32> to vector<512x1xf32>
    %70 = vector.extract_strided_slice %15 {offsets = [0, 96], sizes = [512, 32], strides = [1, 1]} : vector<512x128xf32> to vector<512x32xf32>
    %71 = vector.broadcast %69 : vector<512x1xf32> to vector<512x32xf32>
    %72 = arith.mulf %71, %70 : vector<512x32xf32>
    %73 = arith.addf %68, %72 : vector<512x32xf32>
    %74 = tpu.concatenate %44, %73 in 1 : vector<512x32xf32>, vector<512x32xf32> -> vector<512x64xf32>
    %c0_13 = arith.constant 0 : index
    %c0_14 = arith.constant 0 : index
    %75 = vector.load %arg4[%c0_13, %c0_14] : memref<64x32xf32, #tpu.memory_space<vmem>>, vector<64x32xf32>
    %cst_15 = arith.constant dense<0.000000e+00> : vector<512x32xf32>
    %76 = tpu.matmul %74, %75, %cst_15 {dimension_numbers = #tpu.dot_dimension_numbers<[1], [0], [0], [1], [0, 0, 1, 1], [], []>} : vector<512x64xf32>, vector<64x32xf32>, vector<512x32xf32> -> vector<512x32xf32>
    %77 = vector.extract_strided_slice %1 {offsets = [2, 0], sizes = [1, 32], strides = [1, 1]} : vector<4x136xf32> to vector<1x32xf32>
    %78 = vector.broadcast %77 : vector<1x32xf32> to vector<512x32xf32>
    %79 = arith.addf %76, %78 : vector<512x32xf32>
    %cst_16 = arith.constant 0.000000e+00 : f32
    %80 = vector.broadcast %cst_16 : f32 to vector<512x32xf32>
    %81 = arith.maximumf %79, %80 : vector<512x32xf32>
    %c0_17 = arith.constant 0 : index
    %c0_18 = arith.constant 0 : index
    %82 = vector.load %arg5[%c0_17, %c0_18] : memref<32x128xf32, #tpu.memory_space<vmem>>, vector<32x128xf32>
    %cst_19 = arith.constant dense<0.000000e+00> : vector<512x128xf32>
    %83 = tpu.matmul %81, %82, %cst_19 {dimension_numbers = #tpu.dot_dimension_numbers<[1], [0], [0], [1], [0, 0, 1, 1], [], []>} : vector<512x32xf32>, vector<32x128xf32>, vector<512x128xf32> -> vector<512x128xf32>
    %84 = vector.extract_strided_slice %1 {offsets = [3, 0], sizes = [1, 128], strides = [1, 1]} : vector<4x136xf32> to vector<1x128xf32>
    %85 = vector.broadcast %84 : vector<1x128xf32> to vector<512x128xf32>
    %86 = arith.addf %83, %85 : vector<512x128xf32>
    %cst_20 = arith.constant 5.000000e-01 : f32
    %87 = vector.broadcast %cst_20 : f32 to vector<512x128xf32>
    %88 = arith.mulf %87, %86 : vector<512x128xf32>
    %89 = math.tanh %88 : vector<512x128xf32>
    %cst_21 = arith.constant 1.000000e+00 : f32
    %90 = vector.broadcast %cst_21 : f32 to vector<512x128xf32>
    %91 = arith.addf %89, %90 : vector<512x128xf32>
    %cst_22 = arith.constant 5.000000e-01 : f32
    %92 = vector.broadcast %cst_22 : f32 to vector<512x128xf32>
    %93 = arith.mulf %92, %91 : vector<512x128xf32>
    %c0_23 = arith.constant 0 : index
    %c0_24 = arith.constant 0 : index
    %94 = vector.load %arg7[%c0_23, %c0_24] : memref<512x128xf32, #tpu.memory_space<vmem>>, vector<512x128xf32>
    tpu.vector_store %arg7[%c0_23, %c0_24], %93 {strides = array<i32>} : memref<512x128xf32, #tpu.memory_space<vmem>>, vector<512x128xf32>,
    return
  }
  func.func @transform_0(%arg0: i32) -> (i32, i32) {
    %c0_i32 = arith.constant 0 : i32
    %c0_i32_0 = arith.constant 0 : i32
    return %arg0, %c0_i32 : i32, i32
  }
  func.func @transform_1(%arg0: i32) -> (i32, i32) {
    %c0_i32 = arith.constant 0 : i32
    %c0_i32_0 = arith.constant 0 : i32
    %c0_i32_1 = arith.constant 0 : i32
    return %c0_i32, %c0_i32_0 : i32, i32
  }
  func.func @transform_2(%arg0: i32) -> (i32, i32) {
    %c0_i32 = arith.constant 0 : i32
    %c0_i32_0 = arith.constant 0 : i32
    %c0_i32_1 = arith.constant 0 : i32
    return %c0_i32, %c0_i32_0 : i32, i32
  }
  func.func @transform_3(%arg0: i32) -> (i32, i32) {
    %c0_i32 = arith.constant 0 : i32
    %c0_i32_0 = arith.constant 0 : i32
    %c0_i32_1 = arith.constant 0 : i32
    return %c0_i32, %c0_i32_0 : i32, i32
  }
  func.func @transform_4(%arg0: i32) -> (i32, i32) {
    %c0_i32 = arith.constant 0 : i32
    %c0_i32_0 = arith.constant 0 : i32
    %c0_i32_1 = arith.constant 0 : i32
    return %c0_i32, %c0_i32_0 : i32, i32
  }
  func.func @transform_5(%arg0: i32) -> (i32, i32) {
    %c0_i32 = arith.constant 0 : i32
    %c0_i32_0 = arith.constant 0 : i32
    %c0_i32_1 = arith.constant 0 : i32
    return %c0_i32, %c0_i32_0 : i32, i32
  }
  func.func @transform_6(%arg0: i32) -> (i32, i32) {
    %c0_i32 = arith.constant 0 : i32
    %c0_i32_0 = arith.constant 0 : i32
    return %arg0, %c0_i32 : i32, i32
  }
}

</mosaic_0001>

<llo_original>
// kernel: tpu_custom_call.1
$region0: #{tpu_custom_call.1}
  #allocation0 [shape = 'u32[]', space=smem, size = 0x4, offset = 0x4, fixed_abs, tag = 'smem constant byte address 0x4 - core index']
  #allocation1 [shape = 'u32[144,128]{1,0:T(1,128)}', space=vmem, size = 0x12000, scoped, tag = 'internal scratch']
  %s0 = inlined_call_operand.vmem [shape: f32[1024,32], index: 0, kind: input, shape index: {}]
  %s1 = inlined_call_operand.vmem [shape: f32[32,136], index: 1, kind: input, shape index: {}]
  %s2 = inlined_call_operand.vmem [shape: f32[128,128], index: 2, kind: input, shape index: {}]
  %s3 = inlined_call_operand.vmem [shape: f32[64,32], index: 3, kind: input, shape index: {}]
  %s4 = inlined_call_operand.vmem [shape: f32[32,128], index: 4, kind: input, shape index: {}]
  %s5 = inlined_call_operand.vmem [shape: f32[4,136], index: 5, kind: input, shape index: {}]
  %s6 = inlined_call_operand.hbm [shape: f32[1024,128], index: 6, kind: output, shape index: {}]
  %s7 = sld [smem:[#allocation0]]
  $region57: #{tpu_custom_call.1} parent=0
    _
  %s9 = ssub.s32 1, %s7
  %s10 = scalar_select 0, %s9, %s7
  $region1: #{tpu_custom_call.1} parent=0
    #allocation2 [shape = 'u8[524288]{0}', space=vmem, size = 0x80000, scoped, tag = 'output window, operand 0']
    #allocation3 [shape = 's32[2]{0}', space=sflag, size = 0x8, scoped, tag = 'scoped memory for tpu_custom_call.1']
    %11 = vsyncpa [#allocation3], 0
    %s12 = scalar_lea.sflag [#allocation3], 1
    %13 = vsyncpa %s12, 0
    loop: start=0, step=1, limit=4
    $region2: #{tpu_custom_call.1} parent=1 // loop_pre_header
      _
    $region3: #{tpu_custom_call.1} parent=1 // loop_header
      %s15 = sphi 0, %s19
      %p16 = scmp.ge.s32.totalorder %s15, 4
      %s25 = sphi 0, %s27
      %s28 = sphi 0, %s25
      %s29 = sphi 0, %s28
      %s45 = sphi 0, %s29
      %s49 = sphi 0, %s49
      %s51 = sphi 0, %s49
      %s52 = sphi 0, %s51
      %s66 = sphi 0, %s52
      %s70 = sphi 0, %s70
      %s72 = sphi 0, %s70
      %s73 = sphi 0, %s72
      %s87 = sphi 0, %s73
      %s91 = sphi 0, %s91
      %s93 = sphi 0, %s91
      %s94 = sphi 0, %s93
      %s108 = sphi 0, %s94
      %s112 = sphi 0, %s112
      %s114 = sphi 0, %s112
      %s115 = sphi 0, %s114
      %s129 = sphi 0, %s115
      %s133 = sphi 0, %s133
      %s135 = sphi 0, %s133
      %s136 = sphi 0, %s135
      %s150 = sphi 0, %s136
      %s156 = sphi 0, %s158
      %s159 = sphi 0, %s156
      %s160 = sphi 0, %s159
      %s176 = sphi 0, %s160
    $region4: #{tpu_custom_call.1} parent=1 // loop_header_branch
      %18 = sbr.rel (%p16) target = $region8
    $region5: #{tpu_custom_call.1} parent=1 // loop_body
      %s20 = ssub.s32 %s15, 1
      %s21 = ssub.s32 %s15, 2
      %s22 = sadd.s32 %s15, 1
      %s23 = ssub.s32 %s15, %s22
      %p24 = scmp.eq.s32.totalorder %s23, 0
      %s26 = sadd.s32 %s25, 1
      %s27 = scalar_select %p24, %s25, %s26
      %p30 = pneg %p24
      %p31 = scmp.eq.s32.totalorder %s15, 1
      %p32 = por %p30, %p31
      %p33 = scmp.ne.s32.totalorder %s25, %s28
      %p34 = scmp.eq.s32.totalorder %s15, 0
      %p35 = por %p33, %p34
      %p36 = scmp.ne.s32.totalorder %s25, %s28
      %p37 = scmp.eq.s32.totalorder %s20, 1
      %p38 = por %p36, %p37
      %p39 = scmp.ne.s32.totalorder %s28, %s29
      %p40 = scmp.eq.s32.totalorder %s20, 0
      %p41 = por %p39, %p40
      %p42 = scmp.ne.s32.totalorder %s28, %s29
      %p43 = scmp.eq.s32.totalorder %s21, 1
      %p44 = por %p42, %p43
      %p46 = scmp.ne.s32.totalorder %s29, %s45
      %p47 = scmp.eq.s32.totalorder %s21, 0
      %p48 = por %p46, %p47
      %s50 = sadd.s32 %s49, 1
      %p53 = scmp.eq.s32.totalorder %s15, 1
      %p54 = scmp.ne.s32.totalorder %s49, %s51
      %p55 = scmp.eq.s32.totalorder %s15, 0
      %p56 = por %p54, %p55
      %p57 = scmp.ne.s32.totalorder %s49, %s51
      %p58 = scmp.eq.s32.totalorder %s20, 1
      %p59 = por %p57, %p58
      %p60 = scmp.ne.s32.totalorder %s51, %s52
      %p61 = scmp.eq.s32.totalorder %s20, 0
      %p62 = por %p60, %p61
      %p63 = scmp.ne.s32.totalorder %s51, %s52
      %p64 = scmp.eq.s32.totalorder %s21, 1
      %p65 = por %p63, %p64
      %p67 = scmp.ne.s32.totalorder %s52, %s66
      %p68 = scmp.eq.s32.totalorder %s21, 0
      %p69 = por %p67, %p68
      %s71 = sadd.s32 %s70, 1
      %p74 = scmp.eq.s32.totalorder %s15, 1
      %p75 = scmp.ne.s32.totalorder %s70, %s72
      %p76 = scmp.eq.s32.totalorder %s15, 0
      %p77 = por %p75, %p76
      %p78 = scmp.ne.s32.totalorder %s70, %s72
      %p79 = scmp.eq.s32.totalorder %s20, 1
      %p80 = por %p78, %p79
      %p81 = scmp.ne.s32.totalorder %s72, %s73
      %p82 = scmp.eq.s32.totalorder %s20, 0
      %p83 = por %p81, %p82
      %p84 = scmp.ne.s32.totalorder %s72, %s73
      %p85 = scmp.eq.s32.totalorder %s21, 1
      %p86 = por %p84, %p85
      %p88 = scmp.ne.s32.totalorder %s73, %s87
      %p89 = scmp.eq.s32.totalorder %s21, 0
      %p90 = por %p88, %p89
      %s92 = sadd.s32 %s91, 1
      %p95 = scmp.eq.s32.totalorder %s15, 1
      %p96 = scmp.ne.s32.totalorder %s91, %s93
      %p97 = scmp.eq.s32.totalorder %s15, 0
      %p98 = por %p96, %p97
      %p99 = scmp.ne.s32.totalorder %s91, %s93
      %p100 = scmp.eq.s32.totalorder %s20, 1
      %p101 = por %p99, %p100
      %p102 = scmp.ne.s32.totalorder %s93, %s94
      %p103 = scmp.eq.s32.totalorder %s20, 0
      %p104 = por %p102, %p103
      %p105 = scmp.ne.s32.totalorder %s93, %s94
      %p106 = scmp.eq.s32.totalorder %s21, 1
      %p107 = por %p105, %p106
      %p109 = scmp.ne.s32.totalorder %s94, %s108
      %p110 = scmp.eq.s32.totalorder %s21, 0
      %p111 = por %p109, %p110
      %s113 = sadd.s32 %s112, 1
      %p116 = scmp.eq.s32.totalorder %s15, 1
      %p117 = scmp.ne.s32.totalorder %s112, %s114
      %p118 = scmp.eq.s32.totalorder %s15, 0
      %p119 = por %p117, %p118
      %p120 = scmp.ne.s32.totalorder %s112, %s114
      %p121 = scmp.eq.s32.totalorder %s20, 1
      %p122 = por %p120, %p121
      %p123 = scmp.ne.s32.totalorder %s114, %s115
      %p124 = scmp.eq.s32.totalorder %s20, 0
      %p125 = por %p123, %p124
      %p126 = scmp.ne.s32.totalorder %s114, %s115
      %p127 = scmp.eq.s32.totalorder %s21, 1
      %p128 = por %p126, %p127
      %p130 = scmp.ne.s32.totalorder %s115, %s129
      %p131 = scmp.eq.s32.totalorder %s21, 0
      %p132 = por %p130, %p131
      %s134 = sadd.s32 %s133, 1
      %p137 = scmp.eq.s32.totalorder %s15, 1
      %p138 = scmp.ne.s32.totalorder %s133, %s135
      %p139 = scmp.eq.s32.totalorder %s15, 0
      %p140 = por %p138, %p139
      %p141 = scmp.ne.s32.totalorder %s133, %s135
      %p142 = scmp.eq.s32.totalorder %s20, 1
      %p143 = por %p141, %p142
      %p144 = scmp.ne.s32.totalorder %s135, %s136
      %p145 = scmp.eq.s32.totalorder %s20, 0
      %p146 = por %p144, %p145
      %p147 = scmp.ne.s32.totalorder %s135, %s136
      %p148 = scmp.eq.s32.totalorder %s21, 1
      %p149 = por %p147, %p148
      %p151 = scmp.ne.s32.totalorder %s136, %s150
      %p152 = scmp.eq.s32.totalorder %s21, 0
      %p153 = por %p151, %p152
      %s154 = ssub.s32 %s15, %s22
      %p155 = scmp.eq.s32.totalorder %s154, 0
      %s157 = sadd.s32 %s156, 1
      %s158 = scalar_select %p155, %s156, %s157
      %p161 = pneg %p155
      %p162 = scmp.eq.s32.totalorder %s15, 1
      %p163 = por %p161, %p162
      %p164 = scmp.ne.s32.totalorder %s156, %s159
      %p165 = scmp.eq.s32.totalorder %s15, 0
      %p166 = por %p164, %p165
      %p167 = scmp.ne.s32.totalorder %s156, %s159
      %p168 = scmp.eq.s32.totalorder %s20, 1
      %p169 = por %p167, %p168
      %p170 = scmp.ne.s32.totalorder %s159, %s160
      %p171 = scmp.eq.s32.totalorder %s20, 0
      %p172 = por %p170, %p171
      %p173 = scmp.ne.s32.totalorder %s159, %s160
      %p174 = scmp.eq.s32.totalorder %s21, 1
      %p175 = por %p173, %p174
      %p177 = scmp.ne.s32.totalorder %s160, %s176
      %p178 = scmp.eq.s32.totalorder %s21, 0
      %p179 = por %p177, %p178
      %p180 = scmp.le.s32.totalorder 1, %s15
      %p181 = scmp.lt.s32.totalorder %s15, 3
      %p182 = pnand %p180, %p181
      %p183 = pneg %p182
      // Predicated region
      $region9: #{tpu_custom_call.1} parent=5 // pred_check
        _
      $region10: #{tpu_custom_call.1} parent=5 // pred_check_branch
        %185 = sbr.rel (%p182) target = $region12
      $region11: #{tpu_custom_call.1} parent=5 // pred_region
        %s186 = ssub.s32 %s15, 1
        // Predicated region
        $region13: #{tpu_custom_call.1} parent=11 // pred_check
          %p187 = pneg %p62
        $region14: #{tpu_custom_call.1} parent=11 // pred_check_branch
          %189 = sbr.rel (%p187) target = $region16
        $region15: #{tpu_custom_call.1} parent=11 // pred_region
          _
        $region16: #{tpu_custom_call.1} parent=11 // pred_fallthru
          _
        // Predicated region
        $region17: #{tpu_custom_call.1} parent=11 // pred_check
          %p190 = pneg %p83
        $region18: #{tpu_custom_call.1} parent=11 // pred_check_branch
          %192 = sbr.rel (%p190) target = $region20
        $region19: #{tpu_custom_call.1} parent=11 // pred_region
          _
        $region20: #{tpu_custom_call.1} parent=11 // pred_fallthru
          _
        // Predicated region
        $region21: #{tpu_custom_call.1} parent=11 // pred_check
          %p193 = pneg %p104
        $region22: #{tpu_custom_call.1} parent=11 // pred_check_branch
          %195 = sbr.rel (%p193) target = $region24
        $region23: #{tpu_custom_call.1} parent=11 // pred_region
          _
        $region24: #{tpu_custom_call.1} parent=11 // pred_fallthru
          _
        // Predicated region
        $region25: #{tpu_custom_call.1} parent=11 // pred_check
          %p196 = pneg %p125
        $region26: #{tpu_custom_call.1} parent=11 // pred_check_branch
          %198 = sbr.rel (%p196) target = $region28
        $region27: #{tpu_custom_call.1} parent=11 // pred_region
          _
        $region28: #{tpu_custom_call.1} parent=11 // pred_fallthru
          _
        // Predicated region
        $region29: #{tpu_custom_call.1} parent=11 // pred_check
          %p199 = pneg %p146
        $region30: #{tpu_custom_call.1} parent=11 // pred_check_branch
          %201 = sbr.rel (%p199) target = $region32
        $region31: #{tpu_custom_call.1} parent=11 // pred_region
          _
        $region32: #{tpu_custom_call.1} parent=11 // pred_fallthru
          _
      $region12: #{tpu_custom_call.1} parent=5 // pred_fallthru
        _
      %p202 = scmp.lt.s32.totalorder %s15, 2
      // Predicated region
      $region33: #{tpu_custom_call.1} parent=5 // pred_check
        %p203 = pneg %p202
      $region34: #{tpu_custom_call.1} parent=5 // pred_check_branch
        %205 = sbr.rel (%p203) target = $region36
      $region35: #{tpu_custom_call.1} parent=5 // pred_region
        // Predicated region
        $region37: #{tpu_custom_call.1} parent=35 // pred_check
          %p206 = pneg %p35
        $region38: #{tpu_custom_call.1} parent=35 // pred_check_branch
          %208 = sbr.rel (%p206) target = $region40
        $region39: #{tpu_custom_call.1} parent=35 // pred_region
          %s209 = smul.u32 64, %s15
          %p210 = scmp.lt.s32.totalorder %s209, 127
          %s211 = scalar_select %p210, %s209, 127
          %s212 = smul.addr %s211, 8
          %s213 = scalar_lea.vmem %s0, %s212
          %s214 = smul.u32 64, %s15
        $region40: #{tpu_custom_call.1} parent=35 // pred_fallthru
          _
      $region36: #{tpu_custom_call.1} parent=5 // pred_fallthru
        _
      %p215 = scmp.le.s32.totalorder 1, %s15
      %p216 = scmp.lt.s32.totalorder %s15, 3
      %p217 = pnand %p215, %p216
      %p218 = pneg %p217
      // Predicated region
      $region41: #{tpu_custom_call.1} parent=5 // pred_check
        _
      $region42: #{tpu_custom_call.1} parent=5 // pred_check_branch
        %220 = sbr.rel (%p217) target = $region44
      $region43: #{tpu_custom_call.1} parent=5 // pred_region
        %s221 = ssub.s32 %s15, 1
        %s222 = smul.u32 64, %s20
        %p223 = scmp.lt.s32.totalorder %s222, 127
        %s224 = scalar_select %p223, %s222, 127
        %s225 = smul.addr %s224, 8
        %s226 = scalar_lea.vmem %s0, %s225
        %p227 = pneg %p41
        %p228 = pneg %p38
        %p229 = pneg %p62
        %p230 = pneg %p59
        %p231 = pneg %p83
        %p232 = pneg %p80
        %p233 = pneg %p104
        %p234 = pneg %p101
        %p235 = pneg %p125
        %p236 = pneg %p122
        %p237 = pneg %p146
        %p238 = pneg %p143
        %p239 = pneg %p172
        %p240 = pneg %p169
        %s241 = sand.u32 %s159, 1
        %s242 = scalar_lea.sflag [#allocation3], %s241
        %s243 = sand.u32 %s159, 1
        %s244 = smul.addr %s243, 512
        %s245 = scalar_lea.vmem [#allocation2], %s244
        %s246 = smul.u32 64, %s20
        %p247 = scmp.lt.s32.totalorder %s246, 127
        %s248 = scalar_select %p247, %s246, 127
        %s249 = smul.addr %s248, 8
        %s250 = scalar_lea.vmem %s0, %s249
        %s251 = smul.u32 64, %s20
        %s252 = smul.u32 64, %s20
        %v253 = vld [vmem:[%s250] sm:$0xff]
        %v254 = vld [vmem:[%s250 + $0x8] sm:$0xff]
        %v255 = vld [vmem:[%s250 + $0x10] sm:$0xff]
        %v256 = vld [vmem:[%s250 + $0x18] sm:$0xff]
        %v257 = vld [vmem:[%s250 + $0x20] sm:$0xff]
        %v258 = vld [vmem:[%s250 + $0x28] sm:$0xff]
        %v259 = vld [vmem:[%s250 + $0x30] sm:$0xff]
        %v260 = vld [vmem:[%s250 + $0x38] sm:$0xff]
        %v261 = vld [vmem:[%s250 + $0x40] sm:$0xff]
        %v262 = vld [vmem:[%s250 + $0x48] sm:$0xff]
        %v263 = vld [vmem:[%s250 + $0x50] sm:$0xff]
        %v264 = vld [vmem:[%s250 + $0x58] sm:$0xff]
        %v265 = vld [vmem:[%s250 + $0x60] sm:$0xff]
        %v266 = vld [vmem:[%s250 + $0x68] sm:$0xff]
        %v267 = vld [vmem:[%s250 + $0x70] sm:$0xff]
        %v268 = vld [vmem:[%s250 + $0x78] sm:$0xff]
        %v269 = vld [vmem:[%s250 + $0x80] sm:$0xff]
        %v270 = vld [vmem:[%s250 + $0x88] sm:$0xff]
        %v271 = vld [vmem:[%s250 + $0x90] sm:$0xff]
        %v272 = vld [vmem:[%s250 + $0x98] sm:$0xff]
        %v273 = vld [vmem:[%s250 + $0xa0] sm:$0xff]
        %v274 = vld [vmem:[%s250 + $0xa8] sm:$0xff]
        %v275 = vld [vmem:[%s250 + $0xb0] sm:$0xff]
        %v276 = vld [vmem:[%s250 + $0xb8] sm:$0xff]
        %v277 = vld [vmem:[%s250 + $0xc0] sm:$0xff]
        %v278 = vld [vmem:[%s250 + $0xc8] sm:$0xff]
        %v279 = vld [vmem:[%s250 + $0xd0] sm:$0xff]
        %v280 = vld [vmem:[%s250 + $0xd8] sm:$0xff]
        %v281 = vld [vmem:[%s250 + $0xe0] sm:$0xff]
        %v282 = vld [vmem:[%s250 + $0xe8] sm:$0xff]
        %v283 = vld [vmem:[%s250 + $0xf0] sm:$0xff]
        %v284 = vld [vmem:[%s250 + $0xf8] sm:$0xff]
        %v285 = vld [vmem:[%s250 + $0x100] sm:$0xff]
        %v286 = vld [vmem:[%s250 + $0x108] sm:$0xff]
        %v287 = vld [vmem:[%s250 + $0x110] sm:$0xff]
        %v288 = vld [vmem:[%s250 + $0x118] sm:$0xff]
        %v289 = vld [vmem:[%s250 + $0x120] sm:$0xff]
        %v290 = vld [vmem:[%s250 + $0x128] sm:$0xff]
        %v291 = vld [vmem:[%s250 + $0x130] sm:$0xff]
        %v292 = vld [vmem:[%s250 + $0x138] sm:$0xff]
        %v293 = vld [vmem:[%s250 + $0x140] sm:$0xff]
        %v294 = vld [vmem:[%s250 + $0x148] sm:$0xff]
        %v295 = vld [vmem:[%s250 + $0x150] sm:$0xff]
        %v296 = vld [vmem:[%s250 + $0x158] sm:$0xff]
        %v297 = vld [vmem:[%s250 + $0x160] sm:$0xff]
        %v298 = vld [vmem:[%s250 + $0x168] sm:$0xff]
        %v299 = vld [vmem:[%s250 + $0x170] sm:$0xff]
        %v300 = vld [vmem:[%s250 + $0x178] sm:$0xff]
        %v301 = vld [vmem:[%s250 + $0x180] sm:$0xff]
        %v302 = vld [vmem:[%s250 + $0x188] sm:$0xff]
        %v303 = vld [vmem:[%s250 + $0x190] sm:$0xff]
        %v304 = vld [vmem:[%s250 + $0x198] sm:$0xff]
        %v305 = vld [vmem:[%s250 + $0x1a0] sm:$0xff]
        %v306 = vld [vmem:[%s250 + $0x1a8] sm:$0xff]
        %v307 = vld [vmem:[%s250 + $0x1b0] sm:$0xff]
        %v308 = vld [vmem:[%s250 + $0x1b8] sm:$0xff]
        %v309 = vld [vmem:[%s250 + $0x1c0] sm:$0xff]
        %v310 = vld [vmem:[%s250 + $0x1c8] sm:$0xff]
        %v311 = vld [vmem:[%s250 + $0x1d0] sm:$0xff]
        %v312 = vld [vmem:[%s250 + $0x1d8] sm:$0xff]
        %v313 = vld [vmem:[%s250 + $0x1e0] sm:$0xff]
        %v314 = vld [vmem:[%s250 + $0x1e8] sm:$0xff]
        %v315 = vld [vmem:[%s250 + $0x1f0] sm:$0xff]
        %v316 = vld [vmem:[%s250 + $0x1f8] sm:$0xff]
        %v317 = vld [vmem:[%s5] sm:$0xff]
        %v318 = vld [vmem:[%s1] sm:$0xff]
        %v319 = vld [vmem:[%s1 + $0x8] sm:$0xff]
        %v320 = vld [vmem:[%s1 + $0x10] sm:$0xff]
        %v321 = vld [vmem:[%s1 + $0x18] sm:$0xff]
        %v322 = vld [vmem:[%s1 + $0x20] sm:$0xff]
        %v323 = vld [vmem:[%s1 + $0x28] sm:$0xff]
        %v324 = vld [vmem:[%s1 + $0x30] sm:$0xff]
        %v325 = vld [vmem:[%s1 + $0x38] sm:$0xff]
        %v327 = vlaneseq
        %v328 = vshrl.u32 %v327, 7
        %v329 = vsub.s32 0, %v328
        %v330 = vrot.slane %v317, %v329
        %v331 = vlaneseq
        %v332 = vshrl.u32 %v331, 7
        %v333 = vsub.s32 4, %v332
        %v334 = vrot.slane %v317, %v333
        %v337 = vlaneseq
        %v338 = vshrl.u32 %v337, 7
        %v339 = vsub.s32 0, %v338
        %v340 = vrot.slane %v330, %v339
        %v341 = vlaneseq
        %v342 = vshrl.u32 %v341, 7
        %v343 = vsub.s32 0, %v342
        %v344 = vrot.slane %v334, %v343
        %vm345 = vcmask 261120
        %v347 = vsel %vm345, %v253, 0
        %v350 = vsel %vm345, %v254, 0
        %v353 = vsel %vm345, %v255, 0
        %v356 = vsel %vm345, %v256, 0
        %v359 = vsel %vm345, %v257, 0
        %v362 = vsel %vm345, %v258, 0
        %v365 = vsel %vm345, %v259, 0
        %v368 = vsel %vm345, %v260, 0
        %v371 = vsel %vm345, %v261, 0
        %v374 = vsel %vm345, %v262, 0
        %v377 = vsel %vm345, %v263, 0
        %v380 = vsel %vm345, %v264, 0
        %v383 = vsel %vm345, %v265, 0
        %v386 = vsel %vm345, %v266, 0
        %v389 = vsel %vm345, %v267, 0
        %v392 = vsel %vm345, %v268, 0
        %v395 = vsel %vm345, %v269, 0
        %v398 = vsel %vm345, %v270, 0
        %v401 = vsel %vm345, %v271, 0
        %v404 = vsel %vm345, %v272, 0
        %v407 = vsel %vm345, %v273, 0
        %v410 = vsel %vm345, %v274, 0
        %v413 = vsel %vm345, %v275, 0
        %v416 = vsel %vm345, %v276, 0
        %v419 = vsel %vm345, %v277, 0
        %v422 = vsel %vm345, %v278, 0
        %v425 = vsel %vm345, %v279, 0
        %v428 = vsel %vm345, %v280, 0
        %v431 = vsel %vm345, %v281, 0
        %v434 = vsel %vm345, %v282, 0
        %v437 = vsel %vm345, %v283, 0
        %v440 = vsel %vm345, %v284, 0
        %v443 = vsel %vm345, %v285, 0
        %v446 = vsel %vm345, %v286, 0
        %v449 = vsel %vm345, %v287, 0
        %v452 = vsel %vm345, %v288, 0
        %v455 = vsel %vm345, %v289, 0
        %v458 = vsel %vm345, %v290, 0
        %v461 = vsel %vm345, %v291, 0
        %v464 = vsel %vm345, %v292, 0
        %v467 = vsel %vm345, %v293, 0
        %v470 = vsel %vm345, %v294, 0
        %v473 = vsel %vm345, %v295, 0
        %v476 = vsel %vm345, %v296, 0
        %v479 = vsel %vm345, %v297, 0
        %v482 = vsel %vm345, %v298, 0
        %v485 = vsel %vm345, %v299, 0
        %v488 = vsel %vm345, %v300, 0
        %v491 = vsel %vm345, %v301, 0
        %v494 = vsel %vm345, %v302, 0
        %v497 = vsel %vm345, %v303, 0
        %v500 = vsel %vm345, %v304, 0
        %v503 = vsel %vm345, %v305, 0
        %v506 = vsel %vm345, %v306, 0
        %v509 = vsel %vm345, %v307, 0
        %v512 = vsel %vm345, %v308, 0
        %v515 = vsel %vm345, %v309, 0
        %v518 = vsel %vm345, %v310, 0
        %v521 = vsel %vm345, %v311, 0
        %v524 = vsel %vm345, %v312, 0
        %v527 = vsel %vm345, %v313, 0
        %v530 = vsel %vm345, %v314, 0
        %v533 = vsel %vm345, %v315, 0
        %v536 = vsel %vm345, %v316, 0
        %538 = vmatprep.subr.mxu0 %v319
        %539 = vmatpush1.msra.mxu0 %v318
        %540 = vmatprep.subr.mxu0 %v321
        %541 = vmatpush1.msra.mxu0 %v320
        %542 = vmatprep.subr.mxu0 %v323
        %543 = vmatpush1.msra.mxu0 %v322
        %544 = vmatprep.subr.mxu0 %v325
        %545 = vmatpush1.msra.mxu0 %v324
        %546 = vmatprep.subr.mxu0 0.0
        %547 = vmatpush1.msra.mxu0 0.0
        %548 = vmatprep.subr.mxu0 0.0
        %549 = vmatpush1.msra.mxu0 0.0
        %550 = vmatprep.subr.mxu0 0.0
        %551 = vmatpush1.msra.mxu0 0.0
        %552 = vmatprep.subr.mxu0 0.0
        %553 = vmatpush1.msra.mxu0 0.0
        %554 = vmatprep.subr.mxu0 0.0
        %555 = vmatpush1.msra.mxu0 0.0
        %556 = vmatprep.subr.mxu0 0.0
        %557 = vmatpush1.msra.mxu0 0.0
        %558 = vmatprep.subr.mxu0 0.0
        %559 = vmatpush1.msra.mxu0 0.0
        %560 = vmatprep.subr.mxu0 0.0
        %561 = vmatpush1.msra.mxu0 0.0
        %562 = vmatprep.subr.mxu0 0.0
        %563 = vmatpush1.msra.mxu0 0.0
        %564 = vmatprep.subr.mxu0 0.0
        %565 = vmatpush1.msra.mxu0 0.0
        %566 = vmatprep.subr.mxu0 0.0
        %567 = vmatpush1.msra.mxu0 0.0
        %568 = vmatprep.subr.mxu0 0.0
        %569 = vmatpush1.msra.mxu0 0.0
        %570 = vmatprep.subr.mxu0 0.0
        %571 = vmatpush1.msra.mxu0 0.0
        %572 = vmatprep.subr.mxu0 0.0
        %573 = vmatpush1.msra.mxu0 0.0
        %574 = vmatprep.subr.mxu0 0.0
        %575 = vmatpush1.msra.mxu0 0.0
        %576 = vmatprep.subr.mxu0 0.0
        %577 = vmatpush1.msra.mxu0 0.0
        %578 = vmatprep.subr.mxu0 0.0
        %579 = vmatpush1.msra.mxu0 0.0
        %580 = vmatprep.subr.mxu0 0.0
        %581 = vmatpush1.msra.mxu0 0.0
        %582 = vmatprep.subr.mxu0 0.0
        %583 = vmatpush1.msra.mxu0 0.0
        %584 = vmatprep.subr.mxu0 0.0
        %585 = vmatpush1.msra.mxu0 0.0
        %586 = vmatprep.subr.mxu0 0.0
        %587 = vmatpush1.msra.mxu0 0.0
        %588 = vmatprep.subr.mxu0 0.0
        %589 = vmatpush1.msra.mxu0 0.0
        %590 = vmatprep.subr.mxu0 0.0
        %591 = vmatpush1.msra.mxu0 0.0
        %592 = vmatprep.subr.mxu0 0.0
        %593 = vmatpush1.msra.mxu0 0.0
        %594 = vmatprep.subr.mxu0 0.0
        %595 = vmatpush1.msra.mxu0 0.0
        %596 = vmatprep.subr.mxu0 0.0
        %597 = vmatpush1.msra.mxu0 0.0
        %598 = vmatprep.subr.mxu0 0.0
        %599 = vmatpush1.msra.mxu0 0.0
        %600 = vmatprep.subr.mxu0 0.0
        %601 = vmatpush1.msra.mxu0 0.0
        %602 = vmatprep.mubr.f32.mxu0 0.0
        %603 = vmatmul.mubr.f32.gmra.mrb[0].mxu0 %v347
        %v604 = vpop.f32.mrb[0].mxu0
        %v605 = vadd.f32 %v340, %v604
        %v606 = vpop.f32.mrb[0].mxu0
        %v607 = vadd.f32 %v344, %v606
        %608 = vmatprep.mubr.f32.mxu0 0.0
        %609 = vmatmul.mubr.f32.gmra.mrb[0].mxu0 %v350
        %v610 = vpop.f32.mrb[0].mxu0
        %v611 = vadd.f32 %v340, %v610
        %v612 = vpop.f32.mrb[0].mxu0
        %v613 = vadd.f32 %v344, %v612
        %614 = vmatprep.mubr.f32.mxu0 0.0
        %615 = vmatmul.mubr.f32.gmra.mrb[0].mxu0 %v353
        %v616 = vpop.f32.mrb[0].mxu0
        %v617 = vadd.f32 %v340, %v616
        %v618 = vpop.f32.mrb[0].mxu0
        %v619 = vadd.f32 %v344, %v618
        %620 = vmatprep.mubr.f32.mxu0 0.0
        %621 = vmatmul.mubr.f32.gmra.mrb[0].mxu0 %v356
        %v622 = vpop.f32.mrb[0].mxu0
        %v623 = vadd.f32 %v340, %v622
        %v624 = vpop.f32.mrb[0].mxu0
        %v625 = vadd.f32 %v344, %v624
        %626 = vmatprep.mubr.f32.mxu0 0.0
        %627 = vmatmul.mubr.f32.gmra.mrb[0].mxu0 %v359
        %v628 = vpop.f32.mrb[0].mxu0
        %v629 = vadd.f32 %v340, %v628
        %v630 = vpop.f32.mrb[0].mxu0
        %v631 = vadd.f32 %v344, %v630
        %632 = vmatprep.mubr.f32.mxu0 0.0
        %633 = vmatmul.mubr.f32.gmra.mrb[0].mxu0 %v362
        %v634 = vpop.f32.mrb[0].mxu0
        %v635 = vadd.f32 %v340, %v634
        %v636 = vpop.f32.mrb[0].mxu0
        %v637 = vadd.f32 %v344, %v636
        %638 = vmatprep.mubr.f32.mxu0 0.0
        %639 = vmatmul.mubr.f32.gmra.mrb[0].mxu0 %v365
        %v640 = vpop.f32.mrb[0].mxu0
        %v641 = vadd.f32 %v340, %v640
        %v642 = vpop.f32.mrb[0].mxu0
        %v643 = vadd.f32 %v344, %v642
        %644 = vmatprep.mubr.f32.mxu0 0.0
        %645 = vmatmul.mubr.f32.gmra.mrb[0].mxu0 %v368
        %v646 = vpop.f32.mrb[0].mxu0
        %v647 = vadd.f32 %v340, %v646
        %v648 = vpop.f32.mrb[0].mxu0
        %v649 = vadd.f32 %v344, %v648
        %650 = vmatprep.mubr.f32.mxu0 0.0
        %651 = vmatmul.mubr.f32.gmra.mrb[0].mxu0 %v371
        %v652 = vpop.f32.mrb[0].mxu0
        %v653 = vadd.f32 %v340, %v652
        %v654 = vpop.f32.mrb[0].mxu0
        %v655 = vadd.f32 %v344, %v654
        %656 = vmatprep.mubr.f32.mxu0 0.0
        %657 = vmatmul.mubr.f32.gmra.mrb[0].mxu0 %v374
        %v658 = vpop.f32.mrb[0].mxu0
        %v659 = vadd.f32 %v340, %v658
        %v660 = vpop.f32.mrb[0].mxu0
        %v661 = vadd.f32 %v344, %v660
        %662 = vmatprep.mubr.f32.mxu0 0.0
        %663 = vmatmul.mubr.f32.gmra.mrb[0].mxu0 %v377
        %v664 = vpop.f32.mrb[0].mxu0
        %v665 = vadd.f32 %v340, %v664
        %v666 = vpop.f32.mrb[0].mxu0
        %v667 = vadd.f32 %v344, %v666
        %668 = vmatprep.mubr.f32.mxu0 0.0
        %669 = vmatmul.mubr.f32.gmra.mrb[0].mxu0 %v380
        %v670 = vpop.f32.mrb[0].mxu0
        %v671 = vadd.f32 %v340, %v670
        %v672 = vpop.f32.mrb[0].mxu0
        %v673 = vadd.f32 %v344, %v672
        %674 = vmatprep.mubr.f32.mxu0 0.0
        %675 = vmatmul.mubr.f32.gmra.mrb[0].mxu0 %v383
        %v676 = vpop.f32.mrb[0].mxu0
        %v677 = vadd.f32 %v340, %v676
        %v678 = vpop.f32.mrb[0].mxu0
        %v679 = vadd.f32 %v344, %v678
        %680 = vmatprep.mubr.f32.mxu0 0.0
        %681 = vmatmul.mubr.f32.gmra.mrb[0].mxu0 %v386
        %v682 = vpop.f32.mrb[0].mxu0
        %v683 = vadd.f32 %v340, %v682
        %v684 = vpop.f32.mrb[0].mxu0
        %v685 = vadd.f32 %v344, %v684
        %686 = vmatprep.mubr.f32.mxu0 0.0
        %687 = vmatmul.mubr.f32.gmra.mrb[0].mxu0 %v389
        %v688 = vpop.f32.mrb[0].mxu0
        %v689 = vadd.f32 %v340, %v688
        %v690 = vpop.f32.mrb[0].mxu0
        %v691 = vadd.f32 %v344, %v690
        %692 = vmatprep.mubr.f32.mxu0 0.0
        %693 = vmatmul.mubr.f32.gmra.mrb[0].mxu0 %v392
        %v694 = vpop.f32.mrb[0].mxu0
        %v695 = vadd.f32 %v340, %v694
        %v696 = vpop.f32.mrb[0].mxu0
        %v697 = vadd.f32 %v344, %v696
        %698 = vmatprep.mubr.f32.mxu0 0.0
        %699 = vmatmul.mubr.f32.gmra.mrb[0].mxu0 %v395
        %v700 = vpop.f32.mrb[0].mxu0
        %v701 = vadd.f32 %v340, %v700
        %v702 = vpop.f32.mrb[0].mxu0
        %v703 = vadd.f32 %v344, %v702
        %704 = vmatprep.mubr.f32.mxu0 0.0
        %705 = vmatmul.mubr.f32.gmra.mrb[0].mxu0 %v398
        %v706 = vpop.f32.mrb[0].mxu0
        %v707 = vadd.f32 %v340, %v706
        %v708 = vpop.f32.mrb[0].mxu0
        %v709 = vadd.f32 %v344, %v708
        %710 = vmatprep.mubr.f32.mxu0 0.0
        %711 = vmatmul.mubr.f32.gmra.mrb[0].mxu0 %v401
        %v712 = vpop.f32.mrb[0].mxu0
        %v713 = vadd.f32 %v340, %v712
        %v714 = vpop.f32.mrb[0].mxu0
        %v715 = vadd.f32 %v344, %v714
        %716 = vmatprep.mubr.f32.mxu0 0.0
        %717 = vmatmul.mubr.f32.gmra.mrb[0].mxu0 %v404
        %v718 = vpop.f32.mrb[0].mxu0
        %v719 = vadd.f32 %v340, %v718
        %v720 = vpop.f32.mrb[0].mxu0
        %v721 = vadd.f32 %v344, %v720
        %722 = vmatprep.mubr.f32.mxu0 0.0
        %723 = vmatmul.mubr.f32.gmra.mrb[0].mxu0 %v407
        %v724 = vpop.f32.mrb[0].mxu0
        %v725 = vadd.f32 %v340, %v724
        %v726 = vpop.f32.mrb[0].mxu0
        %v727 = vadd.f32 %v344, %v726
        %728 = vmatprep.mubr.f32.mxu0 0.0
        %729 = vmatmul.mubr.f32.gmra.mrb[0].mxu0 %v410
        %v730 = vpop.f32.mrb[0].mxu0
        %v731 = vadd.f32 %v340, %v730
        %v732 = vpop.f32.mrb[0].mxu0
        %v733 = vadd.f32 %v344, %v732
        %734 = vmatprep.mubr.f32.mxu0 0.0
        %735 = vmatmul.mubr.f32.gmra.mrb[0].mxu0 %v413
        %v736 = vpop.f32.mrb[0].mxu0
        %v737 = vadd.f32 %v340, %v736
        %v738 = vpop.f32.mrb[0].mxu0
        %v739 = vadd.f32 %v344, %v738
        %740 = vmatprep.mubr.f32.mxu0 0.0
        %741 = vmatmul.mubr.f32.gmra.mrb[0].mxu0 %v416
        %v742 = vpop.f32.mrb[0].mxu0
        %v743 = vadd.f32 %v340, %v742
        %v744 = vpop.f32.mrb[0].mxu0
        %v745 = vadd.f32 %v344, %v744
        %746 = vmatprep.mubr.f32.mxu0 0.0
        %747 = vmatmul.mubr.f32.gmra.mrb[0].mxu0 %v419
        %v748 = vpop.f32.mrb[0].mxu0
        %v749 = vadd.f32 %v340, %v748
        %v750 = vpop.f32.mrb[0].mxu0
        %v751 = vadd.f32 %v344, %v750
        %752 = vmatprep.mubr.f32.mxu0 0.0
        %753 = vmatmul.mubr.f32.gmra.mrb[0].mxu0 %v422
        %v754 = vpop.f32.mrb[0].mxu0
        %v755 = vadd.f32 %v340, %v754
        %v756 = vpop.f32.mrb[0].mxu0
        %v757 = vadd.f32 %v344, %v756
        %758 = vmatprep.mubr.f32.mxu0 0.0
        %759 = vmatmul.mubr.f32.gmra.mrb[0].mxu0 %v425
        %v760 = vpop.f32.mrb[0].mxu0
        %v761 = vadd.f32 %v340, %v760
        %v762 = vpop.f32.mrb[0].mxu0
        %v763 = vadd.f32 %v344, %v762
        %764 = vmatprep.mubr.f32.mxu0 0.0
        %765 = vmatmul.mubr.f32.gmra.mrb[0].mxu0 %v428
        %v766 = vpop.f32.mrb[0].mxu0
        %v767 = vadd.f32 %v340, %v766
        %v768 = vpop.f32.mrb[0].mxu0
        %v769 = vadd.f32 %v344, %v768
        %770 = vmatprep.mubr.f32.mxu0 0.0
        %771 = vmatmul.mubr.f32.gmra.mrb[0].mxu0 %v431
        %v772 = vpop.f32.mrb[0].mxu0
        %v773 = vadd.f32 %v340, %v772
        %v774 = vpop.f32.mrb[0].mxu0
        %v775 = vadd.f32 %v344, %v774
        %776 = vmatprep.mubr.f32.mxu0 0.0
        %777 = vmatmul.mubr.f32.gmra.mrb[0].mxu0 %v434
        %v778 = vpop.f32.mrb[0].mxu0
        %v779 = vadd.f32 %v340, %v778
        %v780 = vpop.f32.mrb[0].mxu0
        %v781 = vadd.f32 %v344, %v780
        %782 = vmatprep.mubr.f32.mxu0 0.0
        %783 = vmatmul.mubr.f32.gmra.mrb[0].mxu0 %v437
        %v784 = vpop.f32.mrb[0].mxu0
        %v785 = vadd.f32 %v340, %v784
        %v786 = vpop.f32.mrb[0].mxu0
        %v787 = vadd.f32 %v344, %v786
        %788 = vmatprep.mubr.f32.mxu0 0.0
        %789 = vmatmul.mubr.f32.gmra.mrb[0].mxu0 %v440
        %v790 = vpop.f32.mrb[0].mxu0
        %v791 = vadd.f32 %v340, %v790
        %v792 = vpop.f32.mrb[0].mxu0
        %v793 = vadd.f32 %v344, %v792
        %794 = vmatprep.mubr.f32.mxu0 0.0
        %795 = vmatmul.mubr.f32.gmra.mrb[0].mxu0 %v443
        %v796 = vpop.f32.mrb[0].mxu0
        %v797 = vadd.f32 %v340, %v796
        %v798 = vpop.f32.mrb[0].mxu0
        %v799 = vadd.f32 %v344, %v798
        %800 = vmatprep.mubr.f32.mxu0 0.0
        %801 = vmatmul.mubr.f32.gmra.mrb[0].mxu0 %v446
        %v802 = vpop.f32.mrb[0].mxu0
        %v803 = vadd.f32 %v340, %v802
        %v804 = vpop.f32.mrb[0].mxu0
        %v805 = vadd.f32 %v344, %v804
        %806 = vmatprep.mubr.f32.mxu0 0.0
        %807 = vmatmul.mubr.f32.gmra.mrb[0].mxu0 %v449
        %v808 = vpop.f32.mrb[0].mxu0
        %v809 = vadd.f32 %v340, %v808
        %v810 = vpop.f32.mrb[0].mxu0
        %v811 = vadd.f32 %v344, %v810
        %812 = vmatprep.mubr.f32.mxu0 0.0
        %813 = vmatmul.mubr.f32.gmra.mrb[0].mxu0 %v452
        %v814 = vpop.f32.mrb[0].mxu0
        %v815 = vadd.f32 %v340, %v814
        %v816 = vpop.f32.mrb[0].mxu0
        %v817 = vadd.f32 %v344, %v816
        %818 = vmatprep.mubr.f32.mxu0 0.0
        %819 = vmatmul.mubr.f32.gmra.mrb[0].mxu0 %v455
        %v820 = vpop.f32.mrb[0].mxu0
        %v821 = vadd.f32 %v340, %v820
        %v822 = vpop.f32.mrb[0].mxu0
        %v823 = vadd.f32 %v344, %v822
        %824 = vmatprep.mubr.f32.mxu0 0.0
        %825 = vmatmul.mubr.f32.gmra.mrb[0].mxu0 %v458
        %v826 = vpop.f32.mrb[0].mxu0
        %v827 = vadd.f32 %v340, %v826
        %v828 = vpop.f32.mrb[0].mxu0
        %v829 = vadd.f32 %v344, %v828
        %830 = vmatprep.mubr.f32.mxu0 0.0
        %831 = vmatmul.mubr.f32.gmra.mrb[0].mxu0 %v461
        %v832 = vpop.f32.mrb[0].mxu0
        %v833 = vadd.f32 %v340, %v832
        %v834 = vpop.f32.mrb[0].mxu0
        %v835 = vadd.f32 %v344, %v834
        %836 = vmatprep.mubr.f32.mxu0 0.0
        %837 = vmatmul.mubr.f32.gmra.mrb[0].mxu0 %v464
        %v838 = vpop.f32.mrb[0].mxu0
        %v839 = vadd.f32 %v340, %v838
        %v840 = vpop.f32.mrb[0].mxu0
        %v841 = vadd.f32 %v344, %v840
        %842 = vmatprep.mubr.f32.mxu0 0.0
        %843 = vmatmul.mubr.f32.gmra.mrb[0].mxu0 %v467
        %v844 = vpop.f32.mrb[0].mxu0
        %v845 = vadd.f32 %v340, %v844
        %v846 = vpop.f32.mrb[0].mxu0
        %v847 = vadd.f32 %v344, %v846
        %848 = vmatprep.mubr.f32.mxu0 0.0
        %849 = vmatmul.mubr.f32.gmra.mrb[0].mxu0 %v470
        %v850 = vpop.f32.mrb[0].mxu0
        %v851 = vadd.f32 %v340, %v850
        %v852 = vpop.f32.mrb[0].mxu0
        %v853 = vadd.f32 %v344, %v852
        %854 = vmatprep.mubr.f32.mxu0 0.0
        %855 = vmatmul.mubr.f32.gmra.mrb[0].mxu0 %v473
        %v856 = vpop.f32.mrb[0].mxu0
        %v857 = vadd.f32 %v340, %v856
        %v858 = vpop.f32.mrb[0].mxu0
        %v859 = vadd.f32 %v344, %v858
        %860 = vmatprep.mubr.f32.mxu0 0.0
        %861 = vmatmul.mubr.f32.gmra.mrb[0].mxu0 %v476
        %v862 = vpop.f32.mrb[0].mxu0
        %v863 = vadd.f32 %v340, %v862
        %v864 = vpop.f32.mrb[0].mxu0
        %v865 = vadd.f32 %v344, %v864
        %866 = vmatprep.mubr.f32.mxu0 0.0
        %867 = vmatmul.mubr.f32.gmra.mrb[0].mxu0 %v479
        %v868 = vpop.f32.mrb[0].mxu0
        %v869 = vadd.f32 %v340, %v868
        %v870 = vpop.f32.mrb[0].mxu0
        %v871 = vadd.f32 %v344, %v870
        %872 = vmatprep.mubr.f32.mxu0 0.0
        %873 = vmatmul.mubr.f32.gmra.mrb[0].mxu0 %v482
        %v874 = vpop.f32.mrb[0].mxu0
        %v875 = vadd.f32 %v340, %v874
        %v876 = vpop.f32.mrb[0].mxu0
        %v877 = vadd.f32 %v344, %v876
        %878 = vmatprep.mubr.f32.mxu0 0.0
        %879 = vmatmul.mubr.f32.gmra.mrb[0].mxu0 %v485
        %v880 = vpop.f32.mrb[0].mxu0
        %v881 = vadd.f32 %v340, %v880
        %v882 = vpop.f32.mrb[0].mxu0
        %v883 = vadd.f32 %v344, %v882
        %884 = vmatprep.mubr.f32.mxu0 0.0
        %885 = vmatmul.mubr.f32.gmra.mrb[0].mxu0 %v488
        %v886 = vpop.f32.mrb[0].mxu0
        %v887 = vadd.f32 %v340, %v886
        %v888 = vpop.f32.mrb[0].mxu0
        %v889 = vadd.f32 %v344, %v888
        %890 = vmatprep.mubr.f32.mxu0 0.0
        %891 = vmatmul.mubr.f32.gmra.mrb[0].mxu0 %v491
        %v892 = vpop.f32.mrb[0].mxu0
        %v893 = vadd.f32 %v340, %v892
        %v894 = vpop.f32.mrb[0].mxu0
        %v895 = vadd.f32 %v344, %v894
        %896 = vmatprep.mubr.f32.mxu0 0.0
        %897 = vmatmul.mubr.f32.gmra.mrb[0].mxu0 %v494
        %v898 = vpop.f32.mrb[0].mxu0
        %v899 = vadd.f32 %v340, %v898
        %v900 = vpop.f32.mrb[0].mxu0
        %v901 = vadd.f32 %v344, %v900
        %902 = vmatprep.mubr.f32.mxu0 0.0
        %903 = vmatmul.mubr.f32.gmra.mrb[0].mxu0 %v497
        %v904 = vpop.f32.mrb[0].mxu0
        %v905 = vadd.f32 %v340, %v904
        %v906 = vpop.f32.mrb[0].mxu0
        %v907 = vadd.f32 %v344, %v906
        %908 = vmatprep.mubr.f32.mxu0 0.0
        %909 = vmatmul.mubr.f32.gmra.mrb[0].mxu0 %v500
        %v910 = vpop.f32.mrb[0].mxu0
        %v911 = vadd.f32 %v340, %v910
        %v912 = vpop.f32.mrb[0].mxu0
        %v913 = vadd.f32 %v344, %v912
        %914 = vmatprep.mubr.f32.mxu0 0.0
        %915 = vmatmul.mubr.f32.gmra.mrb[0].mxu0 %v503
        %v916 = vpop.f32.mrb[0].mxu0
        %v917 = vadd.f32 %v340, %v916
        %v918 = vpop.f32.mrb[0].mxu0
        %v919 = vadd.f32 %v344, %v918
        %920 = vmatprep.mubr.f32.mxu0 0.0
        %921 = vmatmul.mubr.f32.gmra.mrb[0].mxu0 %v506
        %v922 = vpop.f32.mrb[0].mxu0
        %v923 = vadd.f32 %v340, %v922
        %v924 = vpop.f32.mrb[0].mxu0
        %v925 = vadd.f32 %v344, %v924
        %926 = vmatprep.mubr.f32.mxu0 0.0
        %927 = vmatmul.mubr.f32.gmra.mrb[0].mxu0 %v509
        %v928 = vpop.f32.mrb[0].mxu0
        %v929 = vadd.f32 %v340, %v928
        %v930 = vpop.f32.mrb[0].mxu0
        %v931 = vadd.f32 %v344, %v930
        %932 = vmatprep.mubr.f32.mxu0 0.0
        %933 = vmatmul.mubr.f32.gmra.mrb[0].mxu0 %v512
        %v934 = vpop.f32.mrb[0].mxu0
        %v935 = vadd.f32 %v340, %v934
        %v936 = vpop.f32.mrb[0].mxu0
        %v937 = vadd.f32 %v344, %v936
        %938 = vmatprep.mubr.f32.mxu0 0.0
        %939 = vmatmul.mubr.f32.gmra.mrb[0].mxu0 %v515
        %v940 = vpop.f32.mrb[0].mxu0
        %v941 = vadd.f32 %v340, %v940
        %v942 = vpop.f32.mrb[0].mxu0
        %v943 = vadd.f32 %v344, %v942
        %944 = vmatprep.mubr.f32.mxu0 0.0
        %945 = vmatmul.mubr.f32.gmra.mrb[0].mxu0 %v518
        %v946 = vpop.f32.mrb[0].mxu0
        %v947 = vadd.f32 %v340, %v946
        %v948 = vpop.f32.mrb[0].mxu0
        %v949 = vadd.f32 %v344, %v948
        %950 = vmatprep.mubr.f32.mxu0 0.0
        %951 = vmatmul.mubr.f32.gmra.mrb[0].mxu0 %v521
        %v952 = vpop.f32.mrb[0].mxu0
        %v953 = vadd.f32 %v340, %v952
        %v954 = vpop.f32.mrb[0].mxu0
        %v955 = vadd.f32 %v344, %v954
        %956 = vmatprep.mubr.f32.mxu0 0.0
        %957 = vmatmul.mubr.f32.gmra.mrb[0].mxu0 %v524
        %v958 = vpop.f32.mrb[0].mxu0
        %v959 = vadd.f32 %v340, %v958
        %v960 = vpop.f32.mrb[0].mxu0
        %v961 = vadd.f32 %v344, %v960
        %962 = vmatprep.mubr.f32.mxu0 0.0
        %963 = vmatmul.mubr.f32.gmra.mrb[0].mxu0 %v527
        %v964 = vpop.f32.mrb[0].mxu0
        %v965 = vadd.f32 %v340, %v964
        %v966 = vpop.f32.mrb[0].mxu0
        %v967 = vadd.f32 %v344, %v966
        %968 = vmatprep.mubr.f32.mxu0 0.0
        %969 = vmatmul.mubr.f32.gmra.mrb[0].mxu0 %v530
        %v970 = vpop.f32.mrb[0].mxu0
        %v971 = vadd.f32 %v340, %v970
        %v972 = vpop.f32.mrb[0].mxu0
        %v973 = vadd.f32 %v344, %v972
        %974 = vmatprep.mubr.f32.mxu0 0.0
        %975 = vmatmul.mubr.f32.gmra.mrb[0].mxu0 %v533
        %v976 = vpop.f32.mrb[0].mxu0
        %v977 = vadd.f32 %v340, %v976
        %v978 = vpop.f32.mrb[0].mxu0
        %v979 = vadd.f32 %v344, %v978
        %980 = vmatprep.mubr.f32.mxu0 0.0
        %981 = vmatmul.mubr.f32.gmra.mrb[0].mxu0 %v536
        %v982 = vpop.f32.mrb[0].mxu0
        %v983 = vadd.f32 %v340, %v982
        %v984 = vpop.f32.mrb[0].mxu0
        %v985 = vadd.f32 %v344, %v984
        %986 = vdwg.mxu0
        %v987 = vmax.f32 %v605, 0.0
        %v988 = vmax.f32 %v611, 0.0
        %v989 = vmax.f32 %v617, 0.0
        %v990 = vmax.f32 %v623, 0.0
        %v991 = vmax.f32 %v629, 0.0
        %v992 = vmax.f32 %v635, 0.0
        %v993 = vmax.f32 %v641, 0.0
        %v994 = vmax.f32 %v647, 0.0
        %v995 = vmax.f32 %v653, 0.0
        %v996 = vmax.f32 %v659, 0.0
        %v997 = vmax.f32 %v665, 0.0
        %v998 = vmax.f32 %v671, 0.0
        %v999 = vmax.f32 %v677, 0.0
        %v1000 = vmax.f32 %v683, 0.0
        %v1001 = vmax.f32 %v689, 0.0
        %v1002 = vmax.f32 %v695, 0.0
        %v1003 = vmax.f32 %v701, 0.0
        %v1004 = vmax.f32 %v707, 0.0
        %v1005 = vmax.f32 %v713, 0.0
        %v1006 = vmax.f32 %v719, 0.0
        %v1007 = vmax.f32 %v725, 0.0
        %v1008 = vmax.f32 %v731, 0.0
        %v1009 = vmax.f32 %v737, 0.0
        %v1010 = vmax.f32 %v743, 0.0
        %v1011 = vmax.f32 %v749, 0.0
        %v1012 = vmax.f32 %v755, 0.0
        %v1013 = vmax.f32 %v761, 0.0
        %v1014 = vmax.f32 %v767, 0.0
        %v1015 = vmax.f32 %v773, 0.0
        %v1016 = vmax.f32 %v779, 0.0
        %v1017 = vmax.f32 %v785, 0.0
        %v1018 = vmax.f32 %v791, 0.0
        %v1019 = vmax.f32 %v797, 0.0
        %v1020 = vmax.f32 %v803, 0.0
        %v1021 = vmax.f32 %v809, 0.0
        %v1022 = vmax.f32 %v815, 0.0
        %v1023 = vmax.f32 %v821, 0.0
        %v1024 = vmax.f32 %v827, 0.0
        %v1025 = vmax.f32 %v833, 0.0
        %v1026 = vmax.f32 %v839, 0.0
        %v1027 = vmax.f32 %v845, 0.0
        %v1028 = vmax.f32 %v851, 0.0
        %v1029 = vmax.f32 %v857, 0.0
        %v1030 = vmax.f32 %v863, 0.0
        %v1031 = vmax.f32 %v869, 0.0
        %v1032 = vmax.f32 %v875, 0.0
        %v1033 = vmax.f32 %v881, 0.0
        %v1034 = vmax.f32 %v887, 0.0
        %v1035 = vmax.f32 %v893, 0.0
        %v1036 = vmax.f32 %v899, 0.0
        %v1037 = vmax.f32 %v905, 0.0
        %v1038 = vmax.f32 %v911, 0.0
        %v1039 = vmax.f32 %v917, 0.0
        %v1040 = vmax.f32 %v923, 0.0
        %v1041 = vmax.f32 %v929, 0.0
        %v1042 = vmax.f32 %v935, 0.0
        %v1043 = vmax.f32 %v941, 0.0
        %v1044 = vmax.f32 %v947, 0.0
        %v1045 = vmax.f32 %v953, 0.0
        %v1046 = vmax.f32 %v959, 0.0
        %v1047 = vmax.f32 %v965, 0.0
        %v1048 = vmax.f32 %v971, 0.0
        %v1049 = vmax.f32 %v977, 0.0
        %v1050 = vmax.f32 %v983, 0.0
        %v1051 = vld [vmem:[%s2] sm:$0xff]
        %v1052 = vld [vmem:[%s2 + $0x8] sm:$0xff]
        %v1053 = vld [vmem:[%s2 + $0x10] sm:$0xff]
        %v1054 = vld [vmem:[%s2 + $0x18] sm:$0xff]
        %v1055 = vld [vmem:[%s2 + $0x20] sm:$0xff]
        %v1056 = vld [vmem:[%s2 + $0x28] sm:$0xff]
        %v1057 = vld [vmem:[%s2 + $0x30] sm:$0xff]
        %v1058 = vld [vmem:[%s2 + $0x38] sm:$0xff]
        %v1059 = vld [vmem:[%s2 + $0x40] sm:$0xff]
        %v1060 = vld [vmem:[%s2 + $0x48] sm:$0xff]
        %v1061 = vld [vmem:[%s2 + $0x50] sm:$0xff]
        %v1062 = vld [vmem:[%s2 + $0x58] sm:$0xff]
        %v1063 = vld [vmem:[%s2 + $0x60] sm:$0xff]
        %v1064 = vld [vmem:[%s2 + $0x68] sm:$0xff]
        %v1065 = vld [vmem:[%s2 + $0x70] sm:$0xff]
        %v1066 = vld [vmem:[%s2 + $0x78] sm:$0xff]
        %v1067 = vlaneseq
        %v1068 = vshrl.u32 %v1067, 7
        %v1069 = vsub.s32 1, %v1068
        %v1070 = vrot.slane %v317, %v1069
        %1071 = vmatprep.subr.mxu0 0.0
        %1072 = vmatpush1.msra.mxu0 %v1051
        %1073 = vmatprep.subr.mxu0 0.0
        %1074 = vmatpush1.msra.mxu0 %v1052
        %1075 = vmatprep.subr.mxu0 0.0
        %1076 = vmatpush1.msra.mxu0 %v1053
        %1077 = vmatprep.subr.mxu0 0.0
        %1078 = vmatpush1.msra.mxu0 %v1054
        %1079 = vmatprep.subr.mxu0 0.0
        %1080 = vmatpush1.msra.mxu0 %v1055
        %1081 = vmatprep.subr.mxu0 0.0
        %1082 = vmatpush1.msra.mxu0 %v1056
        %1083 = vmatprep.subr.mxu0 0.0
        %1084 = vmatpush1.msra.mxu0 %v1057
        %1085 = vmatprep.subr.mxu0 0.0
        %1086 = vmatpush1.msra.mxu0 %v1058
        %1087 = vmatprep.subr.mxu0 0.0
        %1088 = vmatpush1.msra.mxu0 %v1059
        %1089 = vmatprep.subr.mxu0 0.0
        %1090 = vmatpush1.msra.mxu0 %v1060
        %1091 = vmatprep.subr.mxu0 0.0
        %1092 = vmatpush1.msra.mxu0 %v1061
        %1093 = vmatprep.subr.mxu0 0.0
        %1094 = vmatpush1.msra.mxu0 %v1062
        %1095 = vmatprep.subr.mxu0 0.0
        %1096 = vmatpush1.msra.mxu0 %v1063
        %1097 = vmatprep.subr.mxu0 0.0
        %1098 = vmatpush1.msra.mxu0 %v1064
        %1099 = vmatprep.subr.mxu0 0.0
        %1100 = vmatpush1.msra.mxu0 %v1065
        %1101 = vmatprep.subr.mxu0 0.0
        %1102 = vmatpush1.msra.mxu0 %v1066
        %1103 = vmatprep.subr.mxu0 0.0
        %1104 = vmatpush1.msra.mxu0 0.0
        %1105 = vmatprep.subr.mxu0 0.0
        %1106 = vmatpush1.msra.mxu0 0.0
        %1107 = vmatprep.subr.mxu0 0.0
        %1108 = vmatpush1.msra.mxu0 0.0
        %1109 = vmatprep.subr.mxu0 0.0
        %1110 = vmatpush1.msra.mxu0 0.0
        %1111 = vmatprep.subr.mxu0 0.0
        %1112 = vmatpush1.msra.mxu0 0.0
        %1113 = vmatprep.subr.mxu0 0.0
        %1114 = vmatpush1.msra.mxu0 0.0
        %1115 = vmatprep.subr.mxu0 0.0
        %1116 = vmatpush1.msra.mxu0 0.0
        %1117 = vmatprep.subr.mxu0 0.0
        %1118 = vmatpush1.msra.mxu0 0.0
        %1119 = vmatprep.subr.mxu0 0.0
        %1120 = vmatpush1.msra.mxu0 0.0
        %1121 = vmatprep.subr.mxu0 0.0
        %1122 = vmatpush1.msra.mxu0 0.0
        %1123 = vmatprep.subr.mxu0 0.0
        %1124 = vmatpush1.msra.mxu0 0.0
        %1125 = vmatprep.subr.mxu0 0.0
        %1126 = vmatpush1.msra.mxu0 0.0
        %1127 = vmatprep.subr.mxu0 0.0
        %1128 = vmatpush1.msra.mxu0 0.0
        %1129 = vmatprep.subr.mxu0 0.0
        %1130 = vmatpush1.msra.mxu0 0.0
        %1131 = vmatprep.subr.mxu0 0.0
        %1132 = vmatpush1.msra.mxu0 0.0
        %1133 = vmatprep.subr.mxu0 0.0
        %1134 = vmatpush1.msra.mxu0 0.0
        %1135 = vmatprep.mubr.f32.mxu0 0.0
        %1136 = vmatmul.mubr.f32.gmra.mrb[0].mxu0 %v987
        %v1137 = vpop.f32.mrb[0].mxu0
        %v1138 = vadd.f32 %v1070, %v1137
        %v1139 = vpop.f32.mrb[0].mxu0
        %1140 = vmatprep.mubr.f32.mxu0 0.0
        %1141 = vmatmul.mubr.f32.gmra.mrb[0].mxu0 %v988
        %v1142 = vpop.f32.mrb[0].mxu0
        %v1143 = vadd.f32 %v1070, %v1142
        %v1144 = vpop.f32.mrb[0].mxu0
        %1145 = vmatprep.mubr.f32.mxu0 0.0
        %1146 = vmatmul.mubr.f32.gmra.mrb[0].mxu0 %v989
        %v1147 = vpop.f32.mrb[0].mxu0
        %v1148 = vadd.f32 %v1070, %v1147
        %v1149 = vpop.f32.mrb[0].mxu0
        %1150 = vmatprep.mubr.f32.mxu0 0.0
        %1151 = vmatmul.mubr.f32.gmra.mrb[0].mxu0 %v990
        %v1152 = vpop.f32.mrb[0].mxu0
        %v1153 = vadd.f32 %v1070, %v1152
        %v1154 = vpop.f32.mrb[0].mxu0
        %1155 = vmatprep.mubr.f32.mxu0 0.0
        %1156 = vmatmul.mubr.f32.gmra.mrb[0].mxu0 %v991
        %v1157 = vpop.f32.mrb[0].mxu0
        %v1158 = vadd.f32 %v1070, %v1157
        %v1159 = vpop.f32.mrb[0].mxu0
        %1160 = vmatprep.mubr.f32.mxu0 0.0
        %1161 = vmatmul.mubr.f32.gmra.mrb[0].mxu0 %v992
        %v1162 = vpop.f32.mrb[0].mxu0
        %v1163 = vadd.f32 %v1070, %v1162
        %v1164 = vpop.f32.mrb[0].mxu0
        %1165 = vmatprep.mubr.f32.mxu0 0.0
        %1166 = vmatmul.mubr.f32.gmra.mrb[0].mxu0 %v993
        %v1167 = vpop.f32.mrb[0].mxu0
        %v1168 = vadd.f32 %v1070, %v1167
        %v1169 = vpop.f32.mrb[0].mxu0
        %1170 = vmatprep.mubr.f32.mxu0 0.0
        %1171 = vmatmul.mubr.f32.gmra.mrb[0].mxu0 %v994
        %v1172 = vpop.f32.mrb[0].mxu0
        %v1173 = vadd.f32 %v1070, %v1172
        %v1174 = vpop.f32.mrb[0].mxu0
        %1175 = vmatprep.mubr.f32.mxu0 0.0
        %1176 = vmatmul.mubr.f32.gmra.mrb[0].mxu0 %v995
        %v1177 = vpop.f32.mrb[0].mxu0
        %v1178 = vadd.f32 %v1070, %v1177
        %v1179 = vpop.f32.mrb[0].mxu0
        %1180 = vmatprep.mubr.f32.mxu0 0.0
        %1181 = vmatmul.mubr.f32.gmra.mrb[0].mxu0 %v996
        %v1182 = vpop.f32.mrb[0].mxu0
        %v1183 = vadd.f32 %v1070, %v1182
        %v1184 = vpop.f32.mrb[0].mxu0
        %1185 = vmatprep.mubr.f32.mxu0 0.0
        %1186 = vmatmul.mubr.f32.gmra.mrb[0].mxu0 %v997
        %v1187 = vpop.f32.mrb[0].mxu0
        %v1188 = vadd.f32 %v1070, %v1187
        %v1189 = vpop.f32.mrb[0].mxu0
        %1190 = vmatprep.mubr.f32.mxu0 0.0
        %1191 = vmatmul.mubr.f32.gmra.mrb[0].mxu0 %v998
        %v1192 = vpop.f32.mrb[0].mxu0
        %v1193 = vadd.f32 %v1070, %v1192
        %v1194 = vpop.f32.mrb[0].mxu0
        %1195 = vmatprep.mubr.f32.mxu0 0.0
        %1196 = vmatmul.mubr.f32.gmra.mrb[0].mxu0 %v999
        %v1197 = vpop.f32.mrb[0].mxu0
        %v1198 = vadd.f32 %v1070, %v1197
        %v1199 = vpop.f32.mrb[0].mxu0
        %1200 = vmatprep.mubr.f32.mxu0 0.0
        %1201 = vmatmul.mubr.f32.gmra.mrb[0].mxu0 %v1000
        %v1202 = vpop.f32.mrb[0].mxu0
        %v1203 = vadd.f32 %v1070, %v1202
        %v1204 = vpop.f32.mrb[0].mxu0
        %1205 = vmatprep.mubr.f32.mxu0 0.0
        %1206 = vmatmul.mubr.f32.gmra.mrb[0].mxu0 %v1001
        %v1207 = vpop.f32.mrb[0].mxu0
        %v1208 = vadd.f32 %v1070, %v1207
        %v1209 = vpop.f32.mrb[0].mxu0
        %1210 = vmatprep.mubr.f32.mxu0 0.0
        %1211 = vmatmul.mubr.f32.gmra.mrb[0].mxu0 %v1002
        %v1212 = vpop.f32.mrb[0].mxu0
        %v1213 = vadd.f32 %v1070, %v1212
        %v1214 = vpop.f32.mrb[0].mxu0
        %1215 = vmatprep.mubr.f32.mxu0 0.0
        %1216 = vmatmul.mubr.f32.gmra.mrb[0].mxu0 %v1003
        %v1217 = vpop.f32.mrb[0].mxu0
        %v1218 = vadd.f32 %v1070, %v1217
        %v1219 = vpop.f32.mrb[0].mxu0
        %1220 = vmatprep.mubr.f32.mxu0 0.0
        %1221 = vmatmul.mubr.f32.gmra.mrb[0].mxu0 %v1004
        %v1222 = vpop.f32.mrb[0].mxu0
        %v1223 = vadd.f32 %v1070, %v1222
        %v1224 = vpop.f32.mrb[0].mxu0
        %1225 = vmatprep.mubr.f32.mxu0 0.0
        %1226 = vmatmul.mubr.f32.gmra.mrb[0].mxu0 %v1005
        %v1227 = vpop.f32.mrb[0].mxu0
        %v1228 = vadd.f32 %v1070, %v1227
        %v1229 = vpop.f32.mrb[0].mxu0
        %1230 = vmatprep.mubr.f32.mxu0 0.0
        %1231 = vmatmul.mubr.f32.gmra.mrb[0].mxu0 %v1006
        %v1232 = vpop.f32.mrb[0].mxu0
        %v1233 = vadd.f32 %v1070, %v1232
        %v1234 = vpop.f32.mrb[0].mxu0
        %1235 = vmatprep.mubr.f32.mxu0 0.0
        %1236 = vmatmul.mubr.f32.gmra.mrb[0].mxu0 %v1007
        %v1237 = vpop.f32.mrb[0].mxu0
        %v1238 = vadd.f32 %v1070, %v1237
        %v1239 = vpop.f32.mrb[0].mxu0
        %1240 = vmatprep.mubr.f32.mxu0 0.0
        %1241 = vmatmul.mubr.f32.gmra.mrb[0].mxu0 %v1008
        %v1242 = vpop.f32.mrb[0].mxu0
        %v1243 = vadd.f32 %v1070, %v1242
        %v1244 = vpop.f32.mrb[0].mxu0
        %1245 = vmatprep.mubr.f32.mxu0 0.0
        %1246 = vmatmul.mubr.f32.gmra.mrb[0].mxu0 %v1009
        %v1247 = vpop.f32.mrb[0].mxu0
        %v1248 = vadd.f32 %v1070, %v1247
        %v1249 = vpop.f32.mrb[0].mxu0
        %1250 = vmatprep.mubr.f32.mxu0 0.0
        %1251 = vmatmul.mubr.f32.gmra.mrb[0].mxu0 %v1010
        %v1252 = vpop.f32.mrb[0].mxu0
        %v1253 = vadd.f32 %v1070, %v1252
        %v1254 = vpop.f32.mrb[0].mxu0
        %1255 = vmatprep.mubr.f32.mxu0 0.0
        %1256 = vmatmul.mubr.f32.gmra.mrb[0].mxu0 %v1011
        %v1257 = vpop.f32.mrb[0].mxu0
        %v1258 = vadd.f32 %v1070, %v1257
        %v1259 = vpop.f32.mrb[0].mxu0
        %1260 = vmatprep.mubr.f32.mxu0 0.0
        %1261 = vmatmul.mubr.f32.gmra.mrb[0].mxu0 %v1012
        %v1262 = vpop.f32.mrb[0].mxu0
        %v1263 = vadd.f32 %v1070, %v1262
        %v1264 = vpop.f32.mrb[0].mxu0
        %1265 = vmatprep.mubr.f32.mxu0 0.0
        %1266 = vmatmul.mubr.f32.gmra.mrb[0].mxu0 %v1013
        %v1267 = vpop.f32.mrb[0].mxu0
        %v1268 = vadd.f32 %v1070, %v1267
        %v1269 = vpop.f32.mrb[0].mxu0
        %1270 = vmatprep.mubr.f32.mxu0 0.0
        %1271 = vmatmul.mubr.f32.gmra.mrb[0].mxu0 %v1014
        %v1272 = vpop.f32.mrb[0].mxu0
        %v1273 = vadd.f32 %v1070, %v1272
        %v1274 = vpop.f32.mrb[0].mxu0
        %1275 = vmatprep.mubr.f32.mxu0 0.0
        %1276 = vmatmul.mubr.f32.gmra.mrb[0].mxu0 %v1015
        %v1277 = vpop.f32.mrb[0].mxu0
        %v1278 = vadd.f32 %v1070, %v1277
        %v1279 = vpop.f32.mrb[0].mxu0
        %1280 = vmatprep.mubr.f32.mxu0 0.0
        %1281 = vmatmul.mubr.f32.gmra.mrb[0].mxu0 %v1016
        %v1282 = vpop.f32.mrb[0].mxu0
        %v1283 = vadd.f32 %v1070, %v1282
        %v1284 = vpop.f32.mrb[0].mxu0
        %1285 = vmatprep.mubr.f32.mxu0 0.0
        %1286 = vmatmul.mubr.f32.gmra.mrb[0].mxu0 %v1017
        %v1287 = vpop.f32.mrb[0].mxu0
        %v1288 = vadd.f32 %v1070, %v1287
        %v1289 = vpop.f32.mrb[0].mxu0
        %1290 = vmatprep.mubr.f32.mxu0 0.0
        %1291 = vmatmul.mubr.f32.gmra.mrb[0].mxu0 %v1018
        %v1292 = vpop.f32.mrb[0].mxu0
        %v1293 = vadd.f32 %v1070, %v1292
        %v1294 = vpop.f32.mrb[0].mxu0
        %1295 = vmatprep.mubr.f32.mxu0 0.0
        %1296 = vmatmul.mubr.f32.gmra.mrb[0].mxu0 %v1019
        %v1297 = vpop.f32.mrb[0].mxu0
        %v1298 = vadd.f32 %v1070, %v1297
        %v1299 = vpop.f32.mrb[0].mxu0
        %1300 = vmatprep.mubr.f32.mxu0 0.0
        %1301 = vmatmul.mubr.f32.gmra.mrb[0].mxu0 %v1020
        %v1302 = vpop.f32.mrb[0].mxu0
        %v1303 = vadd.f32 %v1070, %v1302
        %v1304 = vpop.f32.mrb[0].mxu0
        %1305 = vmatprep.mubr.f32.mxu0 0.0
        %1306 = vmatmul.mubr.f32.gmra.mrb[0].mxu0 %v1021
        %v1307 = vpop.f32.mrb[0].mxu0
        %v1308 = vadd.f32 %v1070, %v1307
        %v1309 = vpop.f32.mrb[0].mxu0
        %1310 = vmatprep.mubr.f32.mxu0 0.0
        %1311 = vmatmul.mubr.f32.gmra.mrb[0].mxu0 %v1022
        %v1312 = vpop.f32.mrb[0].mxu0
        %v1313 = vadd.f32 %v1070, %v1312
        %v1314 = vpop.f32.mrb[0].mxu0
        %1315 = vmatprep.mubr.f32.mxu0 0.0
        %1316 = vmatmul.mubr.f32.gmra.mrb[0].mxu0 %v1023
        %v1317 = vpop.f32.mrb[0].mxu0
        %v1318 = vadd.f32 %v1070, %v1317
        %v1319 = vpop.f32.mrb[0].mxu0
        %1320 = vmatprep.mubr.f32.mxu0 0.0
        %1321 = vmatmul.mubr.f32.gmra.mrb[0].mxu0 %v1024
        %v1322 = vpop.f32.mrb[0].mxu0
        %v1323 = vadd.f32 %v1070, %v1322
        %v1324 = vpop.f32.mrb[0].mxu0
        %1325 = vmatprep.mubr.f32.mxu0 0.0
        %1326 = vmatmul.mubr.f32.gmra.mrb[0].mxu0 %v1025
        %v1327 = vpop.f32.mrb[0].mxu0
        %v1328 = vadd.f32 %v1070, %v1327
        %v1329 = vpop.f32.mrb[0].mxu0
        %1330 = vmatprep.mubr.f32.mxu0 0.0
        %1331 = vmatmul.mubr.f32.gmra.mrb[0].mxu0 %v1026
        %v1332 = vpop.f32.mrb[0].mxu0
        %v1333 = vadd.f32 %v1070, %v1332
        %v1334 = vpop.f32.mrb[0].mxu0
        %1335 = vmatprep.mubr.f32.mxu0 0.0
        %1336 = vmatmul.mubr.f32.gmra.mrb[0].mxu0 %v1027
        %v1337 = vpop.f32.mrb[0].mxu0
        %v1338 = vadd.f32 %v1070, %v1337
        %v1339 = vpop.f32.mrb[0].mxu0
        %1340 = vmatprep.mubr.f32.mxu0 0.0
        %1341 = vmatmul.mubr.f32.gmra.mrb[0].mxu0 %v1028
        %v1342 = vpop.f32.mrb[0].mxu0
        %v1343 = vadd.f32 %v1070, %v1342
        %v1344 = vpop.f32.mrb[0].mxu0
        %1345 = vmatprep.mubr.f32.mxu0 0.0
        %1346 = vmatmul.mubr.f32.gmra.mrb[0].mxu0 %v1029
        %v1347 = vpop.f32.mrb[0].mxu0
        %v1348 = vadd.f32 %v1070, %v1347
        %v1349 = vpop.f32.mrb[0].mxu0
        %1350 = vmatprep.mubr.f32.mxu0 0.0
        %1351 = vmatmul.mubr.f32.gmra.mrb[0].mxu0 %v1030
        %v1352 = vpop.f32.mrb[0].mxu0
        %v1353 = vadd.f32 %v1070, %v1352
        %v1354 = vpop.f32.mrb[0].mxu0
        %1355 = vmatprep.mubr.f32.mxu0 0.0
        %1356 = vmatmul.mubr.f32.gmra.mrb[0].mxu0 %v1031
        %v1357 = vpop.f32.mrb[0].mxu0
        %v1358 = vadd.f32 %v1070, %v1357
        %v1359 = vpop.f32.mrb[0].mxu0
        %1360 = vmatprep.mubr.f32.mxu0 0.0
        %1361 = vmatmul.mubr.f32.gmra.mrb[0].mxu0 %v1032
        %v1362 = vpop.f32.mrb[0].mxu0
        %v1363 = vadd.f32 %v1070, %v1362
        %v1364 = vpop.f32.mrb[0].mxu0
        %1365 = vmatprep.mubr.f32.mxu0 0.0
        %1366 = vmatmul.mubr.f32.gmra.mrb[0].mxu0 %v1033
        %v1367 = vpop.f32.mrb[0].mxu0
        %v1368 = vadd.f32 %v1070, %v1367
        %v1369 = vpop.f32.mrb[0].mxu0
        %1370 = vmatprep.mubr.f32.mxu0 0.0
        %1371 = vmatmul.mubr.f32.gmra.mrb[0].mxu0 %v1034
        %v1372 = vpop.f32.mrb[0].mxu0
        %v1373 = vadd.f32 %v1070, %v1372
        %v1374 = vpop.f32.mrb[0].mxu0
        %1375 = vmatprep.mubr.f32.mxu0 0.0
        %1376 = vmatmul.mubr.f32.gmra.mrb[0].mxu0 %v1035
        %v1377 = vpop.f32.mrb[0].mxu0
        %v1378 = vadd.f32 %v1070, %v1377
        %v1379 = vpop.f32.mrb[0].mxu0
        %1380 = vmatprep.mubr.f32.mxu0 0.0
        %1381 = vmatmul.mubr.f32.gmra.mrb[0].mxu0 %v1036
        %v1382 = vpop.f32.mrb[0].mxu0
        %v1383 = vadd.f32 %v1070, %v1382
        %v1384 = vpop.f32.mrb[0].mxu0
        %1385 = vmatprep.mubr.f32.mxu0 0.0
        %1386 = vmatmul.mubr.f32.gmra.mrb[0].mxu0 %v1037
        %v1387 = vpop.f32.mrb[0].mxu0
        %v1388 = vadd.f32 %v1070, %v1387
        %v1389 = vpop.f32.mrb[0].mxu0
        %1390 = vmatprep.mubr.f32.mxu0 0.0
        %1391 = vmatmul.mubr.f32.gmra.mrb[0].mxu0 %v1038
        %v1392 = vpop.f32.mrb[0].mxu0
        %v1393 = vadd.f32 %v1070, %v1392
        %v1394 = vpop.f32.mrb[0].mxu0
        %1395 = vmatprep.mubr.f32.mxu0 0.0
        %1396 = vmatmul.mubr.f32.gmra.mrb[0].mxu0 %v1039
        %v1397 = vpop.f32.mrb[0].mxu0
        %v1398 = vadd.f32 %v1070, %v1397
        %v1399 = vpop.f32.mrb[0].mxu0
        %1400 = vmatprep.mubr.f32.mxu0 0.0
        %1401 = vmatmul.mubr.f32.gmra.mrb[0].mxu0 %v1040
        %v1402 = vpop.f32.mrb[0].mxu0
        %v1403 = vadd.f32 %v1070, %v1402
        %v1404 = vpop.f32.mrb[0].mxu0
        %1405 = vmatprep.mubr.f32.mxu0 0.0
        %1406 = vmatmul.mubr.f32.gmra.mrb[0].mxu0 %v1041
        %v1407 = vpop.f32.mrb[0].mxu0
        %v1408 = vadd.f32 %v1070, %v1407
        %v1409 = vpop.f32.mrb[0].mxu0
        %1410 = vmatprep.mubr.f32.mxu0 0.0
        %1411 = vmatmul.mubr.f32.gmra.mrb[0].mxu0 %v1042
        %v1412 = vpop.f32.mrb[0].mxu0
        %v1413 = vadd.f32 %v1070, %v1412
        %v1414 = vpop.f32.mrb[0].mxu0
        %1415 = vmatprep.mubr.f32.mxu0 0.0
        %1416 = vmatmul.mubr.f32.gmra.mrb[0].mxu0 %v1043
        %v1417 = vpop.f32.mrb[0].mxu0
        %v1418 = vadd.f32 %v1070, %v1417
        %v1419 = vpop.f32.mrb[0].mxu0
        %1420 = vmatprep.mubr.f32.mxu0 0.0
        %1421 = vmatmul.mubr.f32.gmra.mrb[0].mxu0 %v1044
        %v1422 = vpop.f32.mrb[0].mxu0
        %v1423 = vadd.f32 %v1070, %v1422
        %v1424 = vpop.f32.mrb[0].mxu0
        %1425 = vmatprep.mubr.f32.mxu0 0.0
        %1426 = vmatmul.mubr.f32.gmra.mrb[0].mxu0 %v1045
        %v1427 = vpop.f32.mrb[0].mxu0
        %v1428 = vadd.f32 %v1070, %v1427
        %v1429 = vpop.f32.mrb[0].mxu0
        %1430 = vmatprep.mubr.f32.mxu0 0.0
        %1431 = vmatmul.mubr.f32.gmra.mrb[0].mxu0 %v1046
        %v1432 = vpop.f32.mrb[0].mxu0
        %v1433 = vadd.f32 %v1070, %v1432
        %v1434 = vpop.f32.mrb[0].mxu0
        %1435 = vmatprep.mubr.f32.mxu0 0.0
        %1436 = vmatmul.mubr.f32.gmra.mrb[0].mxu0 %v1047
        %v1437 = vpop.f32.mrb[0].mxu0
        %v1438 = vadd.f32 %v1070, %v1437
        %v1439 = vpop.f32.mrb[0].mxu0
        %1440 = vmatprep.mubr.f32.mxu0 0.0
        %1441 = vmatmul.mubr.f32.gmra.mrb[0].mxu0 %v1048
        %v1442 = vpop.f32.mrb[0].mxu0
        %v1443 = vadd.f32 %v1070, %v1442
        %v1444 = vpop.f32.mrb[0].mxu0
        %1445 = vmatprep.mubr.f32.mxu0 0.0
        %1446 = vmatmul.mubr.f32.gmra.mrb[0].mxu0 %v1049
        %v1447 = vpop.f32.mrb[0].mxu0
        %v1448 = vadd.f32 %v1070, %v1447
        %v1449 = vpop.f32.mrb[0].mxu0
        %1450 = vmatprep.mubr.f32.mxu0 0.0
        %1451 = vmatmul.mubr.f32.gmra.mrb[0].mxu0 %v1050
        %v1452 = vpop.f32.mrb[0].mxu0
        %v1453 = vadd.f32 %v1070, %v1452
        %v1454 = vpop.f32.mrb[0].mxu0
        %1455 = vdwg.mxu0
        %vm1456 = vcmask 31744
        %v1457 = vsel %vm1456, %v607, -inf
        %1458 = vmax.xlane.f32.xlu0 %v1457
        %v1459 = vpop.xlane.xlu0 %1458
        %v1460 = vsel %vm1456, %v613, -inf
        %1461 = vmax.xlane.f32.xlu0 %v1460
        %v1462 = vpop.xlane.xlu0 %1461
        %v1463 = vsel %vm1456, %v619, -inf
        %1464 = vmax.xlane.f32.xlu0 %v1463
        %v1465 = vpop.xlane.xlu0 %1464
        %v1466 = vsel %vm1456, %v625, -inf
        %1467 = vmax.xlane.f32.xlu0 %v1466
        %v1468 = vpop.xlane.xlu0 %1467
        %v1469 = vsel %vm1456, %v631, -inf
        %1470 = vmax.xlane.f32.xlu0 %v1469
        %v1471 = vpop.xlane.xlu0 %1470
        %v1472 = vsel %vm1456, %v637, -inf
        %1473 = vmax.xlane.f32.xlu0 %v1472
        %v1474 = vpop.xlane.xlu0 %1473
        %v1475 = vsel %vm1456, %v643, -inf
        %1476 = vmax.xlane.f32.xlu0 %v1475
        %v1477 = vpop.xlane.xlu0 %1476
        %v1478 = vsel %vm1456, %v649, -inf
        %1479 = vmax.xlane.f32.xlu0 %v1478
        %v1480 = vpop.xlane.xlu0 %1479
        %v1481 = vsel %vm1456, %v655, -inf
        %1482 = vmax.xlane.f32.xlu0 %v1481
        %v1483 = vpop.xlane.xlu0 %1482
        %v1484 = vsel %vm1456, %v661, -inf
        %1485 = vmax.xlane.f32.xlu0 %v1484
        %v1486 = vpop.xlane.xlu0 %1485
        %v1487 = vsel %vm1456, %v667, -inf
        %1488 = vmax.xlane.f32.xlu0 %v1487
        %v1489 = vpop.xlane.xlu0 %1488
        %v1490 = vsel %vm1456, %v673, -inf
        %1491 = vmax.xlane.f32.xlu0 %v1490
        %v1492 = vpop.xlane.xlu0 %1491
        %v1493 = vsel %vm1456, %v679, -inf
        %1494 = vmax.xlane.f32.xlu0 %v1493
        %v1495 = vpop.xlane.xlu0 %1494
        %v1496 = vsel %vm1456, %v685, -inf
        %1497 = vmax.xlane.f32.xlu0 %v1496
        %v1498 = vpop.xlane.xlu0 %1497
        %v1499 = vsel %vm1456, %v691, -inf
        %1500 = vmax.xlane.f32.xlu0 %v1499
        %v1501 = vpop.xlane.xlu0 %1500
        %v1502 = vsel %vm1456, %v697, -inf
        %1503 = vmax.xlane.f32.xlu0 %v1502
        %v1504 = vpop.xlane.xlu0 %1503
        %v1505 = vsel %vm1456, %v703, -inf
        %1506 = vmax.xlane.f32.xlu0 %v1505
        %v1507 = vpop.xlane.xlu0 %1506
        %v1508 = vsel %vm1456, %v709, -inf
        %1509 = vmax.xlane.f32.xlu0 %v1508
        %v1510 = vpop.xlane.xlu0 %1509
        %v1511 = vsel %vm1456, %v715, -inf
        %1512 = vmax.xlane.f32.xlu0 %v1511
        %v1513 = vpop.xlane.xlu0 %1512
        %v1514 = vsel %vm1456, %v721, -inf
        %1515 = vmax.xlane.f32.xlu0 %v1514
        %v1516 = vpop.xlane.xlu0 %1515
        %v1517 = vsel %vm1456, %v727, -inf
        %1518 = vmax.xlane.f32.xlu0 %v1517
        %v1519 = vpop.xlane.xlu0 %1518
        %v1520 = vsel %vm1456, %v733, -inf
        %1521 = vmax.xlane.f32.xlu0 %v1520
        %v1522 = vpop.xlane.xlu0 %1521
        %v1523 = vsel %vm1456, %v739, -inf
        %1524 = vmax.xlane.f32.xlu0 %v1523
        %v1525 = vpop.xlane.xlu0 %1524
        %v1526 = vsel %vm1456, %v745, -inf
        %1527 = vmax.xlane.f32.xlu0 %v1526
        %v1528 = vpop.xlane.xlu0 %1527
        %v1529 = vsel %vm1456, %v751, -inf
        %1530 = vmax.xlane.f32.xlu0 %v1529
        %v1531 = vpop.xlane.xlu0 %1530
        %v1532 = vsel %vm1456, %v757, -inf
        %1533 = vmax.xlane.f32.xlu0 %v1532
        %v1534 = vpop.xlane.xlu0 %1533
        %v1535 = vsel %vm1456, %v763, -inf
        %1536 = vmax.xlane.f32.xlu0 %v1535
        %v1537 = vpop.xlane.xlu0 %1536
        %v1538 = vsel %vm1456, %v769, -inf
        %1539 = vmax.xlane.f32.xlu0 %v1538
        %v1540 = vpop.xlane.xlu0 %1539
        %v1541 = vsel %vm1456, %v775, -inf
        %1542 = vmax.xlane.f32.xlu0 %v1541
        %v1543 = vpop.xlane.xlu0 %1542
        %v1544 = vsel %vm1456, %v781, -inf
        %1545 = vmax.xlane.f32.xlu0 %v1544
        %v1546 = vpop.xlane.xlu0 %1545
        %v1547 = vsel %vm1456, %v787, -inf
        %1548 = vmax.xlane.f32.xlu0 %v1547
        %v1549 = vpop.xlane.xlu0 %1548
        %v1550 = vsel %vm1456, %v793, -inf
        %1551 = vmax.xlane.f32.xlu0 %v1550
        %v1552 = vpop.xlane.xlu0 %1551
        %v1553 = vsel %vm1456, %v799, -inf
        %1554 = vmax.xlane.f32.xlu0 %v1553
        %v1555 = vpop.xlane.xlu0 %1554
        %v1556 = vsel %vm1456, %v805, -inf
        %1557 = vmax.xlane.f32.xlu0 %v1556
        %v1558 = vpop.xlane.xlu0 %1557
        %v1559 = vsel %vm1456, %v811, -inf
        %1560 = vmax.xlane.f32.xlu0 %v1559
        %v1561 = vpop.xlane.xlu0 %1560
        %v1562 = vsel %vm1456, %v817, -inf
        %1563 = vmax.xlane.f32.xlu0 %v1562
        %v1564 = vpop.xlane.xlu0 %1563
        %v1565 = vsel %vm1456, %v823, -inf
        %1566 = vmax.xlane.f32.xlu0 %v1565
        %v1567 = vpop.xlane.xlu0 %1566
        %v1568 = vsel %vm1456, %v829, -inf
        %1569 = vmax.xlane.f32.xlu0 %v1568
        %v1570 = vpop.xlane.xlu0 %1569
        %v1571 = vsel %vm1456, %v835, -inf
        %1572 = vmax.xlane.f32.xlu0 %v1571
        %v1573 = vpop.xlane.xlu0 %1572
        %v1574 = vsel %vm1456, %v841, -inf
        %1575 = vmax.xlane.f32.xlu0 %v1574
        %v1576 = vpop.xlane.xlu0 %1575
        %v1577 = vsel %vm1456, %v847, -inf
        %1578 = vmax.xlane.f32.xlu0 %v1577
        %v1579 = vpop.xlane.xlu0 %1578
        %v1580 = vsel %vm1456, %v853, -inf
        %1581 = vmax.xlane.f32.xlu0 %v1580
        %v1582 = vpop.xlane.xlu0 %1581
        %v1583 = vsel %vm1456, %v859, -inf
        %1584 = vmax.xlane.f32.xlu0 %v1583
        %v1585 = vpop.xlane.xlu0 %1584
        %v1586 = vsel %vm1456, %v865, -inf
        %1587 = vmax.xlane.f32.xlu0 %v1586
        %v1588 = vpop.xlane.xlu0 %1587
        %v1589 = vsel %vm1456, %v871, -inf
        %1590 = vmax.xlane.f32.xlu0 %v1589
        %v1591 = vpop.xlane.xlu0 %1590
        %v1592 = vsel %vm1456, %v877, -inf
        %1593 = vmax.xlane.f32.xlu0 %v1592
        %v1594 = vpop.xlane.xlu0 %1593
        %v1595 = vsel %vm1456, %v883, -inf
        %1596 = vmax.xlane.f32.xlu0 %v1595
        %v1597 = vpop.xlane.xlu0 %1596
        %v1598 = vsel %vm1456, %v889, -inf
        %1599 = vmax.xlane.f32.xlu0 %v1598
        %v1600 = vpop.xlane.xlu0 %1599
        %v1601 = vsel %vm1456, %v895, -inf
        %1602 = vmax.xlane.f32.xlu0 %v1601
        %v1603 = vpop.xlane.xlu0 %1602
        %v1604 = vsel %vm1456, %v901, -inf
        %1605 = vmax.xlane.f32.xlu0 %v1604
        %v1606 = vpop.xlane.xlu0 %1605
        %v1607 = vsel %vm1456, %v907, -inf
        %1608 = vmax.xlane.f32.xlu0 %v1607
        %v1609 = vpop.xlane.xlu0 %1608
        %v1610 = vsel %vm1456, %v913, -inf
        %1611 = vmax.xlane.f32.xlu0 %v1610
        %v1612 = vpop.xlane.xlu0 %1611
        %v1613 = vsel %vm1456, %v919, -inf
        %1614 = vmax.xlane.f32.xlu0 %v1613
        %v1615 = vpop.xlane.xlu0 %1614
        %v1616 = vsel %vm1456, %v925, -inf
        %1617 = vmax.xlane.f32.xlu0 %v1616
        %v1618 = vpop.xlane.xlu0 %1617
        %v1619 = vsel %vm1456, %v931, -inf
        %1620 = vmax.xlane.f32.xlu0 %v1619
        %v1621 = vpop.xlane.xlu0 %1620
        %v1622 = vsel %vm1456, %v937, -inf
        %1623 = vmax.xlane.f32.xlu0 %v1622
        %v1624 = vpop.xlane.xlu0 %1623
        %v1625 = vsel %vm1456, %v943, -inf
        %1626 = vmax.xlane.f32.xlu0 %v1625
        %v1627 = vpop.xlane.xlu0 %1626
        %v1628 = vsel %vm1456, %v949, -inf
        %1629 = vmax.xlane.f32.xlu0 %v1628
        %v1630 = vpop.xlane.xlu0 %1629
        %v1631 = vsel %vm1456, %v955, -inf
        %1632 = vmax.xlane.f32.xlu0 %v1631
        %v1633 = vpop.xlane.xlu0 %1632
        %v1634 = vsel %vm1456, %v961, -inf
        %1635 = vmax.xlane.f32.xlu0 %v1634
        %v1636 = vpop.xlane.xlu0 %1635
        %v1637 = vsel %vm1456, %v967, -inf
        %1638 = vmax.xlane.f32.xlu0 %v1637
        %v1639 = vpop.xlane.xlu0 %1638
        %v1640 = vsel %vm1456, %v973, -inf
        %1641 = vmax.xlane.f32.xlu0 %v1640
        %v1642 = vpop.xlane.xlu0 %1641
        %v1643 = vsel %vm1456, %v979, -inf
        %1644 = vmax.xlane.f32.xlu0 %v1643
        %v1645 = vpop.xlane.xlu0 %1644
        %v1646 = vsel %vm1456, %v985, -inf
        %1647 = vmax.xlane.f32.xlu0 %v1646
        %v1648 = vpop.xlane.xlu0 %1647
        %v1649 = vsub.f32 %v607, %v1459
        %v1650 = vsub.f32 %v613, %v1462
        %v1651 = vsub.f32 %v619, %v1465
        %v1652 = vsub.f32 %v625, %v1468
        %v1653 = vsub.f32 %v631, %v1471
        %v1654 = vsub.f32 %v637, %v1474
        %v1655 = vsub.f32 %v643, %v1477
        %v1656 = vsub.f32 %v649, %v1480
        %v1657 = vsub.f32 %v655, %v1483
        %v1658 = vsub.f32 %v661, %v1486
        %v1659 = vsub.f32 %v667, %v1489
        %v1660 = vsub.f32 %v673, %v1492
        %v1661 = vsub.f32 %v679, %v1495
        %v1662 = vsub.f32 %v685, %v1498
        %v1663 = vsub.f32 %v691, %v1501
        %v1664 = vsub.f32 %v697, %v1504
        %v1665 = vsub.f32 %v703, %v1507
        %v1666 = vsub.f32 %v709, %v1510
        %v1667 = vsub.f32 %v715, %v1513
        %v1668 = vsub.f32 %v721, %v1516
        %v1669 = vsub.f32 %v727, %v1519
        %v1670 = vsub.f32 %v733, %v1522
        %v1671 = vsub.f32 %v739, %v1525
        %v1672 = vsub.f32 %v745, %v1528
        %v1673 = vsub.f32 %v751, %v1531
        %v1674 = vsub.f32 %v757, %v1534
        %v1675 = vsub.f32 %v763, %v1537
        %v1676 = vsub.f32 %v769, %v1540
        %v1677 = vsub.f32 %v775, %v1543
        %v1678 = vsub.f32 %v781, %v1546
        %v1679 = vsub.f32 %v787, %v1549
        %v1680 = vsub.f32 %v793, %v1552
        %v1681 = vsub.f32 %v799, %v1555
        %v1682 = vsub.f32 %v805, %v1558
        %v1683 = vsub.f32 %v811, %v1561
        %v1684 = vsub.f32 %v817, %v1564
        %v1685 = vsub.f32 %v823, %v1567
        %v1686 = vsub.f32 %v829, %v1570
        %v1687 = vsub.f32 %v835, %v1573
        %v1688 = vsub.f32 %v841, %v1576
        %v1689 = vsub.f32 %v847, %v1579
        %v1690 = vsub.f32 %v853, %v1582
        %v1691 = vsub.f32 %v859, %v1585
        %v1692 = vsub.f32 %v865, %v1588
        %v1693 = vsub.f32 %v871, %v1591
        %v1694 = vsub.f32 %v877, %v1594
        %v1695 = vsub.f32 %v883, %v1597
        %v1696 = vsub.f32 %v889, %v1600
        %v1697 = vsub.f32 %v895, %v1603
        %v1698 = vsub.f32 %v901, %v1606
        %v1699 = vsub.f32 %v907, %v1609
        %v1700 = vsub.f32 %v913, %v1612
        %v1701 = vsub.f32 %v919, %v1615
        %v1702 = vsub.f32 %v925, %v1618
        %v1703 = vsub.f32 %v931, %v1621
        %v1704 = vsub.f32 %v937, %v1624
        %v1705 = vsub.f32 %v943, %v1627
        %v1706 = vsub.f32 %v949, %v1630
        %v1707 = vsub.f32 %v955, %v1633
        %v1708 = vsub.f32 %v961, %v1636
        %v1709 = vsub.f32 %v967, %v1639
        %v1710 = vsub.f32 %v973, %v1642
        %v1711 = vsub.f32 %v979, %v1645
        %v1712 = vsub.f32 %v985, %v1648
        %v1713 = vmul.f32 %v1649, 1.442695
        %v1714 = vpow.pop %v1713
        %v1715 = vmul.f32 %v1650, 1.442695
        %v1716 = vpow.pop %v1715
        %v1717 = vmul.f32 %v1651, 1.442695
        %v1718 = vpow.pop %v1717
        %v1719 = vmul.f32 %v1652, 1.442695
        %v1720 = vpow.pop %v1719
        %v1721 = vmul.f32 %v1653, 1.442695
        %v1722 = vpow.pop %v1721
        %v1723 = vmul.f32 %v1654, 1.442695
        %v1724 = vpow.pop %v1723
        %v1725 = vmul.f32 %v1655, 1.442695
        %v1726 = vpow.pop %v1725
        %v1727 = vmul.f32 %v1656, 1.442695
        %v1728 = vpow.pop %v1727
        %v1729 = vmul.f32 %v1657, 1.442695
        %v1730 = vpow.pop %v1729
        %v1731 = vmul.f32 %v1658, 1.442695
        %v1732 = vpow.pop %v1731
        %v1733 = vmul.f32 %v1659, 1.442695
        %v1734 = vpow.pop %v1733
        %v1735 = vmul.f32 %v1660, 1.442695
        %v1736 = vpow.pop %v1735
        %v1737 = vmul.f32 %v1661, 1.442695
        %v1738 = vpow.pop %v1737
        %v1739 = vmul.f32 %v1662, 1.442695
        %v1740 = vpow.pop %v1739
        %v1741 = vmul.f32 %v1663, 1.442695
        %v1742 = vpow.pop %v1741
        %v1743 = vmul.f32 %v1664, 1.442695
        %v1744 = vpow.pop %v1743
        %v1745 = vmul.f32 %v1665, 1.442695
        %v1746 = vpow.pop %v1745
        %v1747 = vmul.f32 %v1666, 1.442695
        %v1748 = vpow.pop %v1747
        %v1749 = vmul.f32 %v1667, 1.442695
        %v1750 = vpow.pop %v1749
        %v1751 = vmul.f32 %v1668, 1.442695
        %v1752 = vpow.pop %v1751
        %v1753 = vmul.f32 %v1669, 1.442695
        %v1754 = vpow.pop %v1753
        %v1755 = vmul.f32 %v1670, 1.442695
        %v1756 = vpow.pop %v1755
        %v1757 = vmul.f32 %v1671, 1.442695
        %v1758 = vpow.pop %v1757
        %v1759 = vmul.f32 %v1672, 1.442695
        %v1760 = vpow.pop %v1759
        %v1761 = vmul.f32 %v1673, 1.442695
        %v1762 = vpow.pop %v1761
        %v1763 = vmul.f32 %v1674, 1.442695
        %v1764 = vpow.pop %v1763
        %v1765 = vmul.f32 %v1675, 1.442695
        %v1766 = vpow.pop %v1765
        %v1767 = vmul.f32 %v1676, 1.442695
        %v1768 = vpow.pop %v1767
        %v1769 = vmul.f32 %v1677, 1.442695
        %v1770 = vpow.pop %v1769
        %v1771 = vmul.f32 %v1678, 1.442695
        %v1772 = vpow.pop %v1771
        %v1773 = vmul.f32 %v1679, 1.442695
        %v1774 = vpow.pop %v1773
        %v1775 = vmul.f32 %v1680, 1.442695
        %v1776 = vpow.pop %v1775
        %v1777 = vmul.f32 %v1681, 1.442695
        %v1778 = vpow.pop %v1777
        %v1779 = vmul.f32 %v1682, 1.442695
        %v1780 = vpow.pop %v1779
        %v1781 = vmul.f32 %v1683, 1.442695
        %v1782 = vpow.pop %v1781
        %v1783 = vmul.f32 %v1684, 1.442695
        %v1784 = vpow.pop %v1783
        %v1785 = vmul.f32 %v1685, 1.442695
        %v1786 = vpow.pop %v1785
        %v1787 = vmul.f32 %v1686, 1.442695
        %v1788 = vpow.pop %v1787
        %v1789 = vmul.f32 %v1687, 1.442695
        %v1790 = vpow.pop %v1789
        %v1791 = vmul.f32 %v1688, 1.442695
        %v1792 = vpow.pop %v1791
        %v1793 = vmul.f32 %v1689, 1.442695
        %v1794 = vpow.pop %v1793
        %v1795 = vmul.f32 %v1690, 1.442695
        %v1796 = vpow.pop %v1795
        %v1797 = vmul.f32 %v1691, 1.442695
        %v1798 = vpow.pop %v1797
        %v1799 = vmul.f32 %v1692, 1.442695
        %v1800 = vpow.pop %v1799
        %v1801 = vmul.f32 %v1693, 1.442695
        %v1802 = vpow.pop %v1801
        %v1803 = vmul.f32 %v1694, 1.442695
        %v1804 = vpow.pop %v1803
        %v1805 = vmul.f32 %v1695, 1.442695
        %v1806 = vpow.pop %v1805
        %v1807 = vmul.f32 %v1696, 1.442695
        %v1808 = vpow.pop %v1807
        %v1809 = vmul.f32 %v1697, 1.442695
        %v1810 = vpow.pop %v1809
        %v1811 = vmul.f32 %v1698, 1.442695
        %v1812 = vpow.pop %v1811
        %v1813 = vmul.f32 %v1699, 1.442695
        %v1814 = vpow.pop %v1813
        %v1815 = vmul.f32 %v1700, 1.442695
        %v1816 = vpow.pop %v1815
        %v1817 = vmul.f32 %v1701, 1.442695
        %v1818 = vpow.pop %v1817
        %v1819 = vmul.f32 %v1702, 1.442695
        %v1820 = vpow.pop %v1819
        %v1821 = vmul.f32 %v1703, 1.442695
        %v1822 = vpow.pop %v1821
        %v1823 = vmul.f32 %v1704, 1.442695
        %v1824 = vpow.pop %v1823
        %v1825 = vmul.f32 %v1705, 1.442695
        %v1826 = vpow.pop %v1825
        %v1827 = vmul.f32 %v1706, 1.442695
        %v1828 = vpow.pop %v1827
        %v1829 = vmul.f32 %v1707, 1.442695
        %v1830 = vpow.pop %v1829
        %v1831 = vmul.f32 %v1708, 1.442695
        %v1832 = vpow.pop %v1831
        %v1833 = vmul.f32 %v1709, 1.442695
        %v1834 = vpow.pop %v1833
        %v1835 = vmul.f32 %v1710, 1.442695
        %v1836 = vpow.pop %v1835
        %v1837 = vmul.f32 %v1711, 1.442695
        %v1838 = vpow.pop %v1837
        %v1839 = vmul.f32 %v1712, 1.442695
        %v1840 = vpow.pop %v1839
        %v1841 = vsel %vm1456, %v1714, 0.0
        %1842 = vadd.xlane.f32.xlu0 %v1841
        %v1843 = vpop.xlane.xlu0 %1842
        %v1844 = vsel %vm1456, %v1716, 0.0
        %1845 = vadd.xlane.f32.xlu0 %v1844
        %v1846 = vpop.xlane.xlu0 %1845
        %v1847 = vsel %vm1456, %v1718, 0.0
        %1848 = vadd.xlane.f32.xlu0 %v1847
        %v1849 = vpop.xlane.xlu0 %1848
        %v1850 = vsel %vm1456, %v1720, 0.0
        %1851 = vadd.xlane.f32.xlu0 %v1850
        %v1852 = vpop.xlane.xlu0 %1851
        %v1853 = vsel %vm1456, %v1722, 0.0
        %1854 = vadd.xlane.f32.xlu0 %v1853
        %v1855 = vpop.xlane.xlu0 %1854
        %v1856 = vsel %vm1456, %v1724, 0.0
        %1857 = vadd.xlane.f32.xlu0 %v1856
        %v1858 = vpop.xlane.xlu0 %1857
        %v1859 = vsel %vm1456, %v1726, 0.0
        %1860 = vadd.xlane.f32.xlu0 %v1859
        %v1861 = vpop.xlane.xlu0 %1860
        %v1862 = vsel %vm1456, %v1728, 0.0
        %1863 = vadd.xlane.f32.xlu0 %v1862
        %v1864 = vpop.xlane.xlu0 %1863
        %v1865 = vsel %vm1456, %v1730, 0.0
        %1866 = vadd.xlane.f32.xlu0 %v1865
        %v1867 = vpop.xlane.xlu0 %1866
        %v1868 = vsel %vm1456, %v1732, 0.0
        %1869 = vadd.xlane.f32.xlu0 %v1868
        %v1870 = vpop.xlane.xlu0 %1869
        %v1871 = vsel %vm1456, %v1734, 0.0
        %1872 = vadd.xlane.f32.xlu0 %v1871
        %v1873 = vpop.xlane.xlu0 %1872
        %v1874 = vsel %vm1456, %v1736, 0.0
        %1875 = vadd.xlane.f32.xlu0 %v1874
        %v1876 = vpop.xlane.xlu0 %1875
        %v1877 = vsel %vm1456, %v1738, 0.0
        %1878 = vadd.xlane.f32.xlu0 %v1877
        %v1879 = vpop.xlane.xlu0 %1878
        %v1880 = vsel %vm1456, %v1740, 0.0
        %1881 = vadd.xlane.f32.xlu0 %v1880
        %v1882 = vpop.xlane.xlu0 %1881
        %v1883 = vsel %vm1456, %v1742, 0.0
        %1884 = vadd.xlane.f32.xlu0 %v1883
        %v1885 = vpop.xlane.xlu0 %1884
        %v1886 = vsel %vm1456, %v1744, 0.0
        %1887 = vadd.xlane.f32.xlu0 %v1886
        %v1888 = vpop.xlane.xlu0 %1887
        %v1889 = vsel %vm1456, %v1746, 0.0
        %1890 = vadd.xlane.f32.xlu0 %v1889
        %v1891 = vpop.xlane.xlu0 %1890
        %v1892 = vsel %vm1456, %v1748, 0.0
        %1893 = vadd.xlane.f32.xlu0 %v1892
        %v1894 = vpop.xlane.xlu0 %1893
        %v1895 = vsel %vm1456, %v1750, 0.0
        %1896 = vadd.xlane.f32.xlu0 %v1895
        %v1897 = vpop.xlane.xlu0 %1896
        %v1898 = vsel %vm1456, %v1752, 0.0
        %1899 = vadd.xlane.f32.xlu0 %v1898
        %v1900 = vpop.xlane.xlu0 %1899
        %v1901 = vsel %vm1456, %v1754, 0.0
        %1902 = vadd.xlane.f32.xlu0 %v1901
        %v1903 = vpop.xlane.xlu0 %1902
        %v1904 = vsel %vm1456, %v1756, 0.0
        %1905 = vadd.xlane.f32.xlu0 %v1904
        %v1906 = vpop.xlane.xlu0 %1905
        %v1907 = vsel %vm1456, %v1758, 0.0
        %1908 = vadd.xlane.f32.xlu0 %v1907
        %v1909 = vpop.xlane.xlu0 %1908
        %v1910 = vsel %vm1456, %v1760, 0.0
        %1911 = vadd.xlane.f32.xlu0 %v1910
        %v1912 = vpop.xlane.xlu0 %1911
        %v1913 = vsel %vm1456, %v1762, 0.0
        %1914 = vadd.xlane.f32.xlu0 %v1913
        %v1915 = vpop.xlane.xlu0 %1914
        %v1916 = vsel %vm1456, %v1764, 0.0
        %1917 = vadd.xlane.f32.xlu0 %v1916
        %v1918 = vpop.xlane.xlu0 %1917
        %v1919 = vsel %vm1456, %v1766, 0.0
        %1920 = vadd.xlane.f32.xlu0 %v1919
        %v1921 = vpop.xlane.xlu0 %1920
        %v1922 = vsel %vm1456, %v1768, 0.0
        %1923 = vadd.xlane.f32.xlu0 %v1922
        %v1924 = vpop.xlane.xlu0 %1923
        %v1925 = vsel %vm1456, %v1770, 0.0
        %1926 = vadd.xlane.f32.xlu0 %v1925
        %v1927 = vpop.xlane.xlu0 %1926
        %v1928 = vsel %vm1456, %v1772, 0.0
        %1929 = vadd.xlane.f32.xlu0 %v1928
        %v1930 = vpop.xlane.xlu0 %1929
        %v1931 = vsel %vm1456, %v1774, 0.0
        %1932 = vadd.xlane.f32.xlu0 %v1931
        %v1933 = vpop.xlane.xlu0 %1932
        %v1934 = vsel %vm1456, %v1776, 0.0
        %1935 = vadd.xlane.f32.xlu0 %v1934
        %v1936 = vpop.xlane.xlu0 %1935
        %v1937 = vsel %vm1456, %v1778, 0.0
        %1938 = vadd.xlane.f32.xlu0 %v1937
        %v1939 = vpop.xlane.xlu0 %1938
        %v1940 = vsel %vm1456, %v1780, 0.0
        %1941 = vadd.xlane.f32.xlu0 %v1940
        %v1942 = vpop.xlane.xlu0 %1941
        %v1943 = vsel %vm1456, %v1782, 0.0
        %1944 = vadd.xlane.f32.xlu0 %v1943
        %v1945 = vpop.xlane.xlu0 %1944
        %v1946 = vsel %vm1456, %v1784, 0.0
        %1947 = vadd.xlane.f32.xlu0 %v1946
        %v1948 = vpop.xlane.xlu0 %1947
        %v1949 = vsel %vm1456, %v1786, 0.0
        %1950 = vadd.xlane.f32.xlu0 %v1949
        %v1951 = vpop.xlane.xlu0 %1950
        %v1952 = vsel %vm1456, %v1788, 0.0
        %1953 = vadd.xlane.f32.xlu0 %v1952
        %v1954 = vpop.xlane.xlu0 %1953
        %v1955 = vsel %vm1456, %v1790, 0.0
        %1956 = vadd.xlane.f32.xlu0 %v1955
        %v1957 = vpop.xlane.xlu0 %1956
        %v1958 = vsel %vm1456, %v1792, 0.0
        %1959 = vadd.xlane.f32.xlu0 %v1958
        %v1960 = vpop.xlane.xlu0 %1959
        %v1961 = vsel %vm1456, %v1794, 0.0
        %1962 = vadd.xlane.f32.xlu0 %v1961
        %v1963 = vpop.xlane.xlu0 %1962
        %v1964 = vsel %vm1456, %v1796, 0.0
        %1965 = vadd.xlane.f32.xlu0 %v1964
        %v1966 = vpop.xlane.xlu0 %1965
        %v1967 = vsel %vm1456, %v1798, 0.0
        %1968 = vadd.xlane.f32.xlu0 %v1967
        %v1969 = vpop.xlane.xlu0 %1968
        %v1970 = vsel %vm1456, %v1800, 0.0
        %1971 = vadd.xlane.f32.xlu0 %v1970
        %v1972 = vpop.xlane.xlu0 %1971
        %v1973 = vsel %vm1456, %v1802, 0.0
        %1974 = vadd.xlane.f32.xlu0 %v1973
        %v1975 = vpop.xlane.xlu0 %1974
        %v1976 = vsel %vm1456, %v1804, 0.0
        %1977 = vadd.xlane.f32.xlu0 %v1976
        %v1978 = vpop.xlane.xlu0 %1977
        %v1979 = vsel %vm1456, %v1806, 0.0
        %1980 = vadd.xlane.f32.xlu0 %v1979
        %v1981 = vpop.xlane.xlu0 %1980
        %v1982 = vsel %vm1456, %v1808, 0.0
        %1983 = vadd.xlane.f32.xlu0 %v1982
        %v1984 = vpop.xlane.xlu0 %1983
        %v1985 = vsel %vm1456, %v1810, 0.0
        %1986 = vadd.xlane.f32.xlu0 %v1985
        %v1987 = vpop.xlane.xlu0 %1986
        %v1988 = vsel %vm1456, %v1812, 0.0
        %1989 = vadd.xlane.f32.xlu0 %v1988
        %v1990 = vpop.xlane.xlu0 %1989
        %v1991 = vsel %vm1456, %v1814, 0.0
        %1992 = vadd.xlane.f32.xlu0 %v1991
        %v1993 = vpop.xlane.xlu0 %1992
        %v1994 = vsel %vm1456, %v1816, 0.0
        %1995 = vadd.xlane.f32.xlu0 %v1994
        %v1996 = vpop.xlane.xlu0 %1995
        %v1997 = vsel %vm1456, %v1818, 0.0
        %1998 = vadd.xlane.f32.xlu0 %v1997
        %v1999 = vpop.xlane.xlu0 %1998
        %v2000 = vsel %vm1456, %v1820, 0.0
        %2001 = vadd.xlane.f32.xlu0 %v2000
        %v2002 = vpop.xlane.xlu0 %2001
        %v2003 = vsel %vm1456, %v1822, 0.0
        %2004 = vadd.xlane.f32.xlu0 %v2003
        %v2005 = vpop.xlane.xlu0 %2004
        %v2006 = vsel %vm1456, %v1824, 0.0
        %2007 = vadd.xlane.f32.xlu0 %v2006
        %v2008 = vpop.xlane.xlu0 %2007
        %v2009 = vsel %vm1456, %v1826, 0.0
        %2010 = vadd.xlane.f32.xlu0 %v2009
        %v2011 = vpop.xlane.xlu0 %2010
        %v2012 = vsel %vm1456, %v1828, 0.0
        %2013 = vadd.xlane.f32.xlu0 %v2012
        %v2014 = vpop.xlane.xlu0 %2013
        %v2015 = vsel %vm1456, %v1830, 0.0
        %2016 = vadd.xlane.f32.xlu0 %v2015
        %v2017 = vpop.xlane.xlu0 %2016
        %v2018 = vsel %vm1456, %v1832, 0.0
        %2019 = vadd.xlane.f32.xlu0 %v2018
        %v2020 = vpop.xlane.xlu0 %2019
        %v2021 = vsel %vm1456, %v1834, 0.0
        %2022 = vadd.xlane.f32.xlu0 %v2021
        %v2023 = vpop.xlane.xlu0 %2022
        %v2024 = vsel %vm1456, %v1836, 0.0
        %2025 = vadd.xlane.f32.xlu0 %v2024
        %v2026 = vpop.xlane.xlu0 %2025
        %v2027 = vsel %vm1456, %v1838, 0.0
        %2028 = vadd.xlane.f32.xlu0 %v2027
        %v2029 = vpop.xlane.xlu0 %2028
        %v2030 = vsel %vm1456, %v1840, 0.0
        %2031 = vadd.xlane.f32.xlu0 %v2030
        %v2032 = vpop.xlane.xlu0 %2031
        %v2033 = vrcp.pop %v1843
        %v2034 = vmul.f32 %v1714, %v2033
        %v2035 = vrcp.pop %v1846
        %v2036 = vmul.f32 %v1716, %v2035
        %v2037 = vrcp.pop %v1849
        %v2038 = vmul.f32 %v1718, %v2037
        %v2039 = vrcp.pop %v1852
        %v2040 = vmul.f32 %v1720, %v2039
        %v2041 = vrcp.pop %v1855
        %v2042 = vmul.f32 %v1722, %v2041
        %v2043 = vrcp.pop %v1858
        %v2044 = vmul.f32 %v1724, %v2043
        %v2045 = vrcp.pop %v1861
        %v2046 = vmul.f32 %v1726, %v2045
        %v2047 = vrcp.pop %v1864
        %v2048 = vmul.f32 %v1728, %v2047
        %v2049 = vrcp.pop %v1867
        %v2050 = vmul.f32 %v1730, %v2049
        %v2051 = vrcp.pop %v1870
        %v2052 = vmul.f32 %v1732, %v2051
        %v2053 = vrcp.pop %v1873
        %v2054 = vmul.f32 %v1734, %v2053
        %v2055 = vrcp.pop %v1876
        %v2056 = vmul.f32 %v1736, %v2055
        %v2057 = vrcp.pop %v1879
        %v2058 = vmul.f32 %v1738, %v2057
        %v2059 = vrcp.pop %v1882
        %v2060 = vmul.f32 %v1740, %v2059
        %v2061 = vrcp.pop %v1885
        %v2062 = vmul.f32 %v1742, %v2061
        %v2063 = vrcp.pop %v1888
        %v2064 = vmul.f32 %v1744, %v2063
        %v2065 = vrcp.pop %v1891
        %v2066 = vmul.f32 %v1746, %v2065
        %v2067 = vrcp.pop %v1894
        %v2068 = vmul.f32 %v1748, %v2067
        %v2069 = vrcp.pop %v1897
        %v2070 = vmul.f32 %v1750, %v2069
        %v2071 = vrcp.pop %v1900
        %v2072 = vmul.f32 %v1752, %v2071
        %v2073 = vrcp.pop %v1903
        %v2074 = vmul.f32 %v1754, %v2073
        %v2075 = vrcp.pop %v1906
        %v2076 = vmul.f32 %v1756, %v2075
        %v2077 = vrcp.pop %v1909
        %v2078 = vmul.f32 %v1758, %v2077
        %v2079 = vrcp.pop %v1912
        %v2080 = vmul.f32 %v1760, %v2079
        %v2081 = vrcp.pop %v1915
        %v2082 = vmul.f32 %v1762, %v2081
        %v2083 = vrcp.pop %v1918
        %v2084 = vmul.f32 %v1764, %v2083
        %v2085 = vrcp.pop %v1921
        %v2086 = vmul.f32 %v1766, %v2085
        %v2087 = vrcp.pop %v1924
        %v2088 = vmul.f32 %v1768, %v2087
        %v2089 = vrcp.pop %v1927
        %v2090 = vmul.f32 %v1770, %v2089
        %v2091 = vrcp.pop %v1930
        %v2092 = vmul.f32 %v1772, %v2091
        %v2093 = vrcp.pop %v1933
        %v2094 = vmul.f32 %v1774, %v2093
        %v2095 = vrcp.pop %v1936
        %v2096 = vmul.f32 %v1776, %v2095
        %v2097 = vrcp.pop %v1939
        %v2098 = vmul.f32 %v1778, %v2097
        %v2099 = vrcp.pop %v1942
        %v2100 = vmul.f32 %v1780, %v2099
        %v2101 = vrcp.pop %v1945
        %v2102 = vmul.f32 %v1782, %v2101
        %v2103 = vrcp.pop %v1948
        %v2104 = vmul.f32 %v1784, %v2103
        %v2105 = vrcp.pop %v1951
        %v2106 = vmul.f32 %v1786, %v2105
        %v2107 = vrcp.pop %v1954
        %v2108 = vmul.f32 %v1788, %v2107
        %v2109 = vrcp.pop %v1957
        %v2110 = vmul.f32 %v1790, %v2109
        %v2111 = vrcp.pop %v1960
        %v2112 = vmul.f32 %v1792, %v2111
        %v2113 = vrcp.pop %v1963
        %v2114 = vmul.f32 %v1794, %v2113
        %v2115 = vrcp.pop %v1966
        %v2116 = vmul.f32 %v1796, %v2115
        %v2117 = vrcp.pop %v1969
        %v2118 = vmul.f32 %v1798, %v2117
        %v2119 = vrcp.pop %v1972
        %v2120 = vmul.f32 %v1800, %v2119
        %v2121 = vrcp.pop %v1975
        %v2122 = vmul.f32 %v1802, %v2121
        %v2123 = vrcp.pop %v1978
        %v2124 = vmul.f32 %v1804, %v2123
        %v2125 = vrcp.pop %v1981
        %v2126 = vmul.f32 %v1806, %v2125
        %v2127 = vrcp.pop %v1984
        %v2128 = vmul.f32 %v1808, %v2127
        %v2129 = vrcp.pop %v1987
        %v2130 = vmul.f32 %v1810, %v2129
        %v2131 = vrcp.pop %v1990
        %v2132 = vmul.f32 %v1812, %v2131
        %v2133 = vrcp.pop %v1993
        %v2134 = vmul.f32 %v1814, %v2133
        %v2135 = vrcp.pop %v1996
        %v2136 = vmul.f32 %v1816, %v2135
        %v2137 = vrcp.pop %v1999
        %v2138 = vmul.f32 %v1818, %v2137
        %v2139 = vrcp.pop %v2002
        %v2140 = vmul.f32 %v1820, %v2139
        %v2141 = vrcp.pop %v2005
        %v2142 = vmul.f32 %v1822, %v2141
        %v2143 = vrcp.pop %v2008
        %v2144 = vmul.f32 %v1824, %v2143
        %v2145 = vrcp.pop %v2011
        %v2146 = vmul.f32 %v1826, %v2145
        %v2147 = vrcp.pop %v2014
        %v2148 = vmul.f32 %v1828, %v2147
        %v2149 = vrcp.pop %v2017
        %v2150 = vmul.f32 %v1830, %v2149
        %v2151 = vrcp.pop %v2020
        %v2152 = vmul.f32 %v1832, %v2151
        %v2153 = vrcp.pop %v2023
        %v2154 = vmul.f32 %v1834, %v2153
        %v2155 = vrcp.pop %v2026
        %v2156 = vmul.f32 %v1836, %v2155
        %v2157 = vrcp.pop %v2029
        %v2158 = vmul.f32 %v1838, %v2157
        %v2159 = vrcp.pop %v2032
        %v2160 = vmul.f32 %v1840, %v2159
        %2162 = vset.pattern.permute.xlu0 0
        %2163 = vperm.xlu0 %2162, %v2034
        %v2164 = vpop.permute.xlu0 %2163
        %2167 = vset.pattern.permute.xlu0 0
        %2168 = vperm.xlu0 %2167, %v2036
        %v2169 = vpop.permute.xlu0 %2168
        %2172 = vset.pattern.permute.xlu0 0
        %2173 = vperm.xlu0 %2172, %v2038
        %v2174 = vpop.permute.xlu0 %2173
        %2177 = vset.pattern.permute.xlu0 0
        %2178 = vperm.xlu0 %2177, %v2040
        %v2179 = vpop.permute.xlu0 %2178
        %2182 = vset.pattern.permute.xlu0 0
        %2183 = vperm.xlu0 %2182, %v2042
        %v2184 = vpop.permute.xlu0 %2183
        %2187 = vset.pattern.permute.xlu0 0
        %2188 = vperm.xlu0 %2187, %v2044
        %v2189 = vpop.permute.xlu0 %2188
        %2192 = vset.pattern.permute.xlu0 0
        %2193 = vperm.xlu0 %2192, %v2046
        %v2194 = vpop.permute.xlu0 %2193
        %2197 = vset.pattern.permute.xlu0 0
        %2198 = vperm.xlu0 %2197, %v2048
        %v2199 = vpop.permute.xlu0 %2198
        %2202 = vset.pattern.permute.xlu0 0
        %2203 = vperm.xlu0 %2202, %v2050
        %v2204 = vpop.permute.xlu0 %2203
        %2207 = vset.pattern.permute.xlu0 0
        %2208 = vperm.xlu0 %2207, %v2052
        %v2209 = vpop.permute.xlu0 %2208
        %2212 = vset.pattern.permute.xlu0 0
        %2213 = vperm.xlu0 %2212, %v2054
        %v2214 = vpop.permute.xlu0 %2213
        %2217 = vset.pattern.permute.xlu0 0
        %2218 = vperm.xlu0 %2217, %v2056
        %v2219 = vpop.permute.xlu0 %2218
        %2222 = vset.pattern.permute.xlu0 0
        %2223 = vperm.xlu0 %2222, %v2058
        %v2224 = vpop.permute.xlu0 %2223
        %2227 = vset.pattern.permute.xlu0 0
        %2228 = vperm.xlu0 %2227, %v2060
        %v2229 = vpop.permute.xlu0 %2228
        %2232 = vset.pattern.permute.xlu0 0
        %2233 = vperm.xlu0 %2232, %v2062
        %v2234 = vpop.permute.xlu0 %2233
        %2237 = vset.pattern.permute.xlu0 0
        %2238 = vperm.xlu0 %2237, %v2064
        %v2239 = vpop.permute.xlu0 %2238
        %2242 = vset.pattern.permute.xlu0 0
        %2243 = vperm.xlu0 %2242, %v2066
        %v2244 = vpop.permute.xlu0 %2243
        %2247 = vset.pattern.permute.xlu0 0
        %2248 = vperm.xlu0 %2247, %v2068
        %v2249 = vpop.permute.xlu0 %2248
        %2252 = vset.pattern.permute.xlu0 0
        %2253 = vperm.xlu0 %2252, %v2070
        %v2254 = vpop.permute.xlu0 %2253
        %2257 = vset.pattern.permute.xlu0 0
        %2258 = vperm.xlu0 %2257, %v2072
        %v2259 = vpop.permute.xlu0 %2258
        %2262 = vset.pattern.permute.xlu0 0
        %2263 = vperm.xlu0 %2262, %v2074
        %v2264 = vpop.permute.xlu0 %2263
        %2267 = vset.pattern.permute.xlu0 0
        %2268 = vperm.xlu0 %2267, %v2076
        %v2269 = vpop.permute.xlu0 %2268
        %2272 = vset.pattern.permute.xlu0 0
        %2273 = vperm.xlu0 %2272, %v2078
        %v2274 = vpop.permute.xlu0 %2273
        %2277 = vset.pattern.permute.xlu0 0
        %2278 = vperm.xlu0 %2277, %v2080
        %v2279 = vpop.permute.xlu0 %2278
        %2282 = vset.pattern.permute.xlu0 0
        %2283 = vperm.xlu0 %2282, %v2082
        %v2284 = vpop.permute.xlu0 %2283
        %2287 = vset.pattern.permute.xlu0 0
        %2288 = vperm.xlu0 %2287, %v2084
        %v2289 = vpop.permute.xlu0 %2288
        %2292 = vset.pattern.permute.xlu0 0
        %2293 = vperm.xlu0 %2292, %v2086
        %v2294 = vpop.permute.xlu0 %2293
        %2297 = vset.pattern.permute.xlu0 0
        %2298 = vperm.xlu0 %2297, %v2088
        %v2299 = vpop.permute.xlu0 %2298
        %2302 = vset.pattern.permute.xlu0 0
        %2303 = vperm.xlu0 %2302, %v2090
        %v2304 = vpop.permute.xlu0 %2303
        %2307 = vset.pattern.permute.xlu0 0
        %2308 = vperm.xlu0 %2307, %v2092
        %v2309 = vpop.permute.xlu0 %2308
        %2312 = vset.pattern.permute.xlu0 0
        %2313 = vperm.xlu0 %2312, %v2094
        %v2314 = vpop.permute.xlu0 %2313
        %2317 = vset.pattern.permute.xlu0 0
        %2318 = vperm.xlu0 %2317, %v2096
        %v2319 = vpop.permute.xlu0 %2318
        %2322 = vset.pattern.permute.xlu0 0
        %2323 = vperm.xlu0 %2322, %v2098
        %v2324 = vpop.permute.xlu0 %2323
        %2327 = vset.pattern.permute.xlu0 0
        %2328 = vperm.xlu0 %2327, %v2100
        %v2329 = vpop.permute.xlu0 %2328
        %2332 = vset.pattern.permute.xlu0 0
        %2333 = vperm.xlu0 %2332, %v2102
        %v2334 = vpop.permute.xlu0 %2333
        %2337 = vset.pattern.permute.xlu0 0
        %2338 = vperm.xlu0 %2337, %v2104
        %v2339 = vpop.permute.xlu0 %2338
        %2342 = vset.pattern.permute.xlu0 0
        %2343 = vperm.xlu0 %2342, %v2106
        %v2344 = vpop.permute.xlu0 %2343
        %2347 = vset.pattern.permute.xlu0 0
        %2348 = vperm.xlu0 %2347, %v2108
        %v2349 = vpop.permute.xlu0 %2348
        %2352 = vset.pattern.permute.xlu0 0
        %2353 = vperm.xlu0 %2352, %v2110
        %v2354 = vpop.permute.xlu0 %2353
        %2357 = vset.pattern.permute.xlu0 0
        %2358 = vperm.xlu0 %2357, %v2112
        %v2359 = vpop.permute.xlu0 %2358
        %2362 = vset.pattern.permute.xlu0 0
        %2363 = vperm.xlu0 %2362, %v2114
        %v2364 = vpop.permute.xlu0 %2363
        %2367 = vset.pattern.permute.xlu0 0
        %2368 = vperm.xlu0 %2367, %v2116
        %v2369 = vpop.permute.xlu0 %2368
        %2372 = vset.pattern.permute.xlu0 0
        %2373 = vperm.xlu0 %2372, %v2118
        %v2374 = vpop.permute.xlu0 %2373
        %2377 = vset.pattern.permute.xlu0 0
        %2378 = vperm.xlu0 %2377, %v2120
        %v2379 = vpop.permute.xlu0 %2378
        %2382 = vset.pattern.permute.xlu0 0
        %2383 = vperm.xlu0 %2382, %v2122
        %v2384 = vpop.permute.xlu0 %2383
        %2387 = vset.pattern.permute.xlu0 0
        %2388 = vperm.xlu0 %2387, %v2124
        %v2389 = vpop.permute.xlu0 %2388
        %2392 = vset.pattern.permute.xlu0 0
        %2393 = vperm.xlu0 %2392, %v2126
        %v2394 = vpop.permute.xlu0 %2393
        %2397 = vset.pattern.permute.xlu0 0
        %2398 = vperm.xlu0 %2397, %v2128
        %v2399 = vpop.permute.xlu0 %2398
        %2402 = vset.pattern.permute.xlu0 0
        %2403 = vperm.xlu0 %2402, %v2130
        %v2404 = vpop.permute.xlu0 %2403
        %2407 = vset.pattern.permute.xlu0 0
        %2408 = vperm.xlu0 %2407, %v2132
        %v2409 = vpop.permute.xlu0 %2408
        %2412 = vset.pattern.permute.xlu0 0
        %2413 = vperm.xlu0 %2412, %v2134
        %v2414 = vpop.permute.xlu0 %2413
        %2417 = vset.pattern.permute.xlu0 0
        %2418 = vperm.xlu0 %2417, %v2136
        %v2419 = vpop.permute.xlu0 %2418
        %2422 = vset.pattern.permute.xlu0 0
        %2423 = vperm.xlu0 %2422, %v2138
        %v2424 = vpop.permute.xlu0 %2423
        %2427 = vset.pattern.permute.xlu0 0
        %2428 = vperm.xlu0 %2427, %v2140
        %v2429 = vpop.permute.xlu0 %2428
        %2432 = vset.pattern.permute.xlu0 0
        %2433 = vperm.xlu0 %2432, %v2142
        %v2434 = vpop.permute.xlu0 %2433
        %2437 = vset.pattern.permute.xlu0 0
        %2438 = vperm.xlu0 %2437, %v2144
        %v2439 = vpop.permute.xlu0 %2438
        %2442 = vset.pattern.permute.xlu0 0
        %2443 = vperm.xlu0 %2442, %v2146
        %v2444 = vpop.permute.xlu0 %2443
        %2447 = vset.pattern.permute.xlu0 0
        %2448 = vperm.xlu0 %2447, %v2148
        %v2449 = vpop.permute.xlu0 %2448
        %2452 = vset.pattern.permute.xlu0 0
        %2453 = vperm.xlu0 %2452, %v2150
        %v2454 = vpop.permute.xlu0 %2453
        %2457 = vset.pattern.permute.xlu0 0
        %2458 = vperm.xlu0 %2457, %v2152
        %v2459 = vpop.permute.xlu0 %2458
        %2462 = vset.pattern.permute.xlu0 0
        %2463 = vperm.xlu0 %2462, %v2154
        %v2464 = vpop.permute.xlu0 %2463
        %2467 = vset.pattern.permute.xlu0 0
        %2468 = vperm.xlu0 %2467, %v2156
        %v2469 = vpop.permute.xlu0 %2468
        %2472 = vset.pattern.permute.xlu0 0
        %2473 = vperm.xlu0 %2472, %v2158
        %v2474 = vpop.permute.xlu0 %2473
        %2477 = vset.pattern.permute.xlu0 0
        %2478 = vperm.xlu0 %2477, %v2160
        %v2479 = vpop.permute.xlu0 %2478
        %v2481 = vmul.f32 %v2164, %v1138
        %v2482 = vmul.f32 %v2169, %v1143
        %v2483 = vmul.f32 %v2174, %v1148
        %v2484 = vmul.f32 %v2179, %v1153
        %v2485 = vmul.f32 %v2184, %v1158
        %v2486 = vmul.f32 %v2189, %v1163
        %v2487 = vmul.f32 %v2194, %v1168
        %v2488 = vmul.f32 %v2199, %v1173
        %v2489 = vmul.f32 %v2204, %v1178
        %v2490 = vmul.f32 %v2209, %v1183
        %v2491 = vmul.f32 %v2214, %v1188
        %v2492 = vmul.f32 %v2219, %v1193
        %v2493 = vmul.f32 %v2224, %v1198
        %v2494 = vmul.f32 %v2229, %v1203
        %v2495 = vmul.f32 %v2234, %v1208
        %v2496 = vmul.f32 %v2239, %v1213
        %v2497 = vmul.f32 %v2244, %v1218
        %v2498 = vmul.f32 %v2249, %v1223
        %v2499 = vmul.f32 %v2254, %v1228
        %v2500 = vmul.f32 %v2259, %v1233
        %v2501 = vmul.f32 %v2264, %v1238
        %v2502 = vmul.f32 %v2269, %v1243
        %v2503 = vmul.f32 %v2274, %v1248
        %v2504 = vmul.f32 %v2279, %v1253
        %v2505 = vmul.f32 %v2284, %v1258
        %v2506 = vmul.f32 %v2289, %v1263
        %v2507 = vmul.f32 %v2294, %v1268
        %v2508 = vmul.f32 %v2299, %v1273
        %v2509 = vmul.f32 %v2304, %v1278
        %v2510 = vmul.f32 %v2309, %v1283
        %v2511 = vmul.f32 %v2314, %v1288
        %v2512 = vmul.f32 %v2319, %v1293
        %v2513 = vmul.f32 %v2324, %v1298
        %v2514 = vmul.f32 %v2329, %v1303
        %v2515 = vmul.f32 %v2334, %v1308
        %v2516 = vmul.f32 %v2339, %v1313
        %v2517 = vmul.f32 %v2344, %v1318
        %v2518 = vmul.f32 %v2349, %v1323
        %v2519 = vmul.f32 %v2354, %v1328
        %v2520 = vmul.f32 %v2359, %v1333
        %v2521 = vmul.f32 %v2364, %v1338
        %v2522 = vmul.f32 %v2369, %v1343
        %v2523 = vmul.f32 %v2374, %v1348
        %v2524 = vmul.f32 %v2379, %v1353
        %v2525 = vmul.f32 %v2384, %v1358
        %v2526 = vmul.f32 %v2389, %v1363
        %v2527 = vmul.f32 %v2394, %v1368
        %v2528 = vmul.f32 %v2399, %v1373
        %v2529 = vmul.f32 %v2404, %v1378
        %v2530 = vmul.f32 %v2409, %v1383
        %v2531 = vmul.f32 %v2414, %v1388
        %v2532 = vmul.f32 %v2419, %v1393
        %v2533 = vmul.f32 %v2424, %v1398
        %v2534 = vmul.f32 %v2429, %v1403
        %v2535 = vmul.f32 %v2434, %v1408
        %v2536 = vmul.f32 %v2439, %v1413
        %v2537 = vmul.f32 %v2444, %v1418
        %v2538 = vmul.f32 %v2449, %v1423
        %v2539 = vmul.f32 %v2454, %v1428
        %v2540 = vmul.f32 %v2459, %v1433
        %v2541 = vmul.f32 %v2464, %v1438
        %v2542 = vmul.f32 %v2469, %v1443
        %v2543 = vmul.f32 %v2474, %v1448
        %v2544 = vmul.f32 %v2479, %v1453
        %2545 = vset.pattern.permute.xlu0 1
        %2546 = vperm.xlu0 %2545, %v2034
        %v2547 = vpop.permute.xlu0 %2546
        %2549 = vset.pattern.permute.xlu0 1
        %2550 = vperm.xlu0 %2549, %v2036
        %v2551 = vpop.permute.xlu0 %2550
        %2553 = vset.pattern.permute.xlu0 1
        %2554 = vperm.xlu0 %2553, %v2038
        %v2555 = vpop.permute.xlu0 %2554
        %2557 = vset.pattern.permute.xlu0 1
        %2558 = vperm.xlu0 %2557, %v2040
        %v2559 = vpop.permute.xlu0 %2558
        %2561 = vset.pattern.permute.xlu0 1
        %2562 = vperm.xlu0 %2561, %v2042
        %v2563 = vpop.permute.xlu0 %2562
        %2565 = vset.pattern.permute.xlu0 1
        %2566 = vperm.xlu0 %2565, %v2044
        %v2567 = vpop.permute.xlu0 %2566
        %2569 = vset.pattern.permute.xlu0 1
        %2570 = vperm.xlu0 %2569, %v2046
        %v2571 = vpop.permute.xlu0 %2570
        %2573 = vset.pattern.permute.xlu0 1
        %2574 = vperm.xlu0 %2573, %v2048
        %v2575 = vpop.permute.xlu0 %2574
        %2577 = vset.pattern.permute.xlu0 1
        %2578 = vperm.xlu0 %2577, %v2050
        %v2579 = vpop.permute.xlu0 %2578
        %2581 = vset.pattern.permute.xlu0 1
        %2582 = vperm.xlu0 %2581, %v2052
        %v2583 = vpop.permute.xlu0 %2582
        %2585 = vset.pattern.permute.xlu0 1
        %2586 = vperm.xlu0 %2585, %v2054
        %v2587 = vpop.permute.xlu0 %2586
        %2589 = vset.pattern.permute.xlu0 1
        %2590 = vperm.xlu0 %2589, %v2056
        %v2591 = vpop.permute.xlu0 %2590
        %2593 = vset.pattern.permute.xlu0 1
        %2594 = vperm.xlu0 %2593, %v2058
        %v2595 = vpop.permute.xlu0 %2594
        %2597 = vset.pattern.permute.xlu0 1
        %2598 = vperm.xlu0 %2597, %v2060
        %v2599 = vpop.permute.xlu0 %2598
        %2601 = vset.pattern.permute.xlu0 1
        %2602 = vperm.xlu0 %2601, %v2062
        %v2603 = vpop.permute.xlu0 %2602
        %2605 = vset.pattern.permute.xlu0 1
        %2606 = vperm.xlu0 %2605, %v2064
        %v2607 = vpop.permute.xlu0 %2606
        %2609 = vset.pattern.permute.xlu0 1
        %2610 = vperm.xlu0 %2609, %v2066
        %v2611 = vpop.permute.xlu0 %2610
        %2613 = vset.pattern.permute.xlu0 1
        %2614 = vperm.xlu0 %2613, %v2068
        %v2615 = vpop.permute.xlu0 %2614
        %2617 = vset.pattern.permute.xlu0 1
        %2618 = vperm.xlu0 %2617, %v2070
        %v2619 = vpop.permute.xlu0 %2618
        %2621 = vset.pattern.permute.xlu0 1
        %2622 = vperm.xlu0 %2621, %v2072
        %v2623 = vpop.permute.xlu0 %2622
        %2625 = vset.pattern.permute.xlu0 1
        %2626 = vperm.xlu0 %2625, %v2074
        %v2627 = vpop.permute.xlu0 %2626
        %2629 = vset.pattern.permute.xlu0 1
        %2630 = vperm.xlu0 %2629, %v2076
        %v2631 = vpop.permute.xlu0 %2630
        %2633 = vset.pattern.permute.xlu0 1
        %2634 = vperm.xlu0 %2633, %v2078
        %v2635 = vpop.permute.xlu0 %2634
        %2637 = vset.pattern.permute.xlu0 1
        %2638 = vperm.xlu0 %2637, %v2080
        %v2639 = vpop.permute.xlu0 %2638
        %2641 = vset.pattern.permute.xlu0 1
        %2642 = vperm.xlu0 %2641, %v2082
        %v2643 = vpop.permute.xlu0 %2642
        %2645 = vset.pattern.permute.xlu0 1
        %2646 = vperm.xlu0 %2645, %v2084
        %v2647 = vpop.permute.xlu0 %2646
        %2649 = vset.pattern.permute.xlu0 1
        %2650 = vperm.xlu0 %2649, %v2086
        %v2651 = vpop.permute.xlu0 %2650
        %2653 = vset.pattern.permute.xlu0 1
        %2654 = vperm.xlu0 %2653, %v2088
        %v2655 = vpop.permute.xlu0 %2654
        %2657 = vset.pattern.permute.xlu0 1
        %2658 = vperm.xlu0 %2657, %v2090
        %v2659 = vpop.permute.xlu0 %2658
        %2661 = vset.pattern.permute.xlu0 1
        %2662 = vperm.xlu0 %2661, %v2092
        %v2663 = vpop.permute.xlu0 %2662
        %2665 = vset.pattern.permute.xlu0 1
        %2666 = vperm.xlu0 %2665, %v2094
        %v2667 = vpop.permute.xlu0 %2666
        %2669 = vset.pattern.permute.xlu0 1
        %2670 = vperm.xlu0 %2669, %v2096
        %v2671 = vpop.permute.xlu0 %2670
        %2673 = vset.pattern.permute.xlu0 1
        %2674 = vperm.xlu0 %2673, %v2098
        %v2675 = vpop.permute.xlu0 %2674
        %2677 = vset.pattern.permute.xlu0 1
        %2678 = vperm.xlu0 %2677, %v2100
        %v2679 = vpop.permute.xlu0 %2678
        %2681 = vset.pattern.permute.xlu0 1
        %2682 = vperm.xlu0 %2681, %v2102
        %v2683 = vpop.permute.xlu0 %2682
        %2685 = vset.pattern.permute.xlu0 1
        %2686 = vperm.xlu0 %2685, %v2104
        %v2687 = vpop.permute.xlu0 %2686
        %2689 = vset.pattern.permute.xlu0 1
        %2690 = vperm.xlu0 %2689, %v2106
        %v2691 = vpop.permute.xlu0 %2690
        %2693 = vset.pattern.permute.xlu0 1
        %2694 = vperm.xlu0 %2693, %v2108
        %v2695 = vpop.permute.xlu0 %2694
        %2697 = vset.pattern.permute.xlu0 1
        %2698 = vperm.xlu0 %2697, %v2110
        %v2699 = vpop.permute.xlu0 %2698
        %2701 = vset.pattern.permute.xlu0 1
        %2702 = vperm.xlu0 %2701, %v2112
        %v2703 = vpop.permute.xlu0 %2702
        %2705 = vset.pattern.permute.xlu0 1
        %2706 = vperm.xlu0 %2705, %v2114
        %v2707 = vpop.permute.xlu0 %2706
        %2709 = vset.pattern.permute.xlu0 1
        %2710 = vperm.xlu0 %2709, %v2116
        %v2711 = vpop.permute.xlu0 %2710
        %2713 = vset.pattern.permute.xlu0 1
        %2714 = vperm.xlu0 %2713, %v2118
        %v2715 = vpop.permute.xlu0 %2714
        %2717 = vset.pattern.permute.xlu0 1
        %2718 = vperm.xlu0 %2717, %v2120
        %v2719 = vpop.permute.xlu0 %2718
        %2721 = vset.pattern.permute.xlu0 1
        %2722 = vperm.xlu0 %2721, %v2122
        %v2723 = vpop.permute.xlu0 %2722
        %2725 = vset.pattern.permute.xlu0 1
        %2726 = vperm.xlu0 %2725, %v2124
        %v2727 = vpop.permute.xlu0 %2726
        %2729 = vset.pattern.permute.xlu0 1
        %2730 = vperm.xlu0 %2729, %v2126
        %v2731 = vpop.permute.xlu0 %2730
        %2733 = vset.pattern.permute.xlu0 1
        %2734 = vperm.xlu0 %2733, %v2128
        %v2735 = vpop.permute.xlu0 %2734
        %2737 = vset.pattern.permute.xlu0 1
        %2738 = vperm.xlu0 %2737, %v2130
        %v2739 = vpop.permute.xlu0 %2738
        %2741 = vset.pattern.permute.xlu0 1
        %2742 = vperm.xlu0 %2741, %v2132
        %v2743 = vpop.permute.xlu0 %2742
        %2745 = vset.pattern.permute.xlu0 1
        %2746 = vperm.xlu0 %2745, %v2134
        %v2747 = vpop.permute.xlu0 %2746
        %2749 = vset.pattern.permute.xlu0 1
        %2750 = vperm.xlu0 %2749, %v2136
        %v2751 = vpop.permute.xlu0 %2750
        %2753 = vset.pattern.permute.xlu0 1
        %2754 = vperm.xlu0 %2753, %v2138
        %v2755 = vpop.permute.xlu0 %2754
        %2757 = vset.pattern.permute.xlu0 1
        %2758 = vperm.xlu0 %2757, %v2140
        %v2759 = vpop.permute.xlu0 %2758
        %2761 = vset.pattern.permute.xlu0 1
        %2762 = vperm.xlu0 %2761, %v2142
        %v2763 = vpop.permute.xlu0 %2762
        %2765 = vset.pattern.permute.xlu0 1
        %2766 = vperm.xlu0 %2765, %v2144
        %v2767 = vpop.permute.xlu0 %2766
        %2769 = vset.pattern.permute.xlu0 1
        %2770 = vperm.xlu0 %2769, %v2146
        %v2771 = vpop.permute.xlu0 %2770
        %2773 = vset.pattern.permute.xlu0 1
        %2774 = vperm.xlu0 %2773, %v2148
        %v2775 = vpop.permute.xlu0 %2774
        %2777 = vset.pattern.permute.xlu0 1
        %2778 = vperm.xlu0 %2777, %v2150
        %v2779 = vpop.permute.xlu0 %2778
        %2781 = vset.pattern.permute.xlu0 1
        %2782 = vperm.xlu0 %2781, %v2152
        %v2783 = vpop.permute.xlu0 %2782
        %2785 = vset.pattern.permute.xlu0 1
        %2786 = vperm.xlu0 %2785, %v2154
        %v2787 = vpop.permute.xlu0 %2786
        %2789 = vset.pattern.permute.xlu0 1
        %2790 = vperm.xlu0 %2789, %v2156
        %v2791 = vpop.permute.xlu0 %2790
        %2793 = vset.pattern.permute.xlu0 1
        %2794 = vperm.xlu0 %2793, %v2158
        %v2795 = vpop.permute.xlu0 %2794
        %2797 = vset.pattern.permute.xlu0 1
        %2798 = vperm.xlu0 %2797, %v2160
        %v2799 = vpop.permute.xlu0 %2798
        %v2801 = vmul.f32 %v2547, %v1138
        %v2802 = vmul.f32 %v2551, %v1143
        %v2803 = vmul.f32 %v2555, %v1148
        %v2804 = vmul.f32 %v2559, %v1153
        %v2805 = vmul.f32 %v2563, %v1158
        %v2806 = vmul.f32 %v2567, %v1163
        %v2807 = vmul.f32 %v2571, %v1168
        %v2808 = vmul.f32 %v2575, %v1173
        %v2809 = vmul.f32 %v2579, %v1178
        %v2810 = vmul.f32 %v2583, %v1183
        %v2811 = vmul.f32 %v2587, %v1188
        %v2812 = vmul.f32 %v2591, %v1193
        %v2813 = vmul.f32 %v2595, %v1198
        %v2814 = vmul.f32 %v2599, %v1203
        %v2815 = vmul.f32 %v2603, %v1208
        %v2816 = vmul.f32 %v2607, %v1213
        %v2817 = vmul.f32 %v2611, %v1218
        %v2818 = vmul.f32 %v2615, %v1223
        %v2819 = vmul.f32 %v2619, %v1228
        %v2820 = vmul.f32 %v2623, %v1233
        %v2821 = vmul.f32 %v2627, %v1238
        %v2822 = vmul.f32 %v2631, %v1243
        %v2823 = vmul.f32 %v2635, %v1248
        %v2824 = vmul.f32 %v2639, %v1253
        %v2825 = vmul.f32 %v2643, %v1258
        %v2826 = vmul.f32 %v2647, %v1263
        %v2827 = vmul.f32 %v2651, %v1268
        %v2828 = vmul.f32 %v2655, %v1273
        %v2829 = vmul.f32 %v2659, %v1278
        %v2830 = vmul.f32 %v2663, %v1283
        %v2831 = vmul.f32 %v2667, %v1288
        %v2832 = vmul.f32 %v2671, %v1293
        %v2833 = vmul.f32 %v2675, %v1298
        %v2834 = vmul.f32 %v2679, %v1303
        %v2835 = vmul.f32 %v2683, %v1308
        %v2836 = vmul.f32 %v2687, %v1313
        %v2837 = vmul.f32 %v2691, %v1318
        %v2838 = vmul.f32 %v2695, %v1323
        %v2839 = vmul.f32 %v2699, %v1328
        %v2840 = vmul.f32 %v2703, %v1333
        %v2841 = vmul.f32 %v2707, %v1338
        %v2842 = vmul.f32 %v2711, %v1343
        %v2843 = vmul.f32 %v2715, %v1348
        %v2844 = vmul.f32 %v2719, %v1353
        %v2845 = vmul.f32 %v2723, %v1358
        %v2846 = vmul.f32 %v2727, %v1363
        %v2847 = vmul.f32 %v2731, %v1368
        %v2848 = vmul.f32 %v2735, %v1373
        %v2849 = vmul.f32 %v2739, %v1378
        %v2850 = vmul.f32 %v2743, %v1383
        %v2851 = vmul.f32 %v2747, %v1388
        %v2852 = vmul.f32 %v2751, %v1393
        %v2853 = vmul.f32 %v2755, %v1398
        %v2854 = vmul.f32 %v2759, %v1403
        %v2855 = vmul.f32 %v2763, %v1408
        %v2856 = vmul.f32 %v2767, %v1413
        %v2857 = vmul.f32 %v2771, %v1418
        %v2858 = vmul.f32 %v2775, %v1423
        %v2859 = vmul.f32 %v2779, %v1428
        %v2860 = vmul.f32 %v2783, %v1433
        %v2861 = vmul.f32 %v2787, %v1438
        %v2862 = vmul.f32 %v2791, %v1443
        %v2863 = vmul.f32 %v2795, %v1448
        %v2864 = vmul.f32 %v2799, %v1453
        %2929 = vrot.lane.b32.xlu0 %v2801, 96
        %v2930 = vpop.permute.xlu0 %2929
        %2931 = vrot.lane.b32.xlu0 %v2802, 96
        %v2932 = vpop.permute.xlu0 %2931
        %2933 = vrot.lane.b32.xlu0 %v2803, 96
        %v2934 = vpop.permute.xlu0 %2933
        %2935 = vrot.lane.b32.xlu0 %v2804, 96
        %v2936 = vpop.permute.xlu0 %2935
        %2937 = vrot.lane.b32.xlu0 %v2805, 96
        %v2938 = vpop.permute.xlu0 %2937
        %2939 = vrot.lane.b32.xlu0 %v2806, 96
        %v2940 = vpop.permute.xlu0 %2939
        %2941 = vrot.lane.b32.xlu0 %v2807, 96
        %v2942 = vpop.permute.xlu0 %2941
        %2943 = vrot.lane.b32.xlu0 %v2808, 96
        %v2944 = vpop.permute.xlu0 %2943
        %2945 = vrot.lane.b32.xlu0 %v2809, 96
        %v2946 = vpop.permute.xlu0 %2945
        %2947 = vrot.lane.b32.xlu0 %v2810, 96
        %v2948 = vpop.permute.xlu0 %2947
        %2949 = vrot.lane.b32.xlu0 %v2811, 96
        %v2950 = vpop.permute.xlu0 %2949
        %2951 = vrot.lane.b32.xlu0 %v2812, 96
        %v2952 = vpop.permute.xlu0 %2951
        %2953 = vrot.lane.b32.xlu0 %v2813, 96
        %v2954 = vpop.permute.xlu0 %2953
        %2955 = vrot.lane.b32.xlu0 %v2814, 96
        %v2956 = vpop.permute.xlu0 %2955
        %2957 = vrot.lane.b32.xlu0 %v2815, 96
        %v2958 = vpop.permute.xlu0 %2957
        %2959 = vrot.lane.b32.xlu0 %v2816, 96
        %v2960 = vpop.permute.xlu0 %2959
        %2961 = vrot.lane.b32.xlu0 %v2817, 96
        %v2962 = vpop.permute.xlu0 %2961
        %2963 = vrot.lane.b32.xlu0 %v2818, 96
        %v2964 = vpop.permute.xlu0 %2963
        %2965 = vrot.lane.b32.xlu0 %v2819, 96
        %v2966 = vpop.permute.xlu0 %2965
        %2967 = vrot.lane.b32.xlu0 %v2820, 96
        %v2968 = vpop.permute.xlu0 %2967
        %2969 = vrot.lane.b32.xlu0 %v2821, 96
        %v2970 = vpop.permute.xlu0 %2969
        %2971 = vrot.lane.b32.xlu0 %v2822, 96
        %v2972 = vpop.permute.xlu0 %2971
        %2973 = vrot.lane.b32.xlu0 %v2823, 96
        %v2974 = vpop.permute.xlu0 %2973
        %2975 = vrot.lane.b32.xlu0 %v2824, 96
        %v2976 = vpop.permute.xlu0 %2975
        %2977 = vrot.lane.b32.xlu0 %v2825, 96
        %v2978 = vpop.permute.xlu0 %2977
        %2979 = vrot.lane.b32.xlu0 %v2826, 96
        %v2980 = vpop.permute.xlu0 %2979
        %2981 = vrot.lane.b32.xlu0 %v2827, 96
        %v2982 = vpop.permute.xlu0 %2981
        %2983 = vrot.lane.b32.xlu0 %v2828, 96
        %v2984 = vpop.permute.xlu0 %2983
        %2985 = vrot.lane.b32.xlu0 %v2829, 96
        %v2986 = vpop.permute.xlu0 %2985
        %2987 = vrot.lane.b32.xlu0 %v2830, 96
        %v2988 = vpop.permute.xlu0 %2987
        %2989 = vrot.lane.b32.xlu0 %v2831, 96
        %v2990 = vpop.permute.xlu0 %2989
        %2991 = vrot.lane.b32.xlu0 %v2832, 96
        %v2992 = vpop.permute.xlu0 %2991
        %2993 = vrot.lane.b32.xlu0 %v2833, 96
        %v2994 = vpop.permute.xlu0 %2993
        %2995 = vrot.lane.b32.xlu0 %v2834, 96
        %v2996 = vpop.permute.xlu0 %2995
        %2997 = vrot.lane.b32.xlu0 %v2835, 96
        %v2998 = vpop.permute.xlu0 %2997
        %2999 = vrot.lane.b32.xlu0 %v2836, 96
        %v3000 = vpop.permute.xlu0 %2999
        %3001 = vrot.lane.b32.xlu0 %v2837, 96
        %v3002 = vpop.permute.xlu0 %3001
        %3003 = vrot.lane.b32.xlu0 %v2838, 96
        %v3004 = vpop.permute.xlu0 %3003
        %3005 = vrot.lane.b32.xlu0 %v2839, 96
        %v3006 = vpop.permute.xlu0 %3005
        %3007 = vrot.lane.b32.xlu0 %v2840, 96
        %v3008 = vpop.permute.xlu0 %3007
        %3009 = vrot.lane.b32.xlu0 %v2841, 96
        %v3010 = vpop.permute.xlu0 %3009
        %3011 = vrot.lane.b32.xlu0 %v2842, 96
        %v3012 = vpop.permute.xlu0 %3011
        %3013 = vrot.lane.b32.xlu0 %v2843, 96
        %v3014 = vpop.permute.xlu0 %3013
        %3015 = vrot.lane.b32.xlu0 %v2844, 96
        %v3016 = vpop.permute.xlu0 %3015
        %3017 = vrot.lane.b32.xlu0 %v2845, 96
        %v3018 = vpop.permute.xlu0 %3017
        %3019 = vrot.lane.b32.xlu0 %v2846, 96
        %v3020 = vpop.permute.xlu0 %3019
        %3021 = vrot.lane.b32.xlu0 %v2847, 96
        %v3022 = vpop.permute.xlu0 %3021
        %3023 = vrot.lane.b32.xlu0 %v2848, 96
        %v3024 = vpop.permute.xlu0 %3023
        %3025 = vrot.lane.b32.xlu0 %v2849, 96
        %v3026 = vpop.permute.xlu0 %3025
        %3027 = vrot.lane.b32.xlu0 %v2850, 96
        %v3028 = vpop.permute.xlu0 %3027
        %3029 = vrot.lane.b32.xlu0 %v2851, 96
        %v3030 = vpop.permute.xlu0 %3029
        %3031 = vrot.lane.b32.xlu0 %v2852, 96
        %v3032 = vpop.permute.xlu0 %3031
        %3033 = vrot.lane.b32.xlu0 %v2853, 96
        %v3034 = vpop.permute.xlu0 %3033
        %3035 = vrot.lane.b32.xlu0 %v2854, 96
        %v3036 = vpop.permute.xlu0 %3035
        %3037 = vrot.lane.b32.xlu0 %v2855, 96
        %v3038 = vpop.permute.xlu0 %3037
        %3039 = vrot.lane.b32.xlu0 %v2856, 96
        %v3040 = vpop.permute.xlu0 %3039
        %3041 = vrot.lane.b32.xlu0 %v2857, 96
        %v3042 = vpop.permute.xlu0 %3041
        %3043 = vrot.lane.b32.xlu0 %v2858, 96
        %v3044 = vpop.permute.xlu0 %3043
        %3045 = vrot.lane.b32.xlu0 %v2859, 96
        %v3046 = vpop.permute.xlu0 %3045
        %3047 = vrot.lane.b32.xlu0 %v2860, 96
        %v3048 = vpop.permute.xlu0 %3047
        %3049 = vrot.lane.b32.xlu0 %v2861, 96
        %v3050 = vpop.permute.xlu0 %3049
        %3051 = vrot.lane.b32.xlu0 %v2862, 96
        %v3052 = vpop.permute.xlu0 %3051
        %3053 = vrot.lane.b32.xlu0 %v2863, 96
        %v3054 = vpop.permute.xlu0 %3053
        %3055 = vrot.lane.b32.xlu0 %v2864, 96
        %v3056 = vpop.permute.xlu0 %3055
        %v3121 = vadd.f32 %v2481, %v2930
        %v3122 = vadd.f32 %v2482, %v2932
        %v3123 = vadd.f32 %v2483, %v2934
        %v3124 = vadd.f32 %v2484, %v2936
        %v3125 = vadd.f32 %v2485, %v2938
        %v3126 = vadd.f32 %v2486, %v2940
        %v3127 = vadd.f32 %v2487, %v2942
        %v3128 = vadd.f32 %v2488, %v2944
        %v3129 = vadd.f32 %v2489, %v2946
        %v3130 = vadd.f32 %v2490, %v2948
        %v3131 = vadd.f32 %v2491, %v2950
        %v3132 = vadd.f32 %v2492, %v2952
        %v3133 = vadd.f32 %v2493, %v2954
        %v3134 = vadd.f32 %v2494, %v2956
        %v3135 = vadd.f32 %v2495, %v2958
        %v3136 = vadd.f32 %v2496, %v2960
        %v3137 = vadd.f32 %v2497, %v2962
        %v3138 = vadd.f32 %v2498, %v2964
        %v3139 = vadd.f32 %v2499, %v2966
        %v3140 = vadd.f32 %v2500, %v2968
        %v3141 = vadd.f32 %v2501, %v2970
        %v3142 = vadd.f32 %v2502, %v2972
        %v3143 = vadd.f32 %v2503, %v2974
        %v3144 = vadd.f32 %v2504, %v2976
        %v3145 = vadd.f32 %v2505, %v2978
        %v3146 = vadd.f32 %v2506, %v2980
        %v3147 = vadd.f32 %v2507, %v2982
        %v3148 = vadd.f32 %v2508, %v2984
        %v3149 = vadd.f32 %v2509, %v2986
        %v3150 = vadd.f32 %v2510, %v2988
        %v3151 = vadd.f32 %v2511, %v2990
        %v3152 = vadd.f32 %v2512, %v2992
        %v3153 = vadd.f32 %v2513, %v2994
        %v3154 = vadd.f32 %v2514, %v2996
        %v3155 = vadd.f32 %v2515, %v2998
        %v3156 = vadd.f32 %v2516, %v3000
        %v3157 = vadd.f32 %v2517, %v3002
        %v3158 = vadd.f32 %v2518, %v3004
        %v3159 = vadd.f32 %v2519, %v3006
        %v3160 = vadd.f32 %v2520, %v3008
        %v3161 = vadd.f32 %v2521, %v3010
        %v3162 = vadd.f32 %v2522, %v3012
        %v3163 = vadd.f32 %v2523, %v3014
        %v3164 = vadd.f32 %v2524, %v3016
        %v3165 = vadd.f32 %v2525, %v3018
        %v3166 = vadd.f32 %v2526, %v3020
        %v3167 = vadd.f32 %v2527, %v3022
        %v3168 = vadd.f32 %v2528, %v3024
        %v3169 = vadd.f32 %v2529, %v3026
        %v3170 = vadd.f32 %v2530, %v3028
        %v3171 = vadd.f32 %v2531, %v3030
        %v3172 = vadd.f32 %v2532, %v3032
        %v3173 = vadd.f32 %v2533, %v3034
        %v3174 = vadd.f32 %v2534, %v3036
        %v3175 = vadd.f32 %v2535, %v3038
        %v3176 = vadd.f32 %v2536, %v3040
        %v3177 = vadd.f32 %v2537, %v3042
        %v3178 = vadd.f32 %v2538, %v3044
        %v3179 = vadd.f32 %v2539, %v3046
        %v3180 = vadd.f32 %v2540, %v3048
        %v3181 = vadd.f32 %v2541, %v3050
        %v3182 = vadd.f32 %v2542, %v3052
        %v3183 = vadd.f32 %v2543, %v3054
        %v3184 = vadd.f32 %v2544, %v3056
        %3185 = vset.pattern.permute.xlu0 2
        %3186 = vperm.xlu0 %3185, %v2034
        %v3187 = vpop.permute.xlu0 %3186
        %3189 = vset.pattern.permute.xlu0 2
        %3190 = vperm.xlu0 %3189, %v2036
        %v3191 = vpop.permute.xlu0 %3190
        %3193 = vset.pattern.permute.xlu0 2
        %3194 = vperm.xlu0 %3193, %v2038
        %v3195 = vpop.permute.xlu0 %3194
        %3197 = vset.pattern.permute.xlu0 2
        %3198 = vperm.xlu0 %3197, %v2040
        %v3199 = vpop.permute.xlu0 %3198
        %3201 = vset.pattern.permute.xlu0 2
        %3202 = vperm.xlu0 %3201, %v2042
        %v3203 = vpop.permute.xlu0 %3202
        %3205 = vset.pattern.permute.xlu0 2
        %3206 = vperm.xlu0 %3205, %v2044
        %v3207 = vpop.permute.xlu0 %3206
        %3209 = vset.pattern.permute.xlu0 2
        %3210 = vperm.xlu0 %3209, %v2046
        %v3211 = vpop.permute.xlu0 %3210
        %3213 = vset.pattern.permute.xlu0 2
        %3214 = vperm.xlu0 %3213, %v2048
        %v3215 = vpop.permute.xlu0 %3214
        %3217 = vset.pattern.permute.xlu0 2
        %3218 = vperm.xlu0 %3217, %v2050
        %v3219 = vpop.permute.xlu0 %3218
        %3221 = vset.pattern.permute.xlu0 2
        %3222 = vperm.xlu0 %3221, %v2052
        %v3223 = vpop.permute.xlu0 %3222
        %3225 = vset.pattern.permute.xlu0 2
        %3226 = vperm.xlu0 %3225, %v2054
        %v3227 = vpop.permute.xlu0 %3226
        %3229 = vset.pattern.permute.xlu0 2
        %3230 = vperm.xlu0 %3229, %v2056
        %v3231 = vpop.permute.xlu0 %3230
        %3233 = vset.pattern.permute.xlu0 2
        %3234 = vperm.xlu0 %3233, %v2058
        %v3235 = vpop.permute.xlu0 %3234
        %3237 = vset.pattern.permute.xlu0 2
        %3238 = vperm.xlu0 %3237, %v2060
        %v3239 = vpop.permute.xlu0 %3238
        %3241 = vset.pattern.permute.xlu0 2
        %3242 = vperm.xlu0 %3241, %v2062
        %v3243 = vpop.permute.xlu0 %3242
        %3245 = vset.pattern.permute.xlu0 2
        %3246 = vperm.xlu0 %3245, %v2064
        %v3247 = vpop.permute.xlu0 %3246
        %3249 = vset.pattern.permute.xlu0 2
        %3250 = vperm.xlu0 %3249, %v2066
        %v3251 = vpop.permute.xlu0 %3250
        %3253 = vset.pattern.permute.xlu0 2
        %3254 = vperm.xlu0 %3253, %v2068
        %v3255 = vpop.permute.xlu0 %3254
        %3257 = vset.pattern.permute.xlu0 2
        %3258 = vperm.xlu0 %3257, %v2070
        %v3259 = vpop.permute.xlu0 %3258
        %3261 = vset.pattern.permute.xlu0 2
        %3262 = vperm.xlu0 %3261, %v2072
        %v3263 = vpop.permute.xlu0 %3262
        %3265 = vset.pattern.permute.xlu0 2
        %3266 = vperm.xlu0 %3265, %v2074
        %v3267 = vpop.permute.xlu0 %3266
        %3269 = vset.pattern.permute.xlu0 2
        %3270 = vperm.xlu0 %3269, %v2076
        %v3271 = vpop.permute.xlu0 %3270
        %3273 = vset.pattern.permute.xlu0 2
        %3274 = vperm.xlu0 %3273, %v2078
        %v3275 = vpop.permute.xlu0 %3274
        %3277 = vset.pattern.permute.xlu0 2
        %3278 = vperm.xlu0 %3277, %v2080
        %v3279 = vpop.permute.xlu0 %3278
        %3281 = vset.pattern.permute.xlu0 2
        %3282 = vperm.xlu0 %3281, %v2082
        %v3283 = vpop.permute.xlu0 %3282
        %3285 = vset.pattern.permute.xlu0 2
        %3286 = vperm.xlu0 %3285, %v2084
        %v3287 = vpop.permute.xlu0 %3286
        %3289 = vset.pattern.permute.xlu0 2
        %3290 = vperm.xlu0 %3289, %v2086
        %v3291 = vpop.permute.xlu0 %3290
        %3293 = vset.pattern.permute.xlu0 2
        %3294 = vperm.xlu0 %3293, %v2088
        %v3295 = vpop.permute.xlu0 %3294
        %3297 = vset.pattern.permute.xlu0 2
        %3298 = vperm.xlu0 %3297, %v2090
        %v3299 = vpop.permute.xlu0 %3298
        %3301 = vset.pattern.permute.xlu0 2
        %3302 = vperm.xlu0 %3301, %v2092
        %v3303 = vpop.permute.xlu0 %3302
        %3305 = vset.pattern.permute.xlu0 2
        %3306 = vperm.xlu0 %3305, %v2094
        %v3307 = vpop.permute.xlu0 %3306
        %3309 = vset.pattern.permute.xlu0 2
        %3310 = vperm.xlu0 %3309, %v2096
        %v3311 = vpop.permute.xlu0 %3310
        %3313 = vset.pattern.permute.xlu0 2
        %3314 = vperm.xlu0 %3313, %v2098
        %v3315 = vpop.permute.xlu0 %3314
        %3317 = vset.pattern.permute.xlu0 2
        %3318 = vperm.xlu0 %3317, %v2100
        %v3319 = vpop.permute.xlu0 %3318
        %3321 = vset.pattern.permute.xlu0 2
        %3322 = vperm.xlu0 %3321, %v2102
        %v3323 = vpop.permute.xlu0 %3322
        %3325 = vset.pattern.permute.xlu0 2
        %3326 = vperm.xlu0 %3325, %v2104
        %v3327 = vpop.permute.xlu0 %3326
        %3329 = vset.pattern.permute.xlu0 2
        %3330 = vperm.xlu0 %3329, %v2106
        %v3331 = vpop.permute.xlu0 %3330
        %3333 = vset.pattern.permute.xlu0 2
        %3334 = vperm.xlu0 %3333, %v2108
        %v3335 = vpop.permute.xlu0 %3334
        %3337 = vset.pattern.permute.xlu0 2
        %3338 = vperm.xlu0 %3337, %v2110
        %v3339 = vpop.permute.xlu0 %3338
        %3341 = vset.pattern.permute.xlu0 2
        %3342 = vperm.xlu0 %3341, %v2112
        %v3343 = vpop.permute.xlu0 %3342
        %3345 = vset.pattern.permute.xlu0 2
        %3346 = vperm.xlu0 %3345, %v2114
        %v3347 = vpop.permute.xlu0 %3346
        %3349 = vset.pattern.permute.xlu0 2
        %3350 = vperm.xlu0 %3349, %v2116
        %v3351 = vpop.permute.xlu0 %3350
        %3353 = vset.pattern.permute.xlu0 2
        %3354 = vperm.xlu0 %3353, %v2118
        %v3355 = vpop.permute.xlu0 %3354
        %3357 = vset.pattern.permute.xlu0 2
        %3358 = vperm.xlu0 %3357, %v2120
        %v3359 = vpop.permute.xlu0 %3358
        %3361 = vset.pattern.permute.xlu0 2
        %3362 = vperm.xlu0 %3361, %v2122
        %v3363 = vpop.permute.xlu0 %3362
        %3365 = vset.pattern.permute.xlu0 2
        %3366 = vperm.xlu0 %3365, %v2124
        %v3367 = vpop.permute.xlu0 %3366
        %3369 = vset.pattern.permute.xlu0 2
        %3370 = vperm.xlu0 %3369, %v2126
        %v3371 = vpop.permute.xlu0 %3370
        %3373 = vset.pattern.permute.xlu0 2
        %3374 = vperm.xlu0 %3373, %v2128
        %v3375 = vpop.permute.xlu0 %3374
        %3377 = vset.pattern.permute.xlu0 2
        %3378 = vperm.xlu0 %3377, %v2130
        %v3379 = vpop.permute.xlu0 %3378
        %3381 = vset.pattern.permute.xlu0 2
        %3382 = vperm.xlu0 %3381, %v2132
        %v3383 = vpop.permute.xlu0 %3382
        %3385 = vset.pattern.permute.xlu0 2
        %3386 = vperm.xlu0 %3385, %v2134
        %v3387 = vpop.permute.xlu0 %3386
        %3389 = vset.pattern.permute.xlu0 2
        %3390 = vperm.xlu0 %3389, %v2136
        %v3391 = vpop.permute.xlu0 %3390
        %3393 = vset.pattern.permute.xlu0 2
        %3394 = vperm.xlu0 %3393, %v2138
        %v3395 = vpop.permute.xlu0 %3394
        %3397 = vset.pattern.permute.xlu0 2
        %3398 = vperm.xlu0 %3397, %v2140
        %v3399 = vpop.permute.xlu0 %3398
        %3401 = vset.pattern.permute.xlu0 2
        %3402 = vperm.xlu0 %3401, %v2142
        %v3403 = vpop.permute.xlu0 %3402
        %3405 = vset.pattern.permute.xlu0 2
        %3406 = vperm.xlu0 %3405, %v2144
        %v3407 = vpop.permute.xlu0 %3406
        %3409 = vset.pattern.permute.xlu0 2
        %3410 = vperm.xlu0 %3409, %v2146
        %v3411 = vpop.permute.xlu0 %3410
        %3413 = vset.pattern.permute.xlu0 2
        %3414 = vperm.xlu0 %3413, %v2148
        %v3415 = vpop.permute.xlu0 %3414
        %3417 = vset.pattern.permute.xlu0 2
        %3418 = vperm.xlu0 %3417, %v2150
        %v3419 = vpop.permute.xlu0 %3418
        %3421 = vset.pattern.permute.xlu0 2
        %3422 = vperm.xlu0 %3421, %v2152
        %v3423 = vpop.permute.xlu0 %3422
        %3425 = vset.pattern.permute.xlu0 2
        %3426 = vperm.xlu0 %3425, %v2154
        %v3427 = vpop.permute.xlu0 %3426
        %3429 = vset.pattern.permute.xlu0 2
        %3430 = vperm.xlu0 %3429, %v2156
        %v3431 = vpop.permute.xlu0 %3430
        %3433 = vset.pattern.permute.xlu0 2
        %3434 = vperm.xlu0 %3433, %v2158
        %v3435 = vpop.permute.xlu0 %3434
        %3437 = vset.pattern.permute.xlu0 2
        %3438 = vperm.xlu0 %3437, %v2160
        %v3439 = vpop.permute.xlu0 %3438
        %v3441 = vmul.f32 %v3187, %v1138
        %v3442 = vmul.f32 %v3191, %v1143
        %v3443 = vmul.f32 %v3195, %v1148
        %v3444 = vmul.f32 %v3199, %v1153
        %v3445 = vmul.f32 %v3203, %v1158
        %v3446 = vmul.f32 %v3207, %v1163
        %v3447 = vmul.f32 %v3211, %v1168
        %v3448 = vmul.f32 %v3215, %v1173
        %v3449 = vmul.f32 %v3219, %v1178
        %v3450 = vmul.f32 %v3223, %v1183
        %v3451 = vmul.f32 %v3227, %v1188
        %v3452 = vmul.f32 %v3231, %v1193
        %v3453 = vmul.f32 %v3235, %v1198
        %v3454 = vmul.f32 %v3239, %v1203
        %v3455 = vmul.f32 %v3243, %v1208
        %v3456 = vmul.f32 %v3247, %v1213
        %v3457 = vmul.f32 %v3251, %v1218
        %v3458 = vmul.f32 %v3255, %v1223
        %v3459 = vmul.f32 %v3259, %v1228
        %v3460 = vmul.f32 %v3263, %v1233
        %v3461 = vmul.f32 %v3267, %v1238
        %v3462 = vmul.f32 %v3271, %v1243
        %v3463 = vmul.f32 %v3275, %v1248
        %v3464 = vmul.f32 %v3279, %v1253
        %v3465 = vmul.f32 %v3283, %v1258
        %v3466 = vmul.f32 %v3287, %v1263
        %v3467 = vmul.f32 %v3291, %v1268
        %v3468 = vmul.f32 %v3295, %v1273
        %v3469 = vmul.f32 %v3299, %v1278
        %v3470 = vmul.f32 %v3303, %v1283
        %v3471 = vmul.f32 %v3307, %v1288
        %v3472 = vmul.f32 %v3311, %v1293
        %v3473 = vmul.f32 %v3315, %v1298
        %v3474 = vmul.f32 %v3319, %v1303
        %v3475 = vmul.f32 %v3323, %v1308
        %v3476 = vmul.f32 %v3327, %v1313
        %v3477 = vmul.f32 %v3331, %v1318
        %v3478 = vmul.f32 %v3335, %v1323
        %v3479 = vmul.f32 %v3339, %v1328
        %v3480 = vmul.f32 %v3343, %v1333
        %v3481 = vmul.f32 %v3347, %v1338
        %v3482 = vmul.f32 %v3351, %v1343
        %v3483 = vmul.f32 %v3355, %v1348
        %v3484 = vmul.f32 %v3359, %v1353
        %v3485 = vmul.f32 %v3363, %v1358
        %v3486 = vmul.f32 %v3367, %v1363
        %v3487 = vmul.f32 %v3371, %v1368
        %v3488 = vmul.f32 %v3375, %v1373
        %v3489 = vmul.f32 %v3379, %v1378
        %v3490 = vmul.f32 %v3383, %v1383
        %v3491 = vmul.f32 %v3387, %v1388
        %v3492 = vmul.f32 %v3391, %v1393
        %v3493 = vmul.f32 %v3395, %v1398
        %v3494 = vmul.f32 %v3399, %v1403
        %v3495 = vmul.f32 %v3403, %v1408
        %v3496 = vmul.f32 %v3407, %v1413
        %v3497 = vmul.f32 %v3411, %v1418
        %v3498 = vmul.f32 %v3415, %v1423
        %v3499 = vmul.f32 %v3419, %v1428
        %v3500 = vmul.f32 %v3423, %v1433
        %v3501 = vmul.f32 %v3427, %v1438
        %v3502 = vmul.f32 %v3431, %v1443
        %v3503 = vmul.f32 %v3435, %v1448
        %v3504 = vmul.f32 %v3439, %v1453
        %3569 = vrot.lane.b32.xlu0 %v3441, 64
        %v3570 = vpop.permute.xlu0 %3569
        %3571 = vrot.lane.b32.xlu0 %v3442, 64
        %v3572 = vpop.permute.xlu0 %3571
        %3573 = vrot.lane.b32.xlu0 %v3443, 64
        %v3574 = vpop.permute.xlu0 %3573
        %3575 = vrot.lane.b32.xlu0 %v3444, 64
        %v3576 = vpop.permute.xlu0 %3575
        %3577 = vrot.lane.b32.xlu0 %v3445, 64
        %v3578 = vpop.permute.xlu0 %3577
        %3579 = vrot.lane.b32.xlu0 %v3446, 64
        %v3580 = vpop.permute.xlu0 %3579
        %3581 = vrot.lane.b32.xlu0 %v3447, 64
        %v3582 = vpop.permute.xlu0 %3581
        %3583 = vrot.lane.b32.xlu0 %v3448, 64
        %v3584 = vpop.permute.xlu0 %3583
        %3585 = vrot.lane.b32.xlu0 %v3449, 64
        %v3586 = vpop.permute.xlu0 %3585
        %3587 = vrot.lane.b32.xlu0 %v3450, 64
        %v3588 = vpop.permute.xlu0 %3587
        %3589 = vrot.lane.b32.xlu0 %v3451, 64
        %v3590 = vpop.permute.xlu0 %3589
        %3591 = vrot.lane.b32.xlu0 %v3452, 64
        %v3592 = vpop.permute.xlu0 %3591
        %3593 = vrot.lane.b32.xlu0 %v3453, 64
        %v3594 = vpop.permute.xlu0 %3593
        %3595 = vrot.lane.b32.xlu0 %v3454, 64
        %v3596 = vpop.permute.xlu0 %3595
        %3597 = vrot.lane.b32.xlu0 %v3455, 64
        %v3598 = vpop.permute.xlu0 %3597
        %3599 = vrot.lane.b32.xlu0 %v3456, 64
        %v3600 = vpop.permute.xlu0 %3599
        %3601 = vrot.lane.b32.xlu0 %v3457, 64
        %v3602 = vpop.permute.xlu0 %3601
        %3603 = vrot.lane.b32.xlu0 %v3458, 64
        %v3604 = vpop.permute.xlu0 %3603
        %3605 = vrot.lane.b32.xlu0 %v3459, 64
        %v3606 = vpop.permute.xlu0 %3605
        %3607 = vrot.lane.b32.xlu0 %v3460, 64
        %v3608 = vpop.permute.xlu0 %3607
        %3609 = vrot.lane.b32.xlu0 %v3461, 64
        %v3610 = vpop.permute.xlu0 %3609
        %3611 = vrot.lane.b32.xlu0 %v3462, 64
        %v3612 = vpop.permute.xlu0 %3611
        %3613 = vrot.lane.b32.xlu0 %v3463, 64
        %v3614 = vpop.permute.xlu0 %3613
        %3615 = vrot.lane.b32.xlu0 %v3464, 64
        %v3616 = vpop.permute.xlu0 %3615
        %3617 = vrot.lane.b32.xlu0 %v3465, 64
        %v3618 = vpop.permute.xlu0 %3617
        %3619 = vrot.lane.b32.xlu0 %v3466, 64
        %v3620 = vpop.permute.xlu0 %3619
        %3621 = vrot.lane.b32.xlu0 %v3467, 64
        %v3622 = vpop.permute.xlu0 %3621
        %3623 = vrot.lane.b32.xlu0 %v3468, 64
        %v3624 = vpop.permute.xlu0 %3623
        %3625 = vrot.lane.b32.xlu0 %v3469, 64
        %v3626 = vpop.permute.xlu0 %3625
        %3627 = vrot.lane.b32.xlu0 %v3470, 64
        %v3628 = vpop.permute.xlu0 %3627
        %3629 = vrot.lane.b32.xlu0 %v3471, 64
        %v3630 = vpop.permute.xlu0 %3629
        %3631 = vrot.lane.b32.xlu0 %v3472, 64
        %v3632 = vpop.permute.xlu0 %3631
        %3633 = vrot.lane.b32.xlu0 %v3473, 64
        %v3634 = vpop.permute.xlu0 %3633
        %3635 = vrot.lane.b32.xlu0 %v3474, 64
        %v3636 = vpop.permute.xlu0 %3635
        %3637 = vrot.lane.b32.xlu0 %v3475, 64
        %v3638 = vpop.permute.xlu0 %3637
        %3639 = vrot.lane.b32.xlu0 %v3476, 64
        %v3640 = vpop.permute.xlu0 %3639
        %3641 = vrot.lane.b32.xlu0 %v3477, 64
        %v3642 = vpop.permute.xlu0 %3641
        %3643 = vrot.lane.b32.xlu0 %v3478, 64
        %v3644 = vpop.permute.xlu0 %3643
        %3645 = vrot.lane.b32.xlu0 %v3479, 64
        %v3646 = vpop.permute.xlu0 %3645
        %3647 = vrot.lane.b32.xlu0 %v3480, 64
        %v3648 = vpop.permute.xlu0 %3647
        %3649 = vrot.lane.b32.xlu0 %v3481, 64
        %v3650 = vpop.permute.xlu0 %3649
        %3651 = vrot.lane.b32.xlu0 %v3482, 64
        %v3652 = vpop.permute.xlu0 %3651
        %3653 = vrot.lane.b32.xlu0 %v3483, 64
        %v3654 = vpop.permute.xlu0 %3653
        %3655 = vrot.lane.b32.xlu0 %v3484, 64
        %v3656 = vpop.permute.xlu0 %3655
        %3657 = vrot.lane.b32.xlu0 %v3485, 64
        %v3658 = vpop.permute.xlu0 %3657
        %3659 = vrot.lane.b32.xlu0 %v3486, 64
        %v3660 = vpop.permute.xlu0 %3659
        %3661 = vrot.lane.b32.xlu0 %v3487, 64
        %v3662 = vpop.permute.xlu0 %3661
        %3663 = vrot.lane.b32.xlu0 %v3488, 64
        %v3664 = vpop.permute.xlu0 %3663
        %3665 = vrot.lane.b32.xlu0 %v3489, 64
        %v3666 = vpop.permute.xlu0 %3665
        %3667 = vrot.lane.b32.xlu0 %v3490, 64
        %v3668 = vpop.permute.xlu0 %3667
        %3669 = vrot.lane.b32.xlu0 %v3491, 64
        %v3670 = vpop.permute.xlu0 %3669
        %3671 = vrot.lane.b32.xlu0 %v3492, 64
        %v3672 = vpop.permute.xlu0 %3671
        %3673 = vrot.lane.b32.xlu0 %v3493, 64
        %v3674 = vpop.permute.xlu0 %3673
        %3675 = vrot.lane.b32.xlu0 %v3494, 64
        %v3676 = vpop.permute.xlu0 %3675
        %3677 = vrot.lane.b32.xlu0 %v3495, 64
        %v3678 = vpop.permute.xlu0 %3677
        %3679 = vrot.lane.b32.xlu0 %v3496, 64
        %v3680 = vpop.permute.xlu0 %3679
        %3681 = vrot.lane.b32.xlu0 %v3497, 64
        %v3682 = vpop.permute.xlu0 %3681
        %3683 = vrot.lane.b32.xlu0 %v3498, 64
        %v3684 = vpop.permute.xlu0 %3683
        %3685 = vrot.lane.b32.xlu0 %v3499, 64
        %v3686 = vpop.permute.xlu0 %3685
        %3687 = vrot.lane.b32.xlu0 %v3500, 64
        %v3688 = vpop.permute.xlu0 %3687
        %3689 = vrot.lane.b32.xlu0 %v3501, 64
        %v3690 = vpop.permute.xlu0 %3689
        %3691 = vrot.lane.b32.xlu0 %v3502, 64
        %v3692 = vpop.permute.xlu0 %3691
        %3693 = vrot.lane.b32.xlu0 %v3503, 64
        %v3694 = vpop.permute.xlu0 %3693
        %3695 = vrot.lane.b32.xlu0 %v3504, 64
        %v3696 = vpop.permute.xlu0 %3695
        %v3761 = vadd.f32 %v3121, %v3570
        %v3762 = vadd.f32 %v3122, %v3572
        %v3763 = vadd.f32 %v3123, %v3574
        %v3764 = vadd.f32 %v3124, %v3576
        %v3765 = vadd.f32 %v3125, %v3578
        %v3766 = vadd.f32 %v3126, %v3580
        %v3767 = vadd.f32 %v3127, %v3582
        %v3768 = vadd.f32 %v3128, %v3584
        %v3769 = vadd.f32 %v3129, %v3586
        %v3770 = vadd.f32 %v3130, %v3588
        %v3771 = vadd.f32 %v3131, %v3590
        %v3772 = vadd.f32 %v3132, %v3592
        %v3773 = vadd.f32 %v3133, %v3594
        %v3774 = vadd.f32 %v3134, %v3596
        %v3775 = vadd.f32 %v3135, %v3598
        %v3776 = vadd.f32 %v3136, %v3600
        %v3777 = vadd.f32 %v3137, %v3602
        %v3778 = vadd.f32 %v3138, %v3604
        %v3779 = vadd.f32 %v3139, %v3606
        %v3780 = vadd.f32 %v3140, %v3608
        %v3781 = vadd.f32 %v3141, %v3610
        %v3782 = vadd.f32 %v3142, %v3612
        %v3783 = vadd.f32 %v3143, %v3614
        %v3784 = vadd.f32 %v3144, %v3616
        %v3785 = vadd.f32 %v3145, %v3618
        %v3786 = vadd.f32 %v3146, %v3620
        %v3787 = vadd.f32 %v3147, %v3622
        %v3788 = vadd.f32 %v3148, %v3624
        %v3789 = vadd.f32 %v3149, %v3626
        %v3790 = vadd.f32 %v3150, %v3628
        %v3791 = vadd.f32 %v3151, %v3630
        %v3792 = vadd.f32 %v3152, %v3632
        %v3793 = vadd.f32 %v3153, %v3634
        %v3794 = vadd.f32 %v3154, %v3636
        %v3795 = vadd.f32 %v3155, %v3638
        %v3796 = vadd.f32 %v3156, %v3640
        %v3797 = vadd.f32 %v3157, %v3642
        %v3798 = vadd.f32 %v3158, %v3644
        %v3799 = vadd.f32 %v3159, %v3646
        %v3800 = vadd.f32 %v3160, %v3648
        %v3801 = vadd.f32 %v3161, %v3650
        %v3802 = vadd.f32 %v3162, %v3652
        %v3803 = vadd.f32 %v3163, %v3654
        %v3804 = vadd.f32 %v3164, %v3656
        %v3805 = vadd.f32 %v3165, %v3658
        %v3806 = vadd.f32 %v3166, %v3660
        %v3807 = vadd.f32 %v3167, %v3662
        %v3808 = vadd.f32 %v3168, %v3664
        %v3809 = vadd.f32 %v3169, %v3666
        %v3810 = vadd.f32 %v3170, %v3668
        %v3811 = vadd.f32 %v3171, %v3670
        %v3812 = vadd.f32 %v3172, %v3672
        %v3813 = vadd.f32 %v3173, %v3674
        %v3814 = vadd.f32 %v3174, %v3676
        %v3815 = vadd.f32 %v3175, %v3678
        %v3816 = vadd.f32 %v3176, %v3680
        %v3817 = vadd.f32 %v3177, %v3682
        %v3818 = vadd.f32 %v3178, %v3684
        %v3819 = vadd.f32 %v3179, %v3686
        %v3820 = vadd.f32 %v3180, %v3688
        %v3821 = vadd.f32 %v3181, %v3690
        %v3822 = vadd.f32 %v3182, %v3692
        %v3823 = vadd.f32 %v3183, %v3694
        %v3824 = vadd.f32 %v3184, %v3696
        %3825 = vset.pattern.permute.xlu0 3
        %3826 = vperm.xlu0 %3825, %v2034
        %v3827 = vpop.permute.xlu0 %3826
        %3829 = vset.pattern.permute.xlu0 3
        %3830 = vperm.xlu0 %3829, %v2036
        %v3831 = vpop.permute.xlu0 %3830
        %3833 = vset.pattern.permute.xlu0 3
        %3834 = vperm.xlu0 %3833, %v2038
        %v3835 = vpop.permute.xlu0 %3834
        %3837 = vset.pattern.permute.xlu0 3
        %3838 = vperm.xlu0 %3837, %v2040
        %v3839 = vpop.permute.xlu0 %3838
        %3841 = vset.pattern.permute.xlu0 3
        %3842 = vperm.xlu0 %3841, %v2042
        %v3843 = vpop.permute.xlu0 %3842
        %3845 = vset.pattern.permute.xlu0 3
        %3846 = vperm.xlu0 %3845, %v2044
        %v3847 = vpop.permute.xlu0 %3846
        %3849 = vset.pattern.permute.xlu0 3
        %3850 = vperm.xlu0 %3849, %v2046
        %v3851 = vpop.permute.xlu0 %3850
        %3853 = vset.pattern.permute.xlu0 3
        %3854 = vperm.xlu0 %3853, %v2048
        %v3855 = vpop.permute.xlu0 %3854
        %3857 = vset.pattern.permute.xlu0 3
        %3858 = vperm.xlu0 %3857, %v2050
        %v3859 = vpop.permute.xlu0 %3858
        %3861 = vset.pattern.permute.xlu0 3
        %3862 = vperm.xlu0 %3861, %v2052
        %v3863 = vpop.permute.xlu0 %3862
        %3865 = vset.pattern.permute.xlu0 3
        %3866 = vperm.xlu0 %3865, %v2054
        %v3867 = vpop.permute.xlu0 %3866
        %3869 = vset.pattern.permute.xlu0 3
        %3870 = vperm.xlu0 %3869, %v2056
        %v3871 = vpop.permute.xlu0 %3870
        %3873 = vset.pattern.permute.xlu0 3
        %3874 = vperm.xlu0 %3873, %v2058
        %v3875 = vpop.permute.xlu0 %3874
        %3877 = vset.pattern.permute.xlu0 3
        %3878 = vperm.xlu0 %3877, %v2060
        %v3879 = vpop.permute.xlu0 %3878
        %3881 = vset.pattern.permute.xlu0 3
        %3882 = vperm.xlu0 %3881, %v2062
        %v3883 = vpop.permute.xlu0 %3882
        %3885 = vset.pattern.permute.xlu0 3
        %3886 = vperm.xlu0 %3885, %v2064
        %v3887 = vpop.permute.xlu0 %3886
        %3889 = vset.pattern.permute.xlu0 3
        %3890 = vperm.xlu0 %3889, %v2066
        %v3891 = vpop.permute.xlu0 %3890
        %3893 = vset.pattern.permute.xlu0 3
        %3894 = vperm.xlu0 %3893, %v2068
        %v3895 = vpop.permute.xlu0 %3894
        %3897 = vset.pattern.permute.xlu0 3
        %3898 = vperm.xlu0 %3897, %v2070
        %v3899 = vpop.permute.xlu0 %3898
        %3901 = vset.pattern.permute.xlu0 3
        %3902 = vperm.xlu0 %3901, %v2072
        %v3903 = vpop.permute.xlu0 %3902
        %3905 = vset.pattern.permute.xlu0 3
        %3906 = vperm.xlu0 %3905, %v2074
        %v3907 = vpop.permute.xlu0 %3906
        %3909 = vset.pattern.permute.xlu0 3
        %3910 = vperm.xlu0 %3909, %v2076
        %v3911 = vpop.permute.xlu0 %3910
        %3913 = vset.pattern.permute.xlu0 3
        %3914 = vperm.xlu0 %3913, %v2078
        %v3915 = vpop.permute.xlu0 %3914
        %3917 = vset.pattern.permute.xlu0 3
        %3918 = vperm.xlu0 %3917, %v2080
        %v3919 = vpop.permute.xlu0 %3918
        %3921 = vset.pattern.permute.xlu0 3
        %3922 = vperm.xlu0 %3921, %v2082
        %v3923 = vpop.permute.xlu0 %3922
        %3925 = vset.pattern.permute.xlu0 3
        %3926 = vperm.xlu0 %3925, %v2084
        %v3927 = vpop.permute.xlu0 %3926
        %3929 = vset.pattern.permute.xlu0 3
        %3930 = vperm.xlu0 %3929, %v2086
        %v3931 = vpop.permute.xlu0 %3930
        %3933 = vset.pattern.permute.xlu0 3
        %3934 = vperm.xlu0 %3933, %v2088
        %v3935 = vpop.permute.xlu0 %3934
        %3937 = vset.pattern.permute.xlu0 3
        %3938 = vperm.xlu0 %3937, %v2090
        %v3939 = vpop.permute.xlu0 %3938
        %3941 = vset.pattern.permute.xlu0 3
        %3942 = vperm.xlu0 %3941, %v2092
        %v3943 = vpop.permute.xlu0 %3942
        %3945 = vset.pattern.permute.xlu0 3
        %3946 = vperm.xlu0 %3945, %v2094
        %v3947 = vpop.permute.xlu0 %3946
        %3949 = vset.pattern.permute.xlu0 3
        %3950 = vperm.xlu0 %3949, %v2096
        %v3951 = vpop.permute.xlu0 %3950
        %3953 = vset.pattern.permute.xlu0 3
        %3954 = vperm.xlu0 %3953, %v2098
        %v3955 = vpop.permute.xlu0 %3954
        %3957 = vset.pattern.permute.xlu0 3
        %3958 = vperm.xlu0 %3957, %v2100
        %v3959 = vpop.permute.xlu0 %3958
        %3961 = vset.pattern.permute.xlu0 3
        %3962 = vperm.xlu0 %3961, %v2102
        %v3963 = vpop.permute.xlu0 %3962
        %3965 = vset.pattern.permute.xlu0 3
        %3966 = vperm.xlu0 %3965, %v2104
        %v3967 = vpop.permute.xlu0 %3966
        %3969 = vset.pattern.permute.xlu0 3
        %3970 = vperm.xlu0 %3969, %v2106
        %v3971 = vpop.permute.xlu0 %3970
        %3973 = vset.pattern.permute.xlu0 3
        %3974 = vperm.xlu0 %3973, %v2108
        %v3975 = vpop.permute.xlu0 %3974
        %3977 = vset.pattern.permute.xlu0 3
        %3978 = vperm.xlu0 %3977, %v2110
        %v3979 = vpop.permute.xlu0 %3978
        %3981 = vset.pattern.permute.xlu0 3
        %3982 = vperm.xlu0 %3981, %v2112
        %v3983 = vpop.permute.xlu0 %3982
        %3985 = vset.pattern.permute.xlu0 3
        %3986 = vperm.xlu0 %3985, %v2114
        %v3987 = vpop.permute.xlu0 %3986
        %3989 = vset.pattern.permute.xlu0 3
        %3990 = vperm.xlu0 %3989, %v2116
        %v3991 = vpop.permute.xlu0 %3990
        %3993 = vset.pattern.permute.xlu0 3
        %3994 = vperm.xlu0 %3993, %v2118
        %v3995 = vpop.permute.xlu0 %3994
        %3997 = vset.pattern.permute.xlu0 3
        %3998 = vperm.xlu0 %3997, %v2120
        %v3999 = vpop.permute.xlu0 %3998
        %4001 = vset.pattern.permute.xlu0 3
        %4002 = vperm.xlu0 %4001, %v2122
        %v4003 = vpop.permute.xlu0 %4002
        %4005 = vset.pattern.permute.xlu0 3
        %4006 = vperm.xlu0 %4005, %v2124
        %v4007 = vpop.permute.xlu0 %4006
        %4009 = vset.pattern.permute.xlu0 3
        %4010 = vperm.xlu0 %4009, %v2126
        %v4011 = vpop.permute.xlu0 %4010
        %4013 = vset.pattern.permute.xlu0 3
        %4014 = vperm.xlu0 %4013, %v2128
        %v4015 = vpop.permute.xlu0 %4014
        %4017 = vset.pattern.permute.xlu0 3
        %4018 = vperm.xlu0 %4017, %v2130
        %v4019 = vpop.permute.xlu0 %4018
        %4021 = vset.pattern.permute.xlu0 3
        %4022 = vperm.xlu0 %4021, %v2132
        %v4023 = vpop.permute.xlu0 %4022
        %4025 = vset.pattern.permute.xlu0 3
        %4026 = vperm.xlu0 %4025, %v2134
        %v4027 = vpop.permute.xlu0 %4026
        %4029 = vset.pattern.permute.xlu0 3
        %4030 = vperm.xlu0 %4029, %v2136
        %v4031 = vpop.permute.xlu0 %4030
        %4033 = vset.pattern.permute.xlu0 3
        %4034 = vperm.xlu0 %4033, %v2138
        %v4035 = vpop.permute.xlu0 %4034
        %4037 = vset.pattern.permute.xlu0 3
        %4038 = vperm.xlu0 %4037, %v2140
        %v4039 = vpop.permute.xlu0 %4038
        %4041 = vset.pattern.permute.xlu0 3
        %4042 = vperm.xlu0 %4041, %v2142
        %v4043 = vpop.permute.xlu0 %4042
        %4045 = vset.pattern.permute.xlu0 3
        %4046 = vperm.xlu0 %4045, %v2144
        %v4047 = vpop.permute.xlu0 %4046
        %4049 = vset.pattern.permute.xlu0 3
        %4050 = vperm.xlu0 %4049, %v2146
        %v4051 = vpop.permute.xlu0 %4050
        %4053 = vset.pattern.permute.xlu0 3
        %4054 = vperm.xlu0 %4053, %v2148
        %v4055 = vpop.permute.xlu0 %4054
        %4057 = vset.pattern.permute.xlu0 3
        %4058 = vperm.xlu0 %4057, %v2150
        %v4059 = vpop.permute.xlu0 %4058
        %4061 = vset.pattern.permute.xlu0 3
        %4062 = vperm.xlu0 %4061, %v2152
        %v4063 = vpop.permute.xlu0 %4062
        %4065 = vset.pattern.permute.xlu0 3
        %4066 = vperm.xlu0 %4065, %v2154
        %v4067 = vpop.permute.xlu0 %4066
        %4069 = vset.pattern.permute.xlu0 3
        %4070 = vperm.xlu0 %4069, %v2156
        %v4071 = vpop.permute.xlu0 %4070
        %4073 = vset.pattern.permute.xlu0 3
        %4074 = vperm.xlu0 %4073, %v2158
        %v4075 = vpop.permute.xlu0 %4074
        %4077 = vset.pattern.permute.xlu0 3
        %4078 = vperm.xlu0 %4077, %v2160
        %v4079 = vpop.permute.xlu0 %4078
        %v4081 = vmul.f32 %v3827, %v1138
        %v4082 = vmul.f32 %v3831, %v1143
        %v4083 = vmul.f32 %v3835, %v1148
        %v4084 = vmul.f32 %v3839, %v1153
        %v4085 = vmul.f32 %v3843, %v1158
        %v4086 = vmul.f32 %v3847, %v1163
        %v4087 = vmul.f32 %v3851, %v1168
        %v4088 = vmul.f32 %v3855, %v1173
        %v4089 = vmul.f32 %v3859, %v1178
        %v4090 = vmul.f32 %v3863, %v1183
        %v4091 = vmul.f32 %v3867, %v1188
        %v4092 = vmul.f32 %v3871, %v1193
        %v4093 = vmul.f32 %v3875, %v1198
        %v4094 = vmul.f32 %v3879, %v1203
        %v4095 = vmul.f32 %v3883, %v1208
        %v4096 = vmul.f32 %v3887, %v1213
        %v4097 = vmul.f32 %v3891, %v1218
        %v4098 = vmul.f32 %v3895, %v1223
        %v4099 = vmul.f32 %v3899, %v1228
        %v4100 = vmul.f32 %v3903, %v1233
        %v4101 = vmul.f32 %v3907, %v1238
        %v4102 = vmul.f32 %v3911, %v1243
        %v4103 = vmul.f32 %v3915, %v1248
        %v4104 = vmul.f32 %v3919, %v1253
        %v4105 = vmul.f32 %v3923, %v1258
        %v4106 = vmul.f32 %v3927, %v1263
        %v4107 = vmul.f32 %v3931, %v1268
        %v4108 = vmul.f32 %v3935, %v1273
        %v4109 = vmul.f32 %v3939, %v1278
        %v4110 = vmul.f32 %v3943, %v1283
        %v4111 = vmul.f32 %v3947, %v1288
        %v4112 = vmul.f32 %v3951, %v1293
        %v4113 = vmul.f32 %v3955, %v1298
        %v4114 = vmul.f32 %v3959, %v1303
        %v4115 = vmul.f32 %v3963, %v1308
        %v4116 = vmul.f32 %v3967, %v1313
        %v4117 = vmul.f32 %v3971, %v1318
        %v4118 = vmul.f32 %v3975, %v1323
        %v4119 = vmul.f32 %v3979, %v1328
        %v4120 = vmul.f32 %v3983, %v1333
        %v4121 = vmul.f32 %v3987, %v1338
        %v4122 = vmul.f32 %v3991, %v1343
        %v4123 = vmul.f32 %v3995, %v1348
        %v4124 = vmul.f32 %v3999, %v1353
        %v4125 = vmul.f32 %v4003, %v1358
        %v4126 = vmul.f32 %v4007, %v1363
        %v4127 = vmul.f32 %v4011, %v1368
        %v4128 = vmul.f32 %v4015, %v1373
        %v4129 = vmul.f32 %v4019, %v1378
        %v4130 = vmul.f32 %v4023, %v1383
        %v4131 = vmul.f32 %v4027, %v1388
        %v4132 = vmul.f32 %v4031, %v1393
        %v4133 = vmul.f32 %v4035, %v1398
        %v4134 = vmul.f32 %v4039, %v1403
        %v4135 = vmul.f32 %v4043, %v1408
        %v4136 = vmul.f32 %v4047, %v1413
        %v4137 = vmul.f32 %v4051, %v1418
        %v4138 = vmul.f32 %v4055, %v1423
        %v4139 = vmul.f32 %v4059, %v1428
        %v4140 = vmul.f32 %v4063, %v1433
        %v4141 = vmul.f32 %v4067, %v1438
        %v4142 = vmul.f32 %v4071, %v1443
        %v4143 = vmul.f32 %v4075, %v1448
        %v4144 = vmul.f32 %v4079, %v1453
        %4209 = vrot.lane.b32.xlu0 %v4081, 32
        %v4210 = vpop.permute.xlu0 %4209
        %4211 = vrot.lane.b32.xlu0 %v4082, 32
        %v4212 = vpop.permute.xlu0 %4211
        %4213 = vrot.lane.b32.xlu0 %v4083, 32
        %v4214 = vpop.permute.xlu0 %4213
        %4215 = vrot.lane.b32.xlu0 %v4084, 32
        %v4216 = vpop.permute.xlu0 %4215
        %4217 = vrot.lane.b32.xlu0 %v4085, 32
        %v4218 = vpop.permute.xlu0 %4217
        %4219 = vrot.lane.b32.xlu0 %v4086, 32
        %v4220 = vpop.permute.xlu0 %4219
        %4221 = vrot.lane.b32.xlu0 %v4087, 32
        %v4222 = vpop.permute.xlu0 %4221
        %4223 = vrot.lane.b32.xlu0 %v4088, 32
        %v4224 = vpop.permute.xlu0 %4223
        %4225 = vrot.lane.b32.xlu0 %v4089, 32
        %v4226 = vpop.permute.xlu0 %4225
        %4227 = vrot.lane.b32.xlu0 %v4090, 32
        %v4228 = vpop.permute.xlu0 %4227
        %4229 = vrot.lane.b32.xlu0 %v4091, 32
        %v4230 = vpop.permute.xlu0 %4229
        %4231 = vrot.lane.b32.xlu0 %v4092, 32
        %v4232 = vpop.permute.xlu0 %4231
        %4233 = vrot.lane.b32.xlu0 %v4093, 32
        %v4234 = vpop.permute.xlu0 %4233
        %4235 = vrot.lane.b32.xlu0 %v4094, 32
        %v4236 = vpop.permute.xlu0 %4235
        %4237 = vrot.lane.b32.xlu0 %v4095, 32
        %v4238 = vpop.permute.xlu0 %4237
        %4239 = vrot.lane.b32.xlu0 %v4096, 32
        %v4240 = vpop.permute.xlu0 %4239
        %4241 = vrot.lane.b32.xlu0 %v4097, 32
        %v4242 = vpop.permute.xlu0 %4241
        %4243 = vrot.lane.b32.xlu0 %v4098, 32
        %v4244 = vpop.permute.xlu0 %4243
        %4245 = vrot.lane.b32.xlu0 %v4099, 32
        %v4246 = vpop.permute.xlu0 %4245
        %4247 = vrot.lane.b32.xlu0 %v4100, 32
        %v4248 = vpop.permute.xlu0 %4247
        %4249 = vrot.lane.b32.xlu0 %v4101, 32
        %v4250 = vpop.permute.xlu0 %4249
        %4251 = vrot.lane.b32.xlu0 %v4102, 32
        %v4252 = vpop.permute.xlu0 %4251
        %4253 = vrot.lane.b32.xlu0 %v4103, 32
        %v4254 = vpop.permute.xlu0 %4253
        %4255 = vrot.lane.b32.xlu0 %v4104, 32
        %v4256 = vpop.permute.xlu0 %4255
        %4257 = vrot.lane.b32.xlu0 %v4105, 32
        %v4258 = vpop.permute.xlu0 %4257
        %4259 = vrot.lane.b32.xlu0 %v4106, 32
        %v4260 = vpop.permute.xlu0 %4259
        %4261 = vrot.lane.b32.xlu0 %v4107, 32
        %v4262 = vpop.permute.xlu0 %4261
        %4263 = vrot.lane.b32.xlu0 %v4108, 32
        %v4264 = vpop.permute.xlu0 %4263
        %4265 = vrot.lane.b32.xlu0 %v4109, 32
        %v4266 = vpop.permute.xlu0 %4265
        %4267 = vrot.lane.b32.xlu0 %v4110, 32
        %v4268 = vpop.permute.xlu0 %4267
        %4269 = vrot.lane.b32.xlu0 %v4111, 32
        %v4270 = vpop.permute.xlu0 %4269
        %4271 = vrot.lane.b32.xlu0 %v4112, 32
        %v4272 = vpop.permute.xlu0 %4271
        %4273 = vrot.lane.b32.xlu0 %v4113, 32
        %v4274 = vpop.permute.xlu0 %4273
        %4275 = vrot.lane.b32.xlu0 %v4114, 32
        %v4276 = vpop.permute.xlu0 %4275
        %4277 = vrot.lane.b32.xlu0 %v4115, 32
        %v4278 = vpop.permute.xlu0 %4277
        %4279 = vrot.lane.b32.xlu0 %v4116, 32
        %v4280 = vpop.permute.xlu0 %4279
        %4281 = vrot.lane.b32.xlu0 %v4117, 32
        %v4282 = vpop.permute.xlu0 %4281
        %4283 = vrot.lane.b32.xlu0 %v4118, 32
        %v4284 = vpop.permute.xlu0 %4283
        %4285 = vrot.lane.b32.xlu0 %v4119, 32
        %v4286 = vpop.permute.xlu0 %4285
        %4287 = vrot.lane.b32.xlu0 %v4120, 32
        %v4288 = vpop.permute.xlu0 %4287
        %4289 = vrot.lane.b32.xlu0 %v4121, 32
        %v4290 = vpop.permute.xlu0 %4289
        %4291 = vrot.lane.b32.xlu0 %v4122, 32
        %v4292 = vpop.permute.xlu0 %4291
        %4293 = vrot.lane.b32.xlu0 %v4123, 32
        %v4294 = vpop.permute.xlu0 %4293
        %4295 = vrot.lane.b32.xlu0 %v4124, 32
        %v4296 = vpop.permute.xlu0 %4295
        %4297 = vrot.lane.b32.xlu0 %v4125, 32
        %v4298 = vpop.permute.xlu0 %4297
        %4299 = vrot.lane.b32.xlu0 %v4126, 32
        %v4300 = vpop.permute.xlu0 %4299
        %4301 = vrot.lane.b32.xlu0 %v4127, 32
        %v4302 = vpop.permute.xlu0 %4301
        %4303 = vrot.lane.b32.xlu0 %v4128, 32
        %v4304 = vpop.permute.xlu0 %4303
        %4305 = vrot.lane.b32.xlu0 %v4129, 32
        %v4306 = vpop.permute.xlu0 %4305
        %4307 = vrot.lane.b32.xlu0 %v4130, 32
        %v4308 = vpop.permute.xlu0 %4307
        %4309 = vrot.lane.b32.xlu0 %v4131, 32
        %v4310 = vpop.permute.xlu0 %4309
        %4311 = vrot.lane.b32.xlu0 %v4132, 32
        %v4312 = vpop.permute.xlu0 %4311
        %4313 = vrot.lane.b32.xlu0 %v4133, 32
        %v4314 = vpop.permute.xlu0 %4313
        %4315 = vrot.lane.b32.xlu0 %v4134, 32
        %v4316 = vpop.permute.xlu0 %4315
        %4317 = vrot.lane.b32.xlu0 %v4135, 32
        %v4318 = vpop.permute.xlu0 %4317
        %4319 = vrot.lane.b32.xlu0 %v4136, 32
        %v4320 = vpop.permute.xlu0 %4319
        %4321 = vrot.lane.b32.xlu0 %v4137, 32
        %v4322 = vpop.permute.xlu0 %4321
        %4323 = vrot.lane.b32.xlu0 %v4138, 32
        %v4324 = vpop.permute.xlu0 %4323
        %4325 = vrot.lane.b32.xlu0 %v4139, 32
        %v4326 = vpop.permute.xlu0 %4325
        %4327 = vrot.lane.b32.xlu0 %v4140, 32
        %v4328 = vpop.permute.xlu0 %4327
        %4329 = vrot.lane.b32.xlu0 %v4141, 32
        %v4330 = vpop.permute.xlu0 %4329
        %4331 = vrot.lane.b32.xlu0 %v4142, 32
        %v4332 = vpop.permute.xlu0 %4331
        %4333 = vrot.lane.b32.xlu0 %v4143, 32
        %v4334 = vpop.permute.xlu0 %4333
        %4335 = vrot.lane.b32.xlu0 %v4144, 32
        %v4336 = vpop.permute.xlu0 %4335
        %v4401 = vadd.f32 %v3761, %v4210
        %v4402 = vadd.f32 %v3762, %v4212
        %v4403 = vadd.f32 %v3763, %v4214
        %v4404 = vadd.f32 %v3764, %v4216
        %v4405 = vadd.f32 %v3765, %v4218
        %v4406 = vadd.f32 %v3766, %v4220
        %v4407 = vadd.f32 %v3767, %v4222
        %v4408 = vadd.f32 %v3768, %v4224
        %v4409 = vadd.f32 %v3769, %v4226
        %v4410 = vadd.f32 %v3770, %v4228
        %v4411 = vadd.f32 %v3771, %v4230
        %v4412 = vadd.f32 %v3772, %v4232
        %v4413 = vadd.f32 %v3773, %v4234
        %v4414 = vadd.f32 %v3774, %v4236
        %v4415 = vadd.f32 %v3775, %v4238
        %v4416 = vadd.f32 %v3776, %v4240
        %v4417 = vadd.f32 %v3777, %v4242
        %v4418 = vadd.f32 %v3778, %v4244
        %v4419 = vadd.f32 %v3779, %v4246
        %v4420 = vadd.f32 %v3780, %v4248
        %v4421 = vadd.f32 %v3781, %v4250
        %v4422 = vadd.f32 %v3782, %v4252
        %v4423 = vadd.f32 %v3783, %v4254
        %v4424 = vadd.f32 %v3784, %v4256
        %v4425 = vadd.f32 %v3785, %v4258
        %v4426 = vadd.f32 %v3786, %v4260
        %v4427 = vadd.f32 %v3787, %v4262
        %v4428 = vadd.f32 %v3788, %v4264
        %v4429 = vadd.f32 %v3789, %v4266
        %v4430 = vadd.f32 %v3790, %v4268
        %v4431 = vadd.f32 %v3791, %v4270
        %v4432 = vadd.f32 %v3792, %v4272
        %v4433 = vadd.f32 %v3793, %v4274
        %v4434 = vadd.f32 %v3794, %v4276
        %v4435 = vadd.f32 %v3795, %v4278
        %v4436 = vadd.f32 %v3796, %v4280
        %v4437 = vadd.f32 %v3797, %v4282
        %v4438 = vadd.f32 %v3798, %v4284
        %v4439 = vadd.f32 %v3799, %v4286
        %v4440 = vadd.f32 %v3800, %v4288
        %v4441 = vadd.f32 %v3801, %v4290
        %v4442 = vadd.f32 %v3802, %v4292
        %v4443 = vadd.f32 %v3803, %v4294
        %v4444 = vadd.f32 %v3804, %v4296
        %v4445 = vadd.f32 %v3805, %v4298
        %v4446 = vadd.f32 %v3806, %v4300
        %v4447 = vadd.f32 %v3807, %v4302
        %v4448 = vadd.f32 %v3808, %v4304
        %v4449 = vadd.f32 %v3809, %v4306
        %v4450 = vadd.f32 %v3810, %v4308
        %v4451 = vadd.f32 %v3811, %v4310
        %v4452 = vadd.f32 %v3812, %v4312
        %v4453 = vadd.f32 %v3813, %v4314
        %v4454 = vadd.f32 %v3814, %v4316
        %v4455 = vadd.f32 %v3815, %v4318
        %v4456 = vadd.f32 %v3816, %v4320
        %v4457 = vadd.f32 %v3817, %v4322
        %v4458 = vadd.f32 %v3818, %v4324
        %v4459 = vadd.f32 %v3819, %v4326
        %v4460 = vadd.f32 %v3820, %v4328
        %v4461 = vadd.f32 %v3821, %v4330
        %v4462 = vadd.f32 %v3822, %v4332
        %v4463 = vadd.f32 %v3823, %v4334
        %v4464 = vadd.f32 %v3824, %v4336
        %vm4465 = vcmask 64544
        %v4466 = vsel %vm4465, %v607, -inf
        %4467 = vmax.xlane.f32.xlu0 %v4466
        %v4468 = vpop.xlane.xlu0 %4467
        %v4469 = vsel %vm4465, %v613, -inf
        %4470 = vmax.xlane.f32.xlu0 %v4469
        %v4471 = vpop.xlane.xlu0 %4470
        %v4472 = vsel %vm4465, %v619, -inf
        %4473 = vmax.xlane.f32.xlu0 %v4472
        %v4474 = vpop.xlane.xlu0 %4473
        %v4475 = vsel %vm4465, %v625, -inf
        %4476 = vmax.xlane.f32.xlu0 %v4475
        %v4477 = vpop.xlane.xlu0 %4476
        %v4478 = vsel %vm4465, %v631, -inf
        %4479 = vmax.xlane.f32.xlu0 %v4478
        %v4480 = vpop.xlane.xlu0 %4479
        %v4481 = vsel %vm4465, %v637, -inf
        %4482 = vmax.xlane.f32.xlu0 %v4481
        %v4483 = vpop.xlane.xlu0 %4482
        %v4484 = vsel %vm4465, %v643, -inf
        %4485 = vmax.xlane.f32.xlu0 %v4484
        %v4486 = vpop.xlane.xlu0 %4485
        %v4487 = vsel %vm4465, %v649, -inf
        %4488 = vmax.xlane.f32.xlu0 %v4487
        %v4489 = vpop.xlane.xlu0 %4488
        %v4490 = vsel %vm4465, %v655, -inf
        %4491 = vmax.xlane.f32.xlu0 %v4490
        %v4492 = vpop.xlane.xlu0 %4491
        %v4493 = vsel %vm4465, %v661, -inf
        %4494 = vmax.xlane.f32.xlu0 %v4493
        %v4495 = vpop.xlane.xlu0 %4494
        %v4496 = vsel %vm4465, %v667, -inf
        %4497 = vmax.xlane.f32.xlu0 %v4496
        %v4498 = vpop.xlane.xlu0 %4497
        %v4499 = vsel %vm4465, %v673, -inf
        %4500 = vmax.xlane.f32.xlu0 %v4499
        %v4501 = vpop.xlane.xlu0 %4500
        %v4502 = vsel %vm4465, %v679, -inf
        %4503 = vmax.xlane.f32.xlu0 %v4502
        %v4504 = vpop.xlane.xlu0 %4503
        %v4505 = vsel %vm4465, %v685, -inf
        %4506 = vmax.xlane.f32.xlu0 %v4505
        %v4507 = vpop.xlane.xlu0 %4506
        %v4508 = vsel %vm4465, %v691, -inf
        %4509 = vmax.xlane.f32.xlu0 %v4508
        %v4510 = vpop.xlane.xlu0 %4509
        %v4511 = vsel %vm4465, %v697, -inf
        %4512 = vmax.xlane.f32.xlu0 %v4511
        %v4513 = vpop.xlane.xlu0 %4512
        %v4514 = vsel %vm4465, %v703, -inf
        %4515 = vmax.xlane.f32.xlu0 %v4514
        %v4516 = vpop.xlane.xlu0 %4515
        %v4517 = vsel %vm4465, %v709, -inf
        %4518 = vmax.xlane.f32.xlu0 %v4517
        %v4519 = vpop.xlane.xlu0 %4518
        %v4520 = vsel %vm4465, %v715, -inf
        %4521 = vmax.xlane.f32.xlu0 %v4520
        %v4522 = vpop.xlane.xlu0 %4521
        %v4523 = vsel %vm4465, %v721, -inf
        %4524 = vmax.xlane.f32.xlu0 %v4523
        %v4525 = vpop.xlane.xlu0 %4524
        %v4526 = vsel %vm4465, %v727, -inf
        %4527 = vmax.xlane.f32.xlu0 %v4526
        %v4528 = vpop.xlane.xlu0 %4527
        %v4529 = vsel %vm4465, %v733, -inf
        %4530 = vmax.xlane.f32.xlu0 %v4529
        %v4531 = vpop.xlane.xlu0 %4530
        %v4532 = vsel %vm4465, %v739, -inf
        %4533 = vmax.xlane.f32.xlu0 %v4532
        %v4534 = vpop.xlane.xlu0 %4533
        %v4535 = vsel %vm4465, %v745, -inf
        %4536 = vmax.xlane.f32.xlu0 %v4535
        %v4537 = vpop.xlane.xlu0 %4536
        %v4538 = vsel %vm4465, %v751, -inf
        %4539 = vmax.xlane.f32.xlu0 %v4538
        %v4540 = vpop.xlane.xlu0 %4539
        %v4541 = vsel %vm4465, %v757, -inf
        %4542 = vmax.xlane.f32.xlu0 %v4541
        %v4543 = vpop.xlane.xlu0 %4542
        %v4544 = vsel %vm4465, %v763, -inf
        %4545 = vmax.xlane.f32.xlu0 %v4544
        %v4546 = vpop.xlane.xlu0 %4545
        %v4547 = vsel %vm4465, %v769, -inf
        %4548 = vmax.xlane.f32.xlu0 %v4547
        %v4549 = vpop.xlane.xlu0 %4548
        %v4550 = vsel %vm4465, %v775, -inf
        %4551 = vmax.xlane.f32.xlu0 %v4550
        %v4552 = vpop.xlane.xlu0 %4551
        %v4553 = vsel %vm4465, %v781, -inf
        %4554 = vmax.xlane.f32.xlu0 %v4553
        %v4555 = vpop.xlane.xlu0 %4554
        %v4556 = vsel %vm4465, %v787, -inf
        %4557 = vmax.xlane.f32.xlu0 %v4556
        %v4558 = vpop.xlane.xlu0 %4557
        %v4559 = vsel %vm4465, %v793, -inf
        %4560 = vmax.xlane.f32.xlu0 %v4559
        %v4561 = vpop.xlane.xlu0 %4560
        %v4562 = vsel %vm4465, %v799, -inf
        %4563 = vmax.xlane.f32.xlu0 %v4562
        %v4564 = vpop.xlane.xlu0 %4563
        %v4565 = vsel %vm4465, %v805, -inf
        %4566 = vmax.xlane.f32.xlu0 %v4565
        %v4567 = vpop.xlane.xlu0 %4566
        %v4568 = vsel %vm4465, %v811, -inf
        %4569 = vmax.xlane.f32.xlu0 %v4568
        %v4570 = vpop.xlane.xlu0 %4569
        %v4571 = vsel %vm4465, %v817, -inf
        %4572 = vmax.xlane.f32.xlu0 %v4571
        %v4573 = vpop.xlane.xlu0 %4572
        %v4574 = vsel %vm4465, %v823, -inf
        %4575 = vmax.xlane.f32.xlu0 %v4574
        %v4576 = vpop.xlane.xlu0 %4575
        %v4577 = vsel %vm4465, %v829, -inf
        %4578 = vmax.xlane.f32.xlu0 %v4577
        %v4579 = vpop.xlane.xlu0 %4578
        %v4580 = vsel %vm4465, %v835, -inf
        %4581 = vmax.xlane.f32.xlu0 %v4580
        %v4582 = vpop.xlane.xlu0 %4581
        %v4583 = vsel %vm4465, %v841, -inf
        %4584 = vmax.xlane.f32.xlu0 %v4583
        %v4585 = vpop.xlane.xlu0 %4584
        %v4586 = vsel %vm4465, %v847, -inf
        %4587 = vmax.xlane.f32.xlu0 %v4586
        %v4588 = vpop.xlane.xlu0 %4587
        %v4589 = vsel %vm4465, %v853, -inf
        %4590 = vmax.xlane.f32.xlu0 %v4589
        %v4591 = vpop.xlane.xlu0 %4590
        %v4592 = vsel %vm4465, %v859, -inf
        %4593 = vmax.xlane.f32.xlu0 %v4592
        %v4594 = vpop.xlane.xlu0 %4593
        %v4595 = vsel %vm4465, %v865, -inf
        %4596 = vmax.xlane.f32.xlu0 %v4595
        %v4597 = vpop.xlane.xlu0 %4596
        %v4598 = vsel %vm4465, %v871, -inf
        %4599 = vmax.xlane.f32.xlu0 %v4598
        %v4600 = vpop.xlane.xlu0 %4599
        %v4601 = vsel %vm4465, %v877, -inf
        %4602 = vmax.xlane.f32.xlu0 %v4601
        %v4603 = vpop.xlane.xlu0 %4602
        %v4604 = vsel %vm4465, %v883, -inf
        %4605 = vmax.xlane.f32.xlu0 %v4604
        %v4606 = vpop.xlane.xlu0 %4605
        %v4607 = vsel %vm4465, %v889, -inf
        %4608 = vmax.xlane.f32.xlu0 %v4607
        %v4609 = vpop.xlane.xlu0 %4608
        %v4610 = vsel %vm4465, %v895, -inf
        %4611 = vmax.xlane.f32.xlu0 %v4610
        %v4612 = vpop.xlane.xlu0 %4611
        %v4613 = vsel %vm4465, %v901, -inf
        %4614 = vmax.xlane.f32.xlu0 %v4613
        %v4615 = vpop.xlane.xlu0 %4614
        %v4616 = vsel %vm4465, %v907, -inf
        %4617 = vmax.xlane.f32.xlu0 %v4616
        %v4618 = vpop.xlane.xlu0 %4617
        %v4619 = vsel %vm4465, %v913, -inf
        %4620 = vmax.xlane.f32.xlu0 %v4619
        %v4621 = vpop.xlane.xlu0 %4620
        %v4622 = vsel %vm4465, %v919, -inf
        %4623 = vmax.xlane.f32.xlu0 %v4622
        %v4624 = vpop.xlane.xlu0 %4623
        %v4625 = vsel %vm4465, %v925, -inf
        %4626 = vmax.xlane.f32.xlu0 %v4625
        %v4627 = vpop.xlane.xlu0 %4626
        %v4628 = vsel %vm4465, %v931, -inf
        %4629 = vmax.xlane.f32.xlu0 %v4628
        %v4630 = vpop.xlane.xlu0 %4629
        %v4631 = vsel %vm4465, %v937, -inf
        %4632 = vmax.xlane.f32.xlu0 %v4631
        %v4633 = vpop.xlane.xlu0 %4632
        %v4634 = vsel %vm4465, %v943, -inf
        %4635 = vmax.xlane.f32.xlu0 %v4634
        %v4636 = vpop.xlane.xlu0 %4635
        %v4637 = vsel %vm4465, %v949, -inf
        %4638 = vmax.xlane.f32.xlu0 %v4637
        %v4639 = vpop.xlane.xlu0 %4638
        %v4640 = vsel %vm4465, %v955, -inf
        %4641 = vmax.xlane.f32.xlu0 %v4640
        %v4642 = vpop.xlane.xlu0 %4641
        %v4643 = vsel %vm4465, %v961, -inf
        %4644 = vmax.xlane.f32.xlu0 %v4643
        %v4645 = vpop.xlane.xlu0 %4644
        %v4646 = vsel %vm4465, %v967, -inf
        %4647 = vmax.xlane.f32.xlu0 %v4646
        %v4648 = vpop.xlane.xlu0 %4647
        %v4649 = vsel %vm4465, %v973, -inf
        %4650 = vmax.xlane.f32.xlu0 %v4649
        %v4651 = vpop.xlane.xlu0 %4650
        %v4652 = vsel %vm4465, %v979, -inf
        %4653 = vmax.xlane.f32.xlu0 %v4652
        %v4654 = vpop.xlane.xlu0 %4653
        %v4655 = vsel %vm4465, %v985, -inf
        %4656 = vmax.xlane.f32.xlu0 %v4655
        %v4657 = vpop.xlane.xlu0 %4656
        %v4658 = vsub.f32 %v607, %v4468
        %v4659 = vsub.f32 %v613, %v4471
        %v4660 = vsub.f32 %v619, %v4474
        %v4661 = vsub.f32 %v625, %v4477
        %v4662 = vsub.f32 %v631, %v4480
        %v4663 = vsub.f32 %v637, %v4483
        %v4664 = vsub.f32 %v643, %v4486
        %v4665 = vsub.f32 %v649, %v4489
        %v4666 = vsub.f32 %v655, %v4492
        %v4667 = vsub.f32 %v661, %v4495
        %v4668 = vsub.f32 %v667, %v4498
        %v4669 = vsub.f32 %v673, %v4501
        %v4670 = vsub.f32 %v679, %v4504
        %v4671 = vsub.f32 %v685, %v4507
        %v4672 = vsub.f32 %v691, %v4510
        %v4673 = vsub.f32 %v697, %v4513
        %v4674 = vsub.f32 %v703, %v4516
        %v4675 = vsub.f32 %v709, %v4519
        %v4676 = vsub.f32 %v715, %v4522
        %v4677 = vsub.f32 %v721, %v4525
        %v4678 = vsub.f32 %v727, %v4528
        %v4679 = vsub.f32 %v733, %v4531
        %v4680 = vsub.f32 %v739, %v4534
        %v4681 = vsub.f32 %v745, %v4537
        %v4682 = vsub.f32 %v751, %v4540
        %v4683 = vsub.f32 %v757, %v4543
        %v4684 = vsub.f32 %v763, %v4546
        %v4685 = vsub.f32 %v769, %v4549
        %v4686 = vsub.f32 %v775, %v4552
        %v4687 = vsub.f32 %v781, %v4555
        %v4688 = vsub.f32 %v787, %v4558
        %v4689 = vsub.f32 %v793, %v4561
        %v4690 = vsub.f32 %v799, %v4564
        %v4691 = vsub.f32 %v805, %v4567
        %v4692 = vsub.f32 %v811, %v4570
        %v4693 = vsub.f32 %v817, %v4573
        %v4694 = vsub.f32 %v823, %v4576
        %v4695 = vsub.f32 %v829, %v4579
        %v4696 = vsub.f32 %v835, %v4582
        %v4697 = vsub.f32 %v841, %v4585
        %v4698 = vsub.f32 %v847, %v4588
        %v4699 = vsub.f32 %v853, %v4591
        %v4700 = vsub.f32 %v859, %v4594
        %v4701 = vsub.f32 %v865, %v4597
        %v4702 = vsub.f32 %v871, %v4600
        %v4703 = vsub.f32 %v877, %v4603
        %v4704 = vsub.f32 %v883, %v4606
        %v4705 = vsub.f32 %v889, %v4609
        %v4706 = vsub.f32 %v895, %v4612
        %v4707 = vsub.f32 %v901, %v4615
        %v4708 = vsub.f32 %v907, %v4618
        %v4709 = vsub.f32 %v913, %v4621
        %v4710 = vsub.f32 %v919, %v4624
        %v4711 = vsub.f32 %v925, %v4627
        %v4712 = vsub.f32 %v931, %v4630
        %v4713 = vsub.f32 %v937, %v4633
        %v4714 = vsub.f32 %v943, %v4636
        %v4715 = vsub.f32 %v949, %v4639
        %v4716 = vsub.f32 %v955, %v4642
        %v4717 = vsub.f32 %v961, %v4645
        %v4718 = vsub.f32 %v967, %v4648
        %v4719 = vsub.f32 %v973, %v4651
        %v4720 = vsub.f32 %v979, %v4654
        %v4721 = vsub.f32 %v985, %v4657
        %v4722 = vmul.f32 %v4658, 1.442695
        %v4723 = vpow.pop %v4722
        %v4724 = vmul.f32 %v4659, 1.442695
        %v4725 = vpow.pop %v4724
        %v4726 = vmul.f32 %v4660, 1.442695
        %v4727 = vpow.pop %v4726
        %v4728 = vmul.f32 %v4661, 1.442695
        %v4729 = vpow.pop %v4728
        %v4730 = vmul.f32 %v4662, 1.442695
        %v4731 = vpow.pop %v4730
        %v4732 = vmul.f32 %v4663, 1.442695
        %v4733 = vpow.pop %v4732
        %v4734 = vmul.f32 %v4664, 1.442695
        %v4735 = vpow.pop %v4734
        %v4736 = vmul.f32 %v4665, 1.442695
        %v4737 = vpow.pop %v4736
        %v4738 = vmul.f32 %v4666, 1.442695
        %v4739 = vpow.pop %v4738
        %v4740 = vmul.f32 %v4667, 1.442695
        %v4741 = vpow.pop %v4740
        %v4742 = vmul.f32 %v4668, 1.442695
        %v4743 = vpow.pop %v4742
        %v4744 = vmul.f32 %v4669, 1.442695
        %v4745 = vpow.pop %v4744
        %v4746 = vmul.f32 %v4670, 1.442695
        %v4747 = vpow.pop %v4746
        %v4748 = vmul.f32 %v4671, 1.442695
        %v4749 = vpow.pop %v4748
        %v4750 = vmul.f32 %v4672, 1.442695
        %v4751 = vpow.pop %v4750
        %v4752 = vmul.f32 %v4673, 1.442695
        %v4753 = vpow.pop %v4752
        %v4754 = vmul.f32 %v4674, 1.442695
        %v4755 = vpow.pop %v4754
        %v4756 = vmul.f32 %v4675, 1.442695
        %v4757 = vpow.pop %v4756
        %v4758 = vmul.f32 %v4676, 1.442695
        %v4759 = vpow.pop %v4758
        %v4760 = vmul.f32 %v4677, 1.442695
        %v4761 = vpow.pop %v4760
        %v4762 = vmul.f32 %v4678, 1.442695
        %v4763 = vpow.pop %v4762
        %v4764 = vmul.f32 %v4679, 1.442695
        %v4765 = vpow.pop %v4764
        %v4766 = vmul.f32 %v4680, 1.442695
        %v4767 = vpow.pop %v4766
        %v4768 = vmul.f32 %v4681, 1.442695
        %v4769 = vpow.pop %v4768
        %v4770 = vmul.f32 %v4682, 1.442695
        %v4771 = vpow.pop %v4770
        %v4772 = vmul.f32 %v4683, 1.442695
        %v4773 = vpow.pop %v4772
        %v4774 = vmul.f32 %v4684, 1.442695
        %v4775 = vpow.pop %v4774
        %v4776 = vmul.f32 %v4685, 1.442695
        %v4777 = vpow.pop %v4776
        %v4778 = vmul.f32 %v4686, 1.442695
        %v4779 = vpow.pop %v4778
        %v4780 = vmul.f32 %v4687, 1.442695
        %v4781 = vpow.pop %v4780
        %v4782 = vmul.f32 %v4688, 1.442695
        %v4783 = vpow.pop %v4782
        %v4784 = vmul.f32 %v4689, 1.442695
        %v4785 = vpow.pop %v4784
        %v4786 = vmul.f32 %v4690, 1.442695
        %v4787 = vpow.pop %v4786
        %v4788 = vmul.f32 %v4691, 1.442695
        %v4789 = vpow.pop %v4788
        %v4790 = vmul.f32 %v4692, 1.442695
        %v4791 = vpow.pop %v4790
        %v4792 = vmul.f32 %v4693, 1.442695
        %v4793 = vpow.pop %v4792
        %v4794 = vmul.f32 %v4694, 1.442695
        %v4795 = vpow.pop %v4794
        %v4796 = vmul.f32 %v4695, 1.442695
        %v4797 = vpow.pop %v4796
        %v4798 = vmul.f32 %v4696, 1.442695
        %v4799 = vpow.pop %v4798
        %v4800 = vmul.f32 %v4697, 1.442695
        %v4801 = vpow.pop %v4800
        %v4802 = vmul.f32 %v4698, 1.442695
        %v4803 = vpow.pop %v4802
        %v4804 = vmul.f32 %v4699, 1.442695
        %v4805 = vpow.pop %v4804
        %v4806 = vmul.f32 %v4700, 1.442695
        %v4807 = vpow.pop %v4806
        %v4808 = vmul.f32 %v4701, 1.442695
        %v4809 = vpow.pop %v4808
        %v4810 = vmul.f32 %v4702, 1.442695
        %v4811 = vpow.pop %v4810
        %v4812 = vmul.f32 %v4703, 1.442695
        %v4813 = vpow.pop %v4812
        %v4814 = vmul.f32 %v4704, 1.442695
        %v4815 = vpow.pop %v4814
        %v4816 = vmul.f32 %v4705, 1.442695
        %v4817 = vpow.pop %v4816
        %v4818 = vmul.f32 %v4706, 1.442695
        %v4819 = vpow.pop %v4818
        %v4820 = vmul.f32 %v4707, 1.442695
        %v4821 = vpow.pop %v4820
        %v4822 = vmul.f32 %v4708, 1.442695
        %v4823 = vpow.pop %v4822
        %v4824 = vmul.f32 %v4709, 1.442695
        %v4825 = vpow.pop %v4824
        %v4826 = vmul.f32 %v4710, 1.442695
        %v4827 = vpow.pop %v4826
        %v4828 = vmul.f32 %v4711, 1.442695
        %v4829 = vpow.pop %v4828
        %v4830 = vmul.f32 %v4712, 1.442695
        %v4831 = vpow.pop %v4830
        %v4832 = vmul.f32 %v4713, 1.442695
        %v4833 = vpow.pop %v4832
        %v4834 = vmul.f32 %v4714, 1.442695
        %v4835 = vpow.pop %v4834
        %v4836 = vmul.f32 %v4715, 1.442695
        %v4837 = vpow.pop %v4836
        %v4838 = vmul.f32 %v4716, 1.442695
        %v4839 = vpow.pop %v4838
        %v4840 = vmul.f32 %v4717, 1.442695
        %v4841 = vpow.pop %v4840
        %v4842 = vmul.f32 %v4718, 1.442695
        %v4843 = vpow.pop %v4842
        %v4844 = vmul.f32 %v4719, 1.442695
        %v4845 = vpow.pop %v4844
        %v4846 = vmul.f32 %v4720, 1.442695
        %v4847 = vpow.pop %v4846
        %v4848 = vmul.f32 %v4721, 1.442695
        %v4849 = vpow.pop %v4848
        %4914 = vrot.lane.b32.xlu0 %v4723, 124
        %v4915 = vpop.permute.xlu0 %4914
        %4916 = vrot.lane.b32.xlu0 %v4725, 124
        %v4917 = vpop.permute.xlu0 %4916
        %4918 = vrot.lane.b32.xlu0 %v4727, 124
        %v4919 = vpop.permute.xlu0 %4918
        %4920 = vrot.lane.b32.xlu0 %v4729, 124
        %v4921 = vpop.permute.xlu0 %4920
        %4922 = vrot.lane.b32.xlu0 %v4731, 124
        %v4923 = vpop.permute.xlu0 %4922
        %4924 = vrot.lane.b32.xlu0 %v4733, 124
        %v4925 = vpop.permute.xlu0 %4924
        %4926 = vrot.lane.b32.xlu0 %v4735, 124
        %v4927 = vpop.permute.xlu0 %4926
        %4928 = vrot.lane.b32.xlu0 %v4737, 124
        %v4929 = vpop.permute.xlu0 %4928
        %4930 = vrot.lane.b32.xlu0 %v4739, 124
        %v4931 = vpop.permute.xlu0 %4930
        %4932 = vrot.lane.b32.xlu0 %v4741, 124
        %v4933 = vpop.permute.xlu0 %4932
        %4934 = vrot.lane.b32.xlu0 %v4743, 124
        %v4935 = vpop.permute.xlu0 %4934
        %4936 = vrot.lane.b32.xlu0 %v4745, 124
        %v4937 = vpop.permute.xlu0 %4936
        %4938 = vrot.lane.b32.xlu0 %v4747, 124
        %v4939 = vpop.permute.xlu0 %4938
        %4940 = vrot.lane.b32.xlu0 %v4749, 124
        %v4941 = vpop.permute.xlu0 %4940
        %4942 = vrot.lane.b32.xlu0 %v4751, 124
        %v4943 = vpop.permute.xlu0 %4942
        %4944 = vrot.lane.b32.xlu0 %v4753, 124
        %v4945 = vpop.permute.xlu0 %4944
        %4946 = vrot.lane.b32.xlu0 %v4755, 124
        %v4947 = vpop.permute.xlu0 %4946
        %4948 = vrot.lane.b32.xlu0 %v4757, 124
        %v4949 = vpop.permute.xlu0 %4948
        %4950 = vrot.lane.b32.xlu0 %v4759, 124
        %v4951 = vpop.permute.xlu0 %4950
        %4952 = vrot.lane.b32.xlu0 %v4761, 124
        %v4953 = vpop.permute.xlu0 %4952
        %4954 = vrot.lane.b32.xlu0 %v4763, 124
        %v4955 = vpop.permute.xlu0 %4954
        %4956 = vrot.lane.b32.xlu0 %v4765, 124
        %v4957 = vpop.permute.xlu0 %4956
        %4958 = vrot.lane.b32.xlu0 %v4767, 124
        %v4959 = vpop.permute.xlu0 %4958
        %4960 = vrot.lane.b32.xlu0 %v4769, 124
        %v4961 = vpop.permute.xlu0 %4960
        %4962 = vrot.lane.b32.xlu0 %v4771, 124
        %v4963 = vpop.permute.xlu0 %4962
        %4964 = vrot.lane.b32.xlu0 %v4773, 124
        %v4965 = vpop.permute.xlu0 %4964
        %4966 = vrot.lane.b32.xlu0 %v4775, 124
        %v4967 = vpop.permute.xlu0 %4966
        %4968 = vrot.lane.b32.xlu0 %v4777, 124
        %v4969 = vpop.permute.xlu0 %4968
        %4970 = vrot.lane.b32.xlu0 %v4779, 124
        %v4971 = vpop.permute.xlu0 %4970
        %4972 = vrot.lane.b32.xlu0 %v4781, 124
        %v4973 = vpop.permute.xlu0 %4972
        %4974 = vrot.lane.b32.xlu0 %v4783, 124
        %v4975 = vpop.permute.xlu0 %4974
        %4976 = vrot.lane.b32.xlu0 %v4785, 124
        %v4977 = vpop.permute.xlu0 %4976
        %4978 = vrot.lane.b32.xlu0 %v4787, 124
        %v4979 = vpop.permute.xlu0 %4978
        %4980 = vrot.lane.b32.xlu0 %v4789, 124
        %v4981 = vpop.permute.xlu0 %4980
        %4982 = vrot.lane.b32.xlu0 %v4791, 124
        %v4983 = vpop.permute.xlu0 %4982
        %4984 = vrot.lane.b32.xlu0 %v4793, 124
        %v4985 = vpop.permute.xlu0 %4984
        %4986 = vrot.lane.b32.xlu0 %v4795, 124
        %v4987 = vpop.permute.xlu0 %4986
        %4988 = vrot.lane.b32.xlu0 %v4797, 124
        %v4989 = vpop.permute.xlu0 %4988
        %4990 = vrot.lane.b32.xlu0 %v4799, 124
        %v4991 = vpop.permute.xlu0 %4990
        %4992 = vrot.lane.b32.xlu0 %v4801, 124
        %v4993 = vpop.permute.xlu0 %4992
        %4994 = vrot.lane.b32.xlu0 %v4803, 124
        %v4995 = vpop.permute.xlu0 %4994
        %4996 = vrot.lane.b32.xlu0 %v4805, 124
        %v4997 = vpop.permute.xlu0 %4996
        %4998 = vrot.lane.b32.xlu0 %v4807, 124
        %v4999 = vpop.permute.xlu0 %4998
        %5000 = vrot.lane.b32.xlu0 %v4809, 124
        %v5001 = vpop.permute.xlu0 %5000
        %5002 = vrot.lane.b32.xlu0 %v4811, 124
        %v5003 = vpop.permute.xlu0 %5002
        %5004 = vrot.lane.b32.xlu0 %v4813, 124
        %v5005 = vpop.permute.xlu0 %5004
        %5006 = vrot.lane.b32.xlu0 %v4815, 124
        %v5007 = vpop.permute.xlu0 %5006
        %5008 = vrot.lane.b32.xlu0 %v4817, 124
        %v5009 = vpop.permute.xlu0 %5008
        %5010 = vrot.lane.b32.xlu0 %v4819, 124
        %v5011 = vpop.permute.xlu0 %5010
        %5012 = vrot.lane.b32.xlu0 %v4821, 124
        %v5013 = vpop.permute.xlu0 %5012
        %5014 = vrot.lane.b32.xlu0 %v4823, 124
        %v5015 = vpop.permute.xlu0 %5014
        %5016 = vrot.lane.b32.xlu0 %v4825, 124
        %v5017 = vpop.permute.xlu0 %5016
        %5018 = vrot.lane.b32.xlu0 %v4827, 124
        %v5019 = vpop.permute.xlu0 %5018
        %5020 = vrot.lane.b32.xlu0 %v4829, 124
        %v5021 = vpop.permute.xlu0 %5020
        %5022 = vrot.lane.b32.xlu0 %v4831, 124
        %v5023 = vpop.permute.xlu0 %5022
        %5024 = vrot.lane.b32.xlu0 %v4833, 124
        %v5025 = vpop.permute.xlu0 %5024
        %5026 = vrot.lane.b32.xlu0 %v4835, 124
        %v5027 = vpop.permute.xlu0 %5026
        %5028 = vrot.lane.b32.xlu0 %v4837, 124
        %v5029 = vpop.permute.xlu0 %5028
        %5030 = vrot.lane.b32.xlu0 %v4839, 124
        %v5031 = vpop.permute.xlu0 %5030
        %5032 = vrot.lane.b32.xlu0 %v4841, 124
        %v5033 = vpop.permute.xlu0 %5032
        %5034 = vrot.lane.b32.xlu0 %v4843, 124
        %v5035 = vpop.permute.xlu0 %5034
        %5036 = vrot.lane.b32.xlu0 %v4845, 124
        %v5037 = vpop.permute.xlu0 %5036
        %5038 = vrot.lane.b32.xlu0 %v4847, 124
        %v5039 = vpop.permute.xlu0 %5038
        %5040 = vrot.lane.b32.xlu0 %v4849, 124
        %v5041 = vpop.permute.xlu0 %5040
        %v5106 = vsel %vm1456, %v4915, 0.0
        %5107 = vadd.xlane.f32.xlu0 %v5106
        %v5108 = vpop.xlane.xlu0 %5107
        %v5109 = vsel %vm1456, %v4917, 0.0
        %5110 = vadd.xlane.f32.xlu0 %v5109
        %v5111 = vpop.xlane.xlu0 %5110
        %v5112 = vsel %vm1456, %v4919, 0.0
        %5113 = vadd.xlane.f32.xlu0 %v5112
        %v5114 = vpop.xlane.xlu0 %5113
        %v5115 = vsel %vm1456, %v4921, 0.0
        %5116 = vadd.xlane.f32.xlu0 %v5115
        %v5117 = vpop.xlane.xlu0 %5116
        %v5118 = vsel %vm1456, %v4923, 0.0
        %5119 = vadd.xlane.f32.xlu0 %v5118
        %v5120 = vpop.xlane.xlu0 %5119
        %v5121 = vsel %vm1456, %v4925, 0.0
        %5122 = vadd.xlane.f32.xlu0 %v5121
        %v5123 = vpop.xlane.xlu0 %5122
        %v5124 = vsel %vm1456, %v4927, 0.0
        %5125 = vadd.xlane.f32.xlu0 %v5124
        %v5126 = vpop.xlane.xlu0 %5125
        %v5127 = vsel %vm1456, %v4929, 0.0
        %5128 = vadd.xlane.f32.xlu0 %v5127
        %v5129 = vpop.xlane.xlu0 %5128
        %v5130 = vsel %vm1456, %v4931, 0.0
        %5131 = vadd.xlane.f32.xlu0 %v5130
        %v5132 = vpop.xlane.xlu0 %5131
        %v5133 = vsel %vm1456, %v4933, 0.0
        %5134 = vadd.xlane.f32.xlu0 %v5133
        %v5135 = vpop.xlane.xlu0 %5134
        %v5136 = vsel %vm1456, %v4935, 0.0
        %5137 = vadd.xlane.f32.xlu0 %v5136
        %v5138 = vpop.xlane.xlu0 %5137
        %v5139 = vsel %vm1456, %v4937, 0.0
        %5140 = vadd.xlane.f32.xlu0 %v5139
        %v5141 = vpop.xlane.xlu0 %5140
        %v5142 = vsel %vm1456, %v4939, 0.0
        %5143 = vadd.xlane.f32.xlu0 %v5142
        %v5144 = vpop.xlane.xlu0 %5143
        %v5145 = vsel %vm1456, %v4941, 0.0
        %5146 = vadd.xlane.f32.xlu0 %v5145
        %v5147 = vpop.xlane.xlu0 %5146
        %v5148 = vsel %vm1456, %v4943, 0.0
        %5149 = vadd.xlane.f32.xlu0 %v5148
        %v5150 = vpop.xlane.xlu0 %5149
        %v5151 = vsel %vm1456, %v4945, 0.0
        %5152 = vadd.xlane.f32.xlu0 %v5151
        %v5153 = vpop.xlane.xlu0 %5152
        %v5154 = vsel %vm1456, %v4947, 0.0
        %5155 = vadd.xlane.f32.xlu0 %v5154
        %v5156 = vpop.xlane.xlu0 %5155
        %v5157 = vsel %vm1456, %v4949, 0.0
        %5158 = vadd.xlane.f32.xlu0 %v5157
        %v5159 = vpop.xlane.xlu0 %5158
        %v5160 = vsel %vm1456, %v4951, 0.0
        %5161 = vadd.xlane.f32.xlu0 %v5160
        %v5162 = vpop.xlane.xlu0 %5161
        %v5163 = vsel %vm1456, %v4953, 0.0
        %5164 = vadd.xlane.f32.xlu0 %v5163
        %v5165 = vpop.xlane.xlu0 %5164
        %v5166 = vsel %vm1456, %v4955, 0.0
        %5167 = vadd.xlane.f32.xlu0 %v5166
        %v5168 = vpop.xlane.xlu0 %5167
        %v5169 = vsel %vm1456, %v4957, 0.0
        %5170 = vadd.xlane.f32.xlu0 %v5169
        %v5171 = vpop.xlane.xlu0 %5170
        %v5172 = vsel %vm1456, %v4959, 0.0
        %5173 = vadd.xlane.f32.xlu0 %v5172
        %v5174 = vpop.xlane.xlu0 %5173
        %v5175 = vsel %vm1456, %v4961, 0.0
        %5176 = vadd.xlane.f32.xlu0 %v5175
        %v5177 = vpop.xlane.xlu0 %5176
        %v5178 = vsel %vm1456, %v4963, 0.0
        %5179 = vadd.xlane.f32.xlu0 %v5178
        %v5180 = vpop.xlane.xlu0 %5179
        %v5181 = vsel %vm1456, %v4965, 0.0
        %5182 = vadd.xlane.f32.xlu0 %v5181
        %v5183 = vpop.xlane.xlu0 %5182
        %v5184 = vsel %vm1456, %v4967, 0.0
        %5185 = vadd.xlane.f32.xlu0 %v5184
        %v5186 = vpop.xlane.xlu0 %5185
        %v5187 = vsel %vm1456, %v4969, 0.0
        %5188 = vadd.xlane.f32.xlu0 %v5187
        %v5189 = vpop.xlane.xlu0 %5188
        %v5190 = vsel %vm1456, %v4971, 0.0
        %5191 = vadd.xlane.f32.xlu0 %v5190
        %v5192 = vpop.xlane.xlu0 %5191
        %v5193 = vsel %vm1456, %v4973, 0.0
        %5194 = vadd.xlane.f32.xlu0 %v5193
        %v5195 = vpop.xlane.xlu0 %5194
        %v5196 = vsel %vm1456, %v4975, 0.0
        %5197 = vadd.xlane.f32.xlu0 %v5196
        %v5198 = vpop.xlane.xlu0 %5197
        %v5199 = vsel %vm1456, %v4977, 0.0
        %5200 = vadd.xlane.f32.xlu0 %v5199
        %v5201 = vpop.xlane.xlu0 %5200
        %v5202 = vsel %vm1456, %v4979, 0.0
        %5203 = vadd.xlane.f32.xlu0 %v5202
        %v5204 = vpop.xlane.xlu0 %5203
        %v5205 = vsel %vm1456, %v4981, 0.0
        %5206 = vadd.xlane.f32.xlu0 %v5205
        %v5207 = vpop.xlane.xlu0 %5206
        %v5208 = vsel %vm1456, %v4983, 0.0
        %5209 = vadd.xlane.f32.xlu0 %v5208
        %v5210 = vpop.xlane.xlu0 %5209
        %v5211 = vsel %vm1456, %v4985, 0.0
        %5212 = vadd.xlane.f32.xlu0 %v5211
        %v5213 = vpop.xlane.xlu0 %5212
        %v5214 = vsel %vm1456, %v4987, 0.0
        %5215 = vadd.xlane.f32.xlu0 %v5214
        %v5216 = vpop.xlane.xlu0 %5215
        %v5217 = vsel %vm1456, %v4989, 0.0
        %5218 = vadd.xlane.f32.xlu0 %v5217
        %v5219 = vpop.xlane.xlu0 %5218
        %v5220 = vsel %vm1456, %v4991, 0.0
        %5221 = vadd.xlane.f32.xlu0 %v5220
        %v5222 = vpop.xlane.xlu0 %5221
        %v5223 = vsel %vm1456, %v4993, 0.0
        %5224 = vadd.xlane.f32.xlu0 %v5223
        %v5225 = vpop.xlane.xlu0 %5224
        %v5226 = vsel %vm1456, %v4995, 0.0
        %5227 = vadd.xlane.f32.xlu0 %v5226
        %v5228 = vpop.xlane.xlu0 %5227
        %v5229 = vsel %vm1456, %v4997, 0.0
        %5230 = vadd.xlane.f32.xlu0 %v5229
        %v5231 = vpop.xlane.xlu0 %5230
        %v5232 = vsel %vm1456, %v4999, 0.0
        %5233 = vadd.xlane.f32.xlu0 %v5232
        %v5234 = vpop.xlane.xlu0 %5233
        %v5235 = vsel %vm1456, %v5001, 0.0
        %5236 = vadd.xlane.f32.xlu0 %v5235
        %v5237 = vpop.xlane.xlu0 %5236
        %v5238 = vsel %vm1456, %v5003, 0.0
        %5239 = vadd.xlane.f32.xlu0 %v5238
        %v5240 = vpop.xlane.xlu0 %5239
        %v5241 = vsel %vm1456, %v5005, 0.0
        %5242 = vadd.xlane.f32.xlu0 %v5241
        %v5243 = vpop.xlane.xlu0 %5242
        %v5244 = vsel %vm1456, %v5007, 0.0
        %5245 = vadd.xlane.f32.xlu0 %v5244
        %v5246 = vpop.xlane.xlu0 %5245
        %v5247 = vsel %vm1456, %v5009, 0.0
        %5248 = vadd.xlane.f32.xlu0 %v5247
        %v5249 = vpop.xlane.xlu0 %5248
        %v5250 = vsel %vm1456, %v5011, 0.0
        %5251 = vadd.xlane.f32.xlu0 %v5250
        %v5252 = vpop.xlane.xlu0 %5251
        %v5253 = vsel %vm1456, %v5013, 0.0
        %5254 = vadd.xlane.f32.xlu0 %v5253
        %v5255 = vpop.xlane.xlu0 %5254
        %v5256 = vsel %vm1456, %v5015, 0.0
        %5257 = vadd.xlane.f32.xlu0 %v5256
        %v5258 = vpop.xlane.xlu0 %5257
        %v5259 = vsel %vm1456, %v5017, 0.0
        %5260 = vadd.xlane.f32.xlu0 %v5259
        %v5261 = vpop.xlane.xlu0 %5260
        %v5262 = vsel %vm1456, %v5019, 0.0
        %5263 = vadd.xlane.f32.xlu0 %v5262
        %v5264 = vpop.xlane.xlu0 %5263
        %v5265 = vsel %vm1456, %v5021, 0.0
        %5266 = vadd.xlane.f32.xlu0 %v5265
        %v5267 = vpop.xlane.xlu0 %5266
        %v5268 = vsel %vm1456, %v5023, 0.0
        %5269 = vadd.xlane.f32.xlu0 %v5268
        %v5270 = vpop.xlane.xlu0 %5269
        %v5271 = vsel %vm1456, %v5025, 0.0
        %5272 = vadd.xlane.f32.xlu0 %v5271
        %v5273 = vpop.xlane.xlu0 %5272
        %v5274 = vsel %vm1456, %v5027, 0.0
        %5275 = vadd.xlane.f32.xlu0 %v5274
        %v5276 = vpop.xlane.xlu0 %5275
        %v5277 = vsel %vm1456, %v5029, 0.0
        %5278 = vadd.xlane.f32.xlu0 %v5277
        %v5279 = vpop.xlane.xlu0 %5278
        %v5280 = vsel %vm1456, %v5031, 0.0
        %5281 = vadd.xlane.f32.xlu0 %v5280
        %v5282 = vpop.xlane.xlu0 %5281
        %v5283 = vsel %vm1456, %v5033, 0.0
        %5284 = vadd.xlane.f32.xlu0 %v5283
        %v5285 = vpop.xlane.xlu0 %5284
        %v5286 = vsel %vm1456, %v5035, 0.0
        %5287 = vadd.xlane.f32.xlu0 %v5286
        %v5288 = vpop.xlane.xlu0 %5287
        %v5289 = vsel %vm1456, %v5037, 0.0
        %5290 = vadd.xlane.f32.xlu0 %v5289
        %v5291 = vpop.xlane.xlu0 %5290
        %v5292 = vsel %vm1456, %v5039, 0.0
        %5293 = vadd.xlane.f32.xlu0 %v5292
        %v5294 = vpop.xlane.xlu0 %5293
        %v5295 = vsel %vm1456, %v5041, 0.0
        %5296 = vadd.xlane.f32.xlu0 %v5295
        %v5297 = vpop.xlane.xlu0 %5296
        %v5298 = vrcp.pop %v5108
        %v5299 = vmul.f32 %v4723, %v5298
        %v5300 = vrcp.pop %v5111
        %v5301 = vmul.f32 %v4725, %v5300
        %v5302 = vrcp.pop %v5114
        %v5303 = vmul.f32 %v4727, %v5302
        %v5304 = vrcp.pop %v5117
        %v5305 = vmul.f32 %v4729, %v5304
        %v5306 = vrcp.pop %v5120
        %v5307 = vmul.f32 %v4731, %v5306
        %v5308 = vrcp.pop %v5123
        %v5309 = vmul.f32 %v4733, %v5308
        %v5310 = vrcp.pop %v5126
        %v5311 = vmul.f32 %v4735, %v5310
        %v5312 = vrcp.pop %v5129
        %v5313 = vmul.f32 %v4737, %v5312
        %v5314 = vrcp.pop %v5132
        %v5315 = vmul.f32 %v4739, %v5314
        %v5316 = vrcp.pop %v5135
        %v5317 = vmul.f32 %v4741, %v5316
        %v5318 = vrcp.pop %v5138
        %v5319 = vmul.f32 %v4743, %v5318
        %v5320 = vrcp.pop %v5141
        %v5321 = vmul.f32 %v4745, %v5320
        %v5322 = vrcp.pop %v5144
        %v5323 = vmul.f32 %v4747, %v5322
        %v5324 = vrcp.pop %v5147
        %v5325 = vmul.f32 %v4749, %v5324
        %v5326 = vrcp.pop %v5150
        %v5327 = vmul.f32 %v4751, %v5326
        %v5328 = vrcp.pop %v5153
        %v5329 = vmul.f32 %v4753, %v5328
        %v5330 = vrcp.pop %v5156
        %v5331 = vmul.f32 %v4755, %v5330
        %v5332 = vrcp.pop %v5159
        %v5333 = vmul.f32 %v4757, %v5332
        %v5334 = vrcp.pop %v5162
        %v5335 = vmul.f32 %v4759, %v5334
        %v5336 = vrcp.pop %v5165
        %v5337 = vmul.f32 %v4761, %v5336
        %v5338 = vrcp.pop %v5168
        %v5339 = vmul.f32 %v4763, %v5338
        %v5340 = vrcp.pop %v5171
        %v5341 = vmul.f32 %v4765, %v5340
        %v5342 = vrcp.pop %v5174
        %v5343 = vmul.f32 %v4767, %v5342
        %v5344 = vrcp.pop %v5177
        %v5345 = vmul.f32 %v4769, %v5344
        %v5346 = vrcp.pop %v5180
        %v5347 = vmul.f32 %v4771, %v5346
        %v5348 = vrcp.pop %v5183
        %v5349 = vmul.f32 %v4773, %v5348
        %v5350 = vrcp.pop %v5186
        %v5351 = vmul.f32 %v4775, %v5350
        %v5352 = vrcp.pop %v5189
        %v5353 = vmul.f32 %v4777, %v5352
        %v5354 = vrcp.pop %v5192
        %v5355 = vmul.f32 %v4779, %v5354
        %v5356 = vrcp.pop %v5195
        %v5357 = vmul.f32 %v4781, %v5356
        %v5358 = vrcp.pop %v5198
        %v5359 = vmul.f32 %v4783, %v5358
        %v5360 = vrcp.pop %v5201
        %v5361 = vmul.f32 %v4785, %v5360
        %v5362 = vrcp.pop %v5204
        %v5363 = vmul.f32 %v4787, %v5362
        %v5364 = vrcp.pop %v5207
        %v5365 = vmul.f32 %v4789, %v5364
        %v5366 = vrcp.pop %v5210
        %v5367 = vmul.f32 %v4791, %v5366
        %v5368 = vrcp.pop %v5213
        %v5369 = vmul.f32 %v4793, %v5368
        %v5370 = vrcp.pop %v5216
        %v5371 = vmul.f32 %v4795, %v5370
        %v5372 = vrcp.pop %v5219
        %v5373 = vmul.f32 %v4797, %v5372
        %v5374 = vrcp.pop %v5222
        %v5375 = vmul.f32 %v4799, %v5374
        %v5376 = vrcp.pop %v5225
        %v5377 = vmul.f32 %v4801, %v5376
        %v5378 = vrcp.pop %v5228
        %v5379 = vmul.f32 %v4803, %v5378
        %v5380 = vrcp.pop %v5231
        %v5381 = vmul.f32 %v4805, %v5380
        %v5382 = vrcp.pop %v5234
        %v5383 = vmul.f32 %v4807, %v5382
        %v5384 = vrcp.pop %v5237
        %v5385 = vmul.f32 %v4809, %v5384
        %v5386 = vrcp.pop %v5240
        %v5387 = vmul.f32 %v4811, %v5386
        %v5388 = vrcp.pop %v5243
        %v5389 = vmul.f32 %v4813, %v5388
        %v5390 = vrcp.pop %v5246
        %v5391 = vmul.f32 %v4815, %v5390
        %v5392 = vrcp.pop %v5249
        %v5393 = vmul.f32 %v4817, %v5392
        %v5394 = vrcp.pop %v5252
        %v5395 = vmul.f32 %v4819, %v5394
        %v5396 = vrcp.pop %v5255
        %v5397 = vmul.f32 %v4821, %v5396
        %v5398 = vrcp.pop %v5258
        %v5399 = vmul.f32 %v4823, %v5398
        %v5400 = vrcp.pop %v5261
        %v5401 = vmul.f32 %v4825, %v5400
        %v5402 = vrcp.pop %v5264
        %v5403 = vmul.f32 %v4827, %v5402
        %v5404 = vrcp.pop %v5267
        %v5405 = vmul.f32 %v4829, %v5404
        %v5406 = vrcp.pop %v5270
        %v5407 = vmul.f32 %v4831, %v5406
        %v5408 = vrcp.pop %v5273
        %v5409 = vmul.f32 %v4833, %v5408
        %v5410 = vrcp.pop %v5276
        %v5411 = vmul.f32 %v4835, %v5410
        %v5412 = vrcp.pop %v5279
        %v5413 = vmul.f32 %v4837, %v5412
        %v5414 = vrcp.pop %v5282
        %v5415 = vmul.f32 %v4839, %v5414
        %v5416 = vrcp.pop %v5285
        %v5417 = vmul.f32 %v4841, %v5416
        %v5418 = vrcp.pop %v5288
        %v5419 = vmul.f32 %v4843, %v5418
        %v5420 = vrcp.pop %v5291
        %v5421 = vmul.f32 %v4845, %v5420
        %v5422 = vrcp.pop %v5294
        %v5423 = vmul.f32 %v4847, %v5422
        %v5424 = vrcp.pop %v5297
        %v5425 = vmul.f32 %v4849, %v5424
        %5427 = vset.pattern.permute.xlu0 4
        %5428 = vperm.xlu0 %5427, %v5299
        %v5429 = vpop.permute.xlu0 %5428
        %5432 = vset.pattern.permute.xlu0 4
        %5433 = vperm.xlu0 %5432, %v5301
        %v5434 = vpop.permute.xlu0 %5433
        %5437 = vset.pattern.permute.xlu0 4
        %5438 = vperm.xlu0 %5437, %v5303
        %v5439 = vpop.permute.xlu0 %5438
        %5442 = vset.pattern.permute.xlu0 4
        %5443 = vperm.xlu0 %5442, %v5305
        %v5444 = vpop.permute.xlu0 %5443
        %5447 = vset.pattern.permute.xlu0 4
        %5448 = vperm.xlu0 %5447, %v5307
        %v5449 = vpop.permute.xlu0 %5448
        %5452 = vset.pattern.permute.xlu0 4
        %5453 = vperm.xlu0 %5452, %v5309
        %v5454 = vpop.permute.xlu0 %5453
        %5457 = vset.pattern.permute.xlu0 4
        %5458 = vperm.xlu0 %5457, %v5311
        %v5459 = vpop.permute.xlu0 %5458
        %5462 = vset.pattern.permute.xlu0 4
        %5463 = vperm.xlu0 %5462, %v5313
        %v5464 = vpop.permute.xlu0 %5463
        %5467 = vset.pattern.permute.xlu0 4
        %5468 = vperm.xlu0 %5467, %v5315
        %v5469 = vpop.permute.xlu0 %5468
        %5472 = vset.pattern.permute.xlu0 4
        %5473 = vperm.xlu0 %5472, %v5317
        %v5474 = vpop.permute.xlu0 %5473
        %5477 = vset.pattern.permute.xlu0 4
        %5478 = vperm.xlu0 %5477, %v5319
        %v5479 = vpop.permute.xlu0 %5478
        %5482 = vset.pattern.permute.xlu0 4
        %5483 = vperm.xlu0 %5482, %v5321
        %v5484 = vpop.permute.xlu0 %5483
        %5487 = vset.pattern.permute.xlu0 4
        %5488 = vperm.xlu0 %5487, %v5323
        %v5489 = vpop.permute.xlu0 %5488
        %5492 = vset.pattern.permute.xlu0 4
        %5493 = vperm.xlu0 %5492, %v5325
        %v5494 = vpop.permute.xlu0 %5493
        %5497 = vset.pattern.permute.xlu0 4
        %5498 = vperm.xlu0 %5497, %v5327
        %v5499 = vpop.permute.xlu0 %5498
        %5502 = vset.pattern.permute.xlu0 4
        %5503 = vperm.xlu0 %5502, %v5329
        %v5504 = vpop.permute.xlu0 %5503
        %5507 = vset.pattern.permute.xlu0 4
        %5508 = vperm.xlu0 %5507, %v5331
        %v5509 = vpop.permute.xlu0 %5508
        %5512 = vset.pattern.permute.xlu0 4
        %5513 = vperm.xlu0 %5512, %v5333
        %v5514 = vpop.permute.xlu0 %5513
        %5517 = vset.pattern.permute.xlu0 4
        %5518 = vperm.xlu0 %5517, %v5335
        %v5519 = vpop.permute.xlu0 %5518
        %5522 = vset.pattern.permute.xlu0 4
        %5523 = vperm.xlu0 %5522, %v5337
        %v5524 = vpop.permute.xlu0 %5523
        %5527 = vset.pattern.permute.xlu0 4
        %5528 = vperm.xlu0 %5527, %v5339
        %v5529 = vpop.permute.xlu0 %5528
        %5532 = vset.pattern.permute.xlu0 4
        %5533 = vperm.xlu0 %5532, %v5341
        %v5534 = vpop.permute.xlu0 %5533
        %5537 = vset.pattern.permute.xlu0 4
        %5538 = vperm.xlu0 %5537, %v5343
        %v5539 = vpop.permute.xlu0 %5538
        %5542 = vset.pattern.permute.xlu0 4
        %5543 = vperm.xlu0 %5542, %v5345
        %v5544 = vpop.permute.xlu0 %5543
        %5547 = vset.pattern.permute.xlu0 4
        %5548 = vperm.xlu0 %5547, %v5347
        %v5549 = vpop.permute.xlu0 %5548
        %5552 = vset.pattern.permute.xlu0 4
        %5553 = vperm.xlu0 %5552, %v5349
        %v5554 = vpop.permute.xlu0 %5553
        %5557 = vset.pattern.permute.xlu0 4
        %5558 = vperm.xlu0 %5557, %v5351
        %v5559 = vpop.permute.xlu0 %5558
        %5562 = vset.pattern.permute.xlu0 4
        %5563 = vperm.xlu0 %5562, %v5353
        %v5564 = vpop.permute.xlu0 %5563
        %5567 = vset.pattern.permute.xlu0 4
        %5568 = vperm.xlu0 %5567, %v5355
        %v5569 = vpop.permute.xlu0 %5568
        %5572 = vset.pattern.permute.xlu0 4
        %5573 = vperm.xlu0 %5572, %v5357
        %v5574 = vpop.permute.xlu0 %5573
        %5577 = vset.pattern.permute.xlu0 4
        %5578 = vperm.xlu0 %5577, %v5359
        %v5579 = vpop.permute.xlu0 %5578
        %5582 = vset.pattern.permute.xlu0 4
        %5583 = vperm.xlu0 %5582, %v5361
        %v5584 = vpop.permute.xlu0 %5583
        %5587 = vset.pattern.permute.xlu0 4
        %5588 = vperm.xlu0 %5587, %v5363
        %v5589 = vpop.permute.xlu0 %5588
        %5592 = vset.pattern.permute.xlu0 4
        %5593 = vperm.xlu0 %5592, %v5365
        %v5594 = vpop.permute.xlu0 %5593
        %5597 = vset.pattern.permute.xlu0 4
        %5598 = vperm.xlu0 %5597, %v5367
        %v5599 = vpop.permute.xlu0 %5598
        %5602 = vset.pattern.permute.xlu0 4
        %5603 = vperm.xlu0 %5602, %v5369
        %v5604 = vpop.permute.xlu0 %5603
        %5607 = vset.pattern.permute.xlu0 4
        %5608 = vperm.xlu0 %5607, %v5371
        %v5609 = vpop.permute.xlu0 %5608
        %5612 = vset.pattern.permute.xlu0 4
        %5613 = vperm.xlu0 %5612, %v5373
        %v5614 = vpop.permute.xlu0 %5613
        %5617 = vset.pattern.permute.xlu0 4
        %5618 = vperm.xlu0 %5617, %v5375
        %v5619 = vpop.permute.xlu0 %5618
        %5622 = vset.pattern.permute.xlu0 4
        %5623 = vperm.xlu0 %5622, %v5377
        %v5624 = vpop.permute.xlu0 %5623
        %5627 = vset.pattern.permute.xlu0 4
        %5628 = vperm.xlu0 %5627, %v5379
        %v5629 = vpop.permute.xlu0 %5628
        %5632 = vset.pattern.permute.xlu0 4
        %5633 = vperm.xlu0 %5632, %v5381
        %v5634 = vpop.permute.xlu0 %5633
        %5637 = vset.pattern.permute.xlu0 4
        %5638 = vperm.xlu0 %5637, %v5383
        %v5639 = vpop.permute.xlu0 %5638
        %5642 = vset.pattern.permute.xlu0 4
        %5643 = vperm.xlu0 %5642, %v5385
        %v5644 = vpop.permute.xlu0 %5643
        %5647 = vset.pattern.permute.xlu0 4
        %5648 = vperm.xlu0 %5647, %v5387
        %v5649 = vpop.permute.xlu0 %5648
        %5652 = vset.pattern.permute.xlu0 4
        %5653 = vperm.xlu0 %5652, %v5389
        %v5654 = vpop.permute.xlu0 %5653
        %5657 = vset.pattern.permute.xlu0 4
        %5658 = vperm.xlu0 %5657, %v5391
        %v5659 = vpop.permute.xlu0 %5658
        %5662 = vset.pattern.permute.xlu0 4
        %5663 = vperm.xlu0 %5662, %v5393
        %v5664 = vpop.permute.xlu0 %5663
        %5667 = vset.pattern.permute.xlu0 4
        %5668 = vperm.xlu0 %5667, %v5395
        %v5669 = vpop.permute.xlu0 %5668
        %5672 = vset.pattern.permute.xlu0 4
        %5673 = vperm.xlu0 %5672, %v5397
        %v5674 = vpop.permute.xlu0 %5673
        %5677 = vset.pattern.permute.xlu0 4
        %5678 = vperm.xlu0 %5677, %v5399
        %v5679 = vpop.permute.xlu0 %5678
        %5682 = vset.pattern.permute.xlu0 4
        %5683 = vperm.xlu0 %5682, %v5401
        %v5684 = vpop.permute.xlu0 %5683
        %5687 = vset.pattern.permute.xlu0 4
        %5688 = vperm.xlu0 %5687, %v5403
        %v5689 = vpop.permute.xlu0 %5688
        %5692 = vset.pattern.permute.xlu0 4
        %5693 = vperm.xlu0 %5692, %v5405
        %v5694 = vpop.permute.xlu0 %5693
        %5697 = vset.pattern.permute.xlu0 4
        %5698 = vperm.xlu0 %5697, %v5407
        %v5699 = vpop.permute.xlu0 %5698
        %5702 = vset.pattern.permute.xlu0 4
        %5703 = vperm.xlu0 %5702, %v5409
        %v5704 = vpop.permute.xlu0 %5703
        %5707 = vset.pattern.permute.xlu0 4
        %5708 = vperm.xlu0 %5707, %v5411
        %v5709 = vpop.permute.xlu0 %5708
        %5712 = vset.pattern.permute.xlu0 4
        %5713 = vperm.xlu0 %5712, %v5413
        %v5714 = vpop.permute.xlu0 %5713
        %5717 = vset.pattern.permute.xlu0 4
        %5718 = vperm.xlu0 %5717, %v5415
        %v5719 = vpop.permute.xlu0 %5718
        %5722 = vset.pattern.permute.xlu0 4
        %5723 = vperm.xlu0 %5722, %v5417
        %v5724 = vpop.permute.xlu0 %5723
        %5727 = vset.pattern.permute.xlu0 4
        %5728 = vperm.xlu0 %5727, %v5419
        %v5729 = vpop.permute.xlu0 %5728
        %5732 = vset.pattern.permute.xlu0 4
        %5733 = vperm.xlu0 %5732, %v5421
        %v5734 = vpop.permute.xlu0 %5733
        %5737 = vset.pattern.permute.xlu0 4
        %5738 = vperm.xlu0 %5737, %v5423
        %v5739 = vpop.permute.xlu0 %5738
        %5742 = vset.pattern.permute.xlu0 4
        %5743 = vperm.xlu0 %5742, %v5425
        %v5744 = vpop.permute.xlu0 %5743
        %v5746 = vmul.f32 %v5429, %v1138
        %v5747 = vmul.f32 %v5434, %v1143
        %v5748 = vmul.f32 %v5439, %v1148
        %v5749 = vmul.f32 %v5444, %v1153
        %v5750 = vmul.f32 %v5449, %v1158
        %v5751 = vmul.f32 %v5454, %v1163
        %v5752 = vmul.f32 %v5459, %v1168
        %v5753 = vmul.f32 %v5464, %v1173
        %v5754 = vmul.f32 %v5469, %v1178
        %v5755 = vmul.f32 %v5474, %v1183
        %v5756 = vmul.f32 %v5479, %v1188
        %v5757 = vmul.f32 %v5484, %v1193
        %v5758 = vmul.f32 %v5489, %v1198
        %v5759 = vmul.f32 %v5494, %v1203
        %v5760 = vmul.f32 %v5499, %v1208
        %v5761 = vmul.f32 %v5504, %v1213
        %v5762 = vmul.f32 %v5509, %v1218
        %v5763 = vmul.f32 %v5514, %v1223
        %v5764 = vmul.f32 %v5519, %v1228
        %v5765 = vmul.f32 %v5524, %v1233
        %v5766 = vmul.f32 %v5529, %v1238
        %v5767 = vmul.f32 %v5534, %v1243
        %v5768 = vmul.f32 %v5539, %v1248
        %v5769 = vmul.f32 %v5544, %v1253
        %v5770 = vmul.f32 %v5549, %v1258
        %v5771 = vmul.f32 %v5554, %v1263
        %v5772 = vmul.f32 %v5559, %v1268
        %v5773 = vmul.f32 %v5564, %v1273
        %v5774 = vmul.f32 %v5569, %v1278
        %v5775 = vmul.f32 %v5574, %v1283
        %v5776 = vmul.f32 %v5579, %v1288
        %v5777 = vmul.f32 %v5584, %v1293
        %v5778 = vmul.f32 %v5589, %v1298
        %v5779 = vmul.f32 %v5594, %v1303
        %v5780 = vmul.f32 %v5599, %v1308
        %v5781 = vmul.f32 %v5604, %v1313
        %v5782 = vmul.f32 %v5609, %v1318
        %v5783 = vmul.f32 %v5614, %v1323
        %v5784 = vmul.f32 %v5619, %v1328
        %v5785 = vmul.f32 %v5624, %v1333
        %v5786 = vmul.f32 %v5629, %v1338
        %v5787 = vmul.f32 %v5634, %v1343
        %v5788 = vmul.f32 %v5639, %v1348
        %v5789 = vmul.f32 %v5644, %v1353
        %v5790 = vmul.f32 %v5649, %v1358
        %v5791 = vmul.f32 %v5654, %v1363
        %v5792 = vmul.f32 %v5659, %v1368
        %v5793 = vmul.f32 %v5664, %v1373
        %v5794 = vmul.f32 %v5669, %v1378
        %v5795 = vmul.f32 %v5674, %v1383
        %v5796 = vmul.f32 %v5679, %v1388
        %v5797 = vmul.f32 %v5684, %v1393
        %v5798 = vmul.f32 %v5689, %v1398
        %v5799 = vmul.f32 %v5694, %v1403
        %v5800 = vmul.f32 %v5699, %v1408
        %v5801 = vmul.f32 %v5704, %v1413
        %v5802 = vmul.f32 %v5709, %v1418
        %v5803 = vmul.f32 %v5714, %v1423
        %v5804 = vmul.f32 %v5719, %v1428
        %v5805 = vmul.f32 %v5724, %v1433
        %v5806 = vmul.f32 %v5729, %v1438
        %v5807 = vmul.f32 %v5734, %v1443
        %v5808 = vmul.f32 %v5739, %v1448
        %v5809 = vmul.f32 %v5744, %v1453
        %5810 = vset.pattern.permute.xlu0 5
        %5811 = vperm.xlu0 %5810, %v5299
        %v5812 = vpop.permute.xlu0 %5811
        %5814 = vset.pattern.permute.xlu0 5
        %5815 = vperm.xlu0 %5814, %v5301
        %v5816 = vpop.permute.xlu0 %5815
        %5818 = vset.pattern.permute.xlu0 5
        %5819 = vperm.xlu0 %5818, %v5303
        %v5820 = vpop.permute.xlu0 %5819
        %5822 = vset.pattern.permute.xlu0 5
        %5823 = vperm.xlu0 %5822, %v5305
        %v5824 = vpop.permute.xlu0 %5823
        %5826 = vset.pattern.permute.xlu0 5
        %5827 = vperm.xlu0 %5826, %v5307
        %v5828 = vpop.permute.xlu0 %5827
        %5830 = vset.pattern.permute.xlu0 5
        %5831 = vperm.xlu0 %5830, %v5309
        %v5832 = vpop.permute.xlu0 %5831
        %5834 = vset.pattern.permute.xlu0 5
        %5835 = vperm.xlu0 %5834, %v5311
        %v5836 = vpop.permute.xlu0 %5835
        %5838 = vset.pattern.permute.xlu0 5
        %5839 = vperm.xlu0 %5838, %v5313
        %v5840 = vpop.permute.xlu0 %5839
        %5842 = vset.pattern.permute.xlu0 5
        %5843 = vperm.xlu0 %5842, %v5315
        %v5844 = vpop.permute.xlu0 %5843
        %5846 = vset.pattern.permute.xlu0 5
        %5847 = vperm.xlu0 %5846, %v5317
        %v5848 = vpop.permute.xlu0 %5847
        %5850 = vset.pattern.permute.xlu0 5
        %5851 = vperm.xlu0 %5850, %v5319
        %v5852 = vpop.permute.xlu0 %5851
        %5854 = vset.pattern.permute.xlu0 5
        %5855 = vperm.xlu0 %5854, %v5321
        %v5856 = vpop.permute.xlu0 %5855
        %5858 = vset.pattern.permute.xlu0 5
        %5859 = vperm.xlu0 %5858, %v5323
        %v5860 = vpop.permute.xlu0 %5859
        %5862 = vset.pattern.permute.xlu0 5
        %5863 = vperm.xlu0 %5862, %v5325
        %v5864 = vpop.permute.xlu0 %5863
        %5866 = vset.pattern.permute.xlu0 5
        %5867 = vperm.xlu0 %5866, %v5327
        %v5868 = vpop.permute.xlu0 %5867
        %5870 = vset.pattern.permute.xlu0 5
        %5871 = vperm.xlu0 %5870, %v5329
        %v5872 = vpop.permute.xlu0 %5871
        %5874 = vset.pattern.permute.xlu0 5
        %5875 = vperm.xlu0 %5874, %v5331
        %v5876 = vpop.permute.xlu0 %5875
        %5878 = vset.pattern.permute.xlu0 5
        %5879 = vperm.xlu0 %5878, %v5333
        %v5880 = vpop.permute.xlu0 %5879
        %5882 = vset.pattern.permute.xlu0 5
        %5883 = vperm.xlu0 %5882, %v5335
        %v5884 = vpop.permute.xlu0 %5883
        %5886 = vset.pattern.permute.xlu0 5
        %5887 = vperm.xlu0 %5886, %v5337
        %v5888 = vpop.permute.xlu0 %5887
        %5890 = vset.pattern.permute.xlu0 5
        %5891 = vperm.xlu0 %5890, %v5339
        %v5892 = vpop.permute.xlu0 %5891
        %5894 = vset.pattern.permute.xlu0 5
        %5895 = vperm.xlu0 %5894, %v5341
        %v5896 = vpop.permute.xlu0 %5895
        %5898 = vset.pattern.permute.xlu0 5
        %5899 = vperm.xlu0 %5898, %v5343
        %v5900 = vpop.permute.xlu0 %5899
        %5902 = vset.pattern.permute.xlu0 5
        %5903 = vperm.xlu0 %5902, %v5345
        %v5904 = vpop.permute.xlu0 %5903
        %5906 = vset.pattern.permute.xlu0 5
        %5907 = vperm.xlu0 %5906, %v5347
        %v5908 = vpop.permute.xlu0 %5907
        %5910 = vset.pattern.permute.xlu0 5
        %5911 = vperm.xlu0 %5910, %v5349
        %v5912 = vpop.permute.xlu0 %5911
        %5914 = vset.pattern.permute.xlu0 5
        %5915 = vperm.xlu0 %5914, %v5351
        %v5916 = vpop.permute.xlu0 %5915
        %5918 = vset.pattern.permute.xlu0 5
        %5919 = vperm.xlu0 %5918, %v5353
        %v5920 = vpop.permute.xlu0 %5919
        %5922 = vset.pattern.permute.xlu0 5
        %5923 = vperm.xlu0 %5922, %v5355
        %v5924 = vpop.permute.xlu0 %5923
        %5926 = vset.pattern.permute.xlu0 5
        %5927 = vperm.xlu0 %5926, %v5357
        %v5928 = vpop.permute.xlu0 %5927
        %5930 = vset.pattern.permute.xlu0 5
        %5931 = vperm.xlu0 %5930, %v5359
        %v5932 = vpop.permute.xlu0 %5931
        %5934 = vset.pattern.permute.xlu0 5
        %5935 = vperm.xlu0 %5934, %v5361
        %v5936 = vpop.permute.xlu0 %5935
        %5938 = vset.pattern.permute.xlu0 5
        %5939 = vperm.xlu0 %5938, %v5363
        %v5940 = vpop.permute.xlu0 %5939
        %5942 = vset.pattern.permute.xlu0 5
        %5943 = vperm.xlu0 %5942, %v5365
        %v5944 = vpop.permute.xlu0 %5943
        %5946 = vset.pattern.permute.xlu0 5
        %5947 = vperm.xlu0 %5946, %v5367
        %v5948 = vpop.permute.xlu0 %5947
        %5950 = vset.pattern.permute.xlu0 5
        %5951 = vperm.xlu0 %5950, %v5369
        %v5952 = vpop.permute.xlu0 %5951
        %5954 = vset.pattern.permute.xlu0 5
        %5955 = vperm.xlu0 %5954, %v5371
        %v5956 = vpop.permute.xlu0 %5955
        %5958 = vset.pattern.permute.xlu0 5
        %5959 = vperm.xlu0 %5958, %v5373
        %v5960 = vpop.permute.xlu0 %5959
        %5962 = vset.pattern.permute.xlu0 5
        %5963 = vperm.xlu0 %5962, %v5375
        %v5964 = vpop.permute.xlu0 %5963
        %5966 = vset.pattern.permute.xlu0 5
        %5967 = vperm.xlu0 %5966, %v5377
        %v5968 = vpop.permute.xlu0 %5967
        %5970 = vset.pattern.permute.xlu0 5
        %5971 = vperm.xlu0 %5970, %v5379
        %v5972 = vpop.permute.xlu0 %5971
        %5974 = vset.pattern.permute.xlu0 5
        %5975 = vperm.xlu0 %5974, %v5381
        %v5976 = vpop.permute.xlu0 %5975
        %5978 = vset.pattern.permute.xlu0 5
        %5979 = vperm.xlu0 %5978, %v5383
        %v5980 = vpop.permute.xlu0 %5979
        %5982 = vset.pattern.permute.xlu0 5
        %5983 = vperm.xlu0 %5982, %v5385
        %v5984 = vpop.permute.xlu0 %5983
        %5986 = vset.pattern.permute.xlu0 5
        %5987 = vperm.xlu0 %5986, %v5387
        %v5988 = vpop.permute.xlu0 %5987
        %5990 = vset.pattern.permute.xlu0 5
        %5991 = vperm.xlu0 %5990, %v5389
        %v5992 = vpop.permute.xlu0 %5991
        %5994 = vset.pattern.permute.xlu0 5
        %5995 = vperm.xlu0 %5994, %v5391
        %v5996 = vpop.permute.xlu0 %5995
        %5998 = vset.pattern.permute.xlu0 5
        %5999 = vperm.xlu0 %5998, %v5393
        %v6000 = vpop.permute.xlu0 %5999
        %6002 = vset.pattern.permute.xlu0 5
        %6003 = vperm.xlu0 %6002, %v5395
        %v6004 = vpop.permute.xlu0 %6003
        %6006 = vset.pattern.permute.xlu0 5
        %6007 = vperm.xlu0 %6006, %v5397
        %v6008 = vpop.permute.xlu0 %6007
        %6010 = vset.pattern.permute.xlu0 5
        %6011 = vperm.xlu0 %6010, %v5399
        %v6012 = vpop.permute.xlu0 %6011
        %6014 = vset.pattern.permute.xlu0 5
        %6015 = vperm.xlu0 %6014, %v5401
        %v6016 = vpop.permute.xlu0 %6015
        %6018 = vset.pattern.permute.xlu0 5
        %6019 = vperm.xlu0 %6018, %v5403
        %v6020 = vpop.permute.xlu0 %6019
        %6022 = vset.pattern.permute.xlu0 5
        %6023 = vperm.xlu0 %6022, %v5405
        %v6024 = vpop.permute.xlu0 %6023
        %6026 = vset.pattern.permute.xlu0 5
        %6027 = vperm.xlu0 %6026, %v5407
        %v6028 = vpop.permute.xlu0 %6027
        %6030 = vset.pattern.permute.xlu0 5
        %6031 = vperm.xlu0 %6030, %v5409
        %v6032 = vpop.permute.xlu0 %6031
        %6034 = vset.pattern.permute.xlu0 5
        %6035 = vperm.xlu0 %6034, %v5411
        %v6036 = vpop.permute.xlu0 %6035
        %6038 = vset.pattern.permute.xlu0 5
        %6039 = vperm.xlu0 %6038, %v5413
        %v6040 = vpop.permute.xlu0 %6039
        %6042 = vset.pattern.permute.xlu0 5
        %6043 = vperm.xlu0 %6042, %v5415
        %v6044 = vpop.permute.xlu0 %6043
        %6046 = vset.pattern.permute.xlu0 5
        %6047 = vperm.xlu0 %6046, %v5417
        %v6048 = vpop.permute.xlu0 %6047
        %6050 = vset.pattern.permute.xlu0 5
        %6051 = vperm.xlu0 %6050, %v5419
        %v6052 = vpop.permute.xlu0 %6051
        %6054 = vset.pattern.permute.xlu0 5
        %6055 = vperm.xlu0 %6054, %v5421
        %v6056 = vpop.permute.xlu0 %6055
        %6058 = vset.pattern.permute.xlu0 5
        %6059 = vperm.xlu0 %6058, %v5423
        %v6060 = vpop.permute.xlu0 %6059
        %6062 = vset.pattern.permute.xlu0 5
        %6063 = vperm.xlu0 %6062, %v5425
        %v6064 = vpop.permute.xlu0 %6063
        %v6066 = vmul.f32 %v5812, %v1138
        %v6067 = vmul.f32 %v5816, %v1143
        %v6068 = vmul.f32 %v5820, %v1148
        %v6069 = vmul.f32 %v5824, %v1153
        %v6070 = vmul.f32 %v5828, %v1158
        %v6071 = vmul.f32 %v5832, %v1163
        %v6072 = vmul.f32 %v5836, %v1168
        %v6073 = vmul.f32 %v5840, %v1173
        %v6074 = vmul.f32 %v5844, %v1178
        %v6075 = vmul.f32 %v5848, %v1183
        %v6076 = vmul.f32 %v5852, %v1188
        %v6077 = vmul.f32 %v5856, %v1193
        %v6078 = vmul.f32 %v5860, %v1198
        %v6079 = vmul.f32 %v5864, %v1203
        %v6080 = vmul.f32 %v5868, %v1208
        %v6081 = vmul.f32 %v5872, %v1213
        %v6082 = vmul.f32 %v5876, %v1218
        %v6083 = vmul.f32 %v5880, %v1223
        %v6084 = vmul.f32 %v5884, %v1228
        %v6085 = vmul.f32 %v5888, %v1233
        %v6086 = vmul.f32 %v5892, %v1238
        %v6087 = vmul.f32 %v5896, %v1243
        %v6088 = vmul.f32 %v5900, %v1248
        %v6089 = vmul.f32 %v5904, %v1253
        %v6090 = vmul.f32 %v5908, %v1258
        %v6091 = vmul.f32 %v5912, %v1263
        %v6092 = vmul.f32 %v5916, %v1268
        %v6093 = vmul.f32 %v5920, %v1273
        %v6094 = vmul.f32 %v5924, %v1278
        %v6095 = vmul.f32 %v5928, %v1283
        %v6096 = vmul.f32 %v5932, %v1288
        %v6097 = vmul.f32 %v5936, %v1293
        %v6098 = vmul.f32 %v5940, %v1298
        %v6099 = vmul.f32 %v5944, %v1303
        %v6100 = vmul.f32 %v5948, %v1308
        %v6101 = vmul.f32 %v5952, %v1313
        %v6102 = vmul.f32 %v5956, %v1318
        %v6103 = vmul.f32 %v5960, %v1323
        %v6104 = vmul.f32 %v5964, %v1328
        %v6105 = vmul.f32 %v5968, %v1333
        %v6106 = vmul.f32 %v5972, %v1338
        %v6107 = vmul.f32 %v5976, %v1343
        %v6108 = vmul.f32 %v5980, %v1348
        %v6109 = vmul.f32 %v5984, %v1353
        %v6110 = vmul.f32 %v5988, %v1358
        %v6111 = vmul.f32 %v5992, %v1363
        %v6112 = vmul.f32 %v5996, %v1368
        %v6113 = vmul.f32 %v6000, %v1373
        %v6114 = vmul.f32 %v6004, %v1378
        %v6115 = vmul.f32 %v6008, %v1383
        %v6116 = vmul.f32 %v6012, %v1388
        %v6117 = vmul.f32 %v6016, %v1393
        %v6118 = vmul.f32 %v6020, %v1398
        %v6119 = vmul.f32 %v6024, %v1403
        %v6120 = vmul.f32 %v6028, %v1408
        %v6121 = vmul.f32 %v6032, %v1413
        %v6122 = vmul.f32 %v6036, %v1418
        %v6123 = vmul.f32 %v6040, %v1423
        %v6124 = vmul.f32 %v6044, %v1428
        %v6125 = vmul.f32 %v6048, %v1433
        %v6126 = vmul.f32 %v6052, %v1438
        %v6127 = vmul.f32 %v6056, %v1443
        %v6128 = vmul.f32 %v6060, %v1448
        %v6129 = vmul.f32 %v6064, %v1453
        %6194 = vrot.lane.b32.xlu0 %v6066, 96
        %v6195 = vpop.permute.xlu0 %6194
        %6196 = vrot.lane.b32.xlu0 %v6067, 96
        %v6197 = vpop.permute.xlu0 %6196
        %6198 = vrot.lane.b32.xlu0 %v6068, 96
        %v6199 = vpop.permute.xlu0 %6198
        %6200 = vrot.lane.b32.xlu0 %v6069, 96
        %v6201 = vpop.permute.xlu0 %6200
        %6202 = vrot.lane.b32.xlu0 %v6070, 96
        %v6203 = vpop.permute.xlu0 %6202
        %6204 = vrot.lane.b32.xlu0 %v6071, 96
        %v6205 = vpop.permute.xlu0 %6204
        %6206 = vrot.lane.b32.xlu0 %v6072, 96
        %v6207 = vpop.permute.xlu0 %6206
        %6208 = vrot.lane.b32.xlu0 %v6073, 96
        %v6209 = vpop.permute.xlu0 %6208
        %6210 = vrot.lane.b32.xlu0 %v6074, 96
        %v6211 = vpop.permute.xlu0 %6210
        %6212 = vrot.lane.b32.xlu0 %v6075, 96
        %v6213 = vpop.permute.xlu0 %6212
        %6214 = vrot.lane.b32.xlu0 %v6076, 96
        %v6215 = vpop.permute.xlu0 %6214
        %6216 = vrot.lane.b32.xlu0 %v6077, 96
        %v6217 = vpop.permute.xlu0 %6216
        %6218 = vrot.lane.b32.xlu0 %v6078, 96
        %v6219 = vpop.permute.xlu0 %6218
        %6220 = vrot.lane.b32.xlu0 %v6079, 96
        %v6221 = vpop.permute.xlu0 %6220
        %6222 = vrot.lane.b32.xlu0 %v6080, 96
        %v6223 = vpop.permute.xlu0 %6222
        %6224 = vrot.lane.b32.xlu0 %v6081, 96
        %v6225 = vpop.permute.xlu0 %6224
        %6226 = vrot.lane.b32.xlu0 %v6082, 96
        %v6227 = vpop.permute.xlu0 %6226
        %6228 = vrot.lane.b32.xlu0 %v6083, 96
        %v6229 = vpop.permute.xlu0 %6228
        %6230 = vrot.lane.b32.xlu0 %v6084, 96
        %v6231 = vpop.permute.xlu0 %6230
        %6232 = vrot.lane.b32.xlu0 %v6085, 96
        %v6233 = vpop.permute.xlu0 %6232
        %6234 = vrot.lane.b32.xlu0 %v6086, 96
        %v6235 = vpop.permute.xlu0 %6234
        %6236 = vrot.lane.b32.xlu0 %v6087, 96
        %v6237 = vpop.permute.xlu0 %6236
        %6238 = vrot.lane.b32.xlu0 %v6088, 96
        %v6239 = vpop.permute.xlu0 %6238
        %6240 = vrot.lane.b32.xlu0 %v6089, 96
        %v6241 = vpop.permute.xlu0 %6240
        %6242 = vrot.lane.b32.xlu0 %v6090, 96
        %v6243 = vpop.permute.xlu0 %6242
        %6244 = vrot.lane.b32.xlu0 %v6091, 96
        %v6245 = vpop.permute.xlu0 %6244
        %6246 = vrot.lane.b32.xlu0 %v6092, 96
        %v6247 = vpop.permute.xlu0 %6246
        %6248 = vrot.lane.b32.xlu0 %v6093, 96
        %v6249 = vpop.permute.xlu0 %6248
        %6250 = vrot.lane.b32.xlu0 %v6094, 96
        %v6251 = vpop.permute.xlu0 %6250
        %6252 = vrot.lane.b32.xlu0 %v6095, 96
        %v6253 = vpop.permute.xlu0 %6252
        %6254 = vrot.lane.b32.xlu0 %v6096, 96
        %v6255 = vpop.permute.xlu0 %6254
        %6256 = vrot.lane.b32.xlu0 %v6097, 96
        %v6257 = vpop.permute.xlu0 %6256
        %6258 = vrot.lane.b32.xlu0 %v6098, 96
        %v6259 = vpop.permute.xlu0 %6258
        %6260 = vrot.lane.b32.xlu0 %v6099, 96
        %v6261 = vpop.permute.xlu0 %6260
        %6262 = vrot.lane.b32.xlu0 %v6100, 96
        %v6263 = vpop.permute.xlu0 %6262
        %6264 = vrot.lane.b32.xlu0 %v6101, 96
        %v6265 = vpop.permute.xlu0 %6264
        %6266 = vrot.lane.b32.xlu0 %v6102, 96
        %v6267 = vpop.permute.xlu0 %6266
        %6268 = vrot.lane.b32.xlu0 %v6103, 96
        %v6269 = vpop.permute.xlu0 %6268
        %6270 = vrot.lane.b32.xlu0 %v6104, 96
        %v6271 = vpop.permute.xlu0 %6270
        %6272 = vrot.lane.b32.xlu0 %v6105, 96
        %v6273 = vpop.permute.xlu0 %6272
        %6274 = vrot.lane.b32.xlu0 %v6106, 96
        %v6275 = vpop.permute.xlu0 %6274
        %6276 = vrot.lane.b32.xlu0 %v6107, 96
        %v6277 = vpop.permute.xlu0 %6276
        %6278 = vrot.lane.b32.xlu0 %v6108, 96
        %v6279 = vpop.permute.xlu0 %6278
        %6280 = vrot.lane.b32.xlu0 %v6109, 96
        %v6281 = vpop.permute.xlu0 %6280
        %6282 = vrot.lane.b32.xlu0 %v6110, 96
        %v6283 = vpop.permute.xlu0 %6282
        %6284 = vrot.lane.b32.xlu0 %v6111, 96
        %v6285 = vpop.permute.xlu0 %6284
        %6286 = vrot.lane.b32.xlu0 %v6112, 96
        %v6287 = vpop.permute.xlu0 %6286
        %6288 = vrot.lane.b32.xlu0 %v6113, 96
        %v6289 = vpop.permute.xlu0 %6288
        %6290 = vrot.lane.b32.xlu0 %v6114, 96
        %v6291 = vpop.permute.xlu0 %6290
        %6292 = vrot.lane.b32.xlu0 %v6115, 96
        %v6293 = vpop.permute.xlu0 %6292
        %6294 = vrot.lane.b32.xlu0 %v6116, 96
        %v6295 = vpop.permute.xlu0 %6294
        %6296 = vrot.lane.b32.xlu0 %v6117, 96
        %v6297 = vpop.permute.xlu0 %6296
        %6298 = vrot.lane.b32.xlu0 %v6118, 96
        %v6299 = vpop.permute.xlu0 %6298
        %6300 = vrot.lane.b32.xlu0 %v6119, 96
        %v6301 = vpop.permute.xlu0 %6300
        %6302 = vrot.lane.b32.xlu0 %v6120, 96
        %v6303 = vpop.permute.xlu0 %6302
        %6304 = vrot.lane.b32.xlu0 %v6121, 96
        %v6305 = vpop.permute.xlu0 %6304
        %6306 = vrot.lane.b32.xlu0 %v6122, 96
        %v6307 = vpop.permute.xlu0 %6306
        %6308 = vrot.lane.b32.xlu0 %v6123, 96
        %v6309 = vpop.permute.xlu0 %6308
        %6310 = vrot.lane.b32.xlu0 %v6124, 96
        %v6311 = vpop.permute.xlu0 %6310
        %6312 = vrot.lane.b32.xlu0 %v6125, 96
        %v6313 = vpop.permute.xlu0 %6312
        %6314 = vrot.lane.b32.xlu0 %v6126, 96
        %v6315 = vpop.permute.xlu0 %6314
        %6316 = vrot.lane.b32.xlu0 %v6127, 96
        %v6317 = vpop.permute.xlu0 %6316
        %6318 = vrot.lane.b32.xlu0 %v6128, 96
        %v6319 = vpop.permute.xlu0 %6318
        %6320 = vrot.lane.b32.xlu0 %v6129, 96
        %v6321 = vpop.permute.xlu0 %6320
        %v6386 = vadd.f32 %v5746, %v6195
        %v6387 = vadd.f32 %v5747, %v6197
        %v6388 = vadd.f32 %v5748, %v6199
        %v6389 = vadd.f32 %v5749, %v6201
        %v6390 = vadd.f32 %v5750, %v6203
        %v6391 = vadd.f32 %v5751, %v6205
        %v6392 = vadd.f32 %v5752, %v6207
        %v6393 = vadd.f32 %v5753, %v6209
        %v6394 = vadd.f32 %v5754, %v6211
        %v6395 = vadd.f32 %v5755, %v6213
        %v6396 = vadd.f32 %v5756, %v6215
        %v6397 = vadd.f32 %v5757, %v6217
        %v6398 = vadd.f32 %v5758, %v6219
        %v6399 = vadd.f32 %v5759, %v6221
        %v6400 = vadd.f32 %v5760, %v6223
        %v6401 = vadd.f32 %v5761, %v6225
        %v6402 = vadd.f32 %v5762, %v6227
        %v6403 = vadd.f32 %v5763, %v6229
        %v6404 = vadd.f32 %v5764, %v6231
        %v6405 = vadd.f32 %v5765, %v6233
        %v6406 = vadd.f32 %v5766, %v6235
        %v6407 = vadd.f32 %v5767, %v6237
        %v6408 = vadd.f32 %v5768, %v6239
        %v6409 = vadd.f32 %v5769, %v6241
        %v6410 = vadd.f32 %v5770, %v6243
        %v6411 = vadd.f32 %v5771, %v6245
        %v6412 = vadd.f32 %v5772, %v6247
        %v6413 = vadd.f32 %v5773, %v6249
        %v6414 = vadd.f32 %v5774, %v6251
        %v6415 = vadd.f32 %v5775, %v6253
        %v6416 = vadd.f32 %v5776, %v6255
        %v6417 = vadd.f32 %v5777, %v6257
        %v6418 = vadd.f32 %v5778, %v6259
        %v6419 = vadd.f32 %v5779, %v6261
        %v6420 = vadd.f32 %v5780, %v6263
        %v6421 = vadd.f32 %v5781, %v6265
        %v6422 = vadd.f32 %v5782, %v6267
        %v6423 = vadd.f32 %v5783, %v6269
        %v6424 = vadd.f32 %v5784, %v6271
        %v6425 = vadd.f32 %v5785, %v6273
        %v6426 = vadd.f32 %v5786, %v6275
        %v6427 = vadd.f32 %v5787, %v6277
        %v6428 = vadd.f32 %v5788, %v6279
        %v6429 = vadd.f32 %v5789, %v6281
        %v6430 = vadd.f32 %v5790, %v6283
        %v6431 = vadd.f32 %v5791, %v6285
        %v6432 = vadd.f32 %v5792, %v6287
        %v6433 = vadd.f32 %v5793, %v6289
        %v6434 = vadd.f32 %v5794, %v6291
        %v6435 = vadd.f32 %v5795, %v6293
        %v6436 = vadd.f32 %v5796, %v6295
        %v6437 = vadd.f32 %v5797, %v6297
        %v6438 = vadd.f32 %v5798, %v6299
        %v6439 = vadd.f32 %v5799, %v6301
        %v6440 = vadd.f32 %v5800, %v6303
        %v6441 = vadd.f32 %v5801, %v6305
        %v6442 = vadd.f32 %v5802, %v6307
        %v6443 = vadd.f32 %v5803, %v6309
        %v6444 = vadd.f32 %v5804, %v6311
        %v6445 = vadd.f32 %v5805, %v6313
        %v6446 = vadd.f32 %v5806, %v6315
        %v6447 = vadd.f32 %v5807, %v6317
        %v6448 = vadd.f32 %v5808, %v6319
        %v6449 = vadd.f32 %v5809, %v6321
        %6450 = vset.pattern.permute.xlu0 6
        %6451 = vperm.xlu0 %6450, %v5299
        %v6452 = vpop.permute.xlu0 %6451
        %6454 = vset.pattern.permute.xlu0 6
        %6455 = vperm.xlu0 %6454, %v5301
        %v6456 = vpop.permute.xlu0 %6455
        %6458 = vset.pattern.permute.xlu0 6
        %6459 = vperm.xlu0 %6458, %v5303
        %v6460 = vpop.permute.xlu0 %6459
        %6462 = vset.pattern.permute.xlu0 6
        %6463 = vperm.xlu0 %6462, %v5305
        %v6464 = vpop.permute.xlu0 %6463
        %6466 = vset.pattern.permute.xlu0 6
        %6467 = vperm.xlu0 %6466, %v5307
        %v6468 = vpop.permute.xlu0 %6467
        %6470 = vset.pattern.permute.xlu0 6
        %6471 = vperm.xlu0 %6470, %v5309
        %v6472 = vpop.permute.xlu0 %6471
        %6474 = vset.pattern.permute.xlu0 6
        %6475 = vperm.xlu0 %6474, %v5311
        %v6476 = vpop.permute.xlu0 %6475
        %6478 = vset.pattern.permute.xlu0 6
        %6479 = vperm.xlu0 %6478, %v5313
        %v6480 = vpop.permute.xlu0 %6479
        %6482 = vset.pattern.permute.xlu0 6
        %6483 = vperm.xlu0 %6482, %v5315
        %v6484 = vpop.permute.xlu0 %6483
        %6486 = vset.pattern.permute.xlu0 6
        %6487 = vperm.xlu0 %6486, %v5317
        %v6488 = vpop.permute.xlu0 %6487
        %6490 = vset.pattern.permute.xlu0 6
        %6491 = vperm.xlu0 %6490, %v5319
        %v6492 = vpop.permute.xlu0 %6491
        %6494 = vset.pattern.permute.xlu0 6
        %6495 = vperm.xlu0 %6494, %v5321
        %v6496 = vpop.permute.xlu0 %6495
        %6498 = vset.pattern.permute.xlu0 6
        %6499 = vperm.xlu0 %6498, %v5323
        %v6500 = vpop.permute.xlu0 %6499
        %6502 = vset.pattern.permute.xlu0 6
        %6503 = vperm.xlu0 %6502, %v5325
        %v6504 = vpop.permute.xlu0 %6503
        %6506 = vset.pattern.permute.xlu0 6
        %6507 = vperm.xlu0 %6506, %v5327
        %v6508 = vpop.permute.xlu0 %6507
        %6510 = vset.pattern.permute.xlu0 6
        %6511 = vperm.xlu0 %6510, %v5329
        %v6512 = vpop.permute.xlu0 %6511
        %6514 = vset.pattern.permute.xlu0 6
        %6515 = vperm.xlu0 %6514, %v5331
        %v6516 = vpop.permute.xlu0 %6515
        %6518 = vset.pattern.permute.xlu0 6
        %6519 = vperm.xlu0 %6518, %v5333
        %v6520 = vpop.permute.xlu0 %6519
        %6522 = vset.pattern.permute.xlu0 6
        %6523 = vperm.xlu0 %6522, %v5335
        %v6524 = vpop.permute.xlu0 %6523
        %6526 = vset.pattern.permute.xlu0 6
        %6527 = vperm.xlu0 %6526, %v5337
        %v6528 = vpop.permute.xlu0 %6527
        %6530 = vset.pattern.permute.xlu0 6
        %6531 = vperm.xlu0 %6530, %v5339
        %v6532 = vpop.permute.xlu0 %6531
        %6534 = vset.pattern.permute.xlu0 6
        %6535 = vperm.xlu0 %6534, %v5341
        %v6536 = vpop.permute.xlu0 %6535
        %6538 = vset.pattern.permute.xlu0 6
        %6539 = vperm.xlu0 %6538, %v5343
        %v6540 = vpop.permute.xlu0 %6539
        %6542 = vset.pattern.permute.xlu0 6
        %6543 = vperm.xlu0 %6542, %v5345
        %v6544 = vpop.permute.xlu0 %6543
        %6546 = vset.pattern.permute.xlu0 6
        %6547 = vperm.xlu0 %6546, %v5347
        %v6548 = vpop.permute.xlu0 %6547
        %6550 = vset.pattern.permute.xlu0 6
        %6551 = vperm.xlu0 %6550, %v5349
        %v6552 = vpop.permute.xlu0 %6551
        %6554 = vset.pattern.permute.xlu0 6
        %6555 = vperm.xlu0 %6554, %v5351
        %v6556 = vpop.permute.xlu0 %6555
        %6558 = vset.pattern.permute.xlu0 6
        %6559 = vperm.xlu0 %6558, %v5353
        %v6560 = vpop.permute.xlu0 %6559
        %6562 = vset.pattern.permute.xlu0 6
        %6563 = vperm.xlu0 %6562, %v5355
        %v6564 = vpop.permute.xlu0 %6563
        %6566 = vset.pattern.permute.xlu0 6
        %6567 = vperm.xlu0 %6566, %v5357
        %v6568 = vpop.permute.xlu0 %6567
        %6570 = vset.pattern.permute.xlu0 6
        %6571 = vperm.xlu0 %6570, %v5359
        %v6572 = vpop.permute.xlu0 %6571
        %6574 = vset.pattern.permute.xlu0 6
        %6575 = vperm.xlu0 %6574, %v5361
        %v6576 = vpop.permute.xlu0 %6575
        %6578 = vset.pattern.permute.xlu0 6
        %6579 = vperm.xlu0 %6578, %v5363
        %v6580 = vpop.permute.xlu0 %6579
        %6582 = vset.pattern.permute.xlu0 6
        %6583 = vperm.xlu0 %6582, %v5365
        %v6584 = vpop.permute.xlu0 %6583
        %6586 = vset.pattern.permute.xlu0 6
        %6587 = vperm.xlu0 %6586, %v5367
        %v6588 = vpop.permute.xlu0 %6587
        %6590 = vset.pattern.permute.xlu0 6
        %6591 = vperm.xlu0 %6590, %v5369
        %v6592 = vpop.permute.xlu0 %6591
        %6594 = vset.pattern.permute.xlu0 6
        %6595 = vperm.xlu0 %6594, %v5371
        %v6596 = vpop.permute.xlu0 %6595
        %6598 = vset.pattern.permute.xlu0 6
        %6599 = vperm.xlu0 %6598, %v5373
        %v6600 = vpop.permute.xlu0 %6599
        %6602 = vset.pattern.permute.xlu0 6
        %6603 = vperm.xlu0 %6602, %v5375
        %v6604 = vpop.permute.xlu0 %6603
        %6606 = vset.pattern.permute.xlu0 6
        %6607 = vperm.xlu0 %6606, %v5377
        %v6608 = vpop.permute.xlu0 %6607
        %6610 = vset.pattern.permute.xlu0 6
        %6611 = vperm.xlu0 %6610, %v5379
        %v6612 = vpop.permute.xlu0 %6611
        %6614 = vset.pattern.permute.xlu0 6
        %6615 = vperm.xlu0 %6614, %v5381
        %v6616 = vpop.permute.xlu0 %6615
        %6618 = vset.pattern.permute.xlu0 6
        %6619 = vperm.xlu0 %6618, %v5383
        %v6620 = vpop.permute.xlu0 %6619
        %6622 = vset.pattern.permute.xlu0 6
        %6623 = vperm.xlu0 %6622, %v5385
        %v6624 = vpop.permute.xlu0 %6623
        %6626 = vset.pattern.permute.xlu0 6
        %6627 = vperm.xlu0 %6626, %v5387
        %v6628 = vpop.permute.xlu0 %6627
        %6630 = vset.pattern.permute.xlu0 6
        %6631 = vperm.xlu0 %6630, %v5389
        %v6632 = vpop.permute.xlu0 %6631
        %6634 = vset.pattern.permute.xlu0 6
        %6635 = vperm.xlu0 %6634, %v5391
        %v6636 = vpop.permute.xlu0 %6635
        %6638 = vset.pattern.permute.xlu0 6
        %6639 = vperm.xlu0 %6638, %v5393
        %v6640 = vpop.permute.xlu0 %6639
        %6642 = vset.pattern.permute.xlu0 6
        %6643 = vperm.xlu0 %6642, %v5395
        %v6644 = vpop.permute.xlu0 %6643
        %6646 = vset.pattern.permute.xlu0 6
        %6647 = vperm.xlu0 %6646, %v5397
        %v6648 = vpop.permute.xlu0 %6647
        %6650 = vset.pattern.permute.xlu0 6
        %6651 = vperm.xlu0 %6650, %v5399
        %v6652 = vpop.permute.xlu0 %6651
        %6654 = vset.pattern.permute.xlu0 6
        %6655 = vperm.xlu0 %6654, %v5401
        %v6656 = vpop.permute.xlu0 %6655
        %6658 = vset.pattern.permute.xlu0 6
        %6659 = vperm.xlu0 %6658, %v5403
        %v6660 = vpop.permute.xlu0 %6659
        %6662 = vset.pattern.permute.xlu0 6
        %6663 = vperm.xlu0 %6662, %v5405
        %v6664 = vpop.permute.xlu0 %6663
        %6666 = vset.pattern.permute.xlu0 6
        %6667 = vperm.xlu0 %6666, %v5407
        %v6668 = vpop.permute.xlu0 %6667
        %6670 = vset.pattern.permute.xlu0 6
        %6671 = vperm.xlu0 %6670, %v5409
        %v6672 = vpop.permute.xlu0 %6671
        %6674 = vset.pattern.permute.xlu0 6
        %6675 = vperm.xlu0 %6674, %v5411
        %v6676 = vpop.permute.xlu0 %6675
        %6678 = vset.pattern.permute.xlu0 6
        %6679 = vperm.xlu0 %6678, %v5413
        %v6680 = vpop.permute.xlu0 %6679
        %6682 = vset.pattern.permute.xlu0 6
        %6683 = vperm.xlu0 %6682, %v5415
        %v6684 = vpop.permute.xlu0 %6683
        %6686 = vset.pattern.permute.xlu0 6
        %6687 = vperm.xlu0 %6686, %v5417
        %v6688 = vpop.permute.xlu0 %6687
        %6690 = vset.pattern.permute.xlu0 6
        %6691 = vperm.xlu0 %6690, %v5419
        %v6692 = vpop.permute.xlu0 %6691
        %6694 = vset.pattern.permute.xlu0 6
        %6695 = vperm.xlu0 %6694, %v5421
        %v6696 = vpop.permute.xlu0 %6695
        %6698 = vset.pattern.permute.xlu0 6
        %6699 = vperm.xlu0 %6698, %v5423
        %v6700 = vpop.permute.xlu0 %6699
        %6702 = vset.pattern.permute.xlu0 6
        %6703 = vperm.xlu0 %6702, %v5425
        %v6704 = vpop.permute.xlu0 %6703
        %v6706 = vmul.f32 %v6452, %v1138
        %v6707 = vmul.f32 %v6456, %v1143
        %v6708 = vmul.f32 %v6460, %v1148
        %v6709 = vmul.f32 %v6464, %v1153
        %v6710 = vmul.f32 %v6468, %v1158
        %v6711 = vmul.f32 %v6472, %v1163
        %v6712 = vmul.f32 %v6476, %v1168
        %v6713 = vmul.f32 %v6480, %v1173
        %v6714 = vmul.f32 %v6484, %v1178
        %v6715 = vmul.f32 %v6488, %v1183
        %v6716 = vmul.f32 %v6492, %v1188
        %v6717 = vmul.f32 %v6496, %v1193
        %v6718 = vmul.f32 %v6500, %v1198
        %v6719 = vmul.f32 %v6504, %v1203
        %v6720 = vmul.f32 %v6508, %v1208
        %v6721 = vmul.f32 %v6512, %v1213
        %v6722 = vmul.f32 %v6516, %v1218
        %v6723 = vmul.f32 %v6520, %v1223
        %v6724 = vmul.f32 %v6524, %v1228
        %v6725 = vmul.f32 %v6528, %v1233
        %v6726 = vmul.f32 %v6532, %v1238
        %v6727 = vmul.f32 %v6536, %v1243
        %v6728 = vmul.f32 %v6540, %v1248
        %v6729 = vmul.f32 %v6544, %v1253
        %v6730 = vmul.f32 %v6548, %v1258
        %v6731 = vmul.f32 %v6552, %v1263
        %v6732 = vmul.f32 %v6556, %v1268
        %v6733 = vmul.f32 %v6560, %v1273
        %v6734 = vmul.f32 %v6564, %v1278
        %v6735 = vmul.f32 %v6568, %v1283
        %v6736 = vmul.f32 %v6572, %v1288
        %v6737 = vmul.f32 %v6576, %v1293
        %v6738 = vmul.f32 %v6580, %v1298
        %v6739 = vmul.f32 %v6584, %v1303
        %v6740 = vmul.f32 %v6588, %v1308
        %v6741 = vmul.f32 %v6592, %v1313
        %v6742 = vmul.f32 %v6596, %v1318
        %v6743 = vmul.f32 %v6600, %v1323
        %v6744 = vmul.f32 %v6604, %v1328
        %v6745 = vmul.f32 %v6608, %v1333
        %v6746 = vmul.f32 %v6612, %v1338
        %v6747 = vmul.f32 %v6616, %v1343
        %v6748 = vmul.f32 %v6620, %v1348
        %v6749 = vmul.f32 %v6624, %v1353
        %v6750 = vmul.f32 %v6628, %v1358
        %v6751 = vmul.f32 %v6632, %v1363
        %v6752 = vmul.f32 %v6636, %v1368
        %v6753 = vmul.f32 %v6640, %v1373
        %v6754 = vmul.f32 %v6644, %v1378
        %v6755 = vmul.f32 %v6648, %v1383
        %v6756 = vmul.f32 %v6652, %v1388
        %v6757 = vmul.f32 %v6656, %v1393
        %v6758 = vmul.f32 %v6660, %v1398
        %v6759 = vmul.f32 %v6664, %v1403
        %v6760 = vmul.f32 %v6668, %v1408
        %v6761 = vmul.f32 %v6672, %v1413
        %v6762 = vmul.f32 %v6676, %v1418
        %v6763 = vmul.f32 %v6680, %v1423
        %v6764 = vmul.f32 %v6684, %v1428
        %v6765 = vmul.f32 %v6688, %v1433
        %v6766 = vmul.f32 %v6692, %v1438
        %v6767 = vmul.f32 %v6696, %v1443
        %v6768 = vmul.f32 %v6700, %v1448
        %v6769 = vmul.f32 %v6704, %v1453
        %6834 = vrot.lane.b32.xlu0 %v6706, 64
        %v6835 = vpop.permute.xlu0 %6834
        %6836 = vrot.lane.b32.xlu0 %v6707, 64
        %v6837 = vpop.permute.xlu0 %6836
        %6838 = vrot.lane.b32.xlu0 %v6708, 64
        %v6839 = vpop.permute.xlu0 %6838
        %6840 = vrot.lane.b32.xlu0 %v6709, 64
        %v6841 = vpop.permute.xlu0 %6840
        %6842 = vrot.lane.b32.xlu0 %v6710, 64
        %v6843 = vpop.permute.xlu0 %6842
        %6844 = vrot.lane.b32.xlu0 %v6711, 64
        %v6845 = vpop.permute.xlu0 %6844
        %6846 = vrot.lane.b32.xlu0 %v6712, 64
        %v6847 = vpop.permute.xlu0 %6846
        %6848 = vrot.lane.b32.xlu0 %v6713, 64
        %v6849 = vpop.permute.xlu0 %6848
        %6850 = vrot.lane.b32.xlu0 %v6714, 64
        %v6851 = vpop.permute.xlu0 %6850
        %6852 = vrot.lane.b32.xlu0 %v6715, 64
        %v6853 = vpop.permute.xlu0 %6852
        %6854 = vrot.lane.b32.xlu0 %v6716, 64
        %v6855 = vpop.permute.xlu0 %6854
        %6856 = vrot.lane.b32.xlu0 %v6717, 64
        %v6857 = vpop.permute.xlu0 %6856
        %6858 = vrot.lane.b32.xlu0 %v6718, 64
        %v6859 = vpop.permute.xlu0 %6858
        %6860 = vrot.lane.b32.xlu0 %v6719, 64
        %v6861 = vpop.permute.xlu0 %6860
        %6862 = vrot.lane.b32.xlu0 %v6720, 64
        %v6863 = vpop.permute.xlu0 %6862
        %6864 = vrot.lane.b32.xlu0 %v6721, 64
        %v6865 = vpop.permute.xlu0 %6864
        %6866 = vrot.lane.b32.xlu0 %v6722, 64
        %v6867 = vpop.permute.xlu0 %6866
        %6868 = vrot.lane.b32.xlu0 %v6723, 64
        %v6869 = vpop.permute.xlu0 %6868
        %6870 = vrot.lane.b32.xlu0 %v6724, 64
        %v6871 = vpop.permute.xlu0 %6870
        %6872 = vrot.lane.b32.xlu0 %v6725, 64
        %v6873 = vpop.permute.xlu0 %6872
        %6874 = vrot.lane.b32.xlu0 %v6726, 64
        %v6875 = vpop.permute.xlu0 %6874
        %6876 = vrot.lane.b32.xlu0 %v6727, 64
        %v6877 = vpop.permute.xlu0 %6876
        %6878 = vrot.lane.b32.xlu0 %v6728, 64
        %v6879 = vpop.permute.xlu0 %6878
        %6880 = vrot.lane.b32.xlu0 %v6729, 64
        %v6881 = vpop.permute.xlu0 %6880
        %6882 = vrot.lane.b32.xlu0 %v6730, 64
        %v6883 = vpop.permute.xlu0 %6882
        %6884 = vrot.lane.b32.xlu0 %v6731, 64
        %v6885 = vpop.permute.xlu0 %6884
        %6886 = vrot.lane.b32.xlu0 %v6732, 64
        %v6887 = vpop.permute.xlu0 %6886
        %6888 = vrot.lane.b32.xlu0 %v6733, 64
        %v6889 = vpop.permute.xlu0 %6888
        %6890 = vrot.lane.b32.xlu0 %v6734, 64
        %v6891 = vpop.permute.xlu0 %6890
        %6892 = vrot.lane.b32.xlu0 %v6735, 64
        %v6893 = vpop.permute.xlu0 %6892
        %6894 = vrot.lane.b32.xlu0 %v6736, 64
        %v6895 = vpop.permute.xlu0 %6894
        %6896 = vrot.lane.b32.xlu0 %v6737, 64
        %v6897 = vpop.permute.xlu0 %6896
        %6898 = vrot.lane.b32.xlu0 %v6738, 64
        %v6899 = vpop.permute.xlu0 %6898
        %6900 = vrot.lane.b32.xlu0 %v6739, 64
        %v6901 = vpop.permute.xlu0 %6900
        %6902 = vrot.lane.b32.xlu0 %v6740, 64
        %v6903 = vpop.permute.xlu0 %6902
        %6904 = vrot.lane.b32.xlu0 %v6741, 64
        %v6905 = vpop.permute.xlu0 %6904
        %6906 = vrot.lane.b32.xlu0 %v6742, 64
        %v6907 = vpop.permute.xlu0 %6906
        %6908 = vrot.lane.b32.xlu0 %v6743, 64
        %v6909 = vpop.permute.xlu0 %6908
        %6910 = vrot.lane.b32.xlu0 %v6744, 64
        %v6911 = vpop.permute.xlu0 %6910
        %6912 = vrot.lane.b32.xlu0 %v6745, 64
        %v6913 = vpop.permute.xlu0 %6912
        %6914 = vrot.lane.b32.xlu0 %v6746, 64
        %v6915 = vpop.permute.xlu0 %6914
        %6916 = vrot.lane.b32.xlu0 %v6747, 64
        %v6917 = vpop.permute.xlu0 %6916
        %6918 = vrot.lane.b32.xlu0 %v6748, 64
        %v6919 = vpop.permute.xlu0 %6918
        %6920 = vrot.lane.b32.xlu0 %v6749, 64
        %v6921 = vpop.permute.xlu0 %6920
        %6922 = vrot.lane.b32.xlu0 %v6750, 64
        %v6923 = vpop.permute.xlu0 %6922
        %6924 = vrot.lane.b32.xlu0 %v6751, 64
        %v6925 = vpop.permute.xlu0 %6924
        %6926 = vrot.lane.b32.xlu0 %v6752, 64
        %v6927 = vpop.permute.xlu0 %6926
        %6928 = vrot.lane.b32.xlu0 %v6753, 64
        %v6929 = vpop.permute.xlu0 %6928
        %6930 = vrot.lane.b32.xlu0 %v6754, 64
        %v6931 = vpop.permute.xlu0 %6930
        %6932 = vrot.lane.b32.xlu0 %v6755, 64
        %v6933 = vpop.permute.xlu0 %6932
        %6934 = vrot.lane.b32.xlu0 %v6756, 64
        %v6935 = vpop.permute.xlu0 %6934
        %6936 = vrot.lane.b32.xlu0 %v6757, 64
        %v6937 = vpop.permute.xlu0 %6936
        %6938 = vrot.lane.b32.xlu0 %v6758, 64
        %v6939 = vpop.permute.xlu0 %6938
        %6940 = vrot.lane.b32.xlu0 %v6759, 64
        %v6941 = vpop.permute.xlu0 %6940
        %6942 = vrot.lane.b32.xlu0 %v6760, 64
        %v6943 = vpop.permute.xlu0 %6942
        %6944 = vrot.lane.b32.xlu0 %v6761, 64
        %v6945 = vpop.permute.xlu0 %6944
        %6946 = vrot.lane.b32.xlu0 %v6762, 64
        %v6947 = vpop.permute.xlu0 %6946
        %6948 = vrot.lane.b32.xlu0 %v6763, 64
        %v6949 = vpop.permute.xlu0 %6948
        %6950 = vrot.lane.b32.xlu0 %v6764, 64
        %v6951 = vpop.permute.xlu0 %6950
        %6952 = vrot.lane.b32.xlu0 %v6765, 64
        %v6953 = vpop.permute.xlu0 %6952
        %6954 = vrot.lane.b32.xlu0 %v6766, 64
        %v6955 = vpop.permute.xlu0 %6954
        %6956 = vrot.lane.b32.xlu0 %v6767, 64
        %v6957 = vpop.permute.xlu0 %6956
        %6958 = vrot.lane.b32.xlu0 %v6768, 64
        %v6959 = vpop.permute.xlu0 %6958
        %6960 = vrot.lane.b32.xlu0 %v6769, 64
        %v6961 = vpop.permute.xlu0 %6960
        %v7026 = vadd.f32 %v6386, %v6835
        %v7027 = vadd.f32 %v6387, %v6837
        %v7028 = vadd.f32 %v6388, %v6839
        %v7029 = vadd.f32 %v6389, %v6841
        %v7030 = vadd.f32 %v6390, %v6843
        %v7031 = vadd.f32 %v6391, %v6845
        %v7032 = vadd.f32 %v6392, %v6847
        %v7033 = vadd.f32 %v6393, %v6849
        %v7034 = vadd.f32 %v6394, %v6851
        %v7035 = vadd.f32 %v6395, %v6853
        %v7036 = vadd.f32 %v6396, %v6855
        %v7037 = vadd.f32 %v6397, %v6857
        %v7038 = vadd.f32 %v6398, %v6859
        %v7039 = vadd.f32 %v6399, %v6861
        %v7040 = vadd.f32 %v6400, %v6863
        %v7041 = vadd.f32 %v6401, %v6865
        %v7042 = vadd.f32 %v6402, %v6867
        %v7043 = vadd.f32 %v6403, %v6869
        %v7044 = vadd.f32 %v6404, %v6871
        %v7045 = vadd.f32 %v6405, %v6873
        %v7046 = vadd.f32 %v6406, %v6875
        %v7047 = vadd.f32 %v6407, %v6877
        %v7048 = vadd.f32 %v6408, %v6879
        %v7049 = vadd.f32 %v6409, %v6881
        %v7050 = vadd.f32 %v6410, %v6883
        %v7051 = vadd.f32 %v6411, %v6885
        %v7052 = vadd.f32 %v6412, %v6887
        %v7053 = vadd.f32 %v6413, %v6889
        %v7054 = vadd.f32 %v6414, %v6891
        %v7055 = vadd.f32 %v6415, %v6893
        %v7056 = vadd.f32 %v6416, %v6895
        %v7057 = vadd.f32 %v6417, %v6897
        %v7058 = vadd.f32 %v6418, %v6899
        %v7059 = vadd.f32 %v6419, %v6901
        %v7060 = vadd.f32 %v6420, %v6903
        %v7061 = vadd.f32 %v6421, %v6905
        %v7062 = vadd.f32 %v6422, %v6907
        %v7063 = vadd.f32 %v6423, %v6909
        %v7064 = vadd.f32 %v6424, %v6911
        %v7065 = vadd.f32 %v6425, %v6913
        %v7066 = vadd.f32 %v6426, %v6915
        %v7067 = vadd.f32 %v6427, %v6917
        %v7068 = vadd.f32 %v6428, %v6919
        %v7069 = vadd.f32 %v6429, %v6921
        %v7070 = vadd.f32 %v6430, %v6923
        %v7071 = vadd.f32 %v6431, %v6925
        %v7072 = vadd.f32 %v6432, %v6927
        %v7073 = vadd.f32 %v6433, %v6929
        %v7074 = vadd.f32 %v6434, %v6931
        %v7075 = vadd.f32 %v6435, %v6933
        %v7076 = vadd.f32 %v6436, %v6935
        %v7077 = vadd.f32 %v6437, %v6937
        %v7078 = vadd.f32 %v6438, %v6939
        %v7079 = vadd.f32 %v6439, %v6941
        %v7080 = vadd.f32 %v6440, %v6943
        %v7081 = vadd.f32 %v6441, %v6945
        %v7082 = vadd.f32 %v6442, %v6947
        %v7083 = vadd.f32 %v6443, %v6949
        %v7084 = vadd.f32 %v6444, %v6951
        %v7085 = vadd.f32 %v6445, %v6953
        %v7086 = vadd.f32 %v6446, %v6955
        %v7087 = vadd.f32 %v6447, %v6957
        %v7088 = vadd.f32 %v6448, %v6959
        %v7089 = vadd.f32 %v6449, %v6961
        %7090 = vset.pattern.permute.xlu0 7
        %7091 = vperm.xlu0 %7090, %v5299
        %v7092 = vpop.permute.xlu0 %7091
        %7094 = vset.pattern.permute.xlu0 7
        %7095 = vperm.xlu0 %7094, %v5301
        %v7096 = vpop.permute.xlu0 %7095
        %7098 = vset.pattern.permute.xlu0 7
        %7099 = vperm.xlu0 %7098, %v5303
        %v7100 = vpop.permute.xlu0 %7099
        %7102 = vset.pattern.permute.xlu0 7
        %7103 = vperm.xlu0 %7102, %v5305
        %v7104 = vpop.permute.xlu0 %7103
        %7106 = vset.pattern.permute.xlu0 7
        %7107 = vperm.xlu0 %7106, %v5307
        %v7108 = vpop.permute.xlu0 %7107
        %7110 = vset.pattern.permute.xlu0 7
        %7111 = vperm.xlu0 %7110, %v5309
        %v7112 = vpop.permute.xlu0 %7111
        %7114 = vset.pattern.permute.xlu0 7
        %7115 = vperm.xlu0 %7114, %v5311
        %v7116 = vpop.permute.xlu0 %7115
        %7118 = vset.pattern.permute.xlu0 7
        %7119 = vperm.xlu0 %7118, %v5313
        %v7120 = vpop.permute.xlu0 %7119
        %7122 = vset.pattern.permute.xlu0 7
        %7123 = vperm.xlu0 %7122, %v5315
        %v7124 = vpop.permute.xlu0 %7123
        %7126 = vset.pattern.permute.xlu0 7
        %7127 = vperm.xlu0 %7126, %v5317
        %v7128 = vpop.permute.xlu0 %7127
        %7130 = vset.pattern.permute.xlu0 7
        %7131 = vperm.xlu0 %7130, %v5319
        %v7132 = vpop.permute.xlu0 %7131
        %7134 = vset.pattern.permute.xlu0 7
        %7135 = vperm.xlu0 %7134, %v5321
        %v7136 = vpop.permute.xlu0 %7135
        %7138 = vset.pattern.permute.xlu0 7
        %7139 = vperm.xlu0 %7138, %v5323
        %v7140 = vpop.permute.xlu0 %7139
        %7142 = vset.pattern.permute.xlu0 7
        %7143 = vperm.xlu0 %7142, %v5325
        %v7144 = vpop.permute.xlu0 %7143
        %7146 = vset.pattern.permute.xlu0 7
        %7147 = vperm.xlu0 %7146, %v5327
        %v7148 = vpop.permute.xlu0 %7147
        %7150 = vset.pattern.permute.xlu0 7
        %7151 = vperm.xlu0 %7150, %v5329
        %v7152 = vpop.permute.xlu0 %7151
        %7154 = vset.pattern.permute.xlu0 7
        %7155 = vperm.xlu0 %7154, %v5331
        %v7156 = vpop.permute.xlu0 %7155
        %7158 = vset.pattern.permute.xlu0 7
        %7159 = vperm.xlu0 %7158, %v5333
        %v7160 = vpop.permute.xlu0 %7159
        %7162 = vset.pattern.permute.xlu0 7
        %7163 = vperm.xlu0 %7162, %v5335
        %v7164 = vpop.permute.xlu0 %7163
        %7166 = vset.pattern.permute.xlu0 7
        %7167 = vperm.xlu0 %7166, %v5337
        %v7168 = vpop.permute.xlu0 %7167
        %7170 = vset.pattern.permute.xlu0 7
        %7171 = vperm.xlu0 %7170, %v5339
        %v7172 = vpop.permute.xlu0 %7171
        %7174 = vset.pattern.permute.xlu0 7
        %7175 = vperm.xlu0 %7174, %v5341
        %v7176 = vpop.permute.xlu0 %7175
        %7178 = vset.pattern.permute.xlu0 7
        %7179 = vperm.xlu0 %7178, %v5343
        %v7180 = vpop.permute.xlu0 %7179
        %7182 = vset.pattern.permute.xlu0 7
        %7183 = vperm.xlu0 %7182, %v5345
        %v7184 = vpop.permute.xlu0 %7183
        %7186 = vset.pattern.permute.xlu0 7
        %7187 = vperm.xlu0 %7186, %v5347
        %v7188 = vpop.permute.xlu0 %7187
        %7190 = vset.pattern.permute.xlu0 7
        %7191 = vperm.xlu0 %7190, %v5349
        %v7192 = vpop.permute.xlu0 %7191
        %7194 = vset.pattern.permute.xlu0 7
        %7195 = vperm.xlu0 %7194, %v5351
        %v7196 = vpop.permute.xlu0 %7195
        %7198 = vset.pattern.permute.xlu0 7
        %7199 = vperm.xlu0 %7198, %v5353
        %v7200 = vpop.permute.xlu0 %7199
        %7202 = vset.pattern.permute.xlu0 7
        %7203 = vperm.xlu0 %7202, %v5355
        %v7204 = vpop.permute.xlu0 %7203
        %7206 = vset.pattern.permute.xlu0 7
        %7207 = vperm.xlu0 %7206, %v5357
        %v7208 = vpop.permute.xlu0 %7207
        %7210 = vset.pattern.permute.xlu0 7
        %7211 = vperm.xlu0 %7210, %v5359
        %v7212 = vpop.permute.xlu0 %7211
        %7214 = vset.pattern.permute.xlu0 7
        %7215 = vperm.xlu0 %7214, %v5361
        %v7216 = vpop.permute.xlu0 %7215
        %7218 = vset.pattern.permute.xlu0 7
        %7219 = vperm.xlu0 %7218, %v5363
        %v7220 = vpop.permute.xlu0 %7219
        %7222 = vset.pattern.permute.xlu0 7
        %7223 = vperm.xlu0 %7222, %v5365
        %v7224 = vpop.permute.xlu0 %7223
        %7226 = vset.pattern.permute.xlu0 7
        %7227 = vperm.xlu0 %7226, %v5367
        %v7228 = vpop.permute.xlu0 %7227
        %7230 = vset.pattern.permute.xlu0 7
        %7231 = vperm.xlu0 %7230, %v5369
        %v7232 = vpop.permute.xlu0 %7231
        %7234 = vset.pattern.permute.xlu0 7
        %7235 = vperm.xlu0 %7234, %v5371
        %v7236 = vpop.permute.xlu0 %7235
        %7238 = vset.pattern.permute.xlu0 7
        %7239 = vperm.xlu0 %7238, %v5373
        %v7240 = vpop.permute.xlu0 %7239
        %7242 = vset.pattern.permute.xlu0 7
        %7243 = vperm.xlu0 %7242, %v5375
        %v7244 = vpop.permute.xlu0 %7243
        %7246 = vset.pattern.permute.xlu0 7
        %7247 = vperm.xlu0 %7246, %v5377
        %v7248 = vpop.permute.xlu0 %7247
        %7250 = vset.pattern.permute.xlu0 7
        %7251 = vperm.xlu0 %7250, %v5379
        %v7252 = vpop.permute.xlu0 %7251
        %7254 = vset.pattern.permute.xlu0 7
        %7255 = vperm.xlu0 %7254, %v5381
        %v7256 = vpop.permute.xlu0 %7255
        %7258 = vset.pattern.permute.xlu0 7
        %7259 = vperm.xlu0 %7258, %v5383
        %v7260 = vpop.permute.xlu0 %7259
        %7262 = vset.pattern.permute.xlu0 7
        %7263 = vperm.xlu0 %7262, %v5385
        %v7264 = vpop.permute.xlu0 %7263
        %7266 = vset.pattern.permute.xlu0 7
        %7267 = vperm.xlu0 %7266, %v5387
        %v7268 = vpop.permute.xlu0 %7267
        %7270 = vset.pattern.permute.xlu0 7
        %7271 = vperm.xlu0 %7270, %v5389
        %v7272 = vpop.permute.xlu0 %7271
        %7274 = vset.pattern.permute.xlu0 7
        %7275 = vperm.xlu0 %7274, %v5391
        %v7276 = vpop.permute.xlu0 %7275
        %7278 = vset.pattern.permute.xlu0 7
        %7279 = vperm.xlu0 %7278, %v5393
        %v7280 = vpop.permute.xlu0 %7279
        %7282 = vset.pattern.permute.xlu0 7
        %7283 = vperm.xlu0 %7282, %v5395
        %v7284 = vpop.permute.xlu0 %7283
        %7286 = vset.pattern.permute.xlu0 7
        %7287 = vperm.xlu0 %7286, %v5397
        %v7288 = vpop.permute.xlu0 %7287
        %7290 = vset.pattern.permute.xlu0 7
        %7291 = vperm.xlu0 %7290, %v5399
        %v7292 = vpop.permute.xlu0 %7291
        %7294 = vset.pattern.permute.xlu0 7
        %7295 = vperm.xlu0 %7294, %v5401
        %v7296 = vpop.permute.xlu0 %7295
        %7298 = vset.pattern.permute.xlu0 7
        %7299 = vperm.xlu0 %7298, %v5403
        %v7300 = vpop.permute.xlu0 %7299
        %7302 = vset.pattern.permute.xlu0 7
        %7303 = vperm.xlu0 %7302, %v5405
        %v7304 = vpop.permute.xlu0 %7303
        %7306 = vset.pattern.permute.xlu0 7
        %7307 = vperm.xlu0 %7306, %v5407
        %v7308 = vpop.permute.xlu0 %7307
        %7310 = vset.pattern.permute.xlu0 7
        %7311 = vperm.xlu0 %7310, %v5409
        %v7312 = vpop.permute.xlu0 %7311
        %7314 = vset.pattern.permute.xlu0 7
        %7315 = vperm.xlu0 %7314, %v5411
        %v7316 = vpop.permute.xlu0 %7315
        %7318 = vset.pattern.permute.xlu0 7
        %7319 = vperm.xlu0 %7318, %v5413
        %v7320 = vpop.permute.xlu0 %7319
        %7322 = vset.pattern.permute.xlu0 7
        %7323 = vperm.xlu0 %7322, %v5415
        %v7324 = vpop.permute.xlu0 %7323
        %7326 = vset.pattern.permute.xlu0 7
        %7327 = vperm.xlu0 %7326, %v5417
        %v7328 = vpop.permute.xlu0 %7327
        %7330 = vset.pattern.permute.xlu0 7
        %7331 = vperm.xlu0 %7330, %v5419
        %v7332 = vpop.permute.xlu0 %7331
        %7334 = vset.pattern.permute.xlu0 7
        %7335 = vperm.xlu0 %7334, %v5421
        %v7336 = vpop.permute.xlu0 %7335
        %7338 = vset.pattern.permute.xlu0 7
        %7339 = vperm.xlu0 %7338, %v5423
        %v7340 = vpop.permute.xlu0 %7339
        %7342 = vset.pattern.permute.xlu0 7
        %7343 = vperm.xlu0 %7342, %v5425
        %v7344 = vpop.permute.xlu0 %7343
        %v7346 = vmul.f32 %v7092, %v1138
        %v7347 = vmul.f32 %v7096, %v1143
        %v7348 = vmul.f32 %v7100, %v1148
        %v7349 = vmul.f32 %v7104, %v1153
        %v7350 = vmul.f32 %v7108, %v1158
        %v7351 = vmul.f32 %v7112, %v1163
        %v7352 = vmul.f32 %v7116, %v1168
        %v7353 = vmul.f32 %v7120, %v1173
        %v7354 = vmul.f32 %v7124, %v1178
        %v7355 = vmul.f32 %v7128, %v1183
        %v7356 = vmul.f32 %v7132, %v1188
        %v7357 = vmul.f32 %v7136, %v1193
        %v7358 = vmul.f32 %v7140, %v1198
        %v7359 = vmul.f32 %v7144, %v1203
        %v7360 = vmul.f32 %v7148, %v1208
        %v7361 = vmul.f32 %v7152, %v1213
        %v7362 = vmul.f32 %v7156, %v1218
        %v7363 = vmul.f32 %v7160, %v1223
        %v7364 = vmul.f32 %v7164, %v1228
        %v7365 = vmul.f32 %v7168, %v1233
        %v7366 = vmul.f32 %v7172, %v1238
        %v7367 = vmul.f32 %v7176, %v1243
        %v7368 = vmul.f32 %v7180, %v1248
        %v7369 = vmul.f32 %v7184, %v1253
        %v7370 = vmul.f32 %v7188, %v1258
        %v7371 = vmul.f32 %v7192, %v1263
        %v7372 = vmul.f32 %v7196, %v1268
        %v7373 = vmul.f32 %v7200, %v1273
        %v7374 = vmul.f32 %v7204, %v1278
        %v7375 = vmul.f32 %v7208, %v1283
        %v7376 = vmul.f32 %v7212, %v1288
        %v7377 = vmul.f32 %v7216, %v1293
        %v7378 = vmul.f32 %v7220, %v1298
        %v7379 = vmul.f32 %v7224, %v1303
        %v7380 = vmul.f32 %v7228, %v1308
        %v7381 = vmul.f32 %v7232, %v1313
        %v7382 = vmul.f32 %v7236, %v1318
        %v7383 = vmul.f32 %v7240, %v1323
        %v7384 = vmul.f32 %v7244, %v1328
        %v7385 = vmul.f32 %v7248, %v1333
        %v7386 = vmul.f32 %v7252, %v1338
        %v7387 = vmul.f32 %v7256, %v1343
        %v7388 = vmul.f32 %v7260, %v1348
        %v7389 = vmul.f32 %v7264, %v1353
        %v7390 = vmul.f32 %v7268, %v1358
        %v7391 = vmul.f32 %v7272, %v1363
        %v7392 = vmul.f32 %v7276, %v1368
        %v7393 = vmul.f32 %v7280, %v1373
        %v7394 = vmul.f32 %v7284, %v1378
        %v7395 = vmul.f32 %v7288, %v1383
        %v7396 = vmul.f32 %v7292, %v1388
        %v7397 = vmul.f32 %v7296, %v1393
        %v7398 = vmul.f32 %v7300, %v1398
        %v7399 = vmul.f32 %v7304, %v1403
        %v7400 = vmul.f32 %v7308, %v1408
        %v7401 = vmul.f32 %v7312, %v1413
        %v7402 = vmul.f32 %v7316, %v1418
        %v7403 = vmul.f32 %v7320, %v1423
        %v7404 = vmul.f32 %v7324, %v1428
        %v7405 = vmul.f32 %v7328, %v1433
        %v7406 = vmul.f32 %v7332, %v1438
        %v7407 = vmul.f32 %v7336, %v1443
        %v7408 = vmul.f32 %v7340, %v1448
        %v7409 = vmul.f32 %v7344, %v1453
        %7474 = vrot.lane.b32.xlu0 %v7346, 32
        %v7475 = vpop.permute.xlu0 %7474
        %7476 = vrot.lane.b32.xlu0 %v7347, 32
        %v7477 = vpop.permute.xlu0 %7476
        %7478 = vrot.lane.b32.xlu0 %v7348, 32
        %v7479 = vpop.permute.xlu0 %7478
        %7480 = vrot.lane.b32.xlu0 %v7349, 32
        %v7481 = vpop.permute.xlu0 %7480
        %7482 = vrot.lane.b32.xlu0 %v7350, 32
        %v7483 = vpop.permute.xlu0 %7482
        %7484 = vrot.lane.b32.xlu0 %v7351, 32
        %v7485 = vpop.permute.xlu0 %7484
        %7486 = vrot.lane.b32.xlu0 %v7352, 32
        %v7487 = vpop.permute.xlu0 %7486
        %7488 = vrot.lane.b32.xlu0 %v7353, 32
        %v7489 = vpop.permute.xlu0 %7488
        %7490 = vrot.lane.b32.xlu0 %v7354, 32
        %v7491 = vpop.permute.xlu0 %7490
        %7492 = vrot.lane.b32.xlu0 %v7355, 32
        %v7493 = vpop.permute.xlu0 %7492
        %7494 = vrot.lane.b32.xlu0 %v7356, 32
        %v7495 = vpop.permute.xlu0 %7494
        %7496 = vrot.lane.b32.xlu0 %v7357, 32
        %v7497 = vpop.permute.xlu0 %7496
        %7498 = vrot.lane.b32.xlu0 %v7358, 32
        %v7499 = vpop.permute.xlu0 %7498
        %7500 = vrot.lane.b32.xlu0 %v7359, 32
        %v7501 = vpop.permute.xlu0 %7500
        %7502 = vrot.lane.b32.xlu0 %v7360, 32
        %v7503 = vpop.permute.xlu0 %7502
        %7504 = vrot.lane.b32.xlu0 %v7361, 32
        %v7505 = vpop.permute.xlu0 %7504
        %7506 = vrot.lane.b32.xlu0 %v7362, 32
        %v7507 = vpop.permute.xlu0 %7506
        %7508 = vrot.lane.b32.xlu0 %v7363, 32
        %v7509 = vpop.permute.xlu0 %7508
        %7510 = vrot.lane.b32.xlu0 %v7364, 32
        %v7511 = vpop.permute.xlu0 %7510
        %7512 = vrot.lane.b32.xlu0 %v7365, 32
        %v7513 = vpop.permute.xlu0 %7512
        %7514 = vrot.lane.b32.xlu0 %v7366, 32
        %v7515 = vpop.permute.xlu0 %7514
        %7516 = vrot.lane.b32.xlu0 %v7367, 32
        %v7517 = vpop.permute.xlu0 %7516
        %7518 = vrot.lane.b32.xlu0 %v7368, 32
        %v7519 = vpop.permute.xlu0 %7518
        %7520 = vrot.lane.b32.xlu0 %v7369, 32
        %v7521 = vpop.permute.xlu0 %7520
        %7522 = vrot.lane.b32.xlu0 %v7370, 32
        %v7523 = vpop.permute.xlu0 %7522
        %7524 = vrot.lane.b32.xlu0 %v7371, 32
        %v7525 = vpop.permute.xlu0 %7524
        %7526 = vrot.lane.b32.xlu0 %v7372, 32
        %v7527 = vpop.permute.xlu0 %7526
        %7528 = vrot.lane.b32.xlu0 %v7373, 32
        %v7529 = vpop.permute.xlu0 %7528
        %7530 = vrot.lane.b32.xlu0 %v7374, 32
        %v7531 = vpop.permute.xlu0 %7530
        %7532 = vrot.lane.b32.xlu0 %v7375, 32
        %v7533 = vpop.permute.xlu0 %7532
        %7534 = vrot.lane.b32.xlu0 %v7376, 32
        %v7535 = vpop.permute.xlu0 %7534
        %7536 = vrot.lane.b32.xlu0 %v7377, 32
        %v7537 = vpop.permute.xlu0 %7536
        %7538 = vrot.lane.b32.xlu0 %v7378, 32
        %v7539 = vpop.permute.xlu0 %7538
        %7540 = vrot.lane.b32.xlu0 %v7379, 32
        %v7541 = vpop.permute.xlu0 %7540
        %7542 = vrot.lane.b32.xlu0 %v7380, 32
        %v7543 = vpop.permute.xlu0 %7542
        %7544 = vrot.lane.b32.xlu0 %v7381, 32
        %v7545 = vpop.permute.xlu0 %7544
        %7546 = vrot.lane.b32.xlu0 %v7382, 32
        %v7547 = vpop.permute.xlu0 %7546
        %7548 = vrot.lane.b32.xlu0 %v7383, 32
        %v7549 = vpop.permute.xlu0 %7548
        %7550 = vrot.lane.b32.xlu0 %v7384, 32
        %v7551 = vpop.permute.xlu0 %7550
        %7552 = vrot.lane.b32.xlu0 %v7385, 32
        %v7553 = vpop.permute.xlu0 %7552
        %7554 = vrot.lane.b32.xlu0 %v7386, 32
        %v7555 = vpop.permute.xlu0 %7554
        %7556 = vrot.lane.b32.xlu0 %v7387, 32
        %v7557 = vpop.permute.xlu0 %7556
        %7558 = vrot.lane.b32.xlu0 %v7388, 32
        %v7559 = vpop.permute.xlu0 %7558
        %7560 = vrot.lane.b32.xlu0 %v7389, 32
        %v7561 = vpop.permute.xlu0 %7560
        %7562 = vrot.lane.b32.xlu0 %v7390, 32
        %v7563 = vpop.permute.xlu0 %7562
        %7564 = vrot.lane.b32.xlu0 %v7391, 32
        %v7565 = vpop.permute.xlu0 %7564
        %7566 = vrot.lane.b32.xlu0 %v7392, 32
        %v7567 = vpop.permute.xlu0 %7566
        %7568 = vrot.lane.b32.xlu0 %v7393, 32
        %v7569 = vpop.permute.xlu0 %7568
        %7570 = vrot.lane.b32.xlu0 %v7394, 32
        %v7571 = vpop.permute.xlu0 %7570
        %7572 = vrot.lane.b32.xlu0 %v7395, 32
        %v7573 = vpop.permute.xlu0 %7572
        %7574 = vrot.lane.b32.xlu0 %v7396, 32
        %v7575 = vpop.permute.xlu0 %7574
        %7576 = vrot.lane.b32.xlu0 %v7397, 32
        %v7577 = vpop.permute.xlu0 %7576
        %7578 = vrot.lane.b32.xlu0 %v7398, 32
        %v7579 = vpop.permute.xlu0 %7578
        %7580 = vrot.lane.b32.xlu0 %v7399, 32
        %v7581 = vpop.permute.xlu0 %7580
        %7582 = vrot.lane.b32.xlu0 %v7400, 32
        %v7583 = vpop.permute.xlu0 %7582
        %7584 = vrot.lane.b32.xlu0 %v7401, 32
        %v7585 = vpop.permute.xlu0 %7584
        %7586 = vrot.lane.b32.xlu0 %v7402, 32
        %v7587 = vpop.permute.xlu0 %7586
        %7588 = vrot.lane.b32.xlu0 %v7403, 32
        %v7589 = vpop.permute.xlu0 %7588
        %7590 = vrot.lane.b32.xlu0 %v7404, 32
        %v7591 = vpop.permute.xlu0 %7590
        %7592 = vrot.lane.b32.xlu0 %v7405, 32
        %v7593 = vpop.permute.xlu0 %7592
        %7594 = vrot.lane.b32.xlu0 %v7406, 32
        %v7595 = vpop.permute.xlu0 %7594
        %7596 = vrot.lane.b32.xlu0 %v7407, 32
        %v7597 = vpop.permute.xlu0 %7596
        %7598 = vrot.lane.b32.xlu0 %v7408, 32
        %v7599 = vpop.permute.xlu0 %7598
        %7600 = vrot.lane.b32.xlu0 %v7409, 32
        %v7601 = vpop.permute.xlu0 %7600
        %v7666 = vadd.f32 %v7026, %v7475
        %v7667 = vadd.f32 %v7027, %v7477
        %v7668 = vadd.f32 %v7028, %v7479
        %v7669 = vadd.f32 %v7029, %v7481
        %v7670 = vadd.f32 %v7030, %v7483
        %v7671 = vadd.f32 %v7031, %v7485
        %v7672 = vadd.f32 %v7032, %v7487
        %v7673 = vadd.f32 %v7033, %v7489
        %v7674 = vadd.f32 %v7034, %v7491
        %v7675 = vadd.f32 %v7035, %v7493
        %v7676 = vadd.f32 %v7036, %v7495
        %v7677 = vadd.f32 %v7037, %v7497
        %v7678 = vadd.f32 %v7038, %v7499
        %v7679 = vadd.f32 %v7039, %v7501
        %v7680 = vadd.f32 %v7040, %v7503
        %v7681 = vadd.f32 %v7041, %v7505
        %v7682 = vadd.f32 %v7042, %v7507
        %v7683 = vadd.f32 %v7043, %v7509
        %v7684 = vadd.f32 %v7044, %v7511
        %v7685 = vadd.f32 %v7045, %v7513
        %v7686 = vadd.f32 %v7046, %v7515
        %v7687 = vadd.f32 %v7047, %v7517
        %v7688 = vadd.f32 %v7048, %v7519
        %v7689 = vadd.f32 %v7049, %v7521
        %v7690 = vadd.f32 %v7050, %v7523
        %v7691 = vadd.f32 %v7051, %v7525
        %v7692 = vadd.f32 %v7052, %v7527
        %v7693 = vadd.f32 %v7053, %v7529
        %v7694 = vadd.f32 %v7054, %v7531
        %v7695 = vadd.f32 %v7055, %v7533
        %v7696 = vadd.f32 %v7056, %v7535
        %v7697 = vadd.f32 %v7057, %v7537
        %v7698 = vadd.f32 %v7058, %v7539
        %v7699 = vadd.f32 %v7059, %v7541
        %v7700 = vadd.f32 %v7060, %v7543
        %v7701 = vadd.f32 %v7061, %v7545
        %v7702 = vadd.f32 %v7062, %v7547
        %v7703 = vadd.f32 %v7063, %v7549
        %v7704 = vadd.f32 %v7064, %v7551
        %v7705 = vadd.f32 %v7065, %v7553
        %v7706 = vadd.f32 %v7066, %v7555
        %v7707 = vadd.f32 %v7067, %v7557
        %v7708 = vadd.f32 %v7068, %v7559
        %v7709 = vadd.f32 %v7069, %v7561
        %v7710 = vadd.f32 %v7070, %v7563
        %v7711 = vadd.f32 %v7071, %v7565
        %v7712 = vadd.f32 %v7072, %v7567
        %v7713 = vadd.f32 %v7073, %v7569
        %v7714 = vadd.f32 %v7074, %v7571
        %v7715 = vadd.f32 %v7075, %v7573
        %v7716 = vadd.f32 %v7076, %v7575
        %v7717 = vadd.f32 %v7077, %v7577
        %v7718 = vadd.f32 %v7078, %v7579
        %v7719 = vadd.f32 %v7079, %v7581
        %v7720 = vadd.f32 %v7080, %v7583
        %v7721 = vadd.f32 %v7081, %v7585
        %v7722 = vadd.f32 %v7082, %v7587
        %v7723 = vadd.f32 %v7083, %v7589
        %v7724 = vadd.f32 %v7084, %v7591
        %v7725 = vadd.f32 %v7085, %v7593
        %v7726 = vadd.f32 %v7086, %v7595
        %v7727 = vadd.f32 %v7087, %v7597
        %v7728 = vadd.f32 %v7088, %v7599
        %v7729 = vadd.f32 %v7089, %v7601
        %7794 = vrot.lane.b32.xlu0 %v7666, 32
        %v7795 = vpop.permute.xlu0 %7794
        %7796 = vrot.lane.b32.xlu0 %v7667, 32
        %v7797 = vpop.permute.xlu0 %7796
        %7798 = vrot.lane.b32.xlu0 %v7668, 32
        %v7799 = vpop.permute.xlu0 %7798
        %7800 = vrot.lane.b32.xlu0 %v7669, 32
        %v7801 = vpop.permute.xlu0 %7800
        %7802 = vrot.lane.b32.xlu0 %v7670, 32
        %v7803 = vpop.permute.xlu0 %7802
        %7804 = vrot.lane.b32.xlu0 %v7671, 32
        %v7805 = vpop.permute.xlu0 %7804
        %7806 = vrot.lane.b32.xlu0 %v7672, 32
        %v7807 = vpop.permute.xlu0 %7806
        %7808 = vrot.lane.b32.xlu0 %v7673, 32
        %v7809 = vpop.permute.xlu0 %7808
        %7810 = vrot.lane.b32.xlu0 %v7674, 32
        %v7811 = vpop.permute.xlu0 %7810
        %7812 = vrot.lane.b32.xlu0 %v7675, 32
        %v7813 = vpop.permute.xlu0 %7812
        %7814 = vrot.lane.b32.xlu0 %v7676, 32
        %v7815 = vpop.permute.xlu0 %7814
        %7816 = vrot.lane.b32.xlu0 %v7677, 32
        %v7817 = vpop.permute.xlu0 %7816
        %7818 = vrot.lane.b32.xlu0 %v7678, 32
        %v7819 = vpop.permute.xlu0 %7818
        %7820 = vrot.lane.b32.xlu0 %v7679, 32
        %v7821 = vpop.permute.xlu0 %7820
        %7822 = vrot.lane.b32.xlu0 %v7680, 32
        %v7823 = vpop.permute.xlu0 %7822
        %7824 = vrot.lane.b32.xlu0 %v7681, 32
        %v7825 = vpop.permute.xlu0 %7824
        %7826 = vrot.lane.b32.xlu0 %v7682, 32
        %v7827 = vpop.permute.xlu0 %7826
        %7828 = vrot.lane.b32.xlu0 %v7683, 32
        %v7829 = vpop.permute.xlu0 %7828
        %7830 = vrot.lane.b32.xlu0 %v7684, 32
        %v7831 = vpop.permute.xlu0 %7830
        %7832 = vrot.lane.b32.xlu0 %v7685, 32
        %v7833 = vpop.permute.xlu0 %7832
        %7834 = vrot.lane.b32.xlu0 %v7686, 32
        %v7835 = vpop.permute.xlu0 %7834
        %7836 = vrot.lane.b32.xlu0 %v7687, 32
        %v7837 = vpop.permute.xlu0 %7836
        %7838 = vrot.lane.b32.xlu0 %v7688, 32
        %v7839 = vpop.permute.xlu0 %7838
        %7840 = vrot.lane.b32.xlu0 %v7689, 32
        %v7841 = vpop.permute.xlu0 %7840
        %7842 = vrot.lane.b32.xlu0 %v7690, 32
        %v7843 = vpop.permute.xlu0 %7842
        %7844 = vrot.lane.b32.xlu0 %v7691, 32
        %v7845 = vpop.permute.xlu0 %7844
        %7846 = vrot.lane.b32.xlu0 %v7692, 32
        %v7847 = vpop.permute.xlu0 %7846
        %7848 = vrot.lane.b32.xlu0 %v7693, 32
        %v7849 = vpop.permute.xlu0 %7848
        %7850 = vrot.lane.b32.xlu0 %v7694, 32
        %v7851 = vpop.permute.xlu0 %7850
        %7852 = vrot.lane.b32.xlu0 %v7695, 32
        %v7853 = vpop.permute.xlu0 %7852
        %7854 = vrot.lane.b32.xlu0 %v7696, 32
        %v7855 = vpop.permute.xlu0 %7854
        %7856 = vrot.lane.b32.xlu0 %v7697, 32
        %v7857 = vpop.permute.xlu0 %7856
        %7858 = vrot.lane.b32.xlu0 %v7698, 32
        %v7859 = vpop.permute.xlu0 %7858
        %7860 = vrot.lane.b32.xlu0 %v7699, 32
        %v7861 = vpop.permute.xlu0 %7860
        %7862 = vrot.lane.b32.xlu0 %v7700, 32
        %v7863 = vpop.permute.xlu0 %7862
        %7864 = vrot.lane.b32.xlu0 %v7701, 32
        %v7865 = vpop.permute.xlu0 %7864
        %7866 = vrot.lane.b32.xlu0 %v7702, 32
        %v7867 = vpop.permute.xlu0 %7866
        %7868 = vrot.lane.b32.xlu0 %v7703, 32
        %v7869 = vpop.permute.xlu0 %7868
        %7870 = vrot.lane.b32.xlu0 %v7704, 32
        %v7871 = vpop.permute.xlu0 %7870
        %7872 = vrot.lane.b32.xlu0 %v7705, 32
        %v7873 = vpop.permute.xlu0 %7872
        %7874 = vrot.lane.b32.xlu0 %v7706, 32
        %v7875 = vpop.permute.xlu0 %7874
        %7876 = vrot.lane.b32.xlu0 %v7707, 32
        %v7877 = vpop.permute.xlu0 %7876
        %7878 = vrot.lane.b32.xlu0 %v7708, 32
        %v7879 = vpop.permute.xlu0 %7878
        %7880 = vrot.lane.b32.xlu0 %v7709, 32
        %v7881 = vpop.permute.xlu0 %7880
        %7882 = vrot.lane.b32.xlu0 %v7710, 32
        %v7883 = vpop.permute.xlu0 %7882
        %7884 = vrot.lane.b32.xlu0 %v7711, 32
        %v7885 = vpop.permute.xlu0 %7884
        %7886 = vrot.lane.b32.xlu0 %v7712, 32
        %v7887 = vpop.permute.xlu0 %7886
        %7888 = vrot.lane.b32.xlu0 %v7713, 32
        %v7889 = vpop.permute.xlu0 %7888
        %7890 = vrot.lane.b32.xlu0 %v7714, 32
        %v7891 = vpop.permute.xlu0 %7890
        %7892 = vrot.lane.b32.xlu0 %v7715, 32
        %v7893 = vpop.permute.xlu0 %7892
        %7894 = vrot.lane.b32.xlu0 %v7716, 32
        %v7895 = vpop.permute.xlu0 %7894
        %7896 = vrot.lane.b32.xlu0 %v7717, 32
        %v7897 = vpop.permute.xlu0 %7896
        %7898 = vrot.lane.b32.xlu0 %v7718, 32
        %v7899 = vpop.permute.xlu0 %7898
        %7900 = vrot.lane.b32.xlu0 %v7719, 32
        %v7901 = vpop.permute.xlu0 %7900
        %7902 = vrot.lane.b32.xlu0 %v7720, 32
        %v7903 = vpop.permute.xlu0 %7902
        %7904 = vrot.lane.b32.xlu0 %v7721, 32
        %v7905 = vpop.permute.xlu0 %7904
        %7906 = vrot.lane.b32.xlu0 %v7722, 32
        %v7907 = vpop.permute.xlu0 %7906
        %7908 = vrot.lane.b32.xlu0 %v7723, 32
        %v7909 = vpop.permute.xlu0 %7908
        %7910 = vrot.lane.b32.xlu0 %v7724, 32
        %v7911 = vpop.permute.xlu0 %7910
        %7912 = vrot.lane.b32.xlu0 %v7725, 32
        %v7913 = vpop.permute.xlu0 %7912
        %7914 = vrot.lane.b32.xlu0 %v7726, 32
        %v7915 = vpop.permute.xlu0 %7914
        %7916 = vrot.lane.b32.xlu0 %v7727, 32
        %v7917 = vpop.permute.xlu0 %7916
        %7918 = vrot.lane.b32.xlu0 %v7728, 32
        %v7919 = vpop.permute.xlu0 %7918
        %7920 = vrot.lane.b32.xlu0 %v7729, 32
        %v7921 = vpop.permute.xlu0 %7920
        %v7986 = vsel %vm345, %v4401, %v7795
        %v7987 = vsel %vm345, %v4402, %v7797
        %v7988 = vsel %vm345, %v4403, %v7799
        %v7989 = vsel %vm345, %v4404, %v7801
        %v7990 = vsel %vm345, %v4405, %v7803
        %v7991 = vsel %vm345, %v4406, %v7805
        %v7992 = vsel %vm345, %v4407, %v7807
        %v7993 = vsel %vm345, %v4408, %v7809
        %v7994 = vsel %vm345, %v4409, %v7811
        %v7995 = vsel %vm345, %v4410, %v7813
        %v7996 = vsel %vm345, %v4411, %v7815
        %v7997 = vsel %vm345, %v4412, %v7817
        %v7998 = vsel %vm345, %v4413, %v7819
        %v7999 = vsel %vm345, %v4414, %v7821
        %v8000 = vsel %vm345, %v4415, %v7823
        %v8001 = vsel %vm345, %v4416, %v7825
        %v8002 = vsel %vm345, %v4417, %v7827
        %v8003 = vsel %vm345, %v4418, %v7829
        %v8004 = vsel %vm345, %v4419, %v7831
        %v8005 = vsel %vm345, %v4420, %v7833
        %v8006 = vsel %vm345, %v4421, %v7835
        %v8007 = vsel %vm345, %v4422, %v7837
        %v8008 = vsel %vm345, %v4423, %v7839
        %v8009 = vsel %vm345, %v4424, %v7841
        %v8010 = vsel %vm345, %v4425, %v7843
        %v8011 = vsel %vm345, %v4426, %v7845
        %v8012 = vsel %vm345, %v4427, %v7847
        %v8013 = vsel %vm345, %v4428, %v7849
        %v8014 = vsel %vm345, %v4429, %v7851
        %v8015 = vsel %vm345, %v4430, %v7853
        %v8016 = vsel %vm345, %v4431, %v7855
        %v8017 = vsel %vm345, %v4432, %v7857
        %v8018 = vsel %vm345, %v4433, %v7859
        %v8019 = vsel %vm345, %v4434, %v7861
        %v8020 = vsel %vm345, %v4435, %v7863
        %v8021 = vsel %vm345, %v4436, %v7865
        %v8022 = vsel %vm345, %v4437, %v7867
        %v8023 = vsel %vm345, %v4438, %v7869
        %v8024 = vsel %vm345, %v4439, %v7871
        %v8025 = vsel %vm345, %v4440, %v7873
        %v8026 = vsel %vm345, %v4441, %v7875
        %v8027 = vsel %vm345, %v4442, %v7877
        %v8028 = vsel %vm345, %v4443, %v7879
        %v8029 = vsel %vm345, %v4444, %v7881
        %v8030 = vsel %vm345, %v4445, %v7883
        %v8031 = vsel %vm345, %v4446, %v7885
        %v8032 = vsel %vm345, %v4447, %v7887
        %v8033 = vsel %vm345, %v4448, %v7889
        %v8034 = vsel %vm345, %v4449, %v7891
        %v8035 = vsel %vm345, %v4450, %v7893
        %v8036 = vsel %vm345, %v4451, %v7895
        %v8037 = vsel %vm345, %v4452, %v7897
        %v8038 = vsel %vm345, %v4453, %v7899
        %v8039 = vsel %vm345, %v4454, %v7901
        %v8040 = vsel %vm345, %v4455, %v7903
        %v8041 = vsel %vm345, %v4456, %v7905
        %v8042 = vsel %vm345, %v4457, %v7907
        %v8043 = vsel %vm345, %v4458, %v7909
        %v8044 = vsel %vm345, %v4459, %v7911
        %v8045 = vsel %vm345, %v4460, %v7913
        %v8046 = vsel %vm345, %v4461, %v7915
        %v8047 = vsel %vm345, %v4462, %v7917
        %v8048 = vsel %vm345, %v4463, %v7919
        %v8049 = vsel %vm345, %v4464, %v7921
        %v8050 = vld [vmem:[%s3] sm:$0xff]
        %v8051 = vld [vmem:[%s3 + $0x8] sm:$0xff]
        %v8052 = vld [vmem:[%s3 + $0x10] sm:$0xff]
        %v8053 = vld [vmem:[%s3 + $0x18] sm:$0xff]
        %v8054 = vld [vmem:[%s3 + $0x20] sm:$0xff]
        %v8055 = vld [vmem:[%s3 + $0x28] sm:$0xff]
        %v8056 = vld [vmem:[%s3 + $0x30] sm:$0xff]
        %v8057 = vld [vmem:[%s3 + $0x38] sm:$0xff]
        %v8058 = vlaneseq
        %v8059 = vshrl.u32 %v8058, 7
        %v8060 = vsub.s32 2, %v8059
        %v8061 = vrot.slane %v317, %v8060
        %vm8062 = vcmask 523264
        %v8064 = vsel %vm8062, %v7986, 0
        %v8067 = vsel %vm8062, %v7987, 0
        %v8070 = vsel %vm8062, %v7988, 0
        %v8073 = vsel %vm8062, %v7989, 0
        %v8076 = vsel %vm8062, %v7990, 0
        %v8079 = vsel %vm8062, %v7991, 0
        %v8082 = vsel %vm8062, %v7992, 0
        %v8085 = vsel %vm8062, %v7993, 0
        %v8088 = vsel %vm8062, %v7994, 0
        %v8091 = vsel %vm8062, %v7995, 0
        %v8094 = vsel %vm8062, %v7996, 0
        %v8097 = vsel %vm8062, %v7997, 0
        %v8100 = vsel %vm8062, %v7998, 0
        %v8103 = vsel %vm8062, %v7999, 0
        %v8106 = vsel %vm8062, %v8000, 0
        %v8109 = vsel %vm8062, %v8001, 0
        %v8112 = vsel %vm8062, %v8002, 0
        %v8115 = vsel %vm8062, %v8003, 0
        %v8118 = vsel %vm8062, %v8004, 0
        %v8121 = vsel %vm8062, %v8005, 0
        %v8124 = vsel %vm8062, %v8006, 0
        %v8127 = vsel %vm8062, %v8007, 0
        %v8130 = vsel %vm8062, %v8008, 0
        %v8133 = vsel %vm8062, %v8009, 0
        %v8136 = vsel %vm8062, %v8010, 0
        %v8139 = vsel %vm8062, %v8011, 0
        %v8142 = vsel %vm8062, %v8012, 0
        %v8145 = vsel %vm8062, %v8013, 0
        %v8148 = vsel %vm8062, %v8014, 0
        %v8151 = vsel %vm8062, %v8015, 0
        %v8154 = vsel %vm8062, %v8016, 0
        %v8157 = vsel %vm8062, %v8017, 0
        %v8160 = vsel %vm8062, %v8018, 0
        %v8163 = vsel %vm8062, %v8019, 0
        %v8166 = vsel %vm8062, %v8020, 0
        %v8169 = vsel %vm8062, %v8021, 0
        %v8172 = vsel %vm8062, %v8022, 0
        %v8175 = vsel %vm8062, %v8023, 0
        %v8178 = vsel %vm8062, %v8024, 0
        %v8181 = vsel %vm8062, %v8025, 0
        %v8184 = vsel %vm8062, %v8026, 0
        %v8187 = vsel %vm8062, %v8027, 0
        %v8190 = vsel %vm8062, %v8028, 0
        %v8193 = vsel %vm8062, %v8029, 0
        %v8196 = vsel %vm8062, %v8030, 0
        %v8199 = vsel %vm8062, %v8031, 0
        %v8202 = vsel %vm8062, %v8032, 0
        %v8205 = vsel %vm8062, %v8033, 0
        %v8208 = vsel %vm8062, %v8034, 0
        %v8211 = vsel %vm8062, %v8035, 0
        %v8214 = vsel %vm8062, %v8036, 0
        %v8217 = vsel %vm8062, %v8037, 0
        %v8220 = vsel %vm8062, %v8038, 0
        %v8223 = vsel %vm8062, %v8039, 0
        %v8226 = vsel %vm8062, %v8040, 0
        %v8229 = vsel %vm8062, %v8041, 0
        %v8232 = vsel %vm8062, %v8042, 0
        %v8235 = vsel %vm8062, %v8043, 0
        %v8238 = vsel %vm8062, %v8044, 0
        %v8241 = vsel %vm8062, %v8045, 0
        %v8244 = vsel %vm8062, %v8046, 0
        %v8247 = vsel %vm8062, %v8047, 0
        %v8250 = vsel %vm8062, %v8048, 0
        %v8253 = vsel %vm8062, %v8049, 0
        %8255 = vmatprep.subr.mxu0 0.0
        %8256 = vmatpush1.msra.mxu0 %v8050
        %8257 = vmatprep.subr.mxu0 0.0
        %8258 = vmatpush1.msra.mxu0 %v8051
        %8259 = vmatprep.subr.mxu0 0.0
        %8260 = vmatpush1.msra.mxu0 %v8052
        %8261 = vmatprep.subr.mxu0 0.0
        %8262 = vmatpush1.msra.mxu0 %v8053
        %8263 = vmatprep.subr.mxu0 0.0
        %8264 = vmatpush1.msra.mxu0 %v8054
        %8265 = vmatprep.subr.mxu0 0.0
        %8266 = vmatpush1.msra.mxu0 %v8055
        %8267 = vmatprep.subr.mxu0 0.0
        %8268 = vmatpush1.msra.mxu0 %v8056
        %8269 = vmatprep.subr.mxu0 0.0
        %8270 = vmatpush1.msra.mxu0 %v8057
        %8271 = vmatprep.subr.mxu0 0.0
        %8272 = vmatpush1.msra.mxu0 0.0
        %8273 = vmatprep.subr.mxu0 0.0
        %8274 = vmatpush1.msra.mxu0 0.0
        %8275 = vmatprep.subr.mxu0 0.0
        %8276 = vmatpush1.msra.mxu0 0.0
        %8277 = vmatprep.subr.mxu0 0.0
        %8278 = vmatpush1.msra.mxu0 0.0
        %8279 = vmatprep.subr.mxu0 0.0
        %8280 = vmatpush1.msra.mxu0 0.0
        %8281 = vmatprep.subr.mxu0 0.0
        %8282 = vmatpush1.msra.mxu0 0.0
        %8283 = vmatprep.subr.mxu0 0.0
        %8284 = vmatpush1.msra.mxu0 0.0
        %8285 = vmatprep.subr.mxu0 0.0
        %8286 = vmatpush1.msra.mxu0 0.0
        %8287 = vmatprep.subr.mxu0 0.0
        %8288 = vmatpush1.msra.mxu0 0.0
        %8289 = vmatprep.subr.mxu0 0.0
        %8290 = vmatpush1.msra.mxu0 0.0
        %8291 = vmatprep.subr.mxu0 0.0
        %8292 = vmatpush1.msra.mxu0 0.0
        %8293 = vmatprep.subr.mxu0 0.0
        %8294 = vmatpush1.msra.mxu0 0.0
        %8295 = vmatprep.subr.mxu0 0.0
        %8296 = vmatpush1.msra.mxu0 0.0
        %8297 = vmatprep.subr.mxu0 0.0
        %8298 = vmatpush1.msra.mxu0 0.0
        %8299 = vmatprep.subr.mxu0 0.0
        %8300 = vmatpush1.msra.mxu0 0.0
        %8301 = vmatprep.subr.mxu0 0.0
        %8302 = vmatpush1.msra.mxu0 0.0
        %8303 = vmatprep.subr.mxu0 0.0
        %8304 = vmatpush1.msra.mxu0 0.0
        %8305 = vmatprep.subr.mxu0 0.0
        %8306 = vmatpush1.msra.mxu0 0.0
        %8307 = vmatprep.subr.mxu0 0.0
        %8308 = vmatpush1.msra.mxu0 0.0
        %8309 = vmatprep.subr.mxu0 0.0
        %8310 = vmatpush1.msra.mxu0 0.0
        %8311 = vmatprep.subr.mxu0 0.0
        %8312 = vmatpush1.msra.mxu0 0.0
        %8313 = vmatprep.subr.mxu0 0.0
        %8314 = vmatpush1.msra.mxu0 0.0
        %8315 = vmatprep.subr.mxu0 0.0
        %8316 = vmatpush1.msra.mxu0 0.0
        %8317 = vmatprep.subr.mxu0 0.0
        %8318 = vmatpush1.msra.mxu0 0.0
        %8319 = vmatprep.mubr.f32.mxu0 0.0
        %8320 = vmatmul.mubr.f32.gmra.mrb[0].mxu0 %v8064
        %v8321 = vpop.f32.mrb[0].mxu0
        %v8322 = vadd.f32 %v8061, %v8321
        %v8323 = vpop.f32.mrb[0].mxu0
        %8324 = vmatprep.mubr.f32.mxu0 0.0
        %8325 = vmatmul.mubr.f32.gmra.mrb[0].mxu0 %v8067
        %v8326 = vpop.f32.mrb[0].mxu0
        %v8327 = vadd.f32 %v8061, %v8326
        %v8328 = vpop.f32.mrb[0].mxu0
        %8329 = vmatprep.mubr.f32.mxu0 0.0
        %8330 = vmatmul.mubr.f32.gmra.mrb[0].mxu0 %v8070
        %v8331 = vpop.f32.mrb[0].mxu0
        %v8332 = vadd.f32 %v8061, %v8331
        %v8333 = vpop.f32.mrb[0].mxu0
        %8334 = vmatprep.mubr.f32.mxu0 0.0
        %8335 = vmatmul.mubr.f32.gmra.mrb[0].mxu0 %v8073
        %v8336 = vpop.f32.mrb[0].mxu0
        %v8337 = vadd.f32 %v8061, %v8336
        %v8338 = vpop.f32.mrb[0].mxu0
        %8339 = vmatprep.mubr.f32.mxu0 0.0
        %8340 = vmatmul.mubr.f32.gmra.mrb[0].mxu0 %v8076
        %v8341 = vpop.f32.mrb[0].mxu0
        %v8342 = vadd.f32 %v8061, %v8341
        %v8343 = vpop.f32.mrb[0].mxu0
        %8344 = vmatprep.mubr.f32.mxu0 0.0
        %8345 = vmatmul.mubr.f32.gmra.mrb[0].mxu0 %v8079
        %v8346 = vpop.f32.mrb[0].mxu0
        %v8347 = vadd.f32 %v8061, %v8346
        %v8348 = vpop.f32.mrb[0].mxu0
        %8349 = vmatprep.mubr.f32.mxu0 0.0
        %8350 = vmatmul.mubr.f32.gmra.mrb[0].mxu0 %v8082
        %v8351 = vpop.f32.mrb[0].mxu0
        %v8352 = vadd.f32 %v8061, %v8351
        %v8353 = vpop.f32.mrb[0].mxu0
        %8354 = vmatprep.mubr.f32.mxu0 0.0
        %8355 = vmatmul.mubr.f32.gmra.mrb[0].mxu0 %v8085
        %v8356 = vpop.f32.mrb[0].mxu0
        %v8357 = vadd.f32 %v8061, %v8356
        %v8358 = vpop.f32.mrb[0].mxu0
        %8359 = vmatprep.mubr.f32.mxu0 0.0
        %8360 = vmatmul.mubr.f32.gmra.mrb[0].mxu0 %v8088
        %v8361 = vpop.f32.mrb[0].mxu0
        %v8362 = vadd.f32 %v8061, %v8361
        %v8363 = vpop.f32.mrb[0].mxu0
        %8364 = vmatprep.mubr.f32.mxu0 0.0
        %8365 = vmatmul.mubr.f32.gmra.mrb[0].mxu0 %v8091
        %v8366 = vpop.f32.mrb[0].mxu0
        %v8367 = vadd.f32 %v8061, %v8366
        %v8368 = vpop.f32.mrb[0].mxu0
        %8369 = vmatprep.mubr.f32.mxu0 0.0
        %8370 = vmatmul.mubr.f32.gmra.mrb[0].mxu0 %v8094
        %v8371 = vpop.f32.mrb[0].mxu0
        %v8372 = vadd.f32 %v8061, %v8371
        %v8373 = vpop.f32.mrb[0].mxu0
        %8374 = vmatprep.mubr.f32.mxu0 0.0
        %8375 = vmatmul.mubr.f32.gmra.mrb[0].mxu0 %v8097
        %v8376 = vpop.f32.mrb[0].mxu0
        %v8377 = vadd.f32 %v8061, %v8376
        %v8378 = vpop.f32.mrb[0].mxu0
        %8379 = vmatprep.mubr.f32.mxu0 0.0
        %8380 = vmatmul.mubr.f32.gmra.mrb[0].mxu0 %v8100
        %v8381 = vpop.f32.mrb[0].mxu0
        %v8382 = vadd.f32 %v8061, %v8381
        %v8383 = vpop.f32.mrb[0].mxu0
        %8384 = vmatprep.mubr.f32.mxu0 0.0
        %8385 = vmatmul.mubr.f32.gmra.mrb[0].mxu0 %v8103
        %v8386 = vpop.f32.mrb[0].mxu0
        %v8387 = vadd.f32 %v8061, %v8386
        %v8388 = vpop.f32.mrb[0].mxu0
        %8389 = vmatprep.mubr.f32.mxu0 0.0
        %8390 = vmatmul.mubr.f32.gmra.mrb[0].mxu0 %v8106
        %v8391 = vpop.f32.mrb[0].mxu0
        %v8392 = vadd.f32 %v8061, %v8391
        %v8393 = vpop.f32.mrb[0].mxu0
        %8394 = vmatprep.mubr.f32.mxu0 0.0
        %8395 = vmatmul.mubr.f32.gmra.mrb[0].mxu0 %v8109
        %v8396 = vpop.f32.mrb[0].mxu0
        %v8397 = vadd.f32 %v8061, %v8396
        %v8398 = vpop.f32.mrb[0].mxu0
        %8399 = vmatprep.mubr.f32.mxu0 0.0
        %8400 = vmatmul.mubr.f32.gmra.mrb[0].mxu0 %v8112
        %v8401 = vpop.f32.mrb[0].mxu0
        %v8402 = vadd.f32 %v8061, %v8401
        %v8403 = vpop.f32.mrb[0].mxu0
        %8404 = vmatprep.mubr.f32.mxu0 0.0
        %8405 = vmatmul.mubr.f32.gmra.mrb[0].mxu0 %v8115
        %v8406 = vpop.f32.mrb[0].mxu0
        %v8407 = vadd.f32 %v8061, %v8406
        %v8408 = vpop.f32.mrb[0].mxu0
        %8409 = vmatprep.mubr.f32.mxu0 0.0
        %8410 = vmatmul.mubr.f32.gmra.mrb[0].mxu0 %v8118
        %v8411 = vpop.f32.mrb[0].mxu0
        %v8412 = vadd.f32 %v8061, %v8411
        %v8413 = vpop.f32.mrb[0].mxu0
        %8414 = vmatprep.mubr.f32.mxu0 0.0
        %8415 = vmatmul.mubr.f32.gmra.mrb[0].mxu0 %v8121
        %v8416 = vpop.f32.mrb[0].mxu0
        %v8417 = vadd.f32 %v8061, %v8416
        %v8418 = vpop.f32.mrb[0].mxu0
        %8419 = vmatprep.mubr.f32.mxu0 0.0
        %8420 = vmatmul.mubr.f32.gmra.mrb[0].mxu0 %v8124
        %v8421 = vpop.f32.mrb[0].mxu0
        %v8422 = vadd.f32 %v8061, %v8421
        %v8423 = vpop.f32.mrb[0].mxu0
        %8424 = vmatprep.mubr.f32.mxu0 0.0
        %8425 = vmatmul.mubr.f32.gmra.mrb[0].mxu0 %v8127
        %v8426 = vpop.f32.mrb[0].mxu0
        %v8427 = vadd.f32 %v8061, %v8426
        %v8428 = vpop.f32.mrb[0].mxu0
        %8429 = vmatprep.mubr.f32.mxu0 0.0
        %8430 = vmatmul.mubr.f32.gmra.mrb[0].mxu0 %v8130
        %v8431 = vpop.f32.mrb[0].mxu0
        %v8432 = vadd.f32 %v8061, %v8431
        %v8433 = vpop.f32.mrb[0].mxu0
        %8434 = vmatprep.mubr.f32.mxu0 0.0
        %8435 = vmatmul.mubr.f32.gmra.mrb[0].mxu0 %v8133
        %v8436 = vpop.f32.mrb[0].mxu0
        %v8437 = vadd.f32 %v8061, %v8436
        %v8438 = vpop.f32.mrb[0].mxu0
        %8439 = vmatprep.mubr.f32.mxu0 0.0
        %8440 = vmatmul.mubr.f32.gmra.mrb[0].mxu0 %v8136
        %v8441 = vpop.f32.mrb[0].mxu0
        %v8442 = vadd.f32 %v8061, %v8441
        %v8443 = vpop.f32.mrb[0].mxu0
        %8444 = vmatprep.mubr.f32.mxu0 0.0
        %8445 = vmatmul.mubr.f32.gmra.mrb[0].mxu0 %v8139
        %v8446 = vpop.f32.mrb[0].mxu0
        %v8447 = vadd.f32 %v8061, %v8446
        %v8448 = vpop.f32.mrb[0].mxu0
        %8449 = vmatprep.mubr.f32.mxu0 0.0
        %8450 = vmatmul.mubr.f32.gmra.mrb[0].mxu0 %v8142
        %v8451 = vpop.f32.mrb[0].mxu0
        %v8452 = vadd.f32 %v8061, %v8451
        %v8453 = vpop.f32.mrb[0].mxu0
        %8454 = vmatprep.mubr.f32.mxu0 0.0
        %8455 = vmatmul.mubr.f32.gmra.mrb[0].mxu0 %v8145
        %v8456 = vpop.f32.mrb[0].mxu0
        %v8457 = vadd.f32 %v8061, %v8456
        %v8458 = vpop.f32.mrb[0].mxu0
        %8459 = vmatprep.mubr.f32.mxu0 0.0
        %8460 = vmatmul.mubr.f32.gmra.mrb[0].mxu0 %v8148
        %v8461 = vpop.f32.mrb[0].mxu0
        %v8462 = vadd.f32 %v8061, %v8461
        %v8463 = vpop.f32.mrb[0].mxu0
        %8464 = vmatprep.mubr.f32.mxu0 0.0
        %8465 = vmatmul.mubr.f32.gmra.mrb[0].mxu0 %v8151
        %v8466 = vpop.f32.mrb[0].mxu0
        %v8467 = vadd.f32 %v8061, %v8466
        %v8468 = vpop.f32.mrb[0].mxu0
        %8469 = vmatprep.mubr.f32.mxu0 0.0
        %8470 = vmatmul.mubr.f32.gmra.mrb[0].mxu0 %v8154
        %v8471 = vpop.f32.mrb[0].mxu0
        %v8472 = vadd.f32 %v8061, %v8471
        %v8473 = vpop.f32.mrb[0].mxu0
        %8474 = vmatprep.mubr.f32.mxu0 0.0
        %8475 = vmatmul.mubr.f32.gmra.mrb[0].mxu0 %v8157
        %v8476 = vpop.f32.mrb[0].mxu0
        %v8477 = vadd.f32 %v8061, %v8476
        %v8478 = vpop.f32.mrb[0].mxu0
        %8479 = vmatprep.mubr.f32.mxu0 0.0
        %8480 = vmatmul.mubr.f32.gmra.mrb[0].mxu0 %v8160
        %v8481 = vpop.f32.mrb[0].mxu0
        %v8482 = vadd.f32 %v8061, %v8481
        %v8483 = vpop.f32.mrb[0].mxu0
        %8484 = vmatprep.mubr.f32.mxu0 0.0
        %8485 = vmatmul.mubr.f32.gmra.mrb[0].mxu0 %v8163
        %v8486 = vpop.f32.mrb[0].mxu0
        %v8487 = vadd.f32 %v8061, %v8486
        %v8488 = vpop.f32.mrb[0].mxu0
        %8489 = vmatprep.mubr.f32.mxu0 0.0
        %8490 = vmatmul.mubr.f32.gmra.mrb[0].mxu0 %v8166
        %v8491 = vpop.f32.mrb[0].mxu0
        %v8492 = vadd.f32 %v8061, %v8491
        %v8493 = vpop.f32.mrb[0].mxu0
        %8494 = vmatprep.mubr.f32.mxu0 0.0
        %8495 = vmatmul.mubr.f32.gmra.mrb[0].mxu0 %v8169
        %v8496 = vpop.f32.mrb[0].mxu0
        %v8497 = vadd.f32 %v8061, %v8496
        %v8498 = vpop.f32.mrb[0].mxu0
        %8499 = vmatprep.mubr.f32.mxu0 0.0
        %8500 = vmatmul.mubr.f32.gmra.mrb[0].mxu0 %v8172
        %v8501 = vpop.f32.mrb[0].mxu0
        %v8502 = vadd.f32 %v8061, %v8501
        %v8503 = vpop.f32.mrb[0].mxu0
        %8504 = vmatprep.mubr.f32.mxu0 0.0
        %8505 = vmatmul.mubr.f32.gmra.mrb[0].mxu0 %v8175
        %v8506 = vpop.f32.mrb[0].mxu0
        %v8507 = vadd.f32 %v8061, %v8506
        %v8508 = vpop.f32.mrb[0].mxu0
        %8509 = vmatprep.mubr.f32.mxu0 0.0
        %8510 = vmatmul.mubr.f32.gmra.mrb[0].mxu0 %v8178
        %v8511 = vpop.f32.mrb[0].mxu0
        %v8512 = vadd.f32 %v8061, %v8511
        %v8513 = vpop.f32.mrb[0].mxu0
        %8514 = vmatprep.mubr.f32.mxu0 0.0
        %8515 = vmatmul.mubr.f32.gmra.mrb[0].mxu0 %v8181
        %v8516 = vpop.f32.mrb[0].mxu0
        %v8517 = vadd.f32 %v8061, %v8516
        %v8518 = vpop.f32.mrb[0].mxu0
        %8519 = vmatprep.mubr.f32.mxu0 0.0
        %8520 = vmatmul.mubr.f32.gmra.mrb[0].mxu0 %v8184
        %v8521 = vpop.f32.mrb[0].mxu0
        %v8522 = vadd.f32 %v8061, %v8521
        %v8523 = vpop.f32.mrb[0].mxu0
        %8524 = vmatprep.mubr.f32.mxu0 0.0
        %8525 = vmatmul.mubr.f32.gmra.mrb[0].mxu0 %v8187
        %v8526 = vpop.f32.mrb[0].mxu0
        %v8527 = vadd.f32 %v8061, %v8526
        %v8528 = vpop.f32.mrb[0].mxu0
        %8529 = vmatprep.mubr.f32.mxu0 0.0
        %8530 = vmatmul.mubr.f32.gmra.mrb[0].mxu0 %v8190
        %v8531 = vpop.f32.mrb[0].mxu0
        %v8532 = vadd.f32 %v8061, %v8531
        %v8533 = vpop.f32.mrb[0].mxu0
        %8534 = vmatprep.mubr.f32.mxu0 0.0
        %8535 = vmatmul.mubr.f32.gmra.mrb[0].mxu0 %v8193
        %v8536 = vpop.f32.mrb[0].mxu0
        %v8537 = vadd.f32 %v8061, %v8536
        %v8538 = vpop.f32.mrb[0].mxu0
        %8539 = vmatprep.mubr.f32.mxu0 0.0
        %8540 = vmatmul.mubr.f32.gmra.mrb[0].mxu0 %v8196
        %v8541 = vpop.f32.mrb[0].mxu0
        %v8542 = vadd.f32 %v8061, %v8541
        %v8543 = vpop.f32.mrb[0].mxu0
        %8544 = vmatprep.mubr.f32.mxu0 0.0
        %8545 = vmatmul.mubr.f32.gmra.mrb[0].mxu0 %v8199
        %v8546 = vpop.f32.mrb[0].mxu0
        %v8547 = vadd.f32 %v8061, %v8546
        %v8548 = vpop.f32.mrb[0].mxu0
        %8549 = vmatprep.mubr.f32.mxu0 0.0
        %8550 = vmatmul.mubr.f32.gmra.mrb[0].mxu0 %v8202
        %v8551 = vpop.f32.mrb[0].mxu0
        %v8552 = vadd.f32 %v8061, %v8551
        %v8553 = vpop.f32.mrb[0].mxu0
        %8554 = vmatprep.mubr.f32.mxu0 0.0
        %8555 = vmatmul.mubr.f32.gmra.mrb[0].mxu0 %v8205
        %v8556 = vpop.f32.mrb[0].mxu0
        %v8557 = vadd.f32 %v8061, %v8556
        %v8558 = vpop.f32.mrb[0].mxu0
        %8559 = vmatprep.mubr.f32.mxu0 0.0
        %8560 = vmatmul.mubr.f32.gmra.mrb[0].mxu0 %v8208
        %v8561 = vpop.f32.mrb[0].mxu0
        %v8562 = vadd.f32 %v8061, %v8561
        %v8563 = vpop.f32.mrb[0].mxu0
        %8564 = vmatprep.mubr.f32.mxu0 0.0
        %8565 = vmatmul.mubr.f32.gmra.mrb[0].mxu0 %v8211
        %v8566 = vpop.f32.mrb[0].mxu0
        %v8567 = vadd.f32 %v8061, %v8566
        %v8568 = vpop.f32.mrb[0].mxu0
        %8569 = vmatprep.mubr.f32.mxu0 0.0
        %8570 = vmatmul.mubr.f32.gmra.mrb[0].mxu0 %v8214
        %v8571 = vpop.f32.mrb[0].mxu0
        %v8572 = vadd.f32 %v8061, %v8571
        %v8573 = vpop.f32.mrb[0].mxu0
        %8574 = vmatprep.mubr.f32.mxu0 0.0
        %8575 = vmatmul.mubr.f32.gmra.mrb[0].mxu0 %v8217
        %v8576 = vpop.f32.mrb[0].mxu0
        %v8577 = vadd.f32 %v8061, %v8576
        %v8578 = vpop.f32.mrb[0].mxu0
        %8579 = vmatprep.mubr.f32.mxu0 0.0
        %8580 = vmatmul.mubr.f32.gmra.mrb[0].mxu0 %v8220
        %v8581 = vpop.f32.mrb[0].mxu0
        %v8582 = vadd.f32 %v8061, %v8581
        %v8583 = vpop.f32.mrb[0].mxu0
        %8584 = vmatprep.mubr.f32.mxu0 0.0
        %8585 = vmatmul.mubr.f32.gmra.mrb[0].mxu0 %v8223
        %v8586 = vpop.f32.mrb[0].mxu0
        %v8587 = vadd.f32 %v8061, %v8586
        %v8588 = vpop.f32.mrb[0].mxu0
        %8589 = vmatprep.mubr.f32.mxu0 0.0
        %8590 = vmatmul.mubr.f32.gmra.mrb[0].mxu0 %v8226
        %v8591 = vpop.f32.mrb[0].mxu0
        %v8592 = vadd.f32 %v8061, %v8591
        %v8593 = vpop.f32.mrb[0].mxu0
        %8594 = vmatprep.mubr.f32.mxu0 0.0
        %8595 = vmatmul.mubr.f32.gmra.mrb[0].mxu0 %v8229
        %v8596 = vpop.f32.mrb[0].mxu0
        %v8597 = vadd.f32 %v8061, %v8596
        %v8598 = vpop.f32.mrb[0].mxu0
        %8599 = vmatprep.mubr.f32.mxu0 0.0
        %8600 = vmatmul.mubr.f32.gmra.mrb[0].mxu0 %v8232
        %v8601 = vpop.f32.mrb[0].mxu0
        %v8602 = vadd.f32 %v8061, %v8601
        %v8603 = vpop.f32.mrb[0].mxu0
        %8604 = vmatprep.mubr.f32.mxu0 0.0
        %8605 = vmatmul.mubr.f32.gmra.mrb[0].mxu0 %v8235
        %v8606 = vpop.f32.mrb[0].mxu0
        %v8607 = vadd.f32 %v8061, %v8606
        %v8608 = vpop.f32.mrb[0].mxu0
        %8609 = vmatprep.mubr.f32.mxu0 0.0
        %8610 = vmatmul.mubr.f32.gmra.mrb[0].mxu0 %v8238
        %v8611 = vpop.f32.mrb[0].mxu0
        %v8612 = vadd.f32 %v8061, %v8611
        %v8613 = vpop.f32.mrb[0].mxu0
        %8614 = vmatprep.mubr.f32.mxu0 0.0
        %8615 = vmatmul.mubr.f32.gmra.mrb[0].mxu0 %v8241
        %v8616 = vpop.f32.mrb[0].mxu0
        %v8617 = vadd.f32 %v8061, %v8616
        %v8618 = vpop.f32.mrb[0].mxu0
        %8619 = vmatprep.mubr.f32.mxu0 0.0
        %8620 = vmatmul.mubr.f32.gmra.mrb[0].mxu0 %v8244
        %v8621 = vpop.f32.mrb[0].mxu0
        %v8622 = vadd.f32 %v8061, %v8621
        %v8623 = vpop.f32.mrb[0].mxu0
        %8624 = vmatprep.mubr.f32.mxu0 0.0
        %8625 = vmatmul.mubr.f32.gmra.mrb[0].mxu0 %v8247
        %v8626 = vpop.f32.mrb[0].mxu0
        %v8627 = vadd.f32 %v8061, %v8626
        %v8628 = vpop.f32.mrb[0].mxu0
        %8629 = vmatprep.mubr.f32.mxu0 0.0
        %8630 = vmatmul.mubr.f32.gmra.mrb[0].mxu0 %v8250
        %v8631 = vpop.f32.mrb[0].mxu0
        %v8632 = vadd.f32 %v8061, %v8631
        %v8633 = vpop.f32.mrb[0].mxu0
        %8634 = vmatprep.mubr.f32.mxu0 0.0
        %8635 = vmatmul.mubr.f32.gmra.mrb[0].mxu0 %v8253
        %v8636 = vpop.f32.mrb[0].mxu0
        %v8637 = vadd.f32 %v8061, %v8636
        %v8638 = vpop.f32.mrb[0].mxu0
        %8639 = vdwg.mxu0
        %v8640 = vmax.f32 %v8322, 0.0
        %v8641 = vmax.f32 %v8327, 0.0
        %v8642 = vmax.f32 %v8332, 0.0
        %v8643 = vmax.f32 %v8337, 0.0
        %v8644 = vmax.f32 %v8342, 0.0
        %v8645 = vmax.f32 %v8347, 0.0
        %v8646 = vmax.f32 %v8352, 0.0
        %v8647 = vmax.f32 %v8357, 0.0
        %v8648 = vmax.f32 %v8362, 0.0
        %v8649 = vmax.f32 %v8367, 0.0
        %v8650 = vmax.f32 %v8372, 0.0
        %v8651 = vmax.f32 %v8377, 0.0
        %v8652 = vmax.f32 %v8382, 0.0
        %v8653 = vmax.f32 %v8387, 0.0
        %v8654 = vmax.f32 %v8392, 0.0
        %v8655 = vmax.f32 %v8397, 0.0
        %v8656 = vmax.f32 %v8402, 0.0
        %v8657 = vmax.f32 %v8407, 0.0
        %v8658 = vmax.f32 %v8412, 0.0
        %v8659 = vmax.f32 %v8417, 0.0
        %v8660 = vmax.f32 %v8422, 0.0
        %v8661 = vmax.f32 %v8427, 0.0
        %v8662 = vmax.f32 %v8432, 0.0
        %v8663 = vmax.f32 %v8437, 0.0
        %v8664 = vmax.f32 %v8442, 0.0
        %v8665 = vmax.f32 %v8447, 0.0
        %v8666 = vmax.f32 %v8452, 0.0
        %v8667 = vmax.f32 %v8457, 0.0
        %v8668 = vmax.f32 %v8462, 0.0
        %v8669 = vmax.f32 %v8467, 0.0
        %v8670 = vmax.f32 %v8472, 0.0
        %v8671 = vmax.f32 %v8477, 0.0
        %v8672 = vmax.f32 %v8482, 0.0
        %v8673 = vmax.f32 %v8487, 0.0
        %v8674 = vmax.f32 %v8492, 0.0
        %v8675 = vmax.f32 %v8497, 0.0
        %v8676 = vmax.f32 %v8502, 0.0
        %v8677 = vmax.f32 %v8507, 0.0
        %v8678 = vmax.f32 %v8512, 0.0
        %v8679 = vmax.f32 %v8517, 0.0
        %v8680 = vmax.f32 %v8522, 0.0
        %v8681 = vmax.f32 %v8527, 0.0
        %v8682 = vmax.f32 %v8532, 0.0
        %v8683 = vmax.f32 %v8537, 0.0
        %v8684 = vmax.f32 %v8542, 0.0
        %v8685 = vmax.f32 %v8547, 0.0
        %v8686 = vmax.f32 %v8552, 0.0
        %v8687 = vmax.f32 %v8557, 0.0
        %v8688 = vmax.f32 %v8562, 0.0
        %v8689 = vmax.f32 %v8567, 0.0
        %v8690 = vmax.f32 %v8572, 0.0
        %v8691 = vmax.f32 %v8577, 0.0
        %v8692 = vmax.f32 %v8582, 0.0
        %v8693 = vmax.f32 %v8587, 0.0
        %v8694 = vmax.f32 %v8592, 0.0
        %v8695 = vmax.f32 %v8597, 0.0
        %v8696 = vmax.f32 %v8602, 0.0
        %v8697 = vmax.f32 %v8607, 0.0
        %v8698 = vmax.f32 %v8612, 0.0
        %v8699 = vmax.f32 %v8617, 0.0
        %v8700 = vmax.f32 %v8622, 0.0
        %v8701 = vmax.f32 %v8627, 0.0
        %v8702 = vmax.f32 %v8632, 0.0
        %v8703 = vmax.f32 %v8637, 0.0
        %v8704 = vld [vmem:[%s4] sm:$0xff]
        %v8705 = vld [vmem:[%s4 + $0x8] sm:$0xff]
        %v8706 = vld [vmem:[%s4 + $0x10] sm:$0xff]
        %v8707 = vld [vmem:[%s4 + $0x18] sm:$0xff]
        %v8708 = vlaneseq
        %v8709 = vshrl.u32 %v8708, 7
        %v8710 = vsub.s32 3, %v8709
        %v8711 = vrot.slane %v317, %v8710
        %v8713 = vsel %vm345, %v8640, 0
        %v8716 = vsel %vm345, %v8641, 0
        %v8719 = vsel %vm345, %v8642, 0
        %v8722 = vsel %vm345, %v8643, 0
        %v8725 = vsel %vm345, %v8644, 0
        %v8728 = vsel %vm345, %v8645, 0
        %v8731 = vsel %vm345, %v8646, 0
        %v8734 = vsel %vm345, %v8647, 0
        %v8737 = vsel %vm345, %v8648, 0
        %v8740 = vsel %vm345, %v8649, 0
        %v8743 = vsel %vm345, %v8650, 0
        %v8746 = vsel %vm345, %v8651, 0
        %v8749 = vsel %vm345, %v8652, 0
        %v8752 = vsel %vm345, %v8653, 0
        %v8755 = vsel %vm345, %v8654, 0
        %v8758 = vsel %vm345, %v8655, 0
        %v8761 = vsel %vm345, %v8656, 0
        %v8764 = vsel %vm345, %v8657, 0
        %v8767 = vsel %vm345, %v8658, 0
        %v8770 = vsel %vm345, %v8659, 0
        %v8773 = vsel %vm345, %v8660, 0
        %v8776 = vsel %vm345, %v8661, 0
        %v8779 = vsel %vm345, %v8662, 0
        %v8782 = vsel %vm345, %v8663, 0
        %v8785 = vsel %vm345, %v8664, 0
        %v8788 = vsel %vm345, %v8665, 0
        %v8791 = vsel %vm345, %v8666, 0
        %v8794 = vsel %vm345, %v8667, 0
        %v8797 = vsel %vm345, %v8668, 0
        %v8800 = vsel %vm345, %v8669, 0
        %v8803 = vsel %vm345, %v8670, 0
        %v8806 = vsel %vm345, %v8671, 0
        %v8809 = vsel %vm345, %v8672, 0
        %v8812 = vsel %vm345, %v8673, 0
        %v8815 = vsel %vm345, %v8674, 0
        %v8818 = vsel %vm345, %v8675, 0
        %v8821 = vsel %vm345, %v8676, 0
        %v8824 = vsel %vm345, %v8677, 0
        %v8827 = vsel %vm345, %v8678, 0
        %v8830 = vsel %vm345, %v8679, 0
        %v8833 = vsel %vm345, %v8680, 0
        %v8836 = vsel %vm345, %v8681, 0
        %v8839 = vsel %vm345, %v8682, 0
        %v8842 = vsel %vm345, %v8683, 0
        %v8845 = vsel %vm345, %v8684, 0
        %v8848 = vsel %vm345, %v8685, 0
        %v8851 = vsel %vm345, %v8686, 0
        %v8854 = vsel %vm345, %v8687, 0
        %v8857 = vsel %vm345, %v8688, 0
        %v8860 = vsel %vm345, %v8689, 0
        %v8863 = vsel %vm345, %v8690, 0
        %v8866 = vsel %vm345, %v8691, 0
        %v8869 = vsel %vm345, %v8692, 0
        %v8872 = vsel %vm345, %v8693, 0
        %v8875 = vsel %vm345, %v8694, 0
        %v8878 = vsel %vm345, %v8695, 0
        %v8881 = vsel %vm345, %v8696, 0
        %v8884 = vsel %vm345, %v8697, 0
        %v8887 = vsel %vm345, %v8698, 0
        %v8890 = vsel %vm345, %v8699, 0
        %v8893 = vsel %vm345, %v8700, 0
        %v8896 = vsel %vm345, %v8701, 0
        %v8899 = vsel %vm345, %v8702, 0
        %v8902 = vsel %vm345, %v8703, 0
        %8904 = vmatprep.subr.mxu0 0.0
        %8905 = vmatpush1.msra.mxu0 %v8704
        %8906 = vmatprep.subr.mxu0 0.0
        %8907 = vmatpush1.msra.mxu0 %v8705
        %8908 = vmatprep.subr.mxu0 0.0
        %8909 = vmatpush1.msra.mxu0 %v8706
        %8910 = vmatprep.subr.mxu0 0.0
        %8911 = vmatpush1.msra.mxu0 %v8707
        %8912 = vmatprep.subr.mxu0 0.0
        %8913 = vmatpush1.msra.mxu0 0.0
        %8914 = vmatprep.subr.mxu0 0.0
        %8915 = vmatpush1.msra.mxu0 0.0
        %8916 = vmatprep.subr.mxu0 0.0
        %8917 = vmatpush1.msra.mxu0 0.0
        %8918 = vmatprep.subr.mxu0 0.0
        %8919 = vmatpush1.msra.mxu0 0.0
        %8920 = vmatprep.subr.mxu0 0.0
        %8921 = vmatpush1.msra.mxu0 0.0
        %8922 = vmatprep.subr.mxu0 0.0
        %8923 = vmatpush1.msra.mxu0 0.0
        %8924 = vmatprep.subr.mxu0 0.0
        %8925 = vmatpush1.msra.mxu0 0.0
        %8926 = vmatprep.subr.mxu0 0.0
        %8927 = vmatpush1.msra.mxu0 0.0
        %8928 = vmatprep.subr.mxu0 0.0
        %8929 = vmatpush1.msra.mxu0 0.0
        %8930 = vmatprep.subr.mxu0 0.0
        %8931 = vmatpush1.msra.mxu0 0.0
        %8932 = vmatprep.subr.mxu0 0.0
        %8933 = vmatpush1.msra.mxu0 0.0
        %8934 = vmatprep.subr.mxu0 0.0
        %8935 = vmatpush1.msra.mxu0 0.0
        %8936 = vmatprep.subr.mxu0 0.0
        %8937 = vmatpush1.msra.mxu0 0.0
        %8938 = vmatprep.subr.mxu0 0.0
        %8939 = vmatpush1.msra.mxu0 0.0
        %8940 = vmatprep.subr.mxu0 0.0
        %8941 = vmatpush1.msra.mxu0 0.0
        %8942 = vmatprep.subr.mxu0 0.0
        %8943 = vmatpush1.msra.mxu0 0.0
        %8944 = vmatprep.subr.mxu0 0.0
        %8945 = vmatpush1.msra.mxu0 0.0
        %8946 = vmatprep.subr.mxu0 0.0
        %8947 = vmatpush1.msra.mxu0 0.0
        %8948 = vmatprep.subr.mxu0 0.0
        %8949 = vmatpush1.msra.mxu0 0.0
        %8950 = vmatprep.subr.mxu0 0.0
        %8951 = vmatpush1.msra.mxu0 0.0
        %8952 = vmatprep.subr.mxu0 0.0
        %8953 = vmatpush1.msra.mxu0 0.0
        %8954 = vmatprep.subr.mxu0 0.0
        %8955 = vmatpush1.msra.mxu0 0.0
        %8956 = vmatprep.subr.mxu0 0.0
        %8957 = vmatpush1.msra.mxu0 0.0
        %8958 = vmatprep.subr.mxu0 0.0
        %8959 = vmatpush1.msra.mxu0 0.0
        %8960 = vmatprep.subr.mxu0 0.0
        %8961 = vmatpush1.msra.mxu0 0.0
        %8962 = vmatprep.subr.mxu0 0.0
        %8963 = vmatpush1.msra.mxu0 0.0
        %8964 = vmatprep.subr.mxu0 0.0
        %8965 = vmatpush1.msra.mxu0 0.0
        %8966 = vmatprep.subr.mxu0 0.0
        %8967 = vmatpush1.msra.mxu0 0.0
        %8968 = vmatprep.mubr.f32.mxu0 0.0
        %8969 = vmatmul.mubr.f32.gmra.mrb[0].mxu0 %v8713
        %v8970 = vpop.f32.mrb[0].mxu0
        %v8971 = vadd.f32 %v8711, %v8970
        %v8972 = vpop.f32.mrb[0].mxu0
        %8973 = vmatprep.mubr.f32.mxu0 0.0
        %8974 = vmatmul.mubr.f32.gmra.mrb[0].mxu0 %v8716
        %v8975 = vpop.f32.mrb[0].mxu0
        %v8976 = vadd.f32 %v8711, %v8975
        %v8977 = vpop.f32.mrb[0].mxu0
        %8978 = vmatprep.mubr.f32.mxu0 0.0
        %8979 = vmatmul.mubr.f32.gmra.mrb[0].mxu0 %v8719
        %v8980 = vpop.f32.mrb[0].mxu0
        %v8981 = vadd.f32 %v8711, %v8980
        %v8982 = vpop.f32.mrb[0].mxu0
        %8983 = vmatprep.mubr.f32.mxu0 0.0
        %8984 = vmatmul.mubr.f32.gmra.mrb[0].mxu0 %v8722
        %v8985 = vpop.f32.mrb[0].mxu0
        %v8986 = vadd.f32 %v8711, %v8985
        %v8987 = vpop.f32.mrb[0].mxu0
        %8988 = vmatprep.mubr.f32.mxu0 0.0
        %8989 = vmatmul.mubr.f32.gmra.mrb[0].mxu0 %v8725
        %v8990 = vpop.f32.mrb[0].mxu0
        %v8991 = vadd.f32 %v8711, %v8990
        %v8992 = vpop.f32.mrb[0].mxu0
        %8993 = vmatprep.mubr.f32.mxu0 0.0
        %8994 = vmatmul.mubr.f32.gmra.mrb[0].mxu0 %v8728
        %v8995 = vpop.f32.mrb[0].mxu0
        %v8996 = vadd.f32 %v8711, %v8995
        %v8997 = vpop.f32.mrb[0].mxu0
        %8998 = vmatprep.mubr.f32.mxu0 0.0
        %8999 = vmatmul.mubr.f32.gmra.mrb[0].mxu0 %v8731
        %v9000 = vpop.f32.mrb[0].mxu0
        %v9001 = vadd.f32 %v8711, %v9000
        %v9002 = vpop.f32.mrb[0].mxu0
        %9003 = vmatprep.mubr.f32.mxu0 0.0
        %9004 = vmatmul.mubr.f32.gmra.mrb[0].mxu0 %v8734
        %v9005 = vpop.f32.mrb[0].mxu0
        %v9006 = vadd.f32 %v8711, %v9005
        %v9007 = vpop.f32.mrb[0].mxu0
        %9008 = vmatprep.mubr.f32.mxu0 0.0
        %9009 = vmatmul.mubr.f32.gmra.mrb[0].mxu0 %v8737
        %v9010 = vpop.f32.mrb[0].mxu0
        %v9011 = vadd.f32 %v8711, %v9010
        %v9012 = vpop.f32.mrb[0].mxu0
        %9013 = vmatprep.mubr.f32.mxu0 0.0
        %9014 = vmatmul.mubr.f32.gmra.mrb[0].mxu0 %v8740
        %v9015 = vpop.f32.mrb[0].mxu0
        %v9016 = vadd.f32 %v8711, %v9015
        %v9017 = vpop.f32.mrb[0].mxu0
        %9018 = vmatprep.mubr.f32.mxu0 0.0
        %9019 = vmatmul.mubr.f32.gmra.mrb[0].mxu0 %v8743
        %v9020 = vpop.f32.mrb[0].mxu0
        %v9021 = vadd.f32 %v8711, %v9020
        %v9022 = vpop.f32.mrb[0].mxu0
        %9023 = vmatprep.mubr.f32.mxu0 0.0
        %9024 = vmatmul.mubr.f32.gmra.mrb[0].mxu0 %v8746
        %v9025 = vpop.f32.mrb[0].mxu0
        %v9026 = vadd.f32 %v8711, %v9025
        %v9027 = vpop.f32.mrb[0].mxu0
        %9028 = vmatprep.mubr.f32.mxu0 0.0
        %9029 = vmatmul.mubr.f32.gmra.mrb[0].mxu0 %v8749
        %v9030 = vpop.f32.mrb[0].mxu0
        %v9031 = vadd.f32 %v8711, %v9030
        %v9032 = vpop.f32.mrb[0].mxu0
        %9033 = vmatprep.mubr.f32.mxu0 0.0
        %9034 = vmatmul.mubr.f32.gmra.mrb[0].mxu0 %v8752
        %v9035 = vpop.f32.mrb[0].mxu0
        %v9036 = vadd.f32 %v8711, %v9035
        %v9037 = vpop.f32.mrb[0].mxu0
        %9038 = vmatprep.mubr.f32.mxu0 0.0
        %9039 = vmatmul.mubr.f32.gmra.mrb[0].mxu0 %v8755
        %v9040 = vpop.f32.mrb[0].mxu0
        %v9041 = vadd.f32 %v8711, %v9040
        %v9042 = vpop.f32.mrb[0].mxu0
        %9043 = vmatprep.mubr.f32.mxu0 0.0
        %9044 = vmatmul.mubr.f32.gmra.mrb[0].mxu0 %v8758
        %v9045 = vpop.f32.mrb[0].mxu0
        %v9046 = vadd.f32 %v8711, %v9045
        %v9047 = vpop.f32.mrb[0].mxu0
        %9048 = vmatprep.mubr.f32.mxu0 0.0
        %9049 = vmatmul.mubr.f32.gmra.mrb[0].mxu0 %v8761
        %v9050 = vpop.f32.mrb[0].mxu0
        %v9051 = vadd.f32 %v8711, %v9050
        %v9052 = vpop.f32.mrb[0].mxu0
        %9053 = vmatprep.mubr.f32.mxu0 0.0
        %9054 = vmatmul.mubr.f32.gmra.mrb[0].mxu0 %v8764
        %v9055 = vpop.f32.mrb[0].mxu0
        %v9056 = vadd.f32 %v8711, %v9055
        %v9057 = vpop.f32.mrb[0].mxu0
        %9058 = vmatprep.mubr.f32.mxu0 0.0
        %9059 = vmatmul.mubr.f32.gmra.mrb[0].mxu0 %v8767
        %v9060 = vpop.f32.mrb[0].mxu0
        %v9061 = vadd.f32 %v8711, %v9060
        %v9062 = vpop.f32.mrb[0].mxu0
        %9063 = vmatprep.mubr.f32.mxu0 0.0
        %9064 = vmatmul.mubr.f32.gmra.mrb[0].mxu0 %v8770
        %v9065 = vpop.f32.mrb[0].mxu0
        %v9066 = vadd.f32 %v8711, %v9065
        %v9067 = vpop.f32.mrb[0].mxu0
        %9068 = vmatprep.mubr.f32.mxu0 0.0
        %9069 = vmatmul.mubr.f32.gmra.mrb[0].mxu0 %v8773
        %v9070 = vpop.f32.mrb[0].mxu0
        %v9071 = vadd.f32 %v8711, %v9070
        %v9072 = vpop.f32.mrb[0].mxu0
        %9073 = vmatprep.mubr.f32.mxu0 0.0
        %9074 = vmatmul.mubr.f32.gmra.mrb[0].mxu0 %v8776
        %v9075 = vpop.f32.mrb[0].mxu0
        %v9076 = vadd.f32 %v8711, %v9075
        %v9077 = vpop.f32.mrb[0].mxu0
        %9078 = vmatprep.mubr.f32.mxu0 0.0
        %9079 = vmatmul.mubr.f32.gmra.mrb[0].mxu0 %v8779
        %v9080 = vpop.f32.mrb[0].mxu0
        %v9081 = vadd.f32 %v8711, %v9080
        %v9082 = vpop.f32.mrb[0].mxu0
        %9083 = vmatprep.mubr.f32.mxu0 0.0
        %9084 = vmatmul.mubr.f32.gmra.mrb[0].mxu0 %v8782
        %v9085 = vpop.f32.mrb[0].mxu0
        %v9086 = vadd.f32 %v8711, %v9085
        %v9087 = vpop.f32.mrb[0].mxu0
        %9088 = vmatprep.mubr.f32.mxu0 0.0
        %9089 = vmatmul.mubr.f32.gmra.mrb[0].mxu0 %v8785
        %v9090 = vpop.f32.mrb[0].mxu0
        %v9091 = vadd.f32 %v8711, %v9090
        %v9092 = vpop.f32.mrb[0].mxu0
        %9093 = vmatprep.mubr.f32.mxu0 0.0
        %9094 = vmatmul.mubr.f32.gmra.mrb[0].mxu0 %v8788
        %v9095 = vpop.f32.mrb[0].mxu0
        %v9096 = vadd.f32 %v8711, %v9095
        %v9097 = vpop.f32.mrb[0].mxu0
        %9098 = vmatprep.mubr.f32.mxu0 0.0
        %9099 = vmatmul.mubr.f32.gmra.mrb[0].mxu0 %v8791
        %v9100 = vpop.f32.mrb[0].mxu0
        %v9101 = vadd.f32 %v8711, %v9100
        %v9102 = vpop.f32.mrb[0].mxu0
        %9103 = vmatprep.mubr.f32.mxu0 0.0
        %9104 = vmatmul.mubr.f32.gmra.mrb[0].mxu0 %v8794
        %v9105 = vpop.f32.mrb[0].mxu0
        %v9106 = vadd.f32 %v8711, %v9105
        %v9107 = vpop.f32.mrb[0].mxu0
        %9108 = vmatprep.mubr.f32.mxu0 0.0
        %9109 = vmatmul.mubr.f32.gmra.mrb[0].mxu0 %v8797
        %v9110 = vpop.f32.mrb[0].mxu0
        %v9111 = vadd.f32 %v8711, %v9110
        %v9112 = vpop.f32.mrb[0].mxu0
        %9113 = vmatprep.mubr.f32.mxu0 0.0
        %9114 = vmatmul.mubr.f32.gmra.mrb[0].mxu0 %v8800
        %v9115 = vpop.f32.mrb[0].mxu0
        %v9116 = vadd.f32 %v8711, %v9115
        %v9117 = vpop.f32.mrb[0].mxu0
        %9118 = vmatprep.mubr.f32.mxu0 0.0
        %9119 = vmatmul.mubr.f32.gmra.mrb[0].mxu0 %v8803
        %v9120 = vpop.f32.mrb[0].mxu0
        %v9121 = vadd.f32 %v8711, %v9120
        %v9122 = vpop.f32.mrb[0].mxu0
        %9123 = vmatprep.mubr.f32.mxu0 0.0
        %9124 = vmatmul.mubr.f32.gmra.mrb[0].mxu0 %v8806
        %v9125 = vpop.f32.mrb[0].mxu0
        %v9126 = vadd.f32 %v8711, %v9125
        %v9127 = vpop.f32.mrb[0].mxu0
        %9128 = vmatprep.mubr.f32.mxu0 0.0
        %9129 = vmatmul.mubr.f32.gmra.mrb[0].mxu0 %v8809
        %v9130 = vpop.f32.mrb[0].mxu0
        %v9131 = vadd.f32 %v8711, %v9130
        %v9132 = vpop.f32.mrb[0].mxu0
        %9133 = vmatprep.mubr.f32.mxu0 0.0
        %9134 = vmatmul.mubr.f32.gmra.mrb[0].mxu0 %v8812
        %v9135 = vpop.f32.mrb[0].mxu0
        %v9136 = vadd.f32 %v8711, %v9135
        %v9137 = vpop.f32.mrb[0].mxu0
        %9138 = vmatprep.mubr.f32.mxu0 0.0
        %9139 = vmatmul.mubr.f32.gmra.mrb[0].mxu0 %v8815
        %v9140 = vpop.f32.mrb[0].mxu0
        %v9141 = vadd.f32 %v8711, %v9140
        %v9142 = vpop.f32.mrb[0].mxu0
        %9143 = vmatprep.mubr.f32.mxu0 0.0
        %9144 = vmatmul.mubr.f32.gmra.mrb[0].mxu0 %v8818
        %v9145 = vpop.f32.mrb[0].mxu0
        %v9146 = vadd.f32 %v8711, %v9145
        %v9147 = vpop.f32.mrb[0].mxu0
        %9148 = vmatprep.mubr.f32.mxu0 0.0
        %9149 = vmatmul.mubr.f32.gmra.mrb[0].mxu0 %v8821
        %v9150 = vpop.f32.mrb[0].mxu0
        %v9151 = vadd.f32 %v8711, %v9150
        %v9152 = vpop.f32.mrb[0].mxu0
        %9153 = vmatprep.mubr.f32.mxu0 0.0
        %9154 = vmatmul.mubr.f32.gmra.mrb[0].mxu0 %v8824
        %v9155 = vpop.f32.mrb[0].mxu0
        %v9156 = vadd.f32 %v8711, %v9155
        %v9157 = vpop.f32.mrb[0].mxu0
        %9158 = vmatprep.mubr.f32.mxu0 0.0
        %9159 = vmatmul.mubr.f32.gmra.mrb[0].mxu0 %v8827
        %v9160 = vpop.f32.mrb[0].mxu0
        %v9161 = vadd.f32 %v8711, %v9160
        %v9162 = vpop.f32.mrb[0].mxu0
        %9163 = vmatprep.mubr.f32.mxu0 0.0
        %9164 = vmatmul.mubr.f32.gmra.mrb[0].mxu0 %v8830
        %v9165 = vpop.f32.mrb[0].mxu0
        %v9166 = vadd.f32 %v8711, %v9165
        %v9167 = vpop.f32.mrb[0].mxu0
        %9168 = vmatprep.mubr.f32.mxu0 0.0
        %9169 = vmatmul.mubr.f32.gmra.mrb[0].mxu0 %v8833
        %v9170 = vpop.f32.mrb[0].mxu0
        %v9171 = vadd.f32 %v8711, %v9170
        %v9172 = vpop.f32.mrb[0].mxu0
        %9173 = vmatprep.mubr.f32.mxu0 0.0
        %9174 = vmatmul.mubr.f32.gmra.mrb[0].mxu0 %v8836
        %v9175 = vpop.f32.mrb[0].mxu0
        %v9176 = vadd.f32 %v8711, %v9175
        %v9177 = vpop.f32.mrb[0].mxu0
        %9178 = vmatprep.mubr.f32.mxu0 0.0
        %9179 = vmatmul.mubr.f32.gmra.mrb[0].mxu0 %v8839
        %v9180 = vpop.f32.mrb[0].mxu0
        %v9181 = vadd.f32 %v8711, %v9180
        %v9182 = vpop.f32.mrb[0].mxu0
        %9183 = vmatprep.mubr.f32.mxu0 0.0
        %9184 = vmatmul.mubr.f32.gmra.mrb[0].mxu0 %v8842
        %v9185 = vpop.f32.mrb[0].mxu0
        %v9186 = vadd.f32 %v8711, %v9185
        %v9187 = vpop.f32.mrb[0].mxu0
        %9188 = vmatprep.mubr.f32.mxu0 0.0
        %9189 = vmatmul.mubr.f32.gmra.mrb[0].mxu0 %v8845
        %v9190 = vpop.f32.mrb[0].mxu0
        %v9191 = vadd.f32 %v8711, %v9190
        %v9192 = vpop.f32.mrb[0].mxu0
        %9193 = vmatprep.mubr.f32.mxu0 0.0
        %9194 = vmatmul.mubr.f32.gmra.mrb[0].mxu0 %v8848
        %v9195 = vpop.f32.mrb[0].mxu0
        %v9196 = vadd.f32 %v8711, %v9195
        %v9197 = vpop.f32.mrb[0].mxu0
        %9198 = vmatprep.mubr.f32.mxu0 0.0
        %9199 = vmatmul.mubr.f32.gmra.mrb[0].mxu0 %v8851
        %v9200 = vpop.f32.mrb[0].mxu0
        %v9201 = vadd.f32 %v8711, %v9200
        %v9202 = vpop.f32.mrb[0].mxu0
        %9203 = vmatprep.mubr.f32.mxu0 0.0
        %9204 = vmatmul.mubr.f32.gmra.mrb[0].mxu0 %v8854
        %v9205 = vpop.f32.mrb[0].mxu0
        %v9206 = vadd.f32 %v8711, %v9205
        %v9207 = vpop.f32.mrb[0].mxu0
        %9208 = vmatprep.mubr.f32.mxu0 0.0
        %9209 = vmatmul.mubr.f32.gmra.mrb[0].mxu0 %v8857
        %v9210 = vpop.f32.mrb[0].mxu0
        %v9211 = vadd.f32 %v8711, %v9210
        %v9212 = vpop.f32.mrb[0].mxu0
        %9213 = vmatprep.mubr.f32.mxu0 0.0
        %9214 = vmatmul.mubr.f32.gmra.mrb[0].mxu0 %v8860
        %v9215 = vpop.f32.mrb[0].mxu0
        %v9216 = vadd.f32 %v8711, %v9215
        %v9217 = vpop.f32.mrb[0].mxu0
        %9218 = vmatprep.mubr.f32.mxu0 0.0
        %9219 = vmatmul.mubr.f32.gmra.mrb[0].mxu0 %v8863
        %v9220 = vpop.f32.mrb[0].mxu0
        %v9221 = vadd.f32 %v8711, %v9220
        %v9222 = vpop.f32.mrb[0].mxu0
        %9223 = vmatprep.mubr.f32.mxu0 0.0
        %9224 = vmatmul.mubr.f32.gmra.mrb[0].mxu0 %v8866
        %v9225 = vpop.f32.mrb[0].mxu0
        %v9226 = vadd.f32 %v8711, %v9225
        %v9227 = vpop.f32.mrb[0].mxu0
        %9228 = vmatprep.mubr.f32.mxu0 0.0
        %9229 = vmatmul.mubr.f32.gmra.mrb[0].mxu0 %v8869
        %v9230 = vpop.f32.mrb[0].mxu0
        %v9231 = vadd.f32 %v8711, %v9230
        %v9232 = vpop.f32.mrb[0].mxu0
        %9233 = vmatprep.mubr.f32.mxu0 0.0
        %9234 = vmatmul.mubr.f32.gmra.mrb[0].mxu0 %v8872
        %v9235 = vpop.f32.mrb[0].mxu0
        %v9236 = vadd.f32 %v8711, %v9235
        %v9237 = vpop.f32.mrb[0].mxu0
        %9238 = vmatprep.mubr.f32.mxu0 0.0
        %9239 = vmatmul.mubr.f32.gmra.mrb[0].mxu0 %v8875
        %v9240 = vpop.f32.mrb[0].mxu0
        %v9241 = vadd.f32 %v8711, %v9240
        %v9242 = vpop.f32.mrb[0].mxu0
        %9243 = vmatprep.mubr.f32.mxu0 0.0
        %9244 = vmatmul.mubr.f32.gmra.mrb[0].mxu0 %v8878
        %v9245 = vpop.f32.mrb[0].mxu0
        %v9246 = vadd.f32 %v8711, %v9245
        %v9247 = vpop.f32.mrb[0].mxu0
        %9248 = vmatprep.mubr.f32.mxu0 0.0
        %9249 = vmatmul.mubr.f32.gmra.mrb[0].mxu0 %v8881
        %v9250 = vpop.f32.mrb[0].mxu0
        %v9251 = vadd.f32 %v8711, %v9250
        %v9252 = vpop.f32.mrb[0].mxu0
        %9253 = vmatprep.mubr.f32.mxu0 0.0
        %9254 = vmatmul.mubr.f32.gmra.mrb[0].mxu0 %v8884
        %v9255 = vpop.f32.mrb[0].mxu0
        %v9256 = vadd.f32 %v8711, %v9255
        %v9257 = vpop.f32.mrb[0].mxu0
        %9258 = vmatprep.mubr.f32.mxu0 0.0
        %9259 = vmatmul.mubr.f32.gmra.mrb[0].mxu0 %v8887
        %v9260 = vpop.f32.mrb[0].mxu0
        %v9261 = vadd.f32 %v8711, %v9260
        %v9262 = vpop.f32.mrb[0].mxu0
        %9263 = vmatprep.mubr.f32.mxu0 0.0
        %9264 = vmatmul.mubr.f32.gmra.mrb[0].mxu0 %v8890
        %v9265 = vpop.f32.mrb[0].mxu0
        %v9266 = vadd.f32 %v8711, %v9265
        %v9267 = vpop.f32.mrb[0].mxu0
        %9268 = vmatprep.mubr.f32.mxu0 0.0
        %9269 = vmatmul.mubr.f32.gmra.mrb[0].mxu0 %v8893
        %v9270 = vpop.f32.mrb[0].mxu0
        %v9271 = vadd.f32 %v8711, %v9270
        %v9272 = vpop.f32.mrb[0].mxu0
        %9273 = vmatprep.mubr.f32.mxu0 0.0
        %9274 = vmatmul.mubr.f32.gmra.mrb[0].mxu0 %v8896
        %v9275 = vpop.f32.mrb[0].mxu0
        %v9276 = vadd.f32 %v8711, %v9275
        %v9277 = vpop.f32.mrb[0].mxu0
        %9278 = vmatprep.mubr.f32.mxu0 0.0
        %9279 = vmatmul.mubr.f32.gmra.mrb[0].mxu0 %v8899
        %v9280 = vpop.f32.mrb[0].mxu0
        %v9281 = vadd.f32 %v8711, %v9280
        %v9282 = vpop.f32.mrb[0].mxu0
        %9283 = vmatprep.mubr.f32.mxu0 0.0
        %9284 = vmatmul.mubr.f32.gmra.mrb[0].mxu0 %v8902
        %v9285 = vpop.f32.mrb[0].mxu0
        %v9286 = vadd.f32 %v8711, %v9285
        %v9287 = vpop.f32.mrb[0].mxu0
        %9288 = vdwg.mxu0
        %v9289 = vmul.f32 %v8971, 0.5
        %v9290 = vmul.f32 %v8976, 0.5
        %v9291 = vmul.f32 %v8981, 0.5
        %v9292 = vmul.f32 %v8986, 0.5
        %v9293 = vmul.f32 %v8991, 0.5
        %v9294 = vmul.f32 %v8996, 0.5
        %v9295 = vmul.f32 %v9001, 0.5
        %v9296 = vmul.f32 %v9006, 0.5
        %v9297 = vmul.f32 %v9011, 0.5
        %v9298 = vmul.f32 %v9016, 0.5
        %v9299 = vmul.f32 %v9021, 0.5
        %v9300 = vmul.f32 %v9026, 0.5
        %v9301 = vmul.f32 %v9031, 0.5
        %v9302 = vmul.f32 %v9036, 0.5
        %v9303 = vmul.f32 %v9041, 0.5
        %v9304 = vmul.f32 %v9046, 0.5
        %v9305 = vmul.f32 %v9051, 0.5
        %v9306 = vmul.f32 %v9056, 0.5
        %v9307 = vmul.f32 %v9061, 0.5
        %v9308 = vmul.f32 %v9066, 0.5
        %v9309 = vmul.f32 %v9071, 0.5
        %v9310 = vmul.f32 %v9076, 0.5
        %v9311 = vmul.f32 %v9081, 0.5
        %v9312 = vmul.f32 %v9086, 0.5
        %v9313 = vmul.f32 %v9091, 0.5
        %v9314 = vmul.f32 %v9096, 0.5
        %v9315 = vmul.f32 %v9101, 0.5
        %v9316 = vmul.f32 %v9106, 0.5
        %v9317 = vmul.f32 %v9111, 0.5
        %v9318 = vmul.f32 %v9116, 0.5
        %v9319 = vmul.f32 %v9121, 0.5
        %v9320 = vmul.f32 %v9126, 0.5
        %v9321 = vmul.f32 %v9131, 0.5
        %v9322 = vmul.f32 %v9136, 0.5
        %v9323 = vmul.f32 %v9141, 0.5
        %v9324 = vmul.f32 %v9146, 0.5
        %v9325 = vmul.f32 %v9151, 0.5
        %v9326 = vmul.f32 %v9156, 0.5
        %v9327 = vmul.f32 %v9161, 0.5
        %v9328 = vmul.f32 %v9166, 0.5
        %v9329 = vmul.f32 %v9171, 0.5
        %v9330 = vmul.f32 %v9176, 0.5
        %v9331 = vmul.f32 %v9181, 0.5
        %v9332 = vmul.f32 %v9186, 0.5
        %v9333 = vmul.f32 %v9191, 0.5
        %v9334 = vmul.f32 %v9196, 0.5
        %v9335 = vmul.f32 %v9201, 0.5
        %v9336 = vmul.f32 %v9206, 0.5
        %v9337 = vmul.f32 %v9211, 0.5
        %v9338 = vmul.f32 %v9216, 0.5
        %v9339 = vmul.f32 %v9221, 0.5
        %v9340 = vmul.f32 %v9226, 0.5
        %v9341 = vmul.f32 %v9231, 0.5
        %v9342 = vmul.f32 %v9236, 0.5
        %v9343 = vmul.f32 %v9241, 0.5
        %v9344 = vmul.f32 %v9246, 0.5
        %v9345 = vmul.f32 %v9251, 0.5
        %v9346 = vmul.f32 %v9256, 0.5
        %v9347 = vmul.f32 %v9261, 0.5
        %v9348 = vmul.f32 %v9266, 0.5
        %v9349 = vmul.f32 %v9271, 0.5
        %v9350 = vmul.f32 %v9276, 0.5
        %v9351 = vmul.f32 %v9281, 0.5
        %v9352 = vmul.f32 %v9286, 0.5
        %v9353 = vtanh.pop %v9289
        %v9354 = vtanh.pop %v9290
        %v9355 = vtanh.pop %v9291
        %v9356 = vtanh.pop %v9292
        %v9357 = vtanh.pop %v9293
        %v9358 = vtanh.pop %v9294
        %v9359 = vtanh.pop %v9295
        %v9360 = vtanh.pop %v9296
        %v9361 = vtanh.pop %v9297
        %v9362 = vtanh.pop %v9298
        %v9363 = vtanh.pop %v9299
        %v9364 = vtanh.pop %v9300
        %v9365 = vtanh.pop %v9301
        %v9366 = vtanh.pop %v9302
        %v9367 = vtanh.pop %v9303
        %v9368 = vtanh.pop %v9304
        %v9369 = vtanh.pop %v9305
        %v9370 = vtanh.pop %v9306
        %v9371 = vtanh.pop %v9307
        %v9372 = vtanh.pop %v9308
        %v9373 = vtanh.pop %v9309
        %v9374 = vtanh.pop %v9310
        %v9375 = vtanh.pop %v9311
        %v9376 = vtanh.pop %v9312
        %v9377 = vtanh.pop %v9313
        %v9378 = vtanh.pop %v9314
        %v9379 = vtanh.pop %v9315
        %v9380 = vtanh.pop %v9316
        %v9381 = vtanh.pop %v9317
        %v9382 = vtanh.pop %v9318
        %v9383 = vtanh.pop %v9319
        %v9384 = vtanh.pop %v9320
        %v9385 = vtanh.pop %v9321
        %v9386 = vtanh.pop %v9322
        %v9387 = vtanh.pop %v9323
        %v9388 = vtanh.pop %v9324
        %v9389 = vtanh.pop %v9325
        %v9390 = vtanh.pop %v9326
        %v9391 = vtanh.pop %v9327
        %v9392 = vtanh.pop %v9328
        %v9393 = vtanh.pop %v9329
        %v9394 = vtanh.pop %v9330
        %v9395 = vtanh.pop %v9331
        %v9396 = vtanh.pop %v9332
        %v9397 = vtanh.pop %v9333
        %v9398 = vtanh.pop %v9334
        %v9399 = vtanh.pop %v9335
        %v9400 = vtanh.pop %v9336
        %v9401 = vtanh.pop %v9337
        %v9402 = vtanh.pop %v9338
        %v9403 = vtanh.pop %v9339
        %v9404 = vtanh.pop %v9340
        %v9405 = vtanh.pop %v9341
        %v9406 = vtanh.pop %v9342
        %v9407 = vtanh.pop %v9343
        %v9408 = vtanh.pop %v9344
        %v9409 = vtanh.pop %v9345
        %v9410 = vtanh.pop %v9346
        %v9411 = vtanh.pop %v9347
        %v9412 = vtanh.pop %v9348
        %v9413 = vtanh.pop %v9349
        %v9414 = vtanh.pop %v9350
        %v9415 = vtanh.pop %v9351
        %v9416 = vtanh.pop %v9352
        %v9417 = vadd.f32 %v9353, 1.0
        %v9418 = vadd.f32 %v9354, 1.0
        %v9419 = vadd.f32 %v9355, 1.0
        %v9420 = vadd.f32 %v9356, 1.0
        %v9421 = vadd.f32 %v9357, 1.0
        %v9422 = vadd.f32 %v9358, 1.0
        %v9423 = vadd.f32 %v9359, 1.0
        %v9424 = vadd.f32 %v9360, 1.0
        %v9425 = vadd.f32 %v9361, 1.0
        %v9426 = vadd.f32 %v9362, 1.0
        %v9427 = vadd.f32 %v9363, 1.0
        %v9428 = vadd.f32 %v9364, 1.0
        %v9429 = vadd.f32 %v9365, 1.0
        %v9430 = vadd.f32 %v9366, 1.0
        %v9431 = vadd.f32 %v9367, 1.0
        %v9432 = vadd.f32 %v9368, 1.0
        %v9433 = vadd.f32 %v9369, 1.0
        %v9434 = vadd.f32 %v9370, 1.0
        %v9435 = vadd.f32 %v9371, 1.0
        %v9436 = vadd.f32 %v9372, 1.0
        %v9437 = vadd.f32 %v9373, 1.0
        %v9438 = vadd.f32 %v9374, 1.0
        %v9439 = vadd.f32 %v9375, 1.0
        %v9440 = vadd.f32 %v9376, 1.0
        %v9441 = vadd.f32 %v9377, 1.0
        %v9442 = vadd.f32 %v9378, 1.0
        %v9443 = vadd.f32 %v9379, 1.0
        %v9444 = vadd.f32 %v9380, 1.0
        %v9445 = vadd.f32 %v9381, 1.0
        %v9446 = vadd.f32 %v9382, 1.0
        %v9447 = vadd.f32 %v9383, 1.0
        %v9448 = vadd.f32 %v9384, 1.0
        %v9449 = vadd.f32 %v9385, 1.0
        %v9450 = vadd.f32 %v9386, 1.0
        %v9451 = vadd.f32 %v9387, 1.0
        %v9452 = vadd.f32 %v9388, 1.0
        %v9453 = vadd.f32 %v9389, 1.0
        %v9454 = vadd.f32 %v9390, 1.0
        %v9455 = vadd.f32 %v9391, 1.0
        %v9456 = vadd.f32 %v9392, 1.0
        %v9457 = vadd.f32 %v9393, 1.0
        %v9458 = vadd.f32 %v9394, 1.0
        %v9459 = vadd.f32 %v9395, 1.0
        %v9460 = vadd.f32 %v9396, 1.0
        %v9461 = vadd.f32 %v9397, 1.0
        %v9462 = vadd.f32 %v9398, 1.0
        %v9463 = vadd.f32 %v9399, 1.0
        %v9464 = vadd.f32 %v9400, 1.0
        %v9465 = vadd.f32 %v9401, 1.0
        %v9466 = vadd.f32 %v9402, 1.0
        %v9467 = vadd.f32 %v9403, 1.0
        %v9468 = vadd.f32 %v9404, 1.0
        %v9469 = vadd.f32 %v9405, 1.0
        %v9470 = vadd.f32 %v9406, 1.0
        %v9471 = vadd.f32 %v9407, 1.0
        %v9472 = vadd.f32 %v9408, 1.0
        %v9473 = vadd.f32 %v9409, 1.0
        %v9474 = vadd.f32 %v9410, 1.0
        %v9475 = vadd.f32 %v9411, 1.0
        %v9476 = vadd.f32 %v9412, 1.0
        %v9477 = vadd.f32 %v9413, 1.0
        %v9478 = vadd.f32 %v9414, 1.0
        %v9479 = vadd.f32 %v9415, 1.0
        %v9480 = vadd.f32 %v9416, 1.0
        %v9481 = vmul.f32 %v9417, 0.5
        %v9482 = vmul.f32 %v9418, 0.5
        %v9483 = vmul.f32 %v9419, 0.5
        %v9484 = vmul.f32 %v9420, 0.5
        %v9485 = vmul.f32 %v9421, 0.5
        %v9486 = vmul.f32 %v9422, 0.5
        %v9487 = vmul.f32 %v9423, 0.5
        %v9488 = vmul.f32 %v9424, 0.5
        %v9489 = vmul.f32 %v9425, 0.5
        %v9490 = vmul.f32 %v9426, 0.5
        %v9491 = vmul.f32 %v9427, 0.5
        %v9492 = vmul.f32 %v9428, 0.5
        %v9493 = vmul.f32 %v9429, 0.5
        %v9494 = vmul.f32 %v9430, 0.5
        %v9495 = vmul.f32 %v9431, 0.5
        %v9496 = vmul.f32 %v9432, 0.5
        %v9497 = vmul.f32 %v9433, 0.5
        %v9498 = vmul.f32 %v9434, 0.5
        %v9499 = vmul.f32 %v9435, 0.5
        %v9500 = vmul.f32 %v9436, 0.5
        %v9501 = vmul.f32 %v9437, 0.5
        %v9502 = vmul.f32 %v9438, 0.5
        %v9503 = vmul.f32 %v9439, 0.5
        %v9504 = vmul.f32 %v9440, 0.5
        %v9505 = vmul.f32 %v9441, 0.5
        %v9506 = vmul.f32 %v9442, 0.5
        %v9507 = vmul.f32 %v9443, 0.5
        %v9508 = vmul.f32 %v9444, 0.5
        %v9509 = vmul.f32 %v9445, 0.5
        %v9510 = vmul.f32 %v9446, 0.5
        %v9511 = vmul.f32 %v9447, 0.5
        %v9512 = vmul.f32 %v9448, 0.5
        %v9513 = vmul.f32 %v9449, 0.5
        %v9514 = vmul.f32 %v9450, 0.5
        %v9515 = vmul.f32 %v9451, 0.5
        %v9516 = vmul.f32 %v9452, 0.5
        %v9517 = vmul.f32 %v9453, 0.5
        %v9518 = vmul.f32 %v9454, 0.5
        %v9519 = vmul.f32 %v9455, 0.5
        %v9520 = vmul.f32 %v9456, 0.5
        %v9521 = vmul.f32 %v9457, 0.5
        %v9522 = vmul.f32 %v9458, 0.5
        %v9523 = vmul.f32 %v9459, 0.5
        %v9524 = vmul.f32 %v9460, 0.5
        %v9525 = vmul.f32 %v9461, 0.5
        %v9526 = vmul.f32 %v9462, 0.5
        %v9527 = vmul.f32 %v9463, 0.5
        %v9528 = vmul.f32 %v9464, 0.5
        %v9529 = vmul.f32 %v9465, 0.5
        %v9530 = vmul.f32 %v9466, 0.5
        %v9531 = vmul.f32 %v9467, 0.5
        %v9532 = vmul.f32 %v9468, 0.5
        %v9533 = vmul.f32 %v9469, 0.5
        %v9534 = vmul.f32 %v9470, 0.5
        %v9535 = vmul.f32 %v9471, 0.5
        %v9536 = vmul.f32 %v9472, 0.5
        %v9537 = vmul.f32 %v9473, 0.5
        %v9538 = vmul.f32 %v9474, 0.5
        %v9539 = vmul.f32 %v9475, 0.5
        %v9540 = vmul.f32 %v9476, 0.5
        %v9541 = vmul.f32 %v9477, 0.5
        %v9542 = vmul.f32 %v9478, 0.5
        %v9543 = vmul.f32 %v9479, 0.5
        %v9544 = vmul.f32 %v9480, 0.5
        %9545 = vst [vmem:[%s245] sm:$0xff] %v9481
        %9546 = vst [vmem:[%s245 + $0x8] sm:$0xff] %v9482
        %9547 = vst [vmem:[%s245 + $0x10] sm:$0xff] %v9483
        %9548 = vst [vmem:[%s245 + $0x18] sm:$0xff] %v9484
        %9549 = vst [vmem:[%s245 + $0x20] sm:$0xff] %v9485
        %9550 = vst [vmem:[%s245 + $0x28] sm:$0xff] %v9486
        %9551 = vst [vmem:[%s245 + $0x30] sm:$0xff] %v9487
        %9552 = vst [vmem:[%s245 + $0x38] sm:$0xff] %v9488
        %9553 = vst [vmem:[%s245 + $0x40] sm:$0xff] %v9489
        %9554 = vst [vmem:[%s245 + $0x48] sm:$0xff] %v9490
        %9555 = vst [vmem:[%s245 + $0x50] sm:$0xff] %v9491
        %9556 = vst [vmem:[%s245 + $0x58] sm:$0xff] %v9492
        %9557 = vst [vmem:[%s245 + $0x60] sm:$0xff] %v9493
        %9558 = vst [vmem:[%s245 + $0x68] sm:$0xff] %v9494
        %9559 = vst [vmem:[%s245 + $0x70] sm:$0xff] %v9495
        %9560 = vst [vmem:[%s245 + $0x78] sm:$0xff] %v9496
        %9561 = vst [vmem:[%s245 + $0x80] sm:$0xff] %v9497
        %9562 = vst [vmem:[%s245 + $0x88] sm:$0xff] %v9498
        %9563 = vst [vmem:[%s245 + $0x90] sm:$0xff] %v9499
        %9564 = vst [vmem:[%s245 + $0x98] sm:$0xff] %v9500
        %9565 = vst [vmem:[%s245 + $0xa0] sm:$0xff] %v9501
        %9566 = vst [vmem:[%s245 + $0xa8] sm:$0xff] %v9502
        %9567 = vst [vmem:[%s245 + $0xb0] sm:$0xff] %v9503
        %9568 = vst [vmem:[%s245 + $0xb8] sm:$0xff] %v9504
        %9569 = vst [vmem:[%s245 + $0xc0] sm:$0xff] %v9505
        %9570 = vst [vmem:[%s245 + $0xc8] sm:$0xff] %v9506
        %9571 = vst [vmem:[%s245 + $0xd0] sm:$0xff] %v9507
        %9572 = vst [vmem:[%s245 + $0xd8] sm:$0xff] %v9508
        %9573 = vst [vmem:[%s245 + $0xe0] sm:$0xff] %v9509
        %9574 = vst [vmem:[%s245 + $0xe8] sm:$0xff] %v9510
        %9575 = vst [vmem:[%s245 + $0xf0] sm:$0xff] %v9511
        %9576 = vst [vmem:[%s245 + $0xf8] sm:$0xff] %v9512
        %9577 = vst [vmem:[%s245 + $0x100] sm:$0xff] %v9513
        %9578 = vst [vmem:[%s245 + $0x108] sm:$0xff] %v9514
        %9579 = vst [vmem:[%s245 + $0x110] sm:$0xff] %v9515
        %9580 = vst [vmem:[%s245 + $0x118] sm:$0xff] %v9516
        %9581 = vst [vmem:[%s245 + $0x120] sm:$0xff] %v9517
        %9582 = vst [vmem:[%s245 + $0x128] sm:$0xff] %v9518
        %9583 = vst [vmem:[%s245 + $0x130] sm:$0xff] %v9519
        %9584 = vst [vmem:[%s245 + $0x138] sm:$0xff] %v9520
        %9585 = vst [vmem:[%s245 + $0x140] sm:$0xff] %v9521
        %9586 = vst [vmem:[%s245 + $0x148] sm:$0xff] %v9522
        %9587 = vst [vmem:[%s245 + $0x150] sm:$0xff] %v9523
        %9588 = vst [vmem:[%s245 + $0x158] sm:$0xff] %v9524
        %9589 = vst [vmem:[%s245 + $0x160] sm:$0xff] %v9525
        %9590 = vst [vmem:[%s245 + $0x168] sm:$0xff] %v9526
        %9591 = vst [vmem:[%s245 + $0x170] sm:$0xff] %v9527
        %9592 = vst [vmem:[%s245 + $0x178] sm:$0xff] %v9528
        %9593 = vst [vmem:[%s245 + $0x180] sm:$0xff] %v9529
        %9594 = vst [vmem:[%s245 + $0x188] sm:$0xff] %v9530
        %9595 = vst [vmem:[%s245 + $0x190] sm:$0xff] %v9531
        %9596 = vst [vmem:[%s245 + $0x198] sm:$0xff] %v9532
        %9597 = vst [vmem:[%s245 + $0x1a0] sm:$0xff] %v9533
        %9598 = vst [vmem:[%s245 + $0x1a8] sm:$0xff] %v9534
        %9599 = vst [vmem:[%s245 + $0x1b0] sm:$0xff] %v9535
        %9600 = vst [vmem:[%s245 + $0x1b8] sm:$0xff] %v9536
        %9601 = vst [vmem:[%s245 + $0x1c0] sm:$0xff] %v9537
        %9602 = vst [vmem:[%s245 + $0x1c8] sm:$0xff] %v9538
        %9603 = vst [vmem:[%s245 + $0x1d0] sm:$0xff] %v9539
        %9604 = vst [vmem:[%s245 + $0x1d8] sm:$0xff] %v9540
        %9605 = vst [vmem:[%s245 + $0x1e0] sm:$0xff] %v9541
        %9606 = vst [vmem:[%s245 + $0x1e8] sm:$0xff] %v9542
        %9607 = vst [vmem:[%s245 + $0x1f0] sm:$0xff] %v9543
        %9608 = vst [vmem:[%s245 + $0x1f8] sm:$0xff] %v9544
        %s9609 = sand.u32 %s159, 1
        %s9610 = scalar_lea.sflag [#allocation3], %s9609
        %s9611 = sand.u32 %s159, 1
        %s9612 = smul.addr %s9611, 512
        %s9613 = scalar_lea.vmem [#allocation2], %s9612
        // Predicated region
        $region45: #{tpu_custom_call.1} parent=43 // pred_check
          %p9614 = pneg %p169
        $region46: #{tpu_custom_call.1} parent=43 // pred_check_branch
          %9616 = sbr.rel (%p9614) target = $region48
        $region47: #{tpu_custom_call.1} parent=43 // pred_region
          %s9617 = smul.u32 64, %s20
          %s9619 = ssub.s32 8192, 8192
          %9620 = vsyncadd %s9610, %s9619
          %s9621 = smul.addr %s9617, 128
          %s9622 = scalar_lea.hbm %s6, %s9621
          %s9623 = sshll.u32 %s9613, 4
          %s9624 = int_to_ptr.vmem [resolvable:$true] %s9623
          %9629 = dma.vmem_to_hbm [thread:$0]  %s9624, 8192, %s9622, %s9610, 128, 128, 8
        $region48: #{tpu_custom_call.1} parent=43 // pred_fallthru
          _
      $region44: #{tpu_custom_call.1} parent=5 // pred_fallthru
        _
      %p9630 = scmp.le.s32.totalorder 2, %s15
      // Predicated region
      $region49: #{tpu_custom_call.1} parent=5 // pred_check
        %p9631 = pneg %p9630
      $region50: #{tpu_custom_call.1} parent=5 // pred_check_branch
        %9633 = sbr.rel (%p9631) target = $region52
      $region51: #{tpu_custom_call.1} parent=5 // pred_region
        %s9634 = ssub.s32 %s15, 2
        // Predicated region
        $region53: #{tpu_custom_call.1} parent=51 // pred_check
          %p9635 = pneg %p175
        $region54: #{tpu_custom_call.1} parent=51 // pred_check_branch
          %9637 = sbr.rel (%p9635) target = $region56
        $region55: #{tpu_custom_call.1} parent=51 // pred_region
          %s9638 = sand.u32 %s160, 1
          %s9639 = scalar_lea.sflag [#allocation3], %s9638
          %s9640 = sand.u32 %s160, 1
          %s9641 = smul.addr %s9640, 512
          %s9642 = scalar_lea.vmem [#allocation2], %s9641
          %9643 = dma.done %s9639, 8192
        $region56: #{tpu_custom_call.1} parent=51 // pred_fallthru
          _
      $region52: #{tpu_custom_call.1} parent=5 // pred_fallthru
        _
    $region6: #{tpu_custom_call.1} parent=1 // loop_footer
      %s19 = sadd.s32 1, %s15
    $region7: #{tpu_custom_call.1} parent=1 // loop_footer_branch
      %14 = sbr.rel target = $region3
    $region8: #{tpu_custom_call.1} parent=1 // loop_exit
      _
    %9644 = vsyncpa [#allocation3], 1
    %s9645 = scalar_lea.sflag [#allocation3], 1
    %9646 = vsyncpa %s9645, 1

</llo_original>
